<compile_context>
chip_gen: v6e
topology: v6e:2x2x1
jax: 0.10.0
libtpu: 0.0.40
codegen_flags: <defaults>
</compile_context>

<pallas_src>
import jax
import jax.numpy as jnp
from jax import lax
from jax.experimental import pallas as pl
from jax.experimental.pallas import tpu as pltpu


def make_rdb_kernel(H, W, C, G, R, nb):
    HW = H * W
    M = nb * HW

    def kernel(x_ref, w12_ref, b1_ref, w2o_ref, b2_ref, w3_ref, b3_ref,
               f1wt_ref, f1b_ref, f2w_ref, f2b_ref,
               o_ref, xpad_ref, opad_ref):
        # ---- in-kernel zero padding of x (wrapper jnp.pad removed) ----
        # Interior is always fully overwritten each step; only the 1-pixel border must
        # be (re-)zeroed (keeps correctness if grid steps are sharded across cores).
        xpad_ref[:, 0:1, :, :] = jnp.zeros((nb, 1, W + 2, C), jnp.bfloat16)
        xpad_ref[:, H + 1:H + 2, :, :] = jnp.zeros((nb, 1, W + 2, C), jnp.bfloat16)
        xpad_ref[:, :, 0:1, :] = jnp.zeros((nb, H + 2, 1, C), jnp.bfloat16)
        xpad_ref[:, :, W + 1:W + 2, :] = jnp.zeros((nb, H + 2, 1, C), jnp.bfloat16)
        x_f32 = x_ref[...]                                            # (nb,H,W,C) f32
        xpad_ref[:, 1:H + 1, 1:W + 1, :] = x_f32.astype(jnp.bfloat16)

        # ---- im2col of padded x, staged in bf16, built once and reused ----
        xtaps = [xpad_ref[:, dy:dy + H, dx:dx + W, :].reshape(M, C)
                 for dy in range(3) for dx in range(3)]
        xcol = jnp.concatenate(xtaps, axis=-1)                        # (M, 9C) bf16

        # ---- conv1 + conv2(x-part) as ONE big-K matmul (BN scales pre-folded) ----
        acc12 = jnp.dot(xcol, w12_ref[...],
                        preferred_element_type=jnp.float32)           # (M, 2G) f32
        out1 = jnp.maximum(acc12[:, :G] + b1_ref[...], 0.0)           # (M, G)
        acc2x = acc12[:, G:]                                          # (M, G)

        # ---- zero-padded out1 in bf16 scratch (border-only re-zero) ----
        opad_ref[:, 0:1, :, :] = jnp.zeros((nb, 1, W + 2, G), jnp.bfloat16)
        opad_ref[:, H + 1:H + 2, :, :] = jnp.zeros((nb, 1, W + 2, G), jnp.bfloat16)
        opad_ref[:, :, 0:1, :] = jnp.zeros((nb, H + 2, 1, G), jnp.bfloat16)
        opad_ref[:, :, W + 1:W + 2, :] = jnp.zeros((nb, H + 2, 1, G), jnp.bfloat16)
        opad_ref[:, 1:H + 1, 1:W + 1, :] = out1.astype(jnp.bfloat16).reshape(nb, H, W, G)

        otaps = [opad_ref[:, dy:dy + H, dx:dx + W, :].reshape(M, G)
                 for dy in range(3) for dx in range(3)]
        ocol = jnp.concatenate(otaps, axis=-1)                        # (M, 9G) bf16

        # ---- conv2 remainder + folded BN2 + relu ----
        acc2 = acc2x + jnp.dot(ocol, w2o_ref[...], preferred_element_type=jnp.float32)
        out2 = jnp.maximum(acc2 + b2_ref[...], 0.0)                   # (M, G)

        # ---- conv3 (1x1) as ONE K = C+2G matmul over stacked activations ----
        cat3 = jnp.concatenate([xtaps[4], out1.astype(jnp.bfloat16),
                                out2.astype(jnp.bfloat16)], axis=-1)  # (M, C+2G) bf16
        out = (jnp.dot(cat3, w3_ref[...], preferred_element_type=jnp.float32)
               + b3_ref[...])                                         # (M, C) f32

        # ---- SE block (per batch element); tiny FCs on the VPU in f32 ----
        out_b = out.reshape(nb, HW, C)
        y = jnp.mean(out_b, axis=1)                                   # (nb, C)
        h = jnp.maximum(
            jnp.sum(y[:, None, :] * f1wt_ref[...][None, :, :], axis=-1) + f1b_ref[...],
            0.0)                                                      # (nb, R)
        s = jax.nn.sigmoid(
            jnp.sum(h[:, :, None] * f2w_ref[...][None, :, :], axis=1) + f2b_ref[...])  # (nb, C)

        # CutoutDropout: eval mode => identity.
        # TODO(synk): training-mode random cutout (host-RNG gated) not implemented.

        # ---- gate, residual add, ONE big transpose, lane-dense (C, HW) stores ----
        res = x_f32.reshape(nb, HW, C) + out_b * s[:, None, :]        # (nb, HW, C) f32
        resT = res.reshape(M, C).T                                    # (C, M)
        for b in range(nb):
            o_ref[b] = resT[:, b * HW:(b + 1) * HW]                   # (C, HW), HW on lanes

    return kernel


def _pick_batch_block(N, H, W, C, G, budget_bytes=40 << 20):
    """Pick nb | N.  Prefer grid_len >= 2 (keeps both v7x TensorCores busy) and keep the
    dominant per-step VMEM consumers under a budget (64 MiB VMEM on v7x)."""
    cap = min(N, 8)
    if 2 <= N <= 16:
        cap = min(cap, max(1, N // 2))       # force grid_len >= 2 at small batch
    nb = max(1, cap)
    while N % nb:
        nb -= 1

    def est(nb_):
        M = nb_ * H * W
        hw2 = (H + 2) * (W + 2)
        b = 2 * M * 9 * C                    # xcol (bf16)
        b += 2 * M * 9 * G                   # ocol (bf16)
        b += 2 * nb_ * hw2 * (C + G)         # padded scratches (bf16)
        b += 2 * 4 * nb_ * H * W * C         # double-buffered input block (f32)
        b += 2 * 4 * nb_ * H * W * C         # double-buffered output block (f32)
        b += 4 * M * (4 * G + 3 * C)         # acc12/out1/out2/out/res/resT (f32)
        return b

    while nb > 1 and est(nb) > budget_bytes:
        nb -= 1
        while N % nb:
            nb -= 1
    return nb


def residual_dense_block(x_nchw, params):
    N, C, H, W = x_nchw.shape
    G = params["w1"].shape[-1]
    R = params["f1w"].shape[-1]
    HW = H * W

    nb = _pick_batch_block(N, H, W, C, G)
    grid_len = N // nb

    x = jnp.transpose(x_nchw, (0, 2, 3, 1)).astype(jnp.float32)      # NHWC, no wrapper pad

    # One-time host-side weight prep (tiny): fold BN scales into conv weights, merge the
    # two xcol-consuming matmuls, keep the stacked 1x1 weights, stage matmul weights bf16.
    w1s = (params["w1"] * params["s1"].reshape(1, 1, G)).reshape(9 * C, G)
    w2s = params["w2"] * params["s2"].reshape(1, 1, G)
    w2x = w2s[:, :C, :].reshape(9 * C, G)
    w2o = w2s[:, C:, :].reshape(9 * G, G).astype(jnp.bfloat16)
    w12 = jnp.concatenate([w1s, w2x], axis=-1).astype(jnp.bfloat16)  # (9C, 2G)
    w3f = params["w3"].astype(jnp.bfloat16)                          # (C+2G, C), already stacked
    f1wt = params["f1w"].T                                           # (R, C)

    kernel = make_rdb_kernel(H, W, C, G, R, nb)

    def full(shape):
        return pl.BlockSpec(shape, lambda i, n=len(shape): (0,) * n)

    out_lane = pl.pallas_call(
        kernel,
        out_shape=jax.ShapeDtypeStruct((N, C, HW), jnp.float32),
        grid_spec=pltpu.PrefetchScalarGridSpec(
            num_scalar_prefetch=0,
            grid=(grid_len,),
            in_specs=[
                pl.BlockSpec((nb, H, W, C), lambda i: (i, 0, 0, 0)),
                full((9 * C, 2 * G)), full((1, G)),
                full((9 * G, G)), full((1, G)),
                full((C + 2 * G, C)), full((1, C)),
                full((R, C)), full((1, R)), full((R, C)), full((1, C)),
            ],
            out_specs=pl.BlockSpec((nb, C, HW), lambda i: (i, 0, 0)),
            scratch_shapes=[
                pltpu.VMEM((nb, H + 2, W + 2, C), jnp.bfloat16),
                pltpu.VMEM((nb, H + 2, W + 2, G), jnp.bfloat16),
            ]),
        compiler_params=pltpu.CompilerParams(
            dimension_semantics=("parallel",),
            vmem_limit_bytes=64 * 1024 * 1024),
    )(x, w12, params["b1"], w2o, params["b2"], w3f, params["b3"],
      f1wt, params["f1b"], params["f2w"], params["f2b"])

    # (N, C, H*W) is already NCHW-ordered memory: reshape only, no transpose.
    return out_lane.reshape(N, C, H, W)


def init_params(key, C, G, R):
    """Deterministic synthetic parameters; BN (eval) folded into per-channel scale/bias."""
    ks = jax.random.split(key, 18)
    eps = 1e-5

    def nrm(k, shape, s=0.1):
        return jax.random.normal(k, shape, jnp.float32) * s

    # conv1 + bn1
    w1 = nrm(ks[0], (9, C, G))
    cb1 = nrm(ks[1], (G,))
    g1 = jax.random.uniform(ks[2], (G,), jnp.float32, 0.5, 1.5)
    be1 = nrm(ks[3], (G,))
    m1 = nrm(ks[4], (G,))
    v1 = jax.random.uniform(ks[5], (G,), jnp.float32, 0.5, 1.5)
    s1 = g1 / jnp.sqrt(v1 + eps)
    b1 = be1 + (cb1 - m1) * s1
    # conv2 + bn2
    w2 = nrm(ks[6], (9, C + G, G))
    cb2 = nrm(ks[7], (G,))
    g2 = jax.random.uniform(ks[8], (G,), jnp.float32, 0.5, 1.5)
    be2 = nrm(ks[9], (G,))
    m2 = nrm(ks[10], (G,))
    v2 = jax.random.uniform(ks[11], (G,), jnp.float32, 0.5, 1.5)
    s2 = g2 / jnp.sqrt(v2 + eps)
    b2 = be2 + (cb2 - m2) * s2
    # conv3 (1x1)
    w3 = nrm(ks[12], (C + 2 * G, C))
    b3 = nrm(ks[13], (C,))
    # SE block
    f1w = nrm(ks[14], (C, R))
    f1b = nrm(ks[15], (R,))
    f2w = nrm(ks[16], (R, C))
    f2b = nrm(ks[17], (C,))

    return dict(w1=w1, s1=s1.reshape(1, G), b1=b1.reshape(1, G),
                w2=w2, s2=s2.reshape(1, G), b2=b2.reshape(1, G),
                w3=w3, b3=b3.reshape(1, C),
                f1w=f1w, f1b=f1b.reshape(1, R),
                f2w=f2w, f2b=f2b.reshape(1, C))


def reference(x_nchw, params):
    """Pure-JAX f32 reference of the same forward pass (eval mode)."""
    x = jnp.transpose(x_nchw, (0, 2, 3, 1)).astype(jnp.float32)
    N, H, W, C = x.shape

    def conv3x3(inp, w9, scale, bias):
        cin, cout = inp.shape[-1], w9.shape[-1]
        w = w9.reshape(3, 3, cin, cout)
        out = lax.conv_general_dilated(
            inp, w, (1, 1), "SAME",
            dimension_numbers=("NHWC", "HWIO", "NHWC"),
            precision=lax.Precision.HIGHEST)
        return jnp.maximum(out * scale.reshape(1, 1, 1, cout)
                           + bias.reshape(1, 1, 1, cout), 0.0)

    out1 = conv3x3(x, params["w1"], params["s1"], params["b1"])
    out2 = conv3x3(jnp.concatenate([x, out1], -1), params["w2"], params["s2"], params["b2"])
    cat = jnp.concatenate([x, out1, out2], -1)
    out = jnp.einsum("nhwc,cd->nhwd", cat, params["w3"],
                     precision=lax.Precision.HIGHEST) + params["b3"].reshape(1, 1, 1, C)
    y = jnp.mean(out, axis=(1, 2))                                   # (N, C)
    h = jnp.maximum(y @ params["f1w"] + params["f1b"], 0.0)
    s = jax.nn.sigmoid(h @ params["f2w"] + params["f2b"])
    out = out * s[:, None, None, :]
    out = x + out
    return jnp.transpose(out, (0, 3, 1, 2))


if __name__ == "__main__":
    # small shapes consistent with the module (SE reduction=16 needs C >= 16)
    N, C, G, H, W = 2, 32, 16, 16, 16
    R = C // 16

    key = jax.random.PRNGKey(0)
    kx, kp = jax.random.split(key)
    x = jax.random.normal(kx, (N, C, H, W), jnp.float32)
    params = init_params(kp, C, G, R)

    out = residual_dense_block(x, params)
    out = jax.block_until_ready(out)

    assert out.shape == (N, C, H, W)
    ref = reference(x, params)
    err = float(jnp.max(jnp.abs(out - ref)))
    # Kernel stages matmul operands in bf16 (default MXU precision, f32 accumulation);
    # reference is full f32 -> ~1e-2 scale differences are expected.
    assert jnp.allclose(out, ref, rtol=3e-2, atol=3e-2), f"max abs err {err}"

    print("KERNEL_OK")
</pallas_src>

<mosaic_0001>
module attributes {stable_mosaic.version = 11 : i64} {
  func.func @kernel(%arg0: i32, %arg1: memref<1x16x16x32xf32, #tpu.memory_space<vmem>>, %arg2: memref<288x32xbf16, #tpu.memory_space<vmem>>, %arg3: memref<1x16xf32, #tpu.memory_space<vmem>>, %arg4: memref<144x16xbf16, #tpu.memory_space<vmem>>, %arg5: memref<1x16xf32, #tpu.memory_space<vmem>>, %arg6: memref<64x32xbf16, #tpu.memory_space<vmem>>, %arg7: memref<1x32xf32, #tpu.memory_space<vmem>>, %arg8: memref<2x32xf32, #tpu.memory_space<vmem>>, %arg9: memref<1x2xf32, #tpu.memory_space<vmem>>, %arg10: memref<2x32xf32, #tpu.memory_space<vmem>>, %arg11: memref<1x32xf32, #tpu.memory_space<vmem>>, %arg12: memref<1x32x256xf32, #tpu.memory_space<vmem>>, %arg13: memref<1x18x18x32xbf16, #tpu.memory_space<vmem>>, %arg14: memref<1x18x18x16xbf16, #tpu.memory_space<vmem>>) attributes {dimension_semantics = [#tpu.dimension_semantics<parallel>], iteration_bounds = array<i64: 2>, scalar_prefetch = 0 : i64, scratch_operands = 2 : i64, tpu.core_type = #tpu.core_type<tc>, window_params = [{transform_indices = @transform_0, window_bounds = array<i64: 1, 16, 16, 32>}, {pipeline_mode = #tpu.pipeline_mode<synchronous>, transform_indices = @transform_1, window_bounds = array<i64: 288, 32>}, {pipeline_mode = #tpu.pipeline_mode<synchronous>, transform_indices = @transform_2, window_bounds = array<i64: 1, 16>}, {pipeline_mode = #tpu.pipeline_mode<synchronous>, transform_indices = @transform_3, window_bounds = array<i64: 144, 16>}, {pipeline_mode = #tpu.pipeline_mode<synchronous>, transform_indices = @transform_4, window_bounds = array<i64: 1, 16>}, {pipeline_mode = #tpu.pipeline_mode<synchronous>, transform_indices = @transform_5, window_bounds = array<i64: 64, 32>}, {pipeline_mode = #tpu.pipeline_mode<synchronous>, transform_indices = @transform_6, window_bounds = array<i64: 1, 32>}, {pipeline_mode = #tpu.pipeline_mode<synchronous>, transform_indices = @transform_7, window_bounds = array<i64: 2, 32>}, {pipeline_mode = #tpu.pipeline_mode<synchronous>, transform_indices = @transform_8, window_bounds = array<i64: 1, 2>}, {pipeline_mode = #tpu.pipeline_mode<synchronous>, transform_indices = @transform_9, window_bounds = array<i64: 2, 32>}, {pipeline_mode = #tpu.pipeline_mode<synchronous>, transform_indices = @transform_10, window_bounds = array<i64: 1, 32>}, {transform_indices = @transform_11, window_bounds = array<i64: 1, 32, 256>}]} {
    %cst = arith.constant 0.000000e+00 : bf16
    %0 = vector.broadcast %cst : bf16 to vector<1x1x18x32xbf16>
    %c0 = arith.constant 0 : index
    %c0_0 = arith.constant 0 : index
    %c0_1 = arith.constant 0 : index
    %c0_2 = arith.constant 0 : index
    %1 = vector.load %arg13[%c0, %c0_0, %c0_1, %c0_2] : memref<1x18x18x32xbf16, #tpu.memory_space<vmem>>, vector<1x1x18x32xbf16>
    tpu.vector_store %arg13[%c0, %c0_0, %c0_1, %c0_2], %0 {strides = array<i32>} : memref<1x18x18x32xbf16, #tpu.memory_space<vmem>>, vector<1x1x18x32xbf16>,
    %cst_3 = arith.constant 0.000000e+00 : bf16
    %2 = vector.broadcast %cst_3 : bf16 to vector<1x1x18x32xbf16>
    %c0_4 = arith.constant 0 : index
    %c17 = arith.constant 17 : index
    %c0_5 = arith.constant 0 : index
    %c0_6 = arith.constant 0 : index
    %3 = vector.load %arg13[%c0_4, %c17, %c0_5, %c0_6] : memref<1x18x18x32xbf16, #tpu.memory_space<vmem>>, vector<1x1x18x32xbf16>
    tpu.vector_store %arg13[%c0_4, %c17, %c0_5, %c0_6], %2 {strides = array<i32>} : memref<1x18x18x32xbf16, #tpu.memory_space<vmem>>, vector<1x1x18x32xbf16>,
    %cst_7 = arith.constant 0.000000e+00 : bf16
    %4 = vector.broadcast %cst_7 : bf16 to vector<1x18x1x32xbf16>
    %c0_8 = arith.constant 0 : index
    %c0_9 = arith.constant 0 : index
    %c0_10 = arith.constant 0 : index
    %c0_11 = arith.constant 0 : index
    %5 = vector.load %arg13[%c0_8, %c0_9, %c0_10, %c0_11] : memref<1x18x18x32xbf16, #tpu.memory_space<vmem>>, vector<1x18x1x32xbf16>
    tpu.vector_store %arg13[%c0_8, %c0_9, %c0_10, %c0_11], %4 {strides = array<i32>} : memref<1x18x18x32xbf16, #tpu.memory_space<vmem>>, vector<1x18x1x32xbf16>,
    %cst_12 = arith.constant 0.000000e+00 : bf16
    %6 = vector.broadcast %cst_12 : bf16 to vector<1x18x1x32xbf16>
    %c0_13 = arith.constant 0 : index
    %c0_14 = arith.constant 0 : index
    %c17_15 = arith.constant 17 : index
    %c0_16 = arith.constant 0 : index
    %7 = vector.load %arg13[%c0_13, %c0_14, %c17_15, %c0_16] : memref<1x18x18x32xbf16, #tpu.memory_space<vmem>>, vector<1x18x1x32xbf16>
    tpu.vector_store %arg13[%c0_13, %c0_14, %c17_15, %c0_16], %6 {strides = array<i32>} : memref<1x18x18x32xbf16, #tpu.memory_space<vmem>>, vector<1x18x1x32xbf16>,
    %c0_17 = arith.constant 0 : index
    %c0_18 = arith.constant 0 : index
    %c0_19 = arith.constant 0 : index
    %c0_20 = arith.constant 0 : index
    %8 = vector.load %arg1[%c0_17, %c0_18, %c0_19, %c0_20] : memref<1x16x16x32xf32, #tpu.memory_space<vmem>>, vector<1x16x16x32xf32>
    %9 = arith.truncf %8 : vector<1x16x16x32xf32> to vector<1x16x16x32xbf16>
    %c0_21 = arith.constant 0 : index
    %c1 = arith.constant 1 : index
    %c1_22 = arith.constant 1 : index
    %c0_23 = arith.constant 0 : index
    %10 = vector.load %arg13[%c0_21, %c1, %c1_22, %c0_23] : memref<1x18x18x32xbf16, #tpu.memory_space<vmem>>, vector<1x16x16x32xbf16>
    tpu.vector_store %arg13[%c0_21, %c1, %c1_22, %c0_23], %9 {strides = array<i32>} : memref<1x18x18x32xbf16, #tpu.memory_space<vmem>>, vector<1x16x16x32xbf16>,
    %c0_24 = arith.constant 0 : index
    %c0_25 = arith.constant 0 : index
    %c0_26 = arith.constant 0 : index
    %c0_27 = arith.constant 0 : index
    %11 = vector.load %arg13[%c0_24, %c0_25, %c0_26, %c0_27] : memref<1x18x18x32xbf16, #tpu.memory_space<vmem>>, vector<1x16x16x32xbf16>
    %12 = vector.shape_cast %11 : vector<1x16x16x32xbf16> to vector<256x32xbf16>
    %c0_28 = arith.constant 0 : index
    %c0_29 = arith.constant 0 : index
    %c1_30 = arith.constant 1 : index
    %c0_31 = arith.constant 0 : index
    %13 = vector.load %arg13[%c0_28, %c0_29, %c1_30, %c0_31] : memref<1x18x18x32xbf16, #tpu.memory_space<vmem>>, vector<1x16x16x32xbf16>
    %14 = vector.shape_cast %13 : vector<1x16x16x32xbf16> to vector<256x32xbf16>
    %c0_32 = arith.constant 0 : index
    %c0_33 = arith.constant 0 : index
    %c2 = arith.constant 2 : index
    %c0_34 = arith.constant 0 : index
    %15 = vector.load %arg13[%c0_32, %c0_33, %c2, %c0_34] : memref<1x18x18x32xbf16, #tpu.memory_space<vmem>>, vector<1x16x16x32xbf16>
    %16 = vector.shape_cast %15 : vector<1x16x16x32xbf16> to vector<256x32xbf16>
    %c0_35 = arith.constant 0 : index
    %c1_36 = arith.constant 1 : index
    %c0_37 = arith.constant 0 : index
    %c0_38 = arith.constant 0 : index
    %17 = vector.load %arg13[%c0_35, %c1_36, %c0_37, %c0_38] : memref<1x18x18x32xbf16, #tpu.memory_space<vmem>>, vector<1x16x16x32xbf16>
    %18 = vector.shape_cast %17 : vector<1x16x16x32xbf16> to vector<256x32xbf16>
    %c0_39 = arith.constant 0 : index
    %c1_40 = arith.constant 1 : index
    %c1_41 = arith.constant 1 : index
    %c0_42 = arith.constant 0 : index
    %19 = vector.load %arg13[%c0_39, %c1_40, %c1_41, %c0_42] : memref<1x18x18x32xbf16, #tpu.memory_space<vmem>>, vector<1x16x16x32xbf16>
    %20 = vector.shape_cast %19 : vector<1x16x16x32xbf16> to vector<256x32xbf16>
    %c0_43 = arith.constant 0 : index
    %c1_44 = arith.constant 1 : index
    %c2_45 = arith.constant 2 : index
    %c0_46 = arith.constant 0 : index
    %21 = vector.load %arg13[%c0_43, %c1_44, %c2_45, %c0_46] : memref<1x18x18x32xbf16, #tpu.memory_space<vmem>>, vector<1x16x16x32xbf16>
    %22 = vector.shape_cast %21 : vector<1x16x16x32xbf16> to vector<256x32xbf16>
    %c0_47 = arith.constant 0 : index
    %c2_48 = arith.constant 2 : index
    %c0_49 = arith.constant 0 : index
    %c0_50 = arith.constant 0 : index
    %23 = vector.load %arg13[%c0_47, %c2_48, %c0_49, %c0_50] : memref<1x18x18x32xbf16, #tpu.memory_space<vmem>>, vector<1x16x16x32xbf16>
    %24 = vector.shape_cast %23 : vector<1x16x16x32xbf16> to vector<256x32xbf16>
    %c0_51 = arith.constant 0 : index
    %c2_52 = arith.constant 2 : index
    %c1_53 = arith.constant 1 : index
    %c0_54 = arith.constant 0 : index
    %25 = vector.load %arg13[%c0_51, %c2_52, %c1_53, %c0_54] : memref<1x18x18x32xbf16, #tpu.memory_space<vmem>>, vector<1x16x16x32xbf16>
    %26 = vector.shape_cast %25 : vector<1x16x16x32xbf16> to vector<256x32xbf16>
    %c0_55 = arith.constant 0 : index
    %c2_56 = arith.constant 2 : index
    %c2_57 = arith.constant 2 : index
    %c0_58 = arith.constant 0 : index
    %27 = vector.load %arg13[%c0_55, %c2_56, %c2_57, %c0_58] : memref<1x18x18x32xbf16, #tpu.memory_space<vmem>>, vector<1x16x16x32xbf16>
    %28 = vector.shape_cast %27 : vector<1x16x16x32xbf16> to vector<256x32xbf16>
    %29 = tpu.concatenate %12, %14, %16, %18, %20, %22, %24, %26, %28 in 1 : vector<256x32xbf16>, vector<256x32xbf16>, vector<256x32xbf16>, vector<256x32xbf16>, vector<256x32xbf16>, vector<256x32xbf16>, vector<256x32xbf16>, vector<256x32xbf16>, vector<256x32xbf16> -> vector<256x288xbf16>
    %c0_59 = arith.constant 0 : index
    %c0_60 = arith.constant 0 : index
    %30 = vector.load %arg2[%c0_59, %c0_60] : memref<288x32xbf16, #tpu.memory_space<vmem>>, vector<288x32xbf16>
    %cst_61 = arith.constant dense<0.000000e+00> : vector<256x32xf32>
    %31 = tpu.matmul %29, %30, %cst_61 {dimension_numbers = #tpu.dot_dimension_numbers<[1], [0], [0], [1], [0, 0, 1, 1], [], []>} : vector<256x288xbf16>, vector<288x32xbf16>, vector<256x32xf32> -> vector<256x32xf32>
    %32 = vector.extract_strided_slice %31 {offsets = [0, 0], sizes = [256, 16], strides = [1, 1]} : vector<256x32xf32> to vector<256x16xf32>
    %c0_62 = arith.constant 0 : index
    %c0_63 = arith.constant 0 : index
    %33 = vector.load %arg3[%c0_62, %c0_63] : memref<1x16xf32, #tpu.memory_space<vmem>>, vector<1x16xf32>
    %34 = vector.broadcast %33 : vector<1x16xf32> to vector<256x16xf32>
    %35 = arith.addf %32, %34 : vector<256x16xf32>
    %cst_64 = arith.constant 0.000000e+00 : f32
    %36 = vector.broadcast %cst_64 : f32 to vector<256x16xf32>
    %37 = arith.maximumf %35, %36 : vector<256x16xf32>
    %38 = vector.extract_strided_slice %31 {offsets = [0, 16], sizes = [256, 16], strides = [1, 1]} : vector<256x32xf32> to vector<256x16xf32>
    %cst_65 = arith.constant 0.000000e+00 : bf16
    %39 = vector.broadcast %cst_65 : bf16 to vector<1x1x18x16xbf16>
    %c0_66 = arith.constant 0 : index
    %c0_67 = arith.constant 0 : index
    %c0_68 = arith.constant 0 : index
    %c0_69 = arith.constant 0 : index
    %40 = vector.load %arg14[%c0_66, %c0_67, %c0_68, %c0_69] : memref<1x18x18x16xbf16, #tpu.memory_space<vmem>>, vector<1x1x18x16xbf16>
    tpu.vector_store %arg14[%c0_66, %c0_67, %c0_68, %c0_69], %39 {strides = array<i32>} : memref<1x18x18x16xbf16, #tpu.memory_space<vmem>>, vector<1x1x18x16xbf16>,
    %cst_70 = arith.constant 0.000000e+00 : bf16
    %41 = vector.broadcast %cst_70 : bf16 to vector<1x1x18x16xbf16>
    %c0_71 = arith.constant 0 : index
    %c17_72 = arith.constant 17 : index
    %c0_73 = arith.constant 0 : index
    %c0_74 = arith.constant 0 : index
    %42 = vector.load %arg14[%c0_71, %c17_72, %c0_73, %c0_74] : memref<1x18x18x16xbf16, #tpu.memory_space<vmem>>, vector<1x1x18x16xbf16>
    tpu.vector_store %arg14[%c0_71, %c17_72, %c0_73, %c0_74], %41 {strides = array<i32>} : memref<1x18x18x16xbf16, #tpu.memory_space<vmem>>, vector<1x1x18x16xbf16>,
    %cst_75 = arith.constant 0.000000e+00 : bf16
    %43 = vector.broadcast %cst_75 : bf16 to vector<1x18x1x16xbf16>
    %c0_76 = arith.constant 0 : index
    %c0_77 = arith.constant 0 : index
    %c0_78 = arith.constant 0 : index
    %c0_79 = arith.constant 0 : index
    %44 = vector.load %arg14[%c0_76, %c0_77, %c0_78, %c0_79] : memref<1x18x18x16xbf16, #tpu.memory_space<vmem>>, vector<1x18x1x16xbf16>
    tpu.vector_store %arg14[%c0_76, %c0_77, %c0_78, %c0_79], %43 {strides = array<i32>} : memref<1x18x18x16xbf16, #tpu.memory_space<vmem>>, vector<1x18x1x16xbf16>,
    %cst_80 = arith.constant 0.000000e+00 : bf16
    %45 = vector.broadcast %cst_80 : bf16 to vector<1x18x1x16xbf16>
    %c0_81 = arith.constant 0 : index
    %c0_82 = arith.constant 0 : index
    %c17_83 = arith.constant 17 : index
    %c0_84 = arith.constant 0 : index
    %46 = vector.load %arg14[%c0_81, %c0_82, %c17_83, %c0_84] : memref<1x18x18x16xbf16, #tpu.memory_space<vmem>>, vector<1x18x1x16xbf16>
    tpu.vector_store %arg14[%c0_81, %c0_82, %c17_83, %c0_84], %45 {strides = array<i32>} : memref<1x18x18x16xbf16, #tpu.memory_space<vmem>>, vector<1x18x1x16xbf16>,
    %47 = arith.truncf %37 : vector<256x16xf32> to vector<256x16xbf16>
    %48 = vector.shape_cast %47 : vector<256x16xbf16> to vector<1x16x16x16xbf16>
    %c0_85 = arith.constant 0 : index
    %c1_86 = arith.constant 1 : index
    %c1_87 = arith.constant 1 : index
    %c0_88 = arith.constant 0 : index
    %49 = vector.load %arg14[%c0_85, %c1_86, %c1_87, %c0_88] : memref<1x18x18x16xbf16, #tpu.memory_space<vmem>>, vector<1x16x16x16xbf16>
    tpu.vector_store %arg14[%c0_85, %c1_86, %c1_87, %c0_88], %48 {strides = array<i32>} : memref<1x18x18x16xbf16, #tpu.memory_space<vmem>>, vector<1x16x16x16xbf16>,
    %c0_89 = arith.constant 0 : index
    %c0_90 = arith.constant 0 : index
    %c0_91 = arith.constant 0 : index
    %c0_92 = arith.constant 0 : index
    %50 = vector.load %arg14[%c0_89, %c0_90, %c0_91, %c0_92] : memref<1x18x18x16xbf16, #tpu.memory_space<vmem>>, vector<1x16x16x16xbf16>
    %51 = vector.shape_cast %50 : vector<1x16x16x16xbf16> to vector<256x16xbf16>
    %c0_93 = arith.constant 0 : index
    %c0_94 = arith.constant 0 : index
    %c1_95 = arith.constant 1 : index
    %c0_96 = arith.constant 0 : index
    %52 = vector.load %arg14[%c0_93, %c0_94, %c1_95, %c0_96] : memref<1x18x18x16xbf16, #tpu.memory_space<vmem>>, vector<1x16x16x16xbf16>
    %53 = vector.shape_cast %52 : vector<1x16x16x16xbf16> to vector<256x16xbf16>
    %c0_97 = arith.constant 0 : index
    %c0_98 = arith.constant 0 : index
    %c2_99 = arith.constant 2 : index
    %c0_100 = arith.constant 0 : index
    %54 = vector.load %arg14[%c0_97, %c0_98, %c2_99, %c0_100] : memref<1x18x18x16xbf16, #tpu.memory_space<vmem>>, vector<1x16x16x16xbf16>
    %55 = vector.shape_cast %54 : vector<1x16x16x16xbf16> to vector<256x16xbf16>
    %c0_101 = arith.constant 0 : index
    %c1_102 = arith.constant 1 : index
    %c0_103 = arith.constant 0 : index
    %c0_104 = arith.constant 0 : index
    %56 = vector.load %arg14[%c0_101, %c1_102, %c0_103, %c0_104] : memref<1x18x18x16xbf16, #tpu.memory_space<vmem>>, vector<1x16x16x16xbf16>
    %57 = vector.shape_cast %56 : vector<1x16x16x16xbf16> to vector<256x16xbf16>
    %c0_105 = arith.constant 0 : index
    %c1_106 = arith.constant 1 : index
    %c1_107 = arith.constant 1 : index
    %c0_108 = arith.constant 0 : index
    %58 = vector.load %arg14[%c0_105, %c1_106, %c1_107, %c0_108] : memref<1x18x18x16xbf16, #tpu.memory_space<vmem>>, vector<1x16x16x16xbf16>
    %59 = vector.shape_cast %58 : vector<1x16x16x16xbf16> to vector<256x16xbf16>
    %c0_109 = arith.constant 0 : index
    %c1_110 = arith.constant 1 : index
    %c2_111 = arith.constant 2 : index
    %c0_112 = arith.constant 0 : index
    %60 = vector.load %arg14[%c0_109, %c1_110, %c2_111, %c0_112] : memref<1x18x18x16xbf16, #tpu.memory_space<vmem>>, vector<1x16x16x16xbf16>
    %61 = vector.shape_cast %60 : vector<1x16x16x16xbf16> to vector<256x16xbf16>
    %c0_113 = arith.constant 0 : index
    %c2_114 = arith.constant 2 : index
    %c0_115 = arith.constant 0 : index
    %c0_116 = arith.constant 0 : index
    %62 = vector.load %arg14[%c0_113, %c2_114, %c0_115, %c0_116] : memref<1x18x18x16xbf16, #tpu.memory_space<vmem>>, vector<1x16x16x16xbf16>
    %63 = vector.shape_cast %62 : vector<1x16x16x16xbf16> to vector<256x16xbf16>
    %c0_117 = arith.constant 0 : index
    %c2_118 = arith.constant 2 : index
    %c1_119 = arith.constant 1 : index
    %c0_120 = arith.constant 0 : index
    %64 = vector.load %arg14[%c0_117, %c2_118, %c1_119, %c0_120] : memref<1x18x18x16xbf16, #tpu.memory_space<vmem>>, vector<1x16x16x16xbf16>
    %65 = vector.shape_cast %64 : vector<1x16x16x16xbf16> to vector<256x16xbf16>
    %c0_121 = arith.constant 0 : index
    %c2_122 = arith.constant 2 : index
    %c2_123 = arith.constant 2 : index
    %c0_124 = arith.constant 0 : index
    %66 = vector.load %arg14[%c0_121, %c2_122, %c2_123, %c0_124] : memref<1x18x18x16xbf16, #tpu.memory_space<vmem>>, vector<1x16x16x16xbf16>
    %67 = vector.shape_cast %66 : vector<1x16x16x16xbf16> to vector<256x16xbf16>
    %68 = tpu.concatenate %51, %53, %55, %57, %59, %61, %63, %65, %67 in 1 : vector<256x16xbf16>, vector<256x16xbf16>, vector<256x16xbf16>, vector<256x16xbf16>, vector<256x16xbf16>, vector<256x16xbf16>, vector<256x16xbf16>, vector<256x16xbf16>, vector<256x16xbf16> -> vector<256x144xbf16>
    %c0_125 = arith.constant 0 : index
    %c0_126 = arith.constant 0 : index
    %69 = vector.load %arg4[%c0_125, %c0_126] : memref<144x16xbf16, #tpu.memory_space<vmem>>, vector<144x16xbf16>
    %cst_127 = arith.constant dense<0.000000e+00> : vector<256x16xf32>
    %70 = tpu.matmul %68, %69, %cst_127 {dimension_numbers = #tpu.dot_dimension_numbers<[1], [0], [0], [1], [0, 0, 1, 1], [], []>} : vector<256x144xbf16>, vector<144x16xbf16>, vector<256x16xf32> -> vector<256x16xf32>
    %71 = arith.addf %38, %70 : vector<256x16xf32>
    %c0_128 = arith.constant 0 : index
    %c0_129 = arith.constant 0 : index
    %72 = vector.load %arg5[%c0_128, %c0_129] : memref<1x16xf32, #tpu.memory_space<vmem>>, vector<1x16xf32>
    %73 = vector.broadcast %72 : vector<1x16xf32> to vector<256x16xf32>
    %74 = arith.addf %71, %73 : vector<256x16xf32>
    %cst_130 = arith.constant 0.000000e+00 : f32
    %75 = vector.broadcast %cst_130 : f32 to vector<256x16xf32>
    %76 = arith.maximumf %74, %75 : vector<256x16xf32>
    %77 = arith.truncf %37 : vector<256x16xf32> to vector<256x16xbf16>
    %78 = arith.truncf %76 : vector<256x16xf32> to vector<256x16xbf16>
    %79 = tpu.concatenate %20, %77, %78 in 1 : vector<256x32xbf16>, vector<256x16xbf16>, vector<256x16xbf16> -> vector<256x64xbf16>
    %c0_131 = arith.constant 0 : index
    %c0_132 = arith.constant 0 : index
    %80 = vector.load %arg6[%c0_131, %c0_132] : memref<64x32xbf16, #tpu.memory_space<vmem>>, vector<64x32xbf16>
    %cst_133 = arith.constant dense<0.000000e+00> : vector<256x32xf32>
    %81 = tpu.matmul %79, %80, %cst_133 {dimension_numbers = #tpu.dot_dimension_numbers<[1], [0], [0], [1], [0, 0, 1, 1], [], []>} : vector<256x64xbf16>, vector<64x32xbf16>, vector<256x32xf32> -> vector<256x32xf32>
    %c0_134 = arith.constant 0 : index
    %c0_135 = arith.constant 0 : index
    %82 = vector.load %arg7[%c0_134, %c0_135] : memref<1x32xf32, #tpu.memory_space<vmem>>, vector<1x32xf32>
    %83 = vector.broadcast %82 : vector<1x32xf32> to vector<256x32xf32>
    %84 = arith.addf %81, %83 : vector<256x32xf32>
    %85 = vector.shape_cast %84 : vector<256x32xf32> to vector<1x256x32xf32>
    %cst_136 = arith.constant dense<0.000000e+00> : vector<1x32xf32>
    %86 = vector.multi_reduction <add>, %85, %cst_136 [1] : vector<1x256x32xf32> to vector<1x32xf32>
    %cst_137 = arith.constant 2.560000e+02 : f32
    %87 = vector.broadcast %cst_137 : f32 to vector<1x32xf32>
    %88 = arith.divf %86, %87 : vector<1x32xf32>
    %89 = vector.shape_cast %88 : vector<1x32xf32> to vector<1x1x32xf32>
    %c0_138 = arith.constant 0 : index
    %c0_139 = arith.constant 0 : index
    %90 = vector.load %arg8[%c0_138, %c0_139] : memref<2x32xf32, #tpu.memory_space<vmem>>, vector<2x32xf32>
    %91 = vector.shape_cast %90 : vector<2x32xf32> to vector<1x2x32xf32>
    %92 = vector.broadcast %89 : vector<1x1x32xf32> to vector<1x2x32xf32>
    %93 = arith.mulf %92, %91 : vector<1x2x32xf32>
    %cst_140 = arith.constant dense<0.000000e+00> : vector<1x2xf32>
    %94 = vector.multi_reduction <add>, %93, %cst_140 [2] : vector<1x2x32xf32> to vector<1x2xf32>
    %c0_141 = arith.constant 0 : index
    %c0_142 = arith.constant 0 : index
    %95 = vector.load %arg9[%c0_141, %c0_142] : memref<1x2xf32, #tpu.memory_space<vmem>>, vector<1x2xf32>
    %96 = arith.addf %94, %95 : vector<1x2xf32>
    %cst_143 = arith.constant 0.000000e+00 : f32
    %97 = vector.broadcast %cst_143 : f32 to vector<1x2xf32>
    %98 = arith.maximumf %96, %97 : vector<1x2xf32>
    %99 = vector.shape_cast %98 : vector<1x2xf32> to vector<1x2x1xf32>
    %c0_144 = arith.constant 0 : index
    %c0_145 = arith.constant 0 : index
    %100 = vector.load %arg10[%c0_144, %c0_145] : memref<2x32xf32, #tpu.memory_space<vmem>>, vector<2x32xf32>
    %101 = vector.shape_cast %100 : vector<2x32xf32> to vector<1x2x32xf32>
    %102 = vector.broadcast %99 : vector<1x2x1xf32> to vector<1x2x32xf32>
    %103 = arith.mulf %102, %101 : vector<1x2x32xf32>
    %cst_146 = arith.constant dense<0.000000e+00> : vector<1x32xf32>
    %104 = vector.multi_reduction <add>, %103, %cst_146 [1] : vector<1x2x32xf32> to vector<1x32xf32>
    %c0_147 = arith.constant 0 : index
    %c0_148 = arith.constant 0 : index
    %105 = vector.load %arg11[%c0_147, %c0_148] : memref<1x32xf32, #tpu.memory_space<vmem>>, vector<1x32xf32>
    %106 = arith.addf %104, %105 : vector<1x32xf32>
    %107 = arith.negf %106 : vector<1x32xf32>
    %108 = math.exp %107 : vector<1x32xf32>
    %cst_149 = arith.constant 1.000000e+00 : f32
    %109 = vector.broadcast %cst_149 : f32 to vector<1x32xf32>
    %110 = arith.addf %109, %108 : vector<1x32xf32>
    %111 = arith.divf %109, %110 : vector<1x32xf32>
    %112 = vector.shape_cast %8 : vector<1x16x16x32xf32> to vector<1x256x32xf32>
    %113 = vector.shape_cast %111 : vector<1x32xf32> to vector<1x1x32xf32>
    %114 = vector.broadcast %113 : vector<1x1x32xf32> to vector<1x256x32xf32>
    %115 = arith.mulf %85, %114 : vector<1x256x32xf32>
    %116 = arith.addf %112, %115 : vector<1x256x32xf32>
    %117 = vector.shape_cast %116 : vector<1x256x32xf32> to vector<256x32xf32>
    %118 = tpu.transpose %117, [1, 0] : vector<256x32xf32> -> vector<32x256xf32>
    %c0_150 = arith.constant 0 : index
    %c0_151 = arith.constant 0 : index
    %c0_152 = arith.constant 0 : index
    %119 = vector.load %arg12[%c0_150, %c0_151, %c0_152] : memref<1x32x256xf32, #tpu.memory_space<vmem>>, vector<1x32x256xf32>
    %120 = vector.shape_cast %119 : vector<1x32x256xf32> to vector<32x256xf32>
    %121 = vector.shape_cast %118 : vector<32x256xf32> to vector<1x32x256xf32>
    tpu.vector_store %arg12[%c0_150, %c0_151, %c0_152], %121 {strides = array<i32>} : memref<1x32x256xf32, #tpu.memory_space<vmem>>, vector<1x32x256xf32>,
    return
  }
  func.func @transform_0(%arg0: i32) -> (i32, i32, i32, i32) {
    %c0_i32 = arith.constant 0 : i32
    %c0_i32_0 = arith.constant 0 : i32
    %c0_i32_1 = arith.constant 0 : i32
    %c0_i32_2 = arith.constant 0 : i32
    return %arg0, %c0_i32, %c0_i32_0, %c0_i32_1 : i32, i32, i32, i32
  }
  func.func @transform_1(%arg0: i32) -> (i32, i32) {
    %c0_i32 = arith.constant 0 : i32
    %c0_i32_0 = arith.constant 0 : i32
    %c0_i32_1 = arith.constant 0 : i32
    return %c0_i32, %c0_i32_0 : i32, i32
  }
  func.func @transform_2(%arg0: i32) -> (i32, i32) {
    %c0_i32 = arith.constant 0 : i32
    %c0_i32_0 = arith.constant 0 : i32
    %c0_i32_1 = arith.constant 0 : i32
    return %c0_i32, %c0_i32_0 : i32, i32
  }
  func.func @transform_3(%arg0: i32) -> (i32, i32) {
    %c0_i32 = arith.constant 0 : i32
    %c0_i32_0 = arith.constant 0 : i32
    %c0_i32_1 = arith.constant 0 : i32
    return %c0_i32, %c0_i32_0 : i32, i32
  }
  func.func @transform_4(%arg0: i32) -> (i32, i32) {
    %c0_i32 = arith.constant 0 : i32
    %c0_i32_0 = arith.constant 0 : i32
    %c0_i32_1 = arith.constant 0 : i32
    return %c0_i32, %c0_i32_0 : i32, i32
  }
  func.func @transform_5(%arg0: i32) -> (i32, i32) {
    %c0_i32 = arith.constant 0 : i32
    %c0_i32_0 = arith.constant 0 : i32
    %c0_i32_1 = arith.constant 0 : i32
    return %c0_i32, %c0_i32_0 : i32, i32
  }
  func.func @transform_6(%arg0: i32) -> (i32, i32) {
    %c0_i32 = arith.constant 0 : i32
    %c0_i32_0 = arith.constant 0 : i32
    %c0_i32_1 = arith.constant 0 : i32
    return %c0_i32, %c0_i32_0 : i32, i32
  }
  func.func @transform_7(%arg0: i32) -> (i32, i32) {
    %c0_i32 = arith.constant 0 : i32
    %c0_i32_0 = arith.constant 0 : i32
    %c0_i32_1 = arith.constant 0 : i32
    return %c0_i32, %c0_i32_0 : i32, i32
  }
  func.func @transform_8(%arg0: i32) -> (i32, i32) {
    %c0_i32 = arith.constant 0 : i32
    %c0_i32_0 = arith.constant 0 : i32
    %c0_i32_1 = arith.constant 0 : i32
    return %c0_i32, %c0_i32_0 : i32, i32
  }
  func.func @transform_9(%arg0: i32) -> (i32, i32) {
    %c0_i32 = arith.constant 0 : i32
    %c0_i32_0 = arith.constant 0 : i32
    %c0_i32_1 = arith.constant 0 : i32
    return %c0_i32, %c0_i32_0 : i32, i32
  }
  func.func @transform_10(%arg0: i32) -> (i32, i32) {
    %c0_i32 = arith.constant 0 : i32
    %c0_i32_0 = arith.constant 0 : i32
    %c0_i32_1 = arith.constant 0 : i32
    return %c0_i32, %c0_i32_0 : i32, i32
  }
  func.func @transform_11(%arg0: i32) -> (i32, i32, i32) {
    %c0_i32 = arith.constant 0 : i32
    %c0_i32_0 = arith.constant 0 : i32
    %c0_i32_1 = arith.constant 0 : i32
    return %arg0, %c0_i32, %c0_i32_0 : i32, i32, i32
  }
}

</mosaic_0001>

<llo_original>
// kernel: tpu_custom_call.1
$region0: #{tpu_custom_call.1}
  #allocation0 [shape = 'u32[]', space=smem, size = 0x4, offset = 0x4, fixed_abs, tag = 'smem constant byte address 0x4 - core index']
  #allocation1 [shape = 'u32[144,128]{1,0:T(1,128)}', space=vmem, size = 0x12000, scoped, tag = 'internal scratch']
  #allocation2 [shape = 'bf16[1,18,18,32]{3,2,1,0:T(8,128)(2,1)}', space=vmem, size = 0x1b000, scoped, tag = 'scratch operand']
  #allocation3 [shape = 'bf16[1,18,18,16]{3,2,1,0:T(8,128)(2,1)}', space=vmem, size = 0x1b000, scoped, tag = 'scratch operand']
  %s0 = inlined_call_operand.hbm [shape: f32[2,16,16,32], index: 0, kind: input, shape index: {}]
  %s1 = inlined_call_operand.vmem [shape: bf16[288,32], index: 1, kind: input, shape index: {}]
  %s2 = inlined_call_operand.vmem [shape: f32[1,16], index: 2, kind: input, shape index: {}]
  %s3 = inlined_call_operand.vmem [shape: bf16[144,16], index: 3, kind: input, shape index: {}]
  %s4 = inlined_call_operand.vmem [shape: f32[1,16], index: 4, kind: input, shape index: {}]
  %s5 = inlined_call_operand.vmem [shape: bf16[64,32], index: 5, kind: input, shape index: {}]
  %s6 = inlined_call_operand.vmem [shape: f32[1,32], index: 6, kind: input, shape index: {}]
  %s7 = inlined_call_operand.vmem [shape: f32[2,32], index: 7, kind: input, shape index: {}]
  %s8 = inlined_call_operand.vmem [shape: f32[1,2], index: 8, kind: input, shape index: {}]
  %s9 = inlined_call_operand.vmem [shape: f32[2,32], index: 9, kind: input, shape index: {}]
  %s10 = inlined_call_operand.vmem [shape: f32[1,32], index: 10, kind: input, shape index: {}]
  %s11 = inlined_call_operand.hbm [shape: f32[2,32,256], index: 11, kind: output, shape index: {}]
  %s12 = sld [smem:[#allocation0]]
  $region81: #{tpu_custom_call.1} parent=0
    _
  %s14 = ssub.s32 1, %s12
  %s15 = scalar_select 0, %s14, %s12
  $region1: #{tpu_custom_call.1} parent=0
    #allocation4 [shape = 'u8[262144]{0}', space=vmem, size = 0x40000, scoped, tag = 'input window, operand 0']
    #allocation5 [shape = 's32[2]{0}', space=sflag, size = 0x8, scoped, tag = 'scoped memory for tpu_custom_call.1']
    #allocation6 [shape = 's32[2]{0}', space=sflag, size = 0x8, scoped, tag = 'scoped memory for tpu_custom_call.1']
    #allocation7 [shape = 'u8[65536]{0}', space=vmem, size = 0x10000, scoped, tag = 'output window, operand 0']
    %16 = vsyncpa [#allocation5], 0
    %s17 = scalar_lea.sflag [#allocation5], 1
    %18 = vsyncpa %s17, 0
    %19 = vsyncpa [#allocation6], 0
    %s20 = scalar_lea.sflag [#allocation6], 1
    %21 = vsyncpa %s20, 0
    loop: start=0, step=1, limit=4
    $region2: #{tpu_custom_call.1} parent=1 // loop_pre_header
      _
    $region3: #{tpu_custom_call.1} parent=1 // loop_header
      %s23 = sphi 0, %s27
      %p24 = scmp.ge.s32.totalorder %s23, 4
      %s33 = sphi 0, %s35
      %s36 = sphi 0, %s33
      %s37 = sphi 0, %s36
      %s53 = sphi 0, %s37
      %s57 = sphi 0, %s57
      %s59 = sphi 0, %s57
      %s60 = sphi 0, %s59
      %s74 = sphi 0, %s60
      %s78 = sphi 0, %s78
      %s80 = sphi 0, %s78
      %s81 = sphi 0, %s80
      %s95 = sphi 0, %s81
      %s99 = sphi 0, %s99
      %s101 = sphi 0, %s99
      %s102 = sphi 0, %s101
      %s116 = sphi 0, %s102
      %s120 = sphi 0, %s120
      %s122 = sphi 0, %s120
      %s123 = sphi 0, %s122
      %s137 = sphi 0, %s123
      %s141 = sphi 0, %s141
      %s143 = sphi 0, %s141
      %s144 = sphi 0, %s143
      %s158 = sphi 0, %s144
      %s162 = sphi 0, %s162
      %s164 = sphi 0, %s162
      %s165 = sphi 0, %s164
      %s179 = sphi 0, %s165
      %s183 = sphi 0, %s183
      %s185 = sphi 0, %s183
      %s186 = sphi 0, %s185
      %s200 = sphi 0, %s186
      %s204 = sphi 0, %s204
      %s206 = sphi 0, %s204
      %s207 = sphi 0, %s206
      %s221 = sphi 0, %s207
      %s225 = sphi 0, %s225
      %s227 = sphi 0, %s225
      %s228 = sphi 0, %s227
      %s242 = sphi 0, %s228
      %s246 = sphi 0, %s246
      %s248 = sphi 0, %s246
      %s249 = sphi 0, %s248
      %s263 = sphi 0, %s249
      %s269 = sphi 0, %s271
      %s272 = sphi 0, %s269
      %s273 = sphi 0, %s272
      %s289 = sphi 0, %s273
    $region4: #{tpu_custom_call.1} parent=1 // loop_header_branch
      %26 = sbr.rel (%p24) target = $region8
    $region5: #{tpu_custom_call.1} parent=1 // loop_body
      %s28 = ssub.s32 %s23, 1
      %s29 = ssub.s32 %s23, 2
      %s30 = sadd.s32 %s23, 1
      %s31 = ssub.s32 %s23, %s30
      %p32 = scmp.eq.s32.totalorder %s31, 0
      %s34 = sadd.s32 %s33, 1
      %s35 = scalar_select %p32, %s33, %s34
      %p38 = pneg %p32
      %p39 = scmp.eq.s32.totalorder %s23, 1
      %p40 = por %p38, %p39
      %p41 = scmp.ne.s32.totalorder %s33, %s36
      %p42 = scmp.eq.s32.totalorder %s23, 0
      %p43 = por %p41, %p42
      %p44 = scmp.ne.s32.totalorder %s33, %s36
      %p45 = scmp.eq.s32.totalorder %s28, 1
      %p46 = por %p44, %p45
      %p47 = scmp.ne.s32.totalorder %s36, %s37
      %p48 = scmp.eq.s32.totalorder %s28, 0
      %p49 = por %p47, %p48
      %p50 = scmp.ne.s32.totalorder %s36, %s37
      %p51 = scmp.eq.s32.totalorder %s29, 1
      %p52 = por %p50, %p51
      %p54 = scmp.ne.s32.totalorder %s37, %s53
      %p55 = scmp.eq.s32.totalorder %s29, 0
      %p56 = por %p54, %p55
      %s58 = sadd.s32 %s57, 1
      %p61 = scmp.eq.s32.totalorder %s23, 1
      %p62 = scmp.ne.s32.totalorder %s57, %s59
      %p63 = scmp.eq.s32.totalorder %s23, 0
      %p64 = por %p62, %p63
      %p65 = scmp.ne.s32.totalorder %s57, %s59
      %p66 = scmp.eq.s32.totalorder %s28, 1
      %p67 = por %p65, %p66
      %p68 = scmp.ne.s32.totalorder %s59, %s60
      %p69 = scmp.eq.s32.totalorder %s28, 0
      %p70 = por %p68, %p69
      %p71 = scmp.ne.s32.totalorder %s59, %s60
      %p72 = scmp.eq.s32.totalorder %s29, 1
      %p73 = por %p71, %p72
      %p75 = scmp.ne.s32.totalorder %s60, %s74
      %p76 = scmp.eq.s32.totalorder %s29, 0
      %p77 = por %p75, %p76
      %s79 = sadd.s32 %s78, 1
      %p82 = scmp.eq.s32.totalorder %s23, 1
      %p83 = scmp.ne.s32.totalorder %s78, %s80
      %p84 = scmp.eq.s32.totalorder %s23, 0
      %p85 = por %p83, %p84
      %p86 = scmp.ne.s32.totalorder %s78, %s80
      %p87 = scmp.eq.s32.totalorder %s28, 1
      %p88 = por %p86, %p87
      %p89 = scmp.ne.s32.totalorder %s80, %s81
      %p90 = scmp.eq.s32.totalorder %s28, 0
      %p91 = por %p89, %p90
      %p92 = scmp.ne.s32.totalorder %s80, %s81
      %p93 = scmp.eq.s32.totalorder %s29, 1
      %p94 = por %p92, %p93
      %p96 = scmp.ne.s32.totalorder %s81, %s95
      %p97 = scmp.eq.s32.totalorder %s29, 0
      %p98 = por %p96, %p97
      %s100 = sadd.s32 %s99, 1
      %p103 = scmp.eq.s32.totalorder %s23, 1
      %p104 = scmp.ne.s32.totalorder %s99, %s101
      %p105 = scmp.eq.s32.totalorder %s23, 0
      %p106 = por %p104, %p105
      %p107 = scmp.ne.s32.totalorder %s99, %s101
      %p108 = scmp.eq.s32.totalorder %s28, 1
      %p109 = por %p107, %p108
      %p110 = scmp.ne.s32.totalorder %s101, %s102
      %p111 = scmp.eq.s32.totalorder %s28, 0
      %p112 = por %p110, %p111
      %p113 = scmp.ne.s32.totalorder %s101, %s102
      %p114 = scmp.eq.s32.totalorder %s29, 1
      %p115 = por %p113, %p114
      %p117 = scmp.ne.s32.totalorder %s102, %s116
      %p118 = scmp.eq.s32.totalorder %s29, 0
      %p119 = por %p117, %p118
      %s121 = sadd.s32 %s120, 1
      %p124 = scmp.eq.s32.totalorder %s23, 1
      %p125 = scmp.ne.s32.totalorder %s120, %s122
      %p126 = scmp.eq.s32.totalorder %s23, 0
      %p127 = por %p125, %p126
      %p128 = scmp.ne.s32.totalorder %s120, %s122
      %p129 = scmp.eq.s32.totalorder %s28, 1
      %p130 = por %p128, %p129
      %p131 = scmp.ne.s32.totalorder %s122, %s123
      %p132 = scmp.eq.s32.totalorder %s28, 0
      %p133 = por %p131, %p132
      %p134 = scmp.ne.s32.totalorder %s122, %s123
      %p135 = scmp.eq.s32.totalorder %s29, 1
      %p136 = por %p134, %p135
      %p138 = scmp.ne.s32.totalorder %s123, %s137
      %p139 = scmp.eq.s32.totalorder %s29, 0
      %p140 = por %p138, %p139
      %s142 = sadd.s32 %s141, 1
      %p145 = scmp.eq.s32.totalorder %s23, 1
      %p146 = scmp.ne.s32.totalorder %s141, %s143
      %p147 = scmp.eq.s32.totalorder %s23, 0
      %p148 = por %p146, %p147
      %p149 = scmp.ne.s32.totalorder %s141, %s143
      %p150 = scmp.eq.s32.totalorder %s28, 1
      %p151 = por %p149, %p150
      %p152 = scmp.ne.s32.totalorder %s143, %s144
      %p153 = scmp.eq.s32.totalorder %s28, 0
      %p154 = por %p152, %p153
      %p155 = scmp.ne.s32.totalorder %s143, %s144
      %p156 = scmp.eq.s32.totalorder %s29, 1
      %p157 = por %p155, %p156
      %p159 = scmp.ne.s32.totalorder %s144, %s158
      %p160 = scmp.eq.s32.totalorder %s29, 0
      %p161 = por %p159, %p160
      %s163 = sadd.s32 %s162, 1
      %p166 = scmp.eq.s32.totalorder %s23, 1
      %p167 = scmp.ne.s32.totalorder %s162, %s164
      %p168 = scmp.eq.s32.totalorder %s23, 0
      %p169 = por %p167, %p168
      %p170 = scmp.ne.s32.totalorder %s162, %s164
      %p171 = scmp.eq.s32.totalorder %s28, 1
      %p172 = por %p170, %p171
      %p173 = scmp.ne.s32.totalorder %s164, %s165
      %p174 = scmp.eq.s32.totalorder %s28, 0
      %p175 = por %p173, %p174
      %p176 = scmp.ne.s32.totalorder %s164, %s165
      %p177 = scmp.eq.s32.totalorder %s29, 1
      %p178 = por %p176, %p177
      %p180 = scmp.ne.s32.totalorder %s165, %s179
      %p181 = scmp.eq.s32.totalorder %s29, 0
      %p182 = por %p180, %p181
      %s184 = sadd.s32 %s183, 1
      %p187 = scmp.eq.s32.totalorder %s23, 1
      %p188 = scmp.ne.s32.totalorder %s183, %s185
      %p189 = scmp.eq.s32.totalorder %s23, 0
      %p190 = por %p188, %p189
      %p191 = scmp.ne.s32.totalorder %s183, %s185
      %p192 = scmp.eq.s32.totalorder %s28, 1
      %p193 = por %p191, %p192
      %p194 = scmp.ne.s32.totalorder %s185, %s186
      %p195 = scmp.eq.s32.totalorder %s28, 0
      %p196 = por %p194, %p195
      %p197 = scmp.ne.s32.totalorder %s185, %s186
      %p198 = scmp.eq.s32.totalorder %s29, 1
      %p199 = por %p197, %p198
      %p201 = scmp.ne.s32.totalorder %s186, %s200
      %p202 = scmp.eq.s32.totalorder %s29, 0
      %p203 = por %p201, %p202
      %s205 = sadd.s32 %s204, 1
      %p208 = scmp.eq.s32.totalorder %s23, 1
      %p209 = scmp.ne.s32.totalorder %s204, %s206
      %p210 = scmp.eq.s32.totalorder %s23, 0
      %p211 = por %p209, %p210
      %p212 = scmp.ne.s32.totalorder %s204, %s206
      %p213 = scmp.eq.s32.totalorder %s28, 1
      %p214 = por %p212, %p213
      %p215 = scmp.ne.s32.totalorder %s206, %s207
      %p216 = scmp.eq.s32.totalorder %s28, 0
      %p217 = por %p215, %p216
      %p218 = scmp.ne.s32.totalorder %s206, %s207
      %p219 = scmp.eq.s32.totalorder %s29, 1
      %p220 = por %p218, %p219
      %p222 = scmp.ne.s32.totalorder %s207, %s221
      %p223 = scmp.eq.s32.totalorder %s29, 0
      %p224 = por %p222, %p223
      %s226 = sadd.s32 %s225, 1
      %p229 = scmp.eq.s32.totalorder %s23, 1
      %p230 = scmp.ne.s32.totalorder %s225, %s227
      %p231 = scmp.eq.s32.totalorder %s23, 0
      %p232 = por %p230, %p231
      %p233 = scmp.ne.s32.totalorder %s225, %s227
      %p234 = scmp.eq.s32.totalorder %s28, 1
      %p235 = por %p233, %p234
      %p236 = scmp.ne.s32.totalorder %s227, %s228
      %p237 = scmp.eq.s32.totalorder %s28, 0
      %p238 = por %p236, %p237
      %p239 = scmp.ne.s32.totalorder %s227, %s228
      %p240 = scmp.eq.s32.totalorder %s29, 1
      %p241 = por %p239, %p240
      %p243 = scmp.ne.s32.totalorder %s228, %s242
      %p244 = scmp.eq.s32.totalorder %s29, 0
      %p245 = por %p243, %p244
      %s247 = sadd.s32 %s246, 1
      %p250 = scmp.eq.s32.totalorder %s23, 1
      %p251 = scmp.ne.s32.totalorder %s246, %s248
      %p252 = scmp.eq.s32.totalorder %s23, 0
      %p253 = por %p251, %p252
      %p254 = scmp.ne.s32.totalorder %s246, %s248
      %p255 = scmp.eq.s32.totalorder %s28, 1
      %p256 = por %p254, %p255
      %p257 = scmp.ne.s32.totalorder %s248, %s249
      %p258 = scmp.eq.s32.totalorder %s28, 0
      %p259 = por %p257, %p258
      %p260 = scmp.ne.s32.totalorder %s248, %s249
      %p261 = scmp.eq.s32.totalorder %s29, 1
      %p262 = por %p260, %p261
      %p264 = scmp.ne.s32.totalorder %s249, %s263
      %p265 = scmp.eq.s32.totalorder %s29, 0
      %p266 = por %p264, %p265
      %s267 = ssub.s32 %s23, %s30
      %p268 = scmp.eq.s32.totalorder %s267, 0
      %s270 = sadd.s32 %s269, 1
      %s271 = scalar_select %p268, %s269, %s270
      %p274 = pneg %p268
      %p275 = scmp.eq.s32.totalorder %s23, 1
      %p276 = por %p274, %p275
      %p277 = scmp.ne.s32.totalorder %s269, %s272
      %p278 = scmp.eq.s32.totalorder %s23, 0
      %p279 = por %p277, %p278
      %p280 = scmp.ne.s32.totalorder %s269, %s272
      %p281 = scmp.eq.s32.totalorder %s28, 1
      %p282 = por %p280, %p281
      %p283 = scmp.ne.s32.totalorder %s272, %s273
      %p284 = scmp.eq.s32.totalorder %s28, 0
      %p285 = por %p283, %p284
      %p286 = scmp.ne.s32.totalorder %s272, %s273
      %p287 = scmp.eq.s32.totalorder %s29, 1
      %p288 = por %p286, %p287
      %p290 = scmp.ne.s32.totalorder %s273, %s289
      %p291 = scmp.eq.s32.totalorder %s29, 0
      %p292 = por %p290, %p291
      %p293 = scmp.le.s32.totalorder 1, %s23
      %p294 = scmp.lt.s32.totalorder %s23, 3
      %p295 = pnand %p293, %p294
      %p296 = pneg %p295
      // Predicated region
      $region9: #{tpu_custom_call.1} parent=5 // pred_check
        _
      $region10: #{tpu_custom_call.1} parent=5 // pred_check_branch
        %298 = sbr.rel (%p295) target = $region12
      $region11: #{tpu_custom_call.1} parent=5 // pred_region
        %s299 = ssub.s32 %s23, 1
        // Predicated region
        $region13: #{tpu_custom_call.1} parent=11 // pred_check
          %p300 = pneg %p70
        $region14: #{tpu_custom_call.1} parent=11 // pred_check_branch
          %302 = sbr.rel (%p300) target = $region16
        $region15: #{tpu_custom_call.1} parent=11 // pred_region
          _
        $region16: #{tpu_custom_call.1} parent=11 // pred_fallthru
          _
        // Predicated region
        $region17: #{tpu_custom_call.1} parent=11 // pred_check
          %p303 = pneg %p91
        $region18: #{tpu_custom_call.1} parent=11 // pred_check_branch
          %305 = sbr.rel (%p303) target = $region20
        $region19: #{tpu_custom_call.1} parent=11 // pred_region
          _
        $region20: #{tpu_custom_call.1} parent=11 // pred_fallthru
          _
        // Predicated region
        $region21: #{tpu_custom_call.1} parent=11 // pred_check
          %p306 = pneg %p112
        $region22: #{tpu_custom_call.1} parent=11 // pred_check_branch
          %308 = sbr.rel (%p306) target = $region24
        $region23: #{tpu_custom_call.1} parent=11 // pred_region
          _
        $region24: #{tpu_custom_call.1} parent=11 // pred_fallthru
          _
        // Predicated region
        $region25: #{tpu_custom_call.1} parent=11 // pred_check
          %p309 = pneg %p133
        $region26: #{tpu_custom_call.1} parent=11 // pred_check_branch
          %311 = sbr.rel (%p309) target = $region28
        $region27: #{tpu_custom_call.1} parent=11 // pred_region
          _
        $region28: #{tpu_custom_call.1} parent=11 // pred_fallthru
          _
        // Predicated region
        $region29: #{tpu_custom_call.1} parent=11 // pred_check
          %p312 = pneg %p154
        $region30: #{tpu_custom_call.1} parent=11 // pred_check_branch
          %314 = sbr.rel (%p312) target = $region32
        $region31: #{tpu_custom_call.1} parent=11 // pred_region
          _
        $region32: #{tpu_custom_call.1} parent=11 // pred_fallthru
          _
        // Predicated region
        $region33: #{tpu_custom_call.1} parent=11 // pred_check
          %p315 = pneg %p175
        $region34: #{tpu_custom_call.1} parent=11 // pred_check_branch
          %317 = sbr.rel (%p315) target = $region36
        $region35: #{tpu_custom_call.1} parent=11 // pred_region
          _
        $region36: #{tpu_custom_call.1} parent=11 // pred_fallthru
          _
        // Predicated region
        $region37: #{tpu_custom_call.1} parent=11 // pred_check
          %p318 = pneg %p196
        $region38: #{tpu_custom_call.1} parent=11 // pred_check_branch
          %320 = sbr.rel (%p318) target = $region40
        $region39: #{tpu_custom_call.1} parent=11 // pred_region
          _
        $region40: #{tpu_custom_call.1} parent=11 // pred_fallthru
          _
        // Predicated region
        $region41: #{tpu_custom_call.1} parent=11 // pred_check
          %p321 = pneg %p217
        $region42: #{tpu_custom_call.1} parent=11 // pred_check_branch
          %323 = sbr.rel (%p321) target = $region44
        $region43: #{tpu_custom_call.1} parent=11 // pred_region
          _
        $region44: #{tpu_custom_call.1} parent=11 // pred_fallthru
          _
        // Predicated region
        $region45: #{tpu_custom_call.1} parent=11 // pred_check
          %p324 = pneg %p238
        $region46: #{tpu_custom_call.1} parent=11 // pred_check_branch
          %326 = sbr.rel (%p324) target = $region48
        $region47: #{tpu_custom_call.1} parent=11 // pred_region
          _
        $region48: #{tpu_custom_call.1} parent=11 // pred_fallthru
          _
        // Predicated region
        $region49: #{tpu_custom_call.1} parent=11 // pred_check
          %p327 = pneg %p259
        $region50: #{tpu_custom_call.1} parent=11 // pred_check_branch
          %329 = sbr.rel (%p327) target = $region52
        $region51: #{tpu_custom_call.1} parent=11 // pred_region
          _
        $region52: #{tpu_custom_call.1} parent=11 // pred_fallthru
          _
      $region12: #{tpu_custom_call.1} parent=5 // pred_fallthru
        _
      %p330 = scmp.lt.s32.totalorder %s23, 2
      // Predicated region
      $region53: #{tpu_custom_call.1} parent=5 // pred_check
        %p331 = pneg %p330
      $region54: #{tpu_custom_call.1} parent=5 // pred_check_branch
        %333 = sbr.rel (%p331) target = $region56
      $region55: #{tpu_custom_call.1} parent=5 // pred_region
        // Predicated region
        $region57: #{tpu_custom_call.1} parent=55 // pred_check
          %p334 = pneg %p43
        $region58: #{tpu_custom_call.1} parent=55 // pred_check_branch
          %336 = sbr.rel (%p334) target = $region60
        $region59: #{tpu_custom_call.1} parent=55 // pred_region
          %s337 = sand.u32 %s33, 1
          %s338 = scalar_lea.sflag [#allocation5], %s337
          %s339 = sand.u32 %s33, 1
          %s340 = smul.addr %s339, 256
          %s341 = scalar_lea.vmem [#allocation4], %s340
          %s343 = ssub.s32 4096, 4096
          %344 = vsyncadd %s338, %s343
          %s345 = smul.addr %s23, 32
          %s346 = smul.addr %s345, 128
          %s347 = scalar_lea.hbm %s0, %s346
          %s348 = sshll.u32 %s341, 4
          %s349 = int_to_ptr.vmem [resolvable:$true] %s348
          %354 = dma.hbm_to_vmem [thread:$0]  %s347, 4096, %s349, %s338, 128, 128, 8
        $region60: #{tpu_custom_call.1} parent=55 // pred_fallthru
          _
      $region56: #{tpu_custom_call.1} parent=5 // pred_fallthru
        _
      %p355 = scmp.le.s32.totalorder 1, %s23
      %p356 = scmp.lt.s32.totalorder %s23, 3
      %p357 = pnand %p355, %p356
      %p358 = pneg %p357
      // Predicated region
      $region61: #{tpu_custom_call.1} parent=5 // pred_check
        _
      $region62: #{tpu_custom_call.1} parent=5 // pred_check_branch
        %360 = sbr.rel (%p357) target = $region64
      $region63: #{tpu_custom_call.1} parent=5 // pred_region
        %s361 = ssub.s32 %s23, 1
        %s362 = sand.u32 %s36, 1
        %s363 = scalar_lea.sflag [#allocation5], %s362
        %s364 = sand.u32 %s36, 1
        %s365 = smul.addr %s364, 256
        %s366 = scalar_lea.vmem [#allocation4], %s365
        // Predicated region
        $region65: #{tpu_custom_call.1} parent=63 // pred_check
          %p367 = pneg %p49
        $region66: #{tpu_custom_call.1} parent=63 // pred_check_branch
          %369 = sbr.rel (%p367) target = $region68
        $region67: #{tpu_custom_call.1} parent=63 // pred_region
          %370 = dma.done %s363, 4096
        $region68: #{tpu_custom_call.1} parent=63 // pred_fallthru
          _
        %s371 = sand.u32 %s36, 1
        %s372 = scalar_lea.sflag [#allocation5], %s371
        %s373 = sand.u32 %s36, 1
        %s374 = smul.addr %s373, 256
        %s375 = scalar_lea.vmem [#allocation4], %s374
        %p376 = pneg %p49
        %p377 = pneg %p46
        %p378 = pneg %p70
        %p379 = pneg %p67
        %p380 = pneg %p91
        %p381 = pneg %p88
        %p382 = pneg %p112
        %p383 = pneg %p109
        %p384 = pneg %p133
        %p385 = pneg %p130
        %p386 = pneg %p154
        %p387 = pneg %p151
        %p388 = pneg %p175
        %p389 = pneg %p172
        %p390 = pneg %p196
        %p391 = pneg %p193
        %p392 = pneg %p217
        %p393 = pneg %p214
        %p394 = pneg %p238
        %p395 = pneg %p235
        %p396 = pneg %p259
        %p397 = pneg %p256
        %p398 = pneg %p285
        %p399 = pneg %p282
        %s400 = sand.u32 %s272, 1
        %s401 = scalar_lea.sflag [#allocation6], %s400
        %s402 = sand.u32 %s272, 1
        %s403 = smul.addr %s402, 64
        %s404 = scalar_lea.vmem [#allocation7], %s403
        %vm406 = vcmask 257024
        %407 = vst.msk [vmem:[#allocation2] sm:$0xf] %vm406, 0
        %408 = vst.msk [vmem:[#allocation2 + $0x4] sm:$0xf] %vm406, 0
        %vm409 = vcmask 253952
        %410 = vst.msk [vmem:[#allocation2 + $0x8] sm:$0x1] %vm409, 0
        %s411 = scalar_lea.vmem [#allocation2], 204
        %412 = vst.msk [vmem:[%s411] sm:$0xf] %vm406, 0
        %413 = vst.msk [vmem:[%s411 + $0x4] sm:$0xf] %vm406, 0
        %414 = vst.msk [vmem:[%s411 + $0x8] sm:$0x1] %vm409, 0
        %vm415 = vcmask 253952
        %vm416 = vsmask.f32 256
        %vm417 = vmand %vm415, %vm416
        %v418 = vld [vmem:[#allocation2] sm:$0x1]
        %v419 = vsel %vm417, 0, %v418
        %420 = vst [vmem:[#allocation2] sm:$0x1] %v419
        %v421 = vld [vmem:[#allocation2 + $0xc] sm:$0x1]
        %v422 = vsel %vm417, 0, %v421
        %423 = vst [vmem:[#allocation2 + $0xc] sm:$0x1] %v422
        %v424 = vld [vmem:[#allocation2 + $0x18] sm:$0x1]
        %v425 = vsel %vm417, 0, %v424
        %426 = vst [vmem:[#allocation2 + $0x18] sm:$0x1] %v425
        %v427 = vld [vmem:[#allocation2 + $0x24] sm:$0x1]
        %v428 = vsel %vm417, 0, %v427
        %429 = vst [vmem:[#allocation2 + $0x24] sm:$0x1] %v428
        %v430 = vld [vmem:[#allocation2 + $0x30] sm:$0x1]
        %v431 = vsel %vm417, 0, %v430
        %432 = vst [vmem:[#allocation2 + $0x30] sm:$0x1] %v431
        %v433 = vld [vmem:[#allocation2 + $0x3c] sm:$0x1]
        %v434 = vsel %vm417, 0, %v433
        %435 = vst [vmem:[#allocation2 + $0x3c] sm:$0x1] %v434
        %v436 = vld [vmem:[#allocation2 + $0x48] sm:$0x1]
        %v437 = vsel %vm417, 0, %v436
        %438 = vst [vmem:[#allocation2 + $0x48] sm:$0x1] %v437
        %v439 = vld [vmem:[#allocation2 + $0x54] sm:$0x1]
        %v440 = vsel %vm417, 0, %v439
        %441 = vst [vmem:[#allocation2 + $0x54] sm:$0x1] %v440
        %v442 = vld [vmem:[#allocation2 + $0x60] sm:$0x1]
        %v443 = vsel %vm417, 0, %v442
        %444 = vst [vmem:[#allocation2 + $0x60] sm:$0x1] %v443
        %v445 = vld [vmem:[#allocation2 + $0x6c] sm:$0x1]
        %v446 = vsel %vm417, 0, %v445
        %447 = vst [vmem:[#allocation2 + $0x6c] sm:$0x1] %v446
        %v448 = vld [vmem:[#allocation2 + $0x78] sm:$0x1]
        %v449 = vsel %vm417, 0, %v448
        %450 = vst [vmem:[#allocation2 + $0x78] sm:$0x1] %v449
        %v451 = vld [vmem:[#allocation2 + $0x84] sm:$0x1]
        %v452 = vsel %vm417, 0, %v451
        %453 = vst [vmem:[#allocation2 + $0x84] sm:$0x1] %v452
        %v454 = vld [vmem:[#allocation2 + $0x90] sm:$0x1]
        %v455 = vsel %vm417, 0, %v454
        %456 = vst [vmem:[#allocation2 + $0x90] sm:$0x1] %v455
        %v457 = vld [vmem:[#allocation2 + $0x9c] sm:$0x1]
        %v458 = vsel %vm417, 0, %v457
        %459 = vst [vmem:[#allocation2 + $0x9c] sm:$0x1] %v458
        %v460 = vld [vmem:[#allocation2 + $0xa8] sm:$0x1]
        %v461 = vsel %vm417, 0, %v460
        %462 = vst [vmem:[#allocation2 + $0xa8] sm:$0x1] %v461
        %v463 = vld [vmem:[#allocation2 + $0xb4] sm:$0x1]
        %v464 = vsel %vm417, 0, %v463
        %465 = vst [vmem:[#allocation2 + $0xb4] sm:$0x1] %v464
        %v466 = vld [vmem:[#allocation2 + $0xc0] sm:$0x1]
        %v467 = vsel %vm417, 0, %v466
        %468 = vst [vmem:[#allocation2 + $0xc0] sm:$0x1] %v467
        %v469 = vld [vmem:[#allocation2 + $0xcc] sm:$0x1]
        %v470 = vsel %vm417, 0, %v469
        %471 = vst [vmem:[#allocation2 + $0xcc] sm:$0x1] %v470
        %vm472 = vsmask.f32 7938
        %vm473 = vmand %vm415, %vm472
        %v474 = vld [vmem:[#allocation2 + $0x8] sm:$0x1]
        %v475 = vsel %vm473, 0, %v474
        %476 = vst [vmem:[#allocation2 + $0x8] sm:$0x1] %v475
        %v477 = vld [vmem:[#allocation2 + $0x14] sm:$0x1]
        %v478 = vsel %vm473, 0, %v477
        %479 = vst [vmem:[#allocation2 + $0x14] sm:$0x1] %v478
        %v480 = vld [vmem:[#allocation2 + $0x20] sm:$0x1]
        %v481 = vsel %vm473, 0, %v480
        %482 = vst [vmem:[#allocation2 + $0x20] sm:$0x1] %v481
        %v483 = vld [vmem:[#allocation2 + $0x2c] sm:$0x1]
        %v484 = vsel %vm473, 0, %v483
        %485 = vst [vmem:[#allocation2 + $0x2c] sm:$0x1] %v484
        %v486 = vld [vmem:[#allocation2 + $0x38] sm:$0x1]
        %v487 = vsel %vm473, 0, %v486
        %488 = vst [vmem:[#allocation2 + $0x38] sm:$0x1] %v487
        %v489 = vld [vmem:[#allocation2 + $0x44] sm:$0x1]
        %v490 = vsel %vm473, 0, %v489
        %491 = vst [vmem:[#allocation2 + $0x44] sm:$0x1] %v490
        %v492 = vld [vmem:[#allocation2 + $0x50] sm:$0x1]
        %v493 = vsel %vm473, 0, %v492
        %494 = vst [vmem:[#allocation2 + $0x50] sm:$0x1] %v493
        %v495 = vld [vmem:[#allocation2 + $0x5c] sm:$0x1]
        %v496 = vsel %vm473, 0, %v495
        %497 = vst [vmem:[#allocation2 + $0x5c] sm:$0x1] %v496
        %v498 = vld [vmem:[#allocation2 + $0x68] sm:$0x1]
        %v499 = vsel %vm473, 0, %v498
        %500 = vst [vmem:[#allocation2 + $0x68] sm:$0x1] %v499
        %v501 = vld [vmem:[#allocation2 + $0x74] sm:$0x1]
        %v502 = vsel %vm473, 0, %v501
        %503 = vst [vmem:[#allocation2 + $0x74] sm:$0x1] %v502
        %v504 = vld [vmem:[#allocation2 + $0x80] sm:$0x1]
        %v505 = vsel %vm473, 0, %v504
        %506 = vst [vmem:[#allocation2 + $0x80] sm:$0x1] %v505
        %v507 = vld [vmem:[#allocation2 + $0x8c] sm:$0x1]
        %v508 = vsel %vm473, 0, %v507
        %509 = vst [vmem:[#allocation2 + $0x8c] sm:$0x1] %v508
        %v510 = vld [vmem:[#allocation2 + $0x98] sm:$0x1]
        %v511 = vsel %vm473, 0, %v510
        %512 = vst [vmem:[#allocation2 + $0x98] sm:$0x1] %v511
        %v513 = vld [vmem:[#allocation2 + $0xa4] sm:$0x1]
        %v514 = vsel %vm473, 0, %v513
        %515 = vst [vmem:[#allocation2 + $0xa4] sm:$0x1] %v514
        %v516 = vld [vmem:[#allocation2 + $0xb0] sm:$0x1]
        %v517 = vsel %vm473, 0, %v516
        %518 = vst [vmem:[#allocation2 + $0xb0] sm:$0x1] %v517
        %v519 = vld [vmem:[#allocation2 + $0xbc] sm:$0x1]
        %v520 = vsel %vm473, 0, %v519
        %521 = vst [vmem:[#allocation2 + $0xbc] sm:$0x1] %v520
        %v522 = vld [vmem:[#allocation2 + $0xc8] sm:$0x1]
        %v523 = vsel %vm473, 0, %v522
        %524 = vst [vmem:[#allocation2 + $0xc8] sm:$0x1] %v523
        %v525 = vld [vmem:[#allocation2 + $0xd4] sm:$0x1]
        %v526 = vsel %vm473, 0, %v525
        %527 = vst [vmem:[#allocation2 + $0xd4] sm:$0x1] %v526
        %v528 = vld [vmem:[%s366] sm:$0xff]
        %v529 = vld [vmem:[%s366 + $0x8] sm:$0xff]
        %v530 = vld [vmem:[%s366 + $0x10] sm:$0xff]
        %v531 = vld [vmem:[%s366 + $0x18] sm:$0xff]
        %v532 = vld [vmem:[%s366 + $0x20] sm:$0xff]
        %v533 = vld [vmem:[%s366 + $0x28] sm:$0xff]
        %v534 = vld [vmem:[%s366 + $0x30] sm:$0xff]
        %v535 = vld [vmem:[%s366 + $0x38] sm:$0xff]
        %v536 = vld [vmem:[%s366 + $0x40] sm:$0xff]
        %v537 = vld [vmem:[%s366 + $0x48] sm:$0xff]
        %v538 = vld [vmem:[%s366 + $0x50] sm:$0xff]
        %v539 = vld [vmem:[%s366 + $0x58] sm:$0xff]
        %v540 = vld [vmem:[%s366 + $0x60] sm:$0xff]
        %v541 = vld [vmem:[%s366 + $0x68] sm:$0xff]
        %v542 = vld [vmem:[%s366 + $0x70] sm:$0xff]
        %v543 = vld [vmem:[%s366 + $0x78] sm:$0xff]
        %v544 = vld [vmem:[%s366 + $0x80] sm:$0xff]
        %v545 = vld [vmem:[%s366 + $0x88] sm:$0xff]
        %v546 = vld [vmem:[%s366 + $0x90] sm:$0xff]
        %v547 = vld [vmem:[%s366 + $0x98] sm:$0xff]
        %v548 = vld [vmem:[%s366 + $0xa0] sm:$0xff]
        %v549 = vld [vmem:[%s366 + $0xa8] sm:$0xff]
        %v550 = vld [vmem:[%s366 + $0xb0] sm:$0xff]
        %v551 = vld [vmem:[%s366 + $0xb8] sm:$0xff]
        %v552 = vld [vmem:[%s366 + $0xc0] sm:$0xff]
        %v553 = vld [vmem:[%s366 + $0xc8] sm:$0xff]
        %v554 = vld [vmem:[%s366 + $0xd0] sm:$0xff]
        %v555 = vld [vmem:[%s366 + $0xd8] sm:$0xff]
        %v556 = vld [vmem:[%s366 + $0xe0] sm:$0xff]
        %v557 = vld [vmem:[%s366 + $0xe8] sm:$0xff]
        %v558 = vld [vmem:[%s366 + $0xf0] sm:$0xff]
        %v559 = vld [vmem:[%s366 + $0xf8] sm:$0xff]
        %v560 = vpack.c.bf16 %v529, %v528
        %v561 = vpack.c.bf16 %v531, %v530
        %v562 = vpack.c.bf16 %v533, %v532
        %v563 = vpack.c.bf16 %v535, %v534
        %v564 = vpack.c.bf16 %v537, %v536
        %v565 = vpack.c.bf16 %v539, %v538
        %v566 = vpack.c.bf16 %v541, %v540
        %v567 = vpack.c.bf16 %v543, %v542
        %v568 = vpack.c.bf16 %v545, %v544
        %v569 = vpack.c.bf16 %v547, %v546
        %v570 = vpack.c.bf16 %v549, %v548
        %v571 = vpack.c.bf16 %v551, %v550
        %v572 = vpack.c.bf16 %v553, %v552
        %v573 = vpack.c.bf16 %v555, %v554
        %v574 = vpack.c.bf16 %v557, %v556
        %v575 = vpack.c.bf16 %v559, %v558
        %v592 = vunpack.c.l.b16 %v560
        %v593 = vunpack.c.h.b16 %v560
        %v594 = vunpack.c.l.b16 %v561
        %v595 = vunpack.c.h.b16 %v561
        %v596 = vunpack.c.l.b16 %v562
        %v597 = vunpack.c.h.b16 %v562
        %v598 = vunpack.c.l.b16 %v563
        %v599 = vunpack.c.h.b16 %v563
        %v600 = vunpack.c.l.b16 %v564
        %v601 = vunpack.c.h.b16 %v564
        %v602 = vunpack.c.l.b16 %v565
        %v603 = vunpack.c.h.b16 %v565
        %v604 = vunpack.c.l.b16 %v566
        %v605 = vunpack.c.h.b16 %v566
        %v606 = vunpack.c.l.b16 %v567
        %v607 = vunpack.c.h.b16 %v567
        %v608 = vunpack.c.l.b16 %v568
        %v609 = vunpack.c.h.b16 %v568
        %v610 = vunpack.c.l.b16 %v569
        %v611 = vunpack.c.h.b16 %v569
        %v612 = vunpack.c.l.b16 %v570
        %v613 = vunpack.c.h.b16 %v570
        %v614 = vunpack.c.l.b16 %v571
        %v615 = vunpack.c.h.b16 %v571
        %v616 = vunpack.c.l.b16 %v572
        %v617 = vunpack.c.h.b16 %v572
        %v618 = vunpack.c.l.b16 %v573
        %v619 = vunpack.c.h.b16 %v573
        %v620 = vunpack.c.l.b16 %v574
        %v621 = vunpack.c.h.b16 %v574
        %v622 = vunpack.c.l.b16 %v575
        %v623 = vunpack.c.h.b16 %v575
        %v624 = vpack.c.b16 %v592, %v592
        %v625 = vpack.c.b16 %v593, %v593
        %v626 = vpack.c.b16 %v594, %v594
        %v627 = vpack.c.b16 %v595, %v595
        %v628 = vpack.c.b16 %v596, %v596
        %v629 = vpack.c.b16 %v597, %v597
        %v630 = vpack.c.b16 %v598, %v598
        %v631 = vpack.c.b16 %v599, %v599
        %v632 = vpack.c.b16 %v600, %v600
        %v633 = vpack.c.b16 %v601, %v601
        %v634 = vpack.c.b16 %v602, %v602
        %v635 = vpack.c.b16 %v603, %v603
        %v636 = vpack.c.b16 %v604, %v604
        %v637 = vpack.c.b16 %v605, %v605
        %v638 = vpack.c.b16 %v606, %v606
        %v639 = vpack.c.b16 %v607, %v607
        %v640 = vpack.c.b16 %v608, %v608
        %v641 = vpack.c.b16 %v609, %v609
        %v642 = vpack.c.b16 %v610, %v610
        %v643 = vpack.c.b16 %v611, %v611
        %v644 = vpack.c.b16 %v612, %v612
        %v645 = vpack.c.b16 %v613, %v613
        %v646 = vpack.c.b16 %v614, %v614
        %v647 = vpack.c.b16 %v615, %v615
        %v648 = vpack.c.b16 %v616, %v616
        %v649 = vpack.c.b16 %v617, %v617
        %v650 = vpack.c.b16 %v618, %v618
        %v651 = vpack.c.b16 %v619, %v619
        %v652 = vpack.c.b16 %v620, %v620
        %v653 = vpack.c.b16 %v621, %v621
        %v654 = vpack.c.b16 %v622, %v622
        %v655 = vpack.c.b16 %v623, %v623
        %vm656 = vsmask.f32 4368
        %vm657 = vmor %vm416, %vm656
        %v659 = vshrl.u32 %v624, 16
        %v661 = vrot.slane %v659, 7
        %v662 = vshll.u32 %v624, 16
        %v664 = vor.u32 %v661, %v662
        %v665 = vrot.slane %v661, 4
        %v667 = vshrl.u32 %v625, 16
        %v669 = vrot.slane %v667, 7
        %v670 = vshll.u32 %v625, 16
        %v672 = vor.u32 %v669, %v670
        %v673 = vsel %vm657, %v665, %v672
        %v674 = vrot.slane %v669, 4
        %v676 = vshrl.u32 %v626, 16
        %v678 = vrot.slane %v676, 7
        %v679 = vshll.u32 %v626, 16
        %v681 = vor.u32 %v678, %v679
        %v682 = vrot.slane %v678, 4
        %v684 = vshrl.u32 %v627, 16
        %v686 = vrot.slane %v684, 7
        %v687 = vshll.u32 %v627, 16
        %v689 = vor.u32 %v686, %v687
        %v690 = vsel %vm657, %v682, %v689
        %v691 = vrot.slane %v686, 4
        %v693 = vshrl.u32 %v628, 16
        %v695 = vrot.slane %v693, 7
        %v696 = vshll.u32 %v628, 16
        %v698 = vor.u32 %v695, %v696
        %v699 = vrot.slane %v695, 4
        %v701 = vshrl.u32 %v629, 16
        %v703 = vrot.slane %v701, 7
        %v704 = vshll.u32 %v629, 16
        %v706 = vor.u32 %v703, %v704
        %v707 = vsel %vm657, %v699, %v706
        %v708 = vrot.slane %v703, 4
        %v710 = vshrl.u32 %v630, 16
        %v712 = vrot.slane %v710, 7
        %v713 = vshll.u32 %v630, 16
        %v715 = vor.u32 %v712, %v713
        %v716 = vrot.slane %v712, 4
        %v718 = vshrl.u32 %v631, 16
        %v720 = vrot.slane %v718, 7
        %v721 = vshll.u32 %v631, 16
        %v723 = vor.u32 %v720, %v721
        %v724 = vsel %vm657, %v716, %v723
        %v725 = vrot.slane %v720, 4
        %v727 = vshrl.u32 %v632, 16
        %v729 = vrot.slane %v727, 7
        %v730 = vshll.u32 %v632, 16
        %v732 = vor.u32 %v729, %v730
        %v733 = vrot.slane %v729, 4
        %v735 = vshrl.u32 %v633, 16
        %v737 = vrot.slane %v735, 7
        %v738 = vshll.u32 %v633, 16
        %v740 = vor.u32 %v737, %v738
        %v741 = vsel %vm657, %v733, %v740
        %v742 = vrot.slane %v737, 4
        %v744 = vshrl.u32 %v634, 16
        %v746 = vrot.slane %v744, 7
        %v747 = vshll.u32 %v634, 16
        %v749 = vor.u32 %v746, %v747
        %v750 = vrot.slane %v746, 4
        %v752 = vshrl.u32 %v635, 16
        %v754 = vrot.slane %v752, 7
        %v755 = vshll.u32 %v635, 16
        %v757 = vor.u32 %v754, %v755
        %v758 = vsel %vm657, %v750, %v757
        %v759 = vrot.slane %v754, 4
        %v761 = vshrl.u32 %v636, 16
        %v763 = vrot.slane %v761, 7
        %v764 = vshll.u32 %v636, 16
        %v766 = vor.u32 %v763, %v764
        %v767 = vrot.slane %v763, 4
        %v769 = vshrl.u32 %v637, 16
        %v771 = vrot.slane %v769, 7
        %v772 = vshll.u32 %v637, 16
        %v774 = vor.u32 %v771, %v772
        %v775 = vsel %vm657, %v767, %v774
        %v776 = vrot.slane %v771, 4
        %v778 = vshrl.u32 %v638, 16
        %v780 = vrot.slane %v778, 7
        %v781 = vshll.u32 %v638, 16
        %v783 = vor.u32 %v780, %v781
        %v784 = vrot.slane %v780, 4
        %v786 = vshrl.u32 %v639, 16
        %v788 = vrot.slane %v786, 7
        %v789 = vshll.u32 %v639, 16
        %v791 = vor.u32 %v788, %v789
        %v792 = vsel %vm657, %v784, %v791
        %v793 = vrot.slane %v788, 4
        %v795 = vshrl.u32 %v640, 16
        %v797 = vrot.slane %v795, 7
        %v798 = vshll.u32 %v640, 16
        %v800 = vor.u32 %v797, %v798
        %v801 = vrot.slane %v797, 4
        %v803 = vshrl.u32 %v641, 16
        %v805 = vrot.slane %v803, 7
        %v806 = vshll.u32 %v641, 16
        %v808 = vor.u32 %v805, %v806
        %v809 = vsel %vm657, %v801, %v808
        %v810 = vrot.slane %v805, 4
        %v812 = vshrl.u32 %v642, 16
        %v814 = vrot.slane %v812, 7
        %v815 = vshll.u32 %v642, 16
        %v817 = vor.u32 %v814, %v815
        %v818 = vrot.slane %v814, 4
        %v820 = vshrl.u32 %v643, 16
        %v822 = vrot.slane %v820, 7
        %v823 = vshll.u32 %v643, 16
        %v825 = vor.u32 %v822, %v823
        %v826 = vsel %vm657, %v818, %v825
        %v827 = vrot.slane %v822, 4
        %v829 = vshrl.u32 %v644, 16
        %v831 = vrot.slane %v829, 7
        %v832 = vshll.u32 %v644, 16
        %v834 = vor.u32 %v831, %v832
        %v835 = vrot.slane %v831, 4
        %v837 = vshrl.u32 %v645, 16
        %v839 = vrot.slane %v837, 7
        %v840 = vshll.u32 %v645, 16
        %v842 = vor.u32 %v839, %v840
        %v843 = vsel %vm657, %v835, %v842
        %v844 = vrot.slane %v839, 4
        %v846 = vshrl.u32 %v646, 16
        %v848 = vrot.slane %v846, 7
        %v849 = vshll.u32 %v646, 16
        %v851 = vor.u32 %v848, %v849
        %v852 = vrot.slane %v848, 4
        %v854 = vshrl.u32 %v647, 16
        %v856 = vrot.slane %v854, 7
        %v857 = vshll.u32 %v647, 16
        %v859 = vor.u32 %v856, %v857
        %v860 = vsel %vm657, %v852, %v859
        %v861 = vrot.slane %v856, 4
        %v863 = vshrl.u32 %v648, 16
        %v865 = vrot.slane %v863, 7
        %v866 = vshll.u32 %v648, 16
        %v868 = vor.u32 %v865, %v866
        %v869 = vrot.slane %v865, 4
        %v871 = vshrl.u32 %v649, 16
        %v873 = vrot.slane %v871, 7
        %v874 = vshll.u32 %v649, 16
        %v876 = vor.u32 %v873, %v874
        %v877 = vsel %vm657, %v869, %v876
        %v878 = vrot.slane %v873, 4
        %v880 = vshrl.u32 %v650, 16
        %v882 = vrot.slane %v880, 7
        %v883 = vshll.u32 %v650, 16
        %v885 = vor.u32 %v882, %v883
        %v886 = vrot.slane %v882, 4
        %v888 = vshrl.u32 %v651, 16
        %v890 = vrot.slane %v888, 7
        %v891 = vshll.u32 %v651, 16
        %v893 = vor.u32 %v890, %v891
        %v894 = vsel %vm657, %v886, %v893
        %v895 = vrot.slane %v890, 4
        %v897 = vshrl.u32 %v652, 16
        %v899 = vrot.slane %v897, 7
        %v900 = vshll.u32 %v652, 16
        %v902 = vor.u32 %v899, %v900
        %v903 = vrot.slane %v899, 4
        %v905 = vshrl.u32 %v653, 16
        %v907 = vrot.slane %v905, 7
        %v908 = vshll.u32 %v653, 16
        %v910 = vor.u32 %v907, %v908
        %v911 = vsel %vm657, %v903, %v910
        %v912 = vrot.slane %v907, 4
        %v914 = vshrl.u32 %v654, 16
        %v916 = vrot.slane %v914, 7
        %v917 = vshll.u32 %v654, 16
        %v919 = vor.u32 %v916, %v917
        %v920 = vrot.slane %v916, 4
        %v922 = vshrl.u32 %v655, 16
        %v924 = vrot.slane %v922, 7
        %v925 = vshll.u32 %v655, 16
        %v927 = vor.u32 %v924, %v925
        %v928 = vsel %vm657, %v920, %v927
        %v929 = vrot.slane %v924, 4
        %s978 = scalar_lea.vmem [#allocation2], 12
        %vm979 = vcmask 257024
        %vm980 = vmand %vm979, %vm472
        %v981 = vld [vmem:[%s978] sm:$0xf]
        %v982 = vsel %vm980, %v664, %v981
        %983 = vst [vmem:[%s978] sm:$0xf] %v982
        %984 = vst.msk [vmem:[%s978 + $0x4] sm:$0xf] %vm406, %v673
        %v985 = vld [vmem:[%s978 + $0x8] sm:$0x1]
        %v986 = vsel %vm417, %v674, %v985
        %987 = vst [vmem:[%s978 + $0x8] sm:$0x1] %v986
        %v988 = vld [vmem:[%s978 + $0xc] sm:$0xf]
        %v989 = vsel %vm980, %v681, %v988
        %990 = vst [vmem:[%s978 + $0xc] sm:$0xf] %v989
        %991 = vst.msk [vmem:[%s978 + $0x10] sm:$0xf] %vm406, %v690
        %v992 = vld [vmem:[%s978 + $0x14] sm:$0x1]
        %v993 = vsel %vm417, %v691, %v992
        %994 = vst [vmem:[%s978 + $0x14] sm:$0x1] %v993
        %v995 = vld [vmem:[%s978 + $0x18] sm:$0xf]
        %v996 = vsel %vm980, %v698, %v995
        %997 = vst [vmem:[%s978 + $0x18] sm:$0xf] %v996
        %998 = vst.msk [vmem:[%s978 + $0x1c] sm:$0xf] %vm406, %v707
        %v999 = vld [vmem:[%s978 + $0x20] sm:$0x1]
        %v1000 = vsel %vm417, %v708, %v999
        %1001 = vst [vmem:[%s978 + $0x20] sm:$0x1] %v1000
        %v1002 = vld [vmem:[%s978 + $0x24] sm:$0xf]
        %v1003 = vsel %vm980, %v715, %v1002
        %1004 = vst [vmem:[%s978 + $0x24] sm:$0xf] %v1003
        %1005 = vst.msk [vmem:[%s978 + $0x28] sm:$0xf] %vm406, %v724
        %v1006 = vld [vmem:[%s978 + $0x2c] sm:$0x1]
        %v1007 = vsel %vm417, %v725, %v1006
        %1008 = vst [vmem:[%s978 + $0x2c] sm:$0x1] %v1007
        %v1009 = vld [vmem:[%s978 + $0x30] sm:$0xf]
        %v1010 = vsel %vm980, %v732, %v1009
        %1011 = vst [vmem:[%s978 + $0x30] sm:$0xf] %v1010
        %1012 = vst.msk [vmem:[%s978 + $0x34] sm:$0xf] %vm406, %v741
        %v1013 = vld [vmem:[%s978 + $0x38] sm:$0x1]
        %v1014 = vsel %vm417, %v742, %v1013
        %1015 = vst [vmem:[%s978 + $0x38] sm:$0x1] %v1014
        %v1016 = vld [vmem:[%s978 + $0x3c] sm:$0xf]
        %v1017 = vsel %vm980, %v749, %v1016
        %1018 = vst [vmem:[%s978 + $0x3c] sm:$0xf] %v1017
        %1019 = vst.msk [vmem:[%s978 + $0x40] sm:$0xf] %vm406, %v758
        %v1020 = vld [vmem:[%s978 + $0x44] sm:$0x1]
        %v1021 = vsel %vm417, %v759, %v1020
        %1022 = vst [vmem:[%s978 + $0x44] sm:$0x1] %v1021
        %v1023 = vld [vmem:[%s978 + $0x48] sm:$0xf]
        %v1024 = vsel %vm980, %v766, %v1023
        %1025 = vst [vmem:[%s978 + $0x48] sm:$0xf] %v1024
        %1026 = vst.msk [vmem:[%s978 + $0x4c] sm:$0xf] %vm406, %v775
        %v1027 = vld [vmem:[%s978 + $0x50] sm:$0x1]
        %v1028 = vsel %vm417, %v776, %v1027
        %1029 = vst [vmem:[%s978 + $0x50] sm:$0x1] %v1028
        %v1030 = vld [vmem:[%s978 + $0x54] sm:$0xf]
        %v1031 = vsel %vm980, %v783, %v1030
        %1032 = vst [vmem:[%s978 + $0x54] sm:$0xf] %v1031
        %1033 = vst.msk [vmem:[%s978 + $0x58] sm:$0xf] %vm406, %v792
        %v1034 = vld [vmem:[%s978 + $0x5c] sm:$0x1]
        %v1035 = vsel %vm417, %v793, %v1034
        %1036 = vst [vmem:[%s978 + $0x5c] sm:$0x1] %v1035
        %v1037 = vld [vmem:[%s978 + $0x60] sm:$0xf]
        %v1038 = vsel %vm980, %v800, %v1037
        %1039 = vst [vmem:[%s978 + $0x60] sm:$0xf] %v1038
        %1040 = vst.msk [vmem:[%s978 + $0x64] sm:$0xf] %vm406, %v809
        %v1041 = vld [vmem:[%s978 + $0x68] sm:$0x1]
        %v1042 = vsel %vm417, %v810, %v1041
        %1043 = vst [vmem:[%s978 + $0x68] sm:$0x1] %v1042
        %v1044 = vld [vmem:[%s978 + $0x6c] sm:$0xf]
        %v1045 = vsel %vm980, %v817, %v1044
        %1046 = vst [vmem:[%s978 + $0x6c] sm:$0xf] %v1045
        %1047 = vst.msk [vmem:[%s978 + $0x70] sm:$0xf] %vm406, %v826
        %v1048 = vld [vmem:[%s978 + $0x74] sm:$0x1]
        %v1049 = vsel %vm417, %v827, %v1048
        %1050 = vst [vmem:[%s978 + $0x74] sm:$0x1] %v1049
        %v1051 = vld [vmem:[%s978 + $0x78] sm:$0xf]
        %v1052 = vsel %vm980, %v834, %v1051
        %1053 = vst [vmem:[%s978 + $0x78] sm:$0xf] %v1052
        %1054 = vst.msk [vmem:[%s978 + $0x7c] sm:$0xf] %vm406, %v843
        %v1055 = vld [vmem:[%s978 + $0x80] sm:$0x1]
        %v1056 = vsel %vm417, %v844, %v1055
        %1057 = vst [vmem:[%s978 + $0x80] sm:$0x1] %v1056
        %v1058 = vld [vmem:[%s978 + $0x84] sm:$0xf]
        %v1059 = vsel %vm980, %v851, %v1058
        %1060 = vst [vmem:[%s978 + $0x84] sm:$0xf] %v1059
        %1061 = vst.msk [vmem:[%s978 + $0x88] sm:$0xf] %vm406, %v860
        %v1062 = vld [vmem:[%s978 + $0x8c] sm:$0x1]
        %v1063 = vsel %vm417, %v861, %v1062
        %1064 = vst [vmem:[%s978 + $0x8c] sm:$0x1] %v1063
        %v1065 = vld [vmem:[%s978 + $0x90] sm:$0xf]
        %v1066 = vsel %vm980, %v868, %v1065
        %1067 = vst [vmem:[%s978 + $0x90] sm:$0xf] %v1066
        %1068 = vst.msk [vmem:[%s978 + $0x94] sm:$0xf] %vm406, %v877
        %v1069 = vld [vmem:[%s978 + $0x98] sm:$0x1]
        %v1070 = vsel %vm417, %v878, %v1069
        %1071 = vst [vmem:[%s978 + $0x98] sm:$0x1] %v1070
        %v1072 = vld [vmem:[%s978 + $0x9c] sm:$0xf]
        %v1073 = vsel %vm980, %v885, %v1072
        %1074 = vst [vmem:[%s978 + $0x9c] sm:$0xf] %v1073
        %1075 = vst.msk [vmem:[%s978 + $0xa0] sm:$0xf] %vm406, %v894
        %v1076 = vld [vmem:[%s978 + $0xa4] sm:$0x1]
        %v1077 = vsel %vm417, %v895, %v1076
        %1078 = vst [vmem:[%s978 + $0xa4] sm:$0x1] %v1077
        %v1079 = vld [vmem:[%s978 + $0xa8] sm:$0xf]
        %v1080 = vsel %vm980, %v902, %v1079
        %1081 = vst [vmem:[%s978 + $0xa8] sm:$0xf] %v1080
        %1082 = vst.msk [vmem:[%s978 + $0xac] sm:$0xf] %vm406, %v911
        %v1083 = vld [vmem:[%s978 + $0xb0] sm:$0x1]
        %v1084 = vsel %vm417, %v912, %v1083
        %1085 = vst [vmem:[%s978 + $0xb0] sm:$0x1] %v1084
        %v1086 = vld [vmem:[%s978 + $0xb4] sm:$0xf]
        %v1087 = vsel %vm980, %v919, %v1086
        %1088 = vst [vmem:[%s978 + $0xb4] sm:$0xf] %v1087
        %1089 = vst.msk [vmem:[%s978 + $0xb8] sm:$0xf] %vm406, %v928
        %v1090 = vld [vmem:[%s978 + $0xbc] sm:$0x1]
        %v1091 = vsel %vm417, %v929, %v1090
        %1092 = vst [vmem:[%s978 + $0xbc] sm:$0x1] %v1091
        %v1093 = vld [vmem:[#allocation2] sm:$0xf]
        %v1094 = vld [vmem:[#allocation2 + $0x4] sm:$0xf]
        %v1095 = vld [vmem:[#allocation2 + $0xc] sm:$0xf]
        %v1096 = vld [vmem:[#allocation2 + $0x10] sm:$0xf]
        %v1097 = vld [vmem:[#allocation2 + $0x18] sm:$0xf]
        %v1098 = vld [vmem:[#allocation2 + $0x1c] sm:$0xf]
        %v1099 = vld [vmem:[#allocation2 + $0x24] sm:$0xf]
        %v1100 = vld [vmem:[#allocation2 + $0x28] sm:$0xf]
        %v1101 = vld [vmem:[#allocation2 + $0x30] sm:$0xf]
        %v1102 = vld [vmem:[#allocation2 + $0x34] sm:$0xf]
        %v1103 = vld [vmem:[#allocation2 + $0x3c] sm:$0xf]
        %v1104 = vld [vmem:[#allocation2 + $0x40] sm:$0xf]
        %v1105 = vld [vmem:[#allocation2 + $0x48] sm:$0xf]
        %v1106 = vld [vmem:[#allocation2 + $0x4c] sm:$0xf]
        %v1107 = vld [vmem:[#allocation2 + $0x54] sm:$0xf]
        %v1108 = vld [vmem:[#allocation2 + $0x58] sm:$0xf]
        %v1109 = vld [vmem:[#allocation2 + $0x60] sm:$0xf]
        %v1110 = vld [vmem:[#allocation2 + $0x64] sm:$0xf]
        %v1111 = vld [vmem:[#allocation2 + $0x6c] sm:$0xf]
        %v1112 = vld [vmem:[#allocation2 + $0x70] sm:$0xf]
        %v1113 = vld [vmem:[#allocation2 + $0x78] sm:$0xf]
        %v1114 = vld [vmem:[#allocation2 + $0x7c] sm:$0xf]
        %v1115 = vld [vmem:[#allocation2 + $0x84] sm:$0xf]
        %v1116 = vld [vmem:[#allocation2 + $0x88] sm:$0xf]
        %v1117 = vld [vmem:[#allocation2 + $0x90] sm:$0xf]
        %v1118 = vld [vmem:[#allocation2 + $0x94] sm:$0xf]
        %v1119 = vld [vmem:[#allocation2 + $0x9c] sm:$0xf]
        %v1120 = vld [vmem:[#allocation2 + $0xa0] sm:$0xf]
        %v1121 = vld [vmem:[#allocation2 + $0xa8] sm:$0xf]
        %v1122 = vld [vmem:[#allocation2 + $0xac] sm:$0xf]
        %v1123 = vld [vmem:[#allocation2 + $0xb4] sm:$0xf]
        %v1124 = vld [vmem:[#allocation2 + $0xb8] sm:$0xf]
        %v1125 = vld [vmem:[#allocation2 + $0x8] sm:$0x1]
        %v1126 = vld [vmem:[#allocation2 + $0x14] sm:$0x1]
        %v1127 = vld [vmem:[#allocation2 + $0x20] sm:$0x1]
        %v1128 = vld [vmem:[#allocation2 + $0x2c] sm:$0x1]
        %v1129 = vld [vmem:[#allocation2 + $0x38] sm:$0x1]
        %v1130 = vld [vmem:[#allocation2 + $0x44] sm:$0x1]
        %v1131 = vld [vmem:[#allocation2 + $0x50] sm:$0x1]
        %v1132 = vld [vmem:[#allocation2 + $0x5c] sm:$0x1]
        %v1133 = vld [vmem:[#allocation2 + $0x68] sm:$0x1]
        %v1134 = vld [vmem:[#allocation2 + $0x74] sm:$0x1]
        %v1135 = vld [vmem:[#allocation2 + $0x80] sm:$0x1]
        %v1136 = vld [vmem:[#allocation2 + $0x8c] sm:$0x1]
        %v1137 = vld [vmem:[#allocation2 + $0x98] sm:$0x1]
        %v1138 = vld [vmem:[#allocation2 + $0xa4] sm:$0x1]
        %v1139 = vld [vmem:[#allocation2 + $0xb0] sm:$0x1]
        %v1140 = vld [vmem:[#allocation2 + $0xbc] sm:$0x1]
        %vm1141 = vsmask.f32 3328
        %vm1142 = vsmask.f32 7440
        %vm1143 = vmor %vm1141, %vm1142
        %v1145 = vshrl.u32 %v1093, 16
        %v1147 = vrot.slane %v1145, 4
        %v1148 = vshll.u32 %v1093, 16
        %v1150 = vrot.slane %v1148, 5
        %v1151 = vor.u32 %v1147, %v1150
        %v1152 = vrot.slane %v1151, 4
        %v1154 = vshll.u32 %v1094, 16
        %v1156 = vrot.slane %v1154, 5
        %v1157 = vsel %vm1143, %v1152, %v1156
        %v1158 = vshrl.u32 %v1094, 16
        %v1160 = vrot.slane %v1158, 4
        %v1161 = vor.u32 %v1160, %v1156
        %v1162 = vrot.slane %v1161, 4
        %v1164 = vshll.u32 %v1125, 16
        %v1166 = vrot.slane %v1164, 5
        %v1167 = vsel %vm1143, %v1162, %v1166
        %v1169 = vshrl.u32 %v1095, 16
        %v1171 = vrot.slane %v1169, 4
        %v1172 = vshll.u32 %v1095, 16
        %v1174 = vrot.slane %v1172, 5
        %v1175 = vor.u32 %v1171, %v1174
        %v1176 = vrot.slane %v1175, 4
        %v1178 = vshll.u32 %v1096, 16
        %v1180 = vrot.slane %v1178, 5
        %v1181 = vsel %vm1143, %v1176, %v1180
        %v1182 = vshrl.u32 %v1096, 16
        %v1184 = vrot.slane %v1182, 4
        %v1185 = vor.u32 %v1184, %v1180
        %v1186 = vrot.slane %v1185, 4
        %v1188 = vshll.u32 %v1126, 16
        %v1190 = vrot.slane %v1188, 5
        %v1191 = vsel %vm1143, %v1186, %v1190
        %v1193 = vshrl.u32 %v1097, 16
        %v1195 = vrot.slane %v1193, 4
        %v1196 = vshll.u32 %v1097, 16
        %v1198 = vrot.slane %v1196, 5
        %v1199 = vor.u32 %v1195, %v1198
        %v1200 = vrot.slane %v1199, 4
        %v1202 = vshll.u32 %v1098, 16
        %v1204 = vrot.slane %v1202, 5
        %v1205 = vsel %vm1143, %v1200, %v1204
        %v1206 = vshrl.u32 %v1098, 16
        %v1208 = vrot.slane %v1206, 4
        %v1209 = vor.u32 %v1208, %v1204
        %v1210 = vrot.slane %v1209, 4
        %v1212 = vshll.u32 %v1127, 16
        %v1214 = vrot.slane %v1212, 5
        %v1215 = vsel %vm1143, %v1210, %v1214
        %v1217 = vshrl.u32 %v1099, 16
        %v1219 = vrot.slane %v1217, 4
        %v1220 = vshll.u32 %v1099, 16
        %v1222 = vrot.slane %v1220, 5
        %v1223 = vor.u32 %v1219, %v1222
        %v1224 = vrot.slane %v1223, 4
        %v1226 = vshll.u32 %v1100, 16
        %v1228 = vrot.slane %v1226, 5
        %v1229 = vsel %vm1143, %v1224, %v1228
        %v1230 = vshrl.u32 %v1100, 16
        %v1232 = vrot.slane %v1230, 4
        %v1233 = vor.u32 %v1232, %v1228
        %v1234 = vrot.slane %v1233, 4
        %v1236 = vshll.u32 %v1128, 16
        %v1238 = vrot.slane %v1236, 5
        %v1239 = vsel %vm1143, %v1234, %v1238
        %v1241 = vshrl.u32 %v1101, 16
        %v1243 = vrot.slane %v1241, 4
        %v1244 = vshll.u32 %v1101, 16
        %v1246 = vrot.slane %v1244, 5
        %v1247 = vor.u32 %v1243, %v1246
        %v1248 = vrot.slane %v1247, 4
        %v1250 = vshll.u32 %v1102, 16
        %v1252 = vrot.slane %v1250, 5
        %v1253 = vsel %vm1143, %v1248, %v1252
        %v1254 = vshrl.u32 %v1102, 16
        %v1256 = vrot.slane %v1254, 4
        %v1257 = vor.u32 %v1256, %v1252
        %v1258 = vrot.slane %v1257, 4
        %v1260 = vshll.u32 %v1129, 16
        %v1262 = vrot.slane %v1260, 5
        %v1263 = vsel %vm1143, %v1258, %v1262
        %v1265 = vshrl.u32 %v1103, 16
        %v1267 = vrot.slane %v1265, 4
        %v1268 = vshll.u32 %v1103, 16
        %v1270 = vrot.slane %v1268, 5
        %v1271 = vor.u32 %v1267, %v1270
        %v1272 = vrot.slane %v1271, 4
        %v1274 = vshll.u32 %v1104, 16
        %v1276 = vrot.slane %v1274, 5
        %v1277 = vsel %vm1143, %v1272, %v1276
        %v1278 = vshrl.u32 %v1104, 16
        %v1280 = vrot.slane %v1278, 4
        %v1281 = vor.u32 %v1280, %v1276
        %v1282 = vrot.slane %v1281, 4
        %v1284 = vshll.u32 %v1130, 16
        %v1286 = vrot.slane %v1284, 5
        %v1287 = vsel %vm1143, %v1282, %v1286
        %v1289 = vshrl.u32 %v1105, 16
        %v1291 = vrot.slane %v1289, 4
        %v1292 = vshll.u32 %v1105, 16
        %v1294 = vrot.slane %v1292, 5
        %v1295 = vor.u32 %v1291, %v1294
        %v1296 = vrot.slane %v1295, 4
        %v1298 = vshll.u32 %v1106, 16
        %v1300 = vrot.slane %v1298, 5
        %v1301 = vsel %vm1143, %v1296, %v1300
        %v1302 = vshrl.u32 %v1106, 16
        %v1304 = vrot.slane %v1302, 4
        %v1305 = vor.u32 %v1304, %v1300
        %v1306 = vrot.slane %v1305, 4
        %v1308 = vshll.u32 %v1131, 16
        %v1310 = vrot.slane %v1308, 5
        %v1311 = vsel %vm1143, %v1306, %v1310
        %v1313 = vshrl.u32 %v1107, 16
        %v1315 = vrot.slane %v1313, 4
        %v1316 = vshll.u32 %v1107, 16
        %v1318 = vrot.slane %v1316, 5
        %v1319 = vor.u32 %v1315, %v1318
        %v1320 = vrot.slane %v1319, 4
        %v1322 = vshll.u32 %v1108, 16
        %v1324 = vrot.slane %v1322, 5
        %v1325 = vsel %vm1143, %v1320, %v1324
        %v1326 = vshrl.u32 %v1108, 16
        %v1328 = vrot.slane %v1326, 4
        %v1329 = vor.u32 %v1328, %v1324
        %v1330 = vrot.slane %v1329, 4
        %v1332 = vshll.u32 %v1132, 16
        %v1334 = vrot.slane %v1332, 5
        %v1335 = vsel %vm1143, %v1330, %v1334
        %v1337 = vshrl.u32 %v1109, 16
        %v1339 = vrot.slane %v1337, 4
        %v1340 = vshll.u32 %v1109, 16
        %v1342 = vrot.slane %v1340, 5
        %v1343 = vor.u32 %v1339, %v1342
        %v1344 = vrot.slane %v1343, 4
        %v1346 = vshll.u32 %v1110, 16
        %v1348 = vrot.slane %v1346, 5
        %v1349 = vsel %vm1143, %v1344, %v1348
        %v1350 = vshrl.u32 %v1110, 16
        %v1352 = vrot.slane %v1350, 4
        %v1353 = vor.u32 %v1352, %v1348
        %v1354 = vrot.slane %v1353, 4
        %v1356 = vshll.u32 %v1133, 16
        %v1358 = vrot.slane %v1356, 5
        %v1359 = vsel %vm1143, %v1354, %v1358
        %v1361 = vshrl.u32 %v1111, 16
        %v1363 = vrot.slane %v1361, 4
        %v1364 = vshll.u32 %v1111, 16
        %v1366 = vrot.slane %v1364, 5
        %v1367 = vor.u32 %v1363, %v1366
        %v1368 = vrot.slane %v1367, 4
        %v1370 = vshll.u32 %v1112, 16
        %v1372 = vrot.slane %v1370, 5
        %v1373 = vsel %vm1143, %v1368, %v1372
        %v1374 = vshrl.u32 %v1112, 16
        %v1376 = vrot.slane %v1374, 4
        %v1377 = vor.u32 %v1376, %v1372
        %v1378 = vrot.slane %v1377, 4
        %v1380 = vshll.u32 %v1134, 16
        %v1382 = vrot.slane %v1380, 5
        %v1383 = vsel %vm1143, %v1378, %v1382
        %v1385 = vshrl.u32 %v1113, 16
        %v1387 = vrot.slane %v1385, 4
        %v1388 = vshll.u32 %v1113, 16
        %v1390 = vrot.slane %v1388, 5
        %v1391 = vor.u32 %v1387, %v1390
        %v1392 = vrot.slane %v1391, 4
        %v1394 = vshll.u32 %v1114, 16
        %v1396 = vrot.slane %v1394, 5
        %v1397 = vsel %vm1143, %v1392, %v1396
        %v1398 = vshrl.u32 %v1114, 16
        %v1400 = vrot.slane %v1398, 4
        %v1401 = vor.u32 %v1400, %v1396
        %v1402 = vrot.slane %v1401, 4
        %v1404 = vshll.u32 %v1135, 16
        %v1406 = vrot.slane %v1404, 5
        %v1407 = vsel %vm1143, %v1402, %v1406
        %v1409 = vshrl.u32 %v1115, 16
        %v1411 = vrot.slane %v1409, 4
        %v1412 = vshll.u32 %v1115, 16
        %v1414 = vrot.slane %v1412, 5
        %v1415 = vor.u32 %v1411, %v1414
        %v1416 = vrot.slane %v1415, 4
        %v1418 = vshll.u32 %v1116, 16
        %v1420 = vrot.slane %v1418, 5
        %v1421 = vsel %vm1143, %v1416, %v1420
        %v1422 = vshrl.u32 %v1116, 16
        %v1424 = vrot.slane %v1422, 4
        %v1425 = vor.u32 %v1424, %v1420
        %v1426 = vrot.slane %v1425, 4
        %v1428 = vshll.u32 %v1136, 16
        %v1430 = vrot.slane %v1428, 5
        %v1431 = vsel %vm1143, %v1426, %v1430
        %v1433 = vshrl.u32 %v1117, 16
        %v1435 = vrot.slane %v1433, 4
        %v1436 = vshll.u32 %v1117, 16
        %v1438 = vrot.slane %v1436, 5
        %v1439 = vor.u32 %v1435, %v1438
        %v1440 = vrot.slane %v1439, 4
        %v1442 = vshll.u32 %v1118, 16
        %v1444 = vrot.slane %v1442, 5
        %v1445 = vsel %vm1143, %v1440, %v1444
        %v1446 = vshrl.u32 %v1118, 16
        %v1448 = vrot.slane %v1446, 4
        %v1449 = vor.u32 %v1448, %v1444
        %v1450 = vrot.slane %v1449, 4
        %v1452 = vshll.u32 %v1137, 16
        %v1454 = vrot.slane %v1452, 5
        %v1455 = vsel %vm1143, %v1450, %v1454
        %v1457 = vshrl.u32 %v1119, 16
        %v1459 = vrot.slane %v1457, 4
        %v1460 = vshll.u32 %v1119, 16
        %v1462 = vrot.slane %v1460, 5
        %v1463 = vor.u32 %v1459, %v1462
        %v1464 = vrot.slane %v1463, 4
        %v1466 = vshll.u32 %v1120, 16
        %v1468 = vrot.slane %v1466, 5
        %v1469 = vsel %vm1143, %v1464, %v1468
        %v1470 = vshrl.u32 %v1120, 16
        %v1472 = vrot.slane %v1470, 4
        %v1473 = vor.u32 %v1472, %v1468
        %v1474 = vrot.slane %v1473, 4
        %v1476 = vshll.u32 %v1138, 16
        %v1478 = vrot.slane %v1476, 5
        %v1479 = vsel %vm1143, %v1474, %v1478
        %v1481 = vshrl.u32 %v1121, 16
        %v1483 = vrot.slane %v1481, 4
        %v1484 = vshll.u32 %v1121, 16
        %v1486 = vrot.slane %v1484, 5
        %v1487 = vor.u32 %v1483, %v1486
        %v1488 = vrot.slane %v1487, 4
        %v1490 = vshll.u32 %v1122, 16
        %v1492 = vrot.slane %v1490, 5
        %v1493 = vsel %vm1143, %v1488, %v1492
        %v1494 = vshrl.u32 %v1122, 16
        %v1496 = vrot.slane %v1494, 4
        %v1497 = vor.u32 %v1496, %v1492
        %v1498 = vrot.slane %v1497, 4
        %v1500 = vshll.u32 %v1139, 16
        %v1502 = vrot.slane %v1500, 5
        %v1503 = vsel %vm1143, %v1498, %v1502
        %v1505 = vshrl.u32 %v1123, 16
        %v1507 = vrot.slane %v1505, 4
        %v1508 = vshll.u32 %v1123, 16
        %v1510 = vrot.slane %v1508, 5
        %v1511 = vor.u32 %v1507, %v1510
        %v1512 = vrot.slane %v1511, 4
        %v1514 = vshll.u32 %v1124, 16
        %v1516 = vrot.slane %v1514, 5
        %v1517 = vsel %vm1143, %v1512, %v1516
        %v1518 = vshrl.u32 %v1124, 16
        %v1520 = vrot.slane %v1518, 4
        %v1521 = vor.u32 %v1520, %v1516
        %v1522 = vrot.slane %v1521, 4
        %v1524 = vshll.u32 %v1140, 16
        %v1526 = vrot.slane %v1524, 5
        %v1527 = vsel %vm1143, %v1522, %v1526
        %v1528 = vld [vmem:[#allocation2] sm:$0xe]
        %v1529 = vld [vmem:[#allocation2 + $0xc] sm:$0xe]
        %v1530 = vld [vmem:[#allocation2 + $0x18] sm:$0xe]
        %v1531 = vld [vmem:[#allocation2 + $0x24] sm:$0xe]
        %v1532 = vld [vmem:[#allocation2 + $0x30] sm:$0xe]
        %v1533 = vld [vmem:[#allocation2 + $0x3c] sm:$0xe]
        %v1534 = vld [vmem:[#allocation2 + $0x48] sm:$0xe]
        %v1535 = vld [vmem:[#allocation2 + $0x54] sm:$0xe]
        %v1536 = vld [vmem:[#allocation2 + $0x60] sm:$0xe]
        %v1537 = vld [vmem:[#allocation2 + $0x6c] sm:$0xe]
        %v1538 = vld [vmem:[#allocation2 + $0x78] sm:$0xe]
        %v1539 = vld [vmem:[#allocation2 + $0x84] sm:$0xe]
        %v1540 = vld [vmem:[#allocation2 + $0x90] sm:$0xe]
        %v1541 = vld [vmem:[#allocation2 + $0x9c] sm:$0xe]
        %v1542 = vld [vmem:[#allocation2 + $0xa8] sm:$0xe]
        %v1543 = vld [vmem:[#allocation2 + $0xb4] sm:$0xe]
        %vm1592 = vcmask 1042432
        %vm1593 = vcmask 1046532
        %vm1594 = vmor %vm1592, %vm1593
        %v1595 = vrot.slane %v1528, 5
        %v1596 = vrot.slane %v1595, 4
        %v1597 = vrot.slane %v1094, 5
        %v1598 = vsel %vm1594, %v1596, %v1597
        %v1599 = vrot.slane %v1597, 4
        %v1600 = vrot.slane %v1125, 5
        %v1601 = vsel %vm1594, %v1599, %v1600
        %v1602 = vrot.slane %v1529, 5
        %v1603 = vrot.slane %v1602, 4
        %v1604 = vrot.slane %v1096, 5
        %v1605 = vsel %vm1594, %v1603, %v1604
        %v1606 = vrot.slane %v1604, 4
        %v1607 = vrot.slane %v1126, 5
        %v1608 = vsel %vm1594, %v1606, %v1607
        %v1609 = vrot.slane %v1530, 5
        %v1610 = vrot.slane %v1609, 4
        %v1611 = vrot.slane %v1098, 5
        %v1612 = vsel %vm1594, %v1610, %v1611
        %v1613 = vrot.slane %v1611, 4
        %v1614 = vrot.slane %v1127, 5
        %v1615 = vsel %vm1594, %v1613, %v1614
        %v1616 = vrot.slane %v1531, 5
        %v1617 = vrot.slane %v1616, 4
        %v1618 = vrot.slane %v1100, 5
        %v1619 = vsel %vm1594, %v1617, %v1618
        %v1620 = vrot.slane %v1618, 4
        %v1621 = vrot.slane %v1128, 5
        %v1622 = vsel %vm1594, %v1620, %v1621
        %v1623 = vrot.slane %v1532, 5
        %v1624 = vrot.slane %v1623, 4
        %v1625 = vrot.slane %v1102, 5
        %v1626 = vsel %vm1594, %v1624, %v1625
        %v1627 = vrot.slane %v1625, 4
        %v1628 = vrot.slane %v1129, 5
        %v1629 = vsel %vm1594, %v1627, %v1628
        %v1630 = vrot.slane %v1533, 5
        %v1631 = vrot.slane %v1630, 4
        %v1632 = vrot.slane %v1104, 5
        %v1633 = vsel %vm1594, %v1631, %v1632
        %v1634 = vrot.slane %v1632, 4
        %v1635 = vrot.slane %v1130, 5
        %v1636 = vsel %vm1594, %v1634, %v1635
        %v1637 = vrot.slane %v1534, 5
        %v1638 = vrot.slane %v1637, 4
        %v1639 = vrot.slane %v1106, 5
        %v1640 = vsel %vm1594, %v1638, %v1639
        %v1641 = vrot.slane %v1639, 4
        %v1642 = vrot.slane %v1131, 5
        %v1643 = vsel %vm1594, %v1641, %v1642
        %v1644 = vrot.slane %v1535, 5
        %v1645 = vrot.slane %v1644, 4
        %v1646 = vrot.slane %v1108, 5
        %v1647 = vsel %vm1594, %v1645, %v1646
        %v1648 = vrot.slane %v1646, 4
        %v1649 = vrot.slane %v1132, 5
        %v1650 = vsel %vm1594, %v1648, %v1649
        %v1651 = vrot.slane %v1536, 5
        %v1652 = vrot.slane %v1651, 4
        %v1653 = vrot.slane %v1110, 5
        %v1654 = vsel %vm1594, %v1652, %v1653
        %v1655 = vrot.slane %v1653, 4
        %v1656 = vrot.slane %v1133, 5
        %v1657 = vsel %vm1594, %v1655, %v1656
        %v1658 = vrot.slane %v1537, 5
        %v1659 = vrot.slane %v1658, 4
        %v1660 = vrot.slane %v1112, 5
        %v1661 = vsel %vm1594, %v1659, %v1660
        %v1662 = vrot.slane %v1660, 4
        %v1663 = vrot.slane %v1134, 5
        %v1664 = vsel %vm1594, %v1662, %v1663
        %v1665 = vrot.slane %v1538, 5
        %v1666 = vrot.slane %v1665, 4
        %v1667 = vrot.slane %v1114, 5
        %v1668 = vsel %vm1594, %v1666, %v1667
        %v1669 = vrot.slane %v1667, 4
        %v1670 = vrot.slane %v1135, 5
        %v1671 = vsel %vm1594, %v1669, %v1670
        %v1672 = vrot.slane %v1539, 5
        %v1673 = vrot.slane %v1672, 4
        %v1674 = vrot.slane %v1116, 5
        %v1675 = vsel %vm1594, %v1673, %v1674
        %v1676 = vrot.slane %v1674, 4
        %v1677 = vrot.slane %v1136, 5
        %v1678 = vsel %vm1594, %v1676, %v1677
        %v1679 = vrot.slane %v1540, 5
        %v1680 = vrot.slane %v1679, 4
        %v1681 = vrot.slane %v1118, 5
        %v1682 = vsel %vm1594, %v1680, %v1681
        %v1683 = vrot.slane %v1681, 4
        %v1684 = vrot.slane %v1137, 5
        %v1685 = vsel %vm1594, %v1683, %v1684
        %v1686 = vrot.slane %v1541, 5
        %v1687 = vrot.slane %v1686, 4
        %v1688 = vrot.slane %v1120, 5
        %v1689 = vsel %vm1594, %v1687, %v1688
        %v1690 = vrot.slane %v1688, 4
        %v1691 = vrot.slane %v1138, 5
        %v1692 = vsel %vm1594, %v1690, %v1691
        %v1693 = vrot.slane %v1542, 5
        %v1694 = vrot.slane %v1693, 4
        %v1695 = vrot.slane %v1122, 5
        %v1696 = vsel %vm1594, %v1694, %v1695
        %v1697 = vrot.slane %v1695, 4
        %v1698 = vrot.slane %v1139, 5
        %v1699 = vsel %vm1594, %v1697, %v1698
        %v1700 = vrot.slane %v1543, 5
        %v1701 = vrot.slane %v1700, 4
        %v1702 = vrot.slane %v1124, 5
        %v1703 = vsel %vm1594, %v1701, %v1702
        %v1704 = vrot.slane %v1702, 4
        %v1705 = vrot.slane %v1140, 5
        %v1706 = vsel %vm1594, %v1704, %v1705
        %v1707 = vld [vmem:[%s978] sm:$0xf]
        %v1708 = vld [vmem:[%s978 + $0x4] sm:$0xf]
        %v1709 = vld [vmem:[%s978 + $0xc] sm:$0xf]
        %v1710 = vld [vmem:[%s978 + $0x10] sm:$0xf]
        %v1711 = vld [vmem:[%s978 + $0x18] sm:$0xf]
        %v1712 = vld [vmem:[%s978 + $0x1c] sm:$0xf]
        %v1713 = vld [vmem:[%s978 + $0x24] sm:$0xf]
        %v1714 = vld [vmem:[%s978 + $0x28] sm:$0xf]
        %v1715 = vld [vmem:[%s978 + $0x30] sm:$0xf]
        %v1716 = vld [vmem:[%s978 + $0x34] sm:$0xf]
        %v1717 = vld [vmem:[%s978 + $0x3c] sm:$0xf]
        %v1718 = vld [vmem:[%s978 + $0x40] sm:$0xf]
        %v1719 = vld [vmem:[%s978 + $0x48] sm:$0xf]
        %v1720 = vld [vmem:[%s978 + $0x4c] sm:$0xf]
        %v1721 = vld [vmem:[%s978 + $0x54] sm:$0xf]
        %v1722 = vld [vmem:[%s978 + $0x58] sm:$0xf]
        %v1723 = vld [vmem:[%s978 + $0x60] sm:$0xf]
        %v1724 = vld [vmem:[%s978 + $0x64] sm:$0xf]
        %v1725 = vld [vmem:[%s978 + $0x6c] sm:$0xf]
        %v1726 = vld [vmem:[%s978 + $0x70] sm:$0xf]
        %v1727 = vld [vmem:[%s978 + $0x78] sm:$0xf]
        %v1728 = vld [vmem:[%s978 + $0x7c] sm:$0xf]
        %v1729 = vld [vmem:[%s978 + $0x84] sm:$0xf]
        %v1730 = vld [vmem:[%s978 + $0x88] sm:$0xf]
        %v1731 = vld [vmem:[%s978 + $0x90] sm:$0xf]
        %v1732 = vld [vmem:[%s978 + $0x94] sm:$0xf]
        %v1733 = vld [vmem:[%s978 + $0x9c] sm:$0xf]
        %v1734 = vld [vmem:[%s978 + $0xa0] sm:$0xf]
        %v1735 = vld [vmem:[%s978 + $0xa8] sm:$0xf]
        %v1736 = vld [vmem:[%s978 + $0xac] sm:$0xf]
        %v1737 = vld [vmem:[%s978 + $0xb4] sm:$0xf]
        %v1738 = vld [vmem:[%s978 + $0xb8] sm:$0xf]
        %v1739 = vld [vmem:[%s978 + $0x8] sm:$0x1]
        %v1740 = vld [vmem:[%s978 + $0x14] sm:$0x1]
        %v1741 = vld [vmem:[%s978 + $0x20] sm:$0x1]
        %v1742 = vld [vmem:[%s978 + $0x2c] sm:$0x1]
        %v1743 = vld [vmem:[%s978 + $0x38] sm:$0x1]
        %v1744 = vld [vmem:[%s978 + $0x44] sm:$0x1]
        %v1745 = vld [vmem:[%s978 + $0x50] sm:$0x1]
        %v1746 = vld [vmem:[%s978 + $0x5c] sm:$0x1]
        %v1747 = vld [vmem:[%s978 + $0x68] sm:$0x1]
        %v1748 = vld [vmem:[%s978 + $0x74] sm:$0x1]
        %v1749 = vld [vmem:[%s978 + $0x80] sm:$0x1]
        %v1750 = vld [vmem:[%s978 + $0x8c] sm:$0x1]
        %v1751 = vld [vmem:[%s978 + $0x98] sm:$0x1]
        %v1752 = vld [vmem:[%s978 + $0xa4] sm:$0x1]
        %v1753 = vld [vmem:[%s978 + $0xb0] sm:$0x1]
        %v1754 = vld [vmem:[%s978 + $0xbc] sm:$0x1]
        %v1756 = vshrl.u32 %v1707, 16
        %v1758 = vrot.slane %v1756, 4
        %v1759 = vshll.u32 %v1707, 16
        %v1761 = vrot.slane %v1759, 5
        %v1762 = vor.u32 %v1758, %v1761
        %v1763 = vrot.slane %v1762, 4
        %v1765 = vshll.u32 %v1708, 16
        %v1767 = vrot.slane %v1765, 5
        %v1768 = vsel %vm1143, %v1763, %v1767
        %v1769 = vshrl.u32 %v1708, 16
        %v1771 = vrot.slane %v1769, 4
        %v1772 = vor.u32 %v1771, %v1767
        %v1773 = vrot.slane %v1772, 4
        %v1775 = vshll.u32 %v1739, 16
        %v1777 = vrot.slane %v1775, 5
        %v1778 = vsel %vm1143, %v1773, %v1777
        %v1780 = vshrl.u32 %v1709, 16
        %v1782 = vrot.slane %v1780, 4
        %v1783 = vshll.u32 %v1709, 16
        %v1785 = vrot.slane %v1783, 5
        %v1786 = vor.u32 %v1782, %v1785
        %v1787 = vrot.slane %v1786, 4
        %v1789 = vshll.u32 %v1710, 16
        %v1791 = vrot.slane %v1789, 5
        %v1792 = vsel %vm1143, %v1787, %v1791
        %v1793 = vshrl.u32 %v1710, 16
        %v1795 = vrot.slane %v1793, 4
        %v1796 = vor.u32 %v1795, %v1791
        %v1797 = vrot.slane %v1796, 4
        %v1799 = vshll.u32 %v1740, 16
        %v1801 = vrot.slane %v1799, 5
        %v1802 = vsel %vm1143, %v1797, %v1801
        %v1804 = vshrl.u32 %v1711, 16
        %v1806 = vrot.slane %v1804, 4
        %v1807 = vshll.u32 %v1711, 16
        %v1809 = vrot.slane %v1807, 5
        %v1810 = vor.u32 %v1806, %v1809
        %v1811 = vrot.slane %v1810, 4
        %v1813 = vshll.u32 %v1712, 16
        %v1815 = vrot.slane %v1813, 5
        %v1816 = vsel %vm1143, %v1811, %v1815
        %v1817 = vshrl.u32 %v1712, 16
        %v1819 = vrot.slane %v1817, 4
        %v1820 = vor.u32 %v1819, %v1815
        %v1821 = vrot.slane %v1820, 4
        %v1823 = vshll.u32 %v1741, 16
        %v1825 = vrot.slane %v1823, 5
        %v1826 = vsel %vm1143, %v1821, %v1825
        %v1828 = vshrl.u32 %v1713, 16
        %v1830 = vrot.slane %v1828, 4
        %v1831 = vshll.u32 %v1713, 16
        %v1833 = vrot.slane %v1831, 5
        %v1834 = vor.u32 %v1830, %v1833
        %v1835 = vrot.slane %v1834, 4
        %v1837 = vshll.u32 %v1714, 16
        %v1839 = vrot.slane %v1837, 5
        %v1840 = vsel %vm1143, %v1835, %v1839
        %v1841 = vshrl.u32 %v1714, 16
        %v1843 = vrot.slane %v1841, 4
        %v1844 = vor.u32 %v1843, %v1839
        %v1845 = vrot.slane %v1844, 4
        %v1847 = vshll.u32 %v1742, 16
        %v1849 = vrot.slane %v1847, 5
        %v1850 = vsel %vm1143, %v1845, %v1849
        %v1852 = vshrl.u32 %v1715, 16
        %v1854 = vrot.slane %v1852, 4
        %v1855 = vshll.u32 %v1715, 16
        %v1857 = vrot.slane %v1855, 5
        %v1858 = vor.u32 %v1854, %v1857
        %v1859 = vrot.slane %v1858, 4
        %v1861 = vshll.u32 %v1716, 16
        %v1863 = vrot.slane %v1861, 5
        %v1864 = vsel %vm1143, %v1859, %v1863
        %v1865 = vshrl.u32 %v1716, 16
        %v1867 = vrot.slane %v1865, 4
        %v1868 = vor.u32 %v1867, %v1863
        %v1869 = vrot.slane %v1868, 4
        %v1871 = vshll.u32 %v1743, 16
        %v1873 = vrot.slane %v1871, 5
        %v1874 = vsel %vm1143, %v1869, %v1873
        %v1876 = vshrl.u32 %v1717, 16
        %v1878 = vrot.slane %v1876, 4
        %v1879 = vshll.u32 %v1717, 16
        %v1881 = vrot.slane %v1879, 5
        %v1882 = vor.u32 %v1878, %v1881
        %v1883 = vrot.slane %v1882, 4
        %v1885 = vshll.u32 %v1718, 16
        %v1887 = vrot.slane %v1885, 5
        %v1888 = vsel %vm1143, %v1883, %v1887
        %v1889 = vshrl.u32 %v1718, 16
        %v1891 = vrot.slane %v1889, 4
        %v1892 = vor.u32 %v1891, %v1887
        %v1893 = vrot.slane %v1892, 4
        %v1895 = vshll.u32 %v1744, 16
        %v1897 = vrot.slane %v1895, 5
        %v1898 = vsel %vm1143, %v1893, %v1897
        %v1900 = vshrl.u32 %v1719, 16
        %v1902 = vrot.slane %v1900, 4
        %v1903 = vshll.u32 %v1719, 16
        %v1905 = vrot.slane %v1903, 5
        %v1906 = vor.u32 %v1902, %v1905
        %v1907 = vrot.slane %v1906, 4
        %v1909 = vshll.u32 %v1720, 16
        %v1911 = vrot.slane %v1909, 5
        %v1912 = vsel %vm1143, %v1907, %v1911
        %v1913 = vshrl.u32 %v1720, 16
        %v1915 = vrot.slane %v1913, 4
        %v1916 = vor.u32 %v1915, %v1911
        %v1917 = vrot.slane %v1916, 4
        %v1919 = vshll.u32 %v1745, 16
        %v1921 = vrot.slane %v1919, 5
        %v1922 = vsel %vm1143, %v1917, %v1921
        %v1924 = vshrl.u32 %v1721, 16
        %v1926 = vrot.slane %v1924, 4
        %v1927 = vshll.u32 %v1721, 16
        %v1929 = vrot.slane %v1927, 5
        %v1930 = vor.u32 %v1926, %v1929
        %v1931 = vrot.slane %v1930, 4
        %v1933 = vshll.u32 %v1722, 16
        %v1935 = vrot.slane %v1933, 5
        %v1936 = vsel %vm1143, %v1931, %v1935
        %v1937 = vshrl.u32 %v1722, 16
        %v1939 = vrot.slane %v1937, 4
        %v1940 = vor.u32 %v1939, %v1935
        %v1941 = vrot.slane %v1940, 4
        %v1943 = vshll.u32 %v1746, 16
        %v1945 = vrot.slane %v1943, 5
        %v1946 = vsel %vm1143, %v1941, %v1945
        %v1948 = vshrl.u32 %v1723, 16
        %v1950 = vrot.slane %v1948, 4
        %v1951 = vshll.u32 %v1723, 16
        %v1953 = vrot.slane %v1951, 5
        %v1954 = vor.u32 %v1950, %v1953
        %v1955 = vrot.slane %v1954, 4
        %v1957 = vshll.u32 %v1724, 16
        %v1959 = vrot.slane %v1957, 5
        %v1960 = vsel %vm1143, %v1955, %v1959
        %v1961 = vshrl.u32 %v1724, 16
        %v1963 = vrot.slane %v1961, 4
        %v1964 = vor.u32 %v1963, %v1959
        %v1965 = vrot.slane %v1964, 4
        %v1967 = vshll.u32 %v1747, 16
        %v1969 = vrot.slane %v1967, 5
        %v1970 = vsel %vm1143, %v1965, %v1969
        %v1972 = vshrl.u32 %v1725, 16
        %v1974 = vrot.slane %v1972, 4
        %v1975 = vshll.u32 %v1725, 16
        %v1977 = vrot.slane %v1975, 5
        %v1978 = vor.u32 %v1974, %v1977
        %v1979 = vrot.slane %v1978, 4
        %v1981 = vshll.u32 %v1726, 16
        %v1983 = vrot.slane %v1981, 5
        %v1984 = vsel %vm1143, %v1979, %v1983
        %v1985 = vshrl.u32 %v1726, 16
        %v1987 = vrot.slane %v1985, 4
        %v1988 = vor.u32 %v1987, %v1983
        %v1989 = vrot.slane %v1988, 4
        %v1991 = vshll.u32 %v1748, 16
        %v1993 = vrot.slane %v1991, 5
        %v1994 = vsel %vm1143, %v1989, %v1993
        %v1996 = vshrl.u32 %v1727, 16
        %v1998 = vrot.slane %v1996, 4
        %v1999 = vshll.u32 %v1727, 16
        %v2001 = vrot.slane %v1999, 5
        %v2002 = vor.u32 %v1998, %v2001
        %v2003 = vrot.slane %v2002, 4
        %v2005 = vshll.u32 %v1728, 16
        %v2007 = vrot.slane %v2005, 5
        %v2008 = vsel %vm1143, %v2003, %v2007
        %v2009 = vshrl.u32 %v1728, 16
        %v2011 = vrot.slane %v2009, 4
        %v2012 = vor.u32 %v2011, %v2007
        %v2013 = vrot.slane %v2012, 4
        %v2015 = vshll.u32 %v1749, 16
        %v2017 = vrot.slane %v2015, 5
        %v2018 = vsel %vm1143, %v2013, %v2017
        %v2020 = vshrl.u32 %v1729, 16
        %v2022 = vrot.slane %v2020, 4
        %v2023 = vshll.u32 %v1729, 16
        %v2025 = vrot.slane %v2023, 5
        %v2026 = vor.u32 %v2022, %v2025
        %v2027 = vrot.slane %v2026, 4
        %v2029 = vshll.u32 %v1730, 16
        %v2031 = vrot.slane %v2029, 5
        %v2032 = vsel %vm1143, %v2027, %v2031
        %v2033 = vshrl.u32 %v1730, 16
        %v2035 = vrot.slane %v2033, 4
        %v2036 = vor.u32 %v2035, %v2031
        %v2037 = vrot.slane %v2036, 4
        %v2039 = vshll.u32 %v1750, 16
        %v2041 = vrot.slane %v2039, 5
        %v2042 = vsel %vm1143, %v2037, %v2041
        %v2044 = vshrl.u32 %v1731, 16
        %v2046 = vrot.slane %v2044, 4
        %v2047 = vshll.u32 %v1731, 16
        %v2049 = vrot.slane %v2047, 5
        %v2050 = vor.u32 %v2046, %v2049
        %v2051 = vrot.slane %v2050, 4
        %v2053 = vshll.u32 %v1732, 16
        %v2055 = vrot.slane %v2053, 5
        %v2056 = vsel %vm1143, %v2051, %v2055
        %v2057 = vshrl.u32 %v1732, 16
        %v2059 = vrot.slane %v2057, 4
        %v2060 = vor.u32 %v2059, %v2055
        %v2061 = vrot.slane %v2060, 4
        %v2063 = vshll.u32 %v1751, 16
        %v2065 = vrot.slane %v2063, 5
        %v2066 = vsel %vm1143, %v2061, %v2065
        %v2068 = vshrl.u32 %v1733, 16
        %v2070 = vrot.slane %v2068, 4
        %v2071 = vshll.u32 %v1733, 16
        %v2073 = vrot.slane %v2071, 5
        %v2074 = vor.u32 %v2070, %v2073
        %v2075 = vrot.slane %v2074, 4
        %v2077 = vshll.u32 %v1734, 16
        %v2079 = vrot.slane %v2077, 5
        %v2080 = vsel %vm1143, %v2075, %v2079
        %v2081 = vshrl.u32 %v1734, 16
        %v2083 = vrot.slane %v2081, 4
        %v2084 = vor.u32 %v2083, %v2079
        %v2085 = vrot.slane %v2084, 4
        %v2087 = vshll.u32 %v1752, 16
        %v2089 = vrot.slane %v2087, 5
        %v2090 = vsel %vm1143, %v2085, %v2089
        %v2092 = vshrl.u32 %v1735, 16
        %v2094 = vrot.slane %v2092, 4
        %v2095 = vshll.u32 %v1735, 16
        %v2097 = vrot.slane %v2095, 5
        %v2098 = vor.u32 %v2094, %v2097
        %v2099 = vrot.slane %v2098, 4
        %v2101 = vshll.u32 %v1736, 16
        %v2103 = vrot.slane %v2101, 5
        %v2104 = vsel %vm1143, %v2099, %v2103
        %v2105 = vshrl.u32 %v1736, 16
        %v2107 = vrot.slane %v2105, 4
        %v2108 = vor.u32 %v2107, %v2103
        %v2109 = vrot.slane %v2108, 4
        %v2111 = vshll.u32 %v1753, 16
        %v2113 = vrot.slane %v2111, 5
        %v2114 = vsel %vm1143, %v2109, %v2113
        %v2116 = vshrl.u32 %v1737, 16
        %v2118 = vrot.slane %v2116, 4
        %v2119 = vshll.u32 %v1737, 16
        %v2121 = vrot.slane %v2119, 5
        %v2122 = vor.u32 %v2118, %v2121
        %v2123 = vrot.slane %v2122, 4
        %v2125 = vshll.u32 %v1738, 16
        %v2127 = vrot.slane %v2125, 5
        %v2128 = vsel %vm1143, %v2123, %v2127
        %v2129 = vshrl.u32 %v1738, 16
        %v2131 = vrot.slane %v2129, 4
        %v2132 = vor.u32 %v2131, %v2127
        %v2133 = vrot.slane %v2132, 4
        %v2135 = vshll.u32 %v1754, 16
        %v2137 = vrot.slane %v2135, 5
        %v2138 = vsel %vm1143, %v2133, %v2137
        %v2139 = vld [vmem:[%s978] sm:$0xe]
        %v2140 = vld [vmem:[%s978 + $0xc] sm:$0xe]
        %v2141 = vld [vmem:[%s978 + $0x18] sm:$0xe]
        %v2142 = vld [vmem:[%s978 + $0x24] sm:$0xe]
        %v2143 = vld [vmem:[%s978 + $0x30] sm:$0xe]
        %v2144 = vld [vmem:[%s978 + $0x3c] sm:$0xe]
        %v2145 = vld [vmem:[%s978 + $0x48] sm:$0xe]
        %v2146 = vld [vmem:[%s978 + $0x54] sm:$0xe]
        %v2147 = vld [vmem:[%s978 + $0x60] sm:$0xe]
        %v2148 = vld [vmem:[%s978 + $0x6c] sm:$0xe]
        %v2149 = vld [vmem:[%s978 + $0x78] sm:$0xe]
        %v2150 = vld [vmem:[%s978 + $0x84] sm:$0xe]
        %v2151 = vld [vmem:[%s978 + $0x90] sm:$0xe]
        %v2152 = vld [vmem:[%s978 + $0x9c] sm:$0xe]
        %v2153 = vld [vmem:[%s978 + $0xa8] sm:$0xe]
        %v2154 = vld [vmem:[%s978 + $0xb4] sm:$0xe]
        %v2203 = vrot.slane %v2139, 5
        %v2204 = vrot.slane %v2203, 4
        %v2205 = vrot.slane %v1708, 5
        %v2206 = vsel %vm1594, %v2204, %v2205
        %v2207 = vrot.slane %v2205, 4
        %v2208 = vrot.slane %v1739, 5
        %v2209 = vsel %vm1594, %v2207, %v2208
        %v2210 = vrot.slane %v2140, 5
        %v2211 = vrot.slane %v2210, 4
        %v2212 = vrot.slane %v1710, 5
        %v2213 = vsel %vm1594, %v2211, %v2212
        %v2214 = vrot.slane %v2212, 4
        %v2215 = vrot.slane %v1740, 5
        %v2216 = vsel %vm1594, %v2214, %v2215
        %v2217 = vrot.slane %v2141, 5
        %v2218 = vrot.slane %v2217, 4
        %v2219 = vrot.slane %v1712, 5
        %v2220 = vsel %vm1594, %v2218, %v2219
        %v2221 = vrot.slane %v2219, 4
        %v2222 = vrot.slane %v1741, 5
        %v2223 = vsel %vm1594, %v2221, %v2222
        %v2224 = vrot.slane %v2142, 5
        %v2225 = vrot.slane %v2224, 4
        %v2226 = vrot.slane %v1714, 5
        %v2227 = vsel %vm1594, %v2225, %v2226
        %v2228 = vrot.slane %v2226, 4
        %v2229 = vrot.slane %v1742, 5
        %v2230 = vsel %vm1594, %v2228, %v2229
        %v2231 = vrot.slane %v2143, 5
        %v2232 = vrot.slane %v2231, 4
        %v2233 = vrot.slane %v1716, 5
        %v2234 = vsel %vm1594, %v2232, %v2233
        %v2235 = vrot.slane %v2233, 4
        %v2236 = vrot.slane %v1743, 5
        %v2237 = vsel %vm1594, %v2235, %v2236
        %v2238 = vrot.slane %v2144, 5
        %v2239 = vrot.slane %v2238, 4
        %v2240 = vrot.slane %v1718, 5
        %v2241 = vsel %vm1594, %v2239, %v2240
        %v2242 = vrot.slane %v2240, 4
        %v2243 = vrot.slane %v1744, 5
        %v2244 = vsel %vm1594, %v2242, %v2243
        %v2245 = vrot.slane %v2145, 5
        %v2246 = vrot.slane %v2245, 4
        %v2247 = vrot.slane %v1720, 5
        %v2248 = vsel %vm1594, %v2246, %v2247
        %v2249 = vrot.slane %v2247, 4
        %v2250 = vrot.slane %v1745, 5
        %v2251 = vsel %vm1594, %v2249, %v2250
        %v2252 = vrot.slane %v2146, 5
        %v2253 = vrot.slane %v2252, 4
        %v2254 = vrot.slane %v1722, 5
        %v2255 = vsel %vm1594, %v2253, %v2254
        %v2256 = vrot.slane %v2254, 4
        %v2257 = vrot.slane %v1746, 5
        %v2258 = vsel %vm1594, %v2256, %v2257
        %v2259 = vrot.slane %v2147, 5
        %v2260 = vrot.slane %v2259, 4
        %v2261 = vrot.slane %v1724, 5
        %v2262 = vsel %vm1594, %v2260, %v2261
        %v2263 = vrot.slane %v2261, 4
        %v2264 = vrot.slane %v1747, 5
        %v2265 = vsel %vm1594, %v2263, %v2264
        %v2266 = vrot.slane %v2148, 5
        %v2267 = vrot.slane %v2266, 4
        %v2268 = vrot.slane %v1726, 5
        %v2269 = vsel %vm1594, %v2267, %v2268
        %v2270 = vrot.slane %v2268, 4
        %v2271 = vrot.slane %v1748, 5
        %v2272 = vsel %vm1594, %v2270, %v2271
        %v2273 = vrot.slane %v2149, 5
        %v2274 = vrot.slane %v2273, 4
        %v2275 = vrot.slane %v1728, 5
        %v2276 = vsel %vm1594, %v2274, %v2275
        %v2277 = vrot.slane %v2275, 4
        %v2278 = vrot.slane %v1749, 5
        %v2279 = vsel %vm1594, %v2277, %v2278
        %v2280 = vrot.slane %v2150, 5
        %v2281 = vrot.slane %v2280, 4
        %v2282 = vrot.slane %v1730, 5
        %v2283 = vsel %vm1594, %v2281, %v2282
        %v2284 = vrot.slane %v2282, 4
        %v2285 = vrot.slane %v1750, 5
        %v2286 = vsel %vm1594, %v2284, %v2285
        %v2287 = vrot.slane %v2151, 5
        %v2288 = vrot.slane %v2287, 4
        %v2289 = vrot.slane %v1732, 5
        %v2290 = vsel %vm1594, %v2288, %v2289
        %v2291 = vrot.slane %v2289, 4
        %v2292 = vrot.slane %v1751, 5
        %v2293 = vsel %vm1594, %v2291, %v2292
        %v2294 = vrot.slane %v2152, 5
        %v2295 = vrot.slane %v2294, 4
        %v2296 = vrot.slane %v1734, 5
        %v2297 = vsel %vm1594, %v2295, %v2296
        %v2298 = vrot.slane %v2296, 4
        %v2299 = vrot.slane %v1752, 5
        %v2300 = vsel %vm1594, %v2298, %v2299
        %v2301 = vrot.slane %v2153, 5
        %v2302 = vrot.slane %v2301, 4
        %v2303 = vrot.slane %v1736, 5
        %v2304 = vsel %vm1594, %v2302, %v2303
        %v2305 = vrot.slane %v2303, 4
        %v2306 = vrot.slane %v1753, 5
        %v2307 = vsel %vm1594, %v2305, %v2306
        %v2308 = vrot.slane %v2154, 5
        %v2309 = vrot.slane %v2308, 4
        %v2310 = vrot.slane %v1738, 5
        %v2311 = vsel %vm1594, %v2309, %v2310
        %v2312 = vrot.slane %v2310, 4
        %v2313 = vrot.slane %v1754, 5
        %v2314 = vsel %vm1594, %v2312, %v2313
        %s2315 = scalar_lea.vmem [#allocation2], 24
        %v2316 = vld [vmem:[%s2315] sm:$0xf]
        %v2317 = vld [vmem:[%s2315 + $0x4] sm:$0xf]
        %v2318 = vld [vmem:[%s2315 + $0xc] sm:$0xf]
        %v2319 = vld [vmem:[%s2315 + $0x10] sm:$0xf]
        %v2320 = vld [vmem:[%s2315 + $0x18] sm:$0xf]
        %v2321 = vld [vmem:[%s2315 + $0x1c] sm:$0xf]
        %v2322 = vld [vmem:[%s2315 + $0x24] sm:$0xf]
        %v2323 = vld [vmem:[%s2315 + $0x28] sm:$0xf]
        %v2324 = vld [vmem:[%s2315 + $0x30] sm:$0xf]
        %v2325 = vld [vmem:[%s2315 + $0x34] sm:$0xf]
        %v2326 = vld [vmem:[%s2315 + $0x3c] sm:$0xf]
        %v2327 = vld [vmem:[%s2315 + $0x40] sm:$0xf]
        %v2328 = vld [vmem:[%s2315 + $0x48] sm:$0xf]
        %v2329 = vld [vmem:[%s2315 + $0x4c] sm:$0xf]
        %v2330 = vld [vmem:[%s2315 + $0x54] sm:$0xf]
        %v2331 = vld [vmem:[%s2315 + $0x58] sm:$0xf]
        %v2332 = vld [vmem:[%s2315 + $0x60] sm:$0xf]
        %v2333 = vld [vmem:[%s2315 + $0x64] sm:$0xf]
        %v2334 = vld [vmem:[%s2315 + $0x6c] sm:$0xf]
        %v2335 = vld [vmem:[%s2315 + $0x70] sm:$0xf]
        %v2336 = vld [vmem:[%s2315 + $0x78] sm:$0xf]
        %v2337 = vld [vmem:[%s2315 + $0x7c] sm:$0xf]
        %v2338 = vld [vmem:[%s2315 + $0x84] sm:$0xf]
        %v2339 = vld [vmem:[%s2315 + $0x88] sm:$0xf]
        %v2340 = vld [vmem:[%s2315 + $0x90] sm:$0xf]
        %v2341 = vld [vmem:[%s2315 + $0x94] sm:$0xf]
        %v2342 = vld [vmem:[%s2315 + $0x9c] sm:$0xf]
        %v2343 = vld [vmem:[%s2315 + $0xa0] sm:$0xf]
        %v2344 = vld [vmem:[%s2315 + $0xa8] sm:$0xf]
        %v2345 = vld [vmem:[%s2315 + $0xac] sm:$0xf]
        %v2346 = vld [vmem:[%s2315 + $0xb4] sm:$0xf]
        %v2347 = vld [vmem:[%s2315 + $0xb8] sm:$0xf]
        %v2348 = vld [vmem:[%s2315 + $0x8] sm:$0x1]
        %v2349 = vld [vmem:[%s2315 + $0x14] sm:$0x1]
        %v2350 = vld [vmem:[%s2315 + $0x20] sm:$0x1]
        %v2351 = vld [vmem:[%s2315 + $0x2c] sm:$0x1]
        %v2352 = vld [vmem:[%s2315 + $0x38] sm:$0x1]
        %v2353 = vld [vmem:[%s2315 + $0x44] sm:$0x1]
        %v2354 = vld [vmem:[%s2315 + $0x50] sm:$0x1]
        %v2355 = vld [vmem:[%s2315 + $0x5c] sm:$0x1]
        %v2356 = vld [vmem:[%s2315 + $0x68] sm:$0x1]
        %v2357 = vld [vmem:[%s2315 + $0x74] sm:$0x1]
        %v2358 = vld [vmem:[%s2315 + $0x80] sm:$0x1]
        %v2359 = vld [vmem:[%s2315 + $0x8c] sm:$0x1]
        %v2360 = vld [vmem:[%s2315 + $0x98] sm:$0x1]
        %v2361 = vld [vmem:[%s2315 + $0xa4] sm:$0x1]
        %v2362 = vld [vmem:[%s2315 + $0xb0] sm:$0x1]
        %v2363 = vld [vmem:[%s2315 + $0xbc] sm:$0x1]
        %v2365 = vshrl.u32 %v2316, 16
        %v2367 = vrot.slane %v2365, 4
        %v2368 = vshll.u32 %v2316, 16
        %v2370 = vrot.slane %v2368, 5
        %v2371 = vor.u32 %v2367, %v2370
        %v2372 = vrot.slane %v2371, 4
        %v2374 = vshll.u32 %v2317, 16
        %v2376 = vrot.slane %v2374, 5
        %v2377 = vsel %vm1143, %v2372, %v2376
        %v2378 = vshrl.u32 %v2317, 16
        %v2380 = vrot.slane %v2378, 4
        %v2381 = vor.u32 %v2380, %v2376
        %v2382 = vrot.slane %v2381, 4
        %v2384 = vshll.u32 %v2348, 16
        %v2386 = vrot.slane %v2384, 5
        %v2387 = vsel %vm1143, %v2382, %v2386
        %v2389 = vshrl.u32 %v2318, 16
        %v2391 = vrot.slane %v2389, 4
        %v2392 = vshll.u32 %v2318, 16
        %v2394 = vrot.slane %v2392, 5
        %v2395 = vor.u32 %v2391, %v2394
        %v2396 = vrot.slane %v2395, 4
        %v2398 = vshll.u32 %v2319, 16
        %v2400 = vrot.slane %v2398, 5
        %v2401 = vsel %vm1143, %v2396, %v2400
        %v2402 = vshrl.u32 %v2319, 16
        %v2404 = vrot.slane %v2402, 4
        %v2405 = vor.u32 %v2404, %v2400
        %v2406 = vrot.slane %v2405, 4
        %v2408 = vshll.u32 %v2349, 16
        %v2410 = vrot.slane %v2408, 5
        %v2411 = vsel %vm1143, %v2406, %v2410
        %v2413 = vshrl.u32 %v2320, 16
        %v2415 = vrot.slane %v2413, 4
        %v2416 = vshll.u32 %v2320, 16
        %v2418 = vrot.slane %v2416, 5
        %v2419 = vor.u32 %v2415, %v2418
        %v2420 = vrot.slane %v2419, 4
        %v2422 = vshll.u32 %v2321, 16
        %v2424 = vrot.slane %v2422, 5
        %v2425 = vsel %vm1143, %v2420, %v2424
        %v2426 = vshrl.u32 %v2321, 16
        %v2428 = vrot.slane %v2426, 4
        %v2429 = vor.u32 %v2428, %v2424
        %v2430 = vrot.slane %v2429, 4
        %v2432 = vshll.u32 %v2350, 16
        %v2434 = vrot.slane %v2432, 5
        %v2435 = vsel %vm1143, %v2430, %v2434
        %v2437 = vshrl.u32 %v2322, 16
        %v2439 = vrot.slane %v2437, 4
        %v2440 = vshll.u32 %v2322, 16
        %v2442 = vrot.slane %v2440, 5
        %v2443 = vor.u32 %v2439, %v2442
        %v2444 = vrot.slane %v2443, 4
        %v2446 = vshll.u32 %v2323, 16
        %v2448 = vrot.slane %v2446, 5
        %v2449 = vsel %vm1143, %v2444, %v2448
        %v2450 = vshrl.u32 %v2323, 16
        %v2452 = vrot.slane %v2450, 4
        %v2453 = vor.u32 %v2452, %v2448
        %v2454 = vrot.slane %v2453, 4
        %v2456 = vshll.u32 %v2351, 16
        %v2458 = vrot.slane %v2456, 5
        %v2459 = vsel %vm1143, %v2454, %v2458
        %v2461 = vshrl.u32 %v2324, 16
        %v2463 = vrot.slane %v2461, 4
        %v2464 = vshll.u32 %v2324, 16
        %v2466 = vrot.slane %v2464, 5
        %v2467 = vor.u32 %v2463, %v2466
        %v2468 = vrot.slane %v2467, 4
        %v2470 = vshll.u32 %v2325, 16
        %v2472 = vrot.slane %v2470, 5
        %v2473 = vsel %vm1143, %v2468, %v2472
        %v2474 = vshrl.u32 %v2325, 16
        %v2476 = vrot.slane %v2474, 4
        %v2477 = vor.u32 %v2476, %v2472
        %v2478 = vrot.slane %v2477, 4
        %v2480 = vshll.u32 %v2352, 16
        %v2482 = vrot.slane %v2480, 5
        %v2483 = vsel %vm1143, %v2478, %v2482
        %v2485 = vshrl.u32 %v2326, 16
        %v2487 = vrot.slane %v2485, 4
        %v2488 = vshll.u32 %v2326, 16
        %v2490 = vrot.slane %v2488, 5
        %v2491 = vor.u32 %v2487, %v2490
        %v2492 = vrot.slane %v2491, 4
        %v2494 = vshll.u32 %v2327, 16
        %v2496 = vrot.slane %v2494, 5
        %v2497 = vsel %vm1143, %v2492, %v2496
        %v2498 = vshrl.u32 %v2327, 16
        %v2500 = vrot.slane %v2498, 4
        %v2501 = vor.u32 %v2500, %v2496
        %v2502 = vrot.slane %v2501, 4
        %v2504 = vshll.u32 %v2353, 16
        %v2506 = vrot.slane %v2504, 5
        %v2507 = vsel %vm1143, %v2502, %v2506
        %v2509 = vshrl.u32 %v2328, 16
        %v2511 = vrot.slane %v2509, 4
        %v2512 = vshll.u32 %v2328, 16
        %v2514 = vrot.slane %v2512, 5
        %v2515 = vor.u32 %v2511, %v2514
        %v2516 = vrot.slane %v2515, 4
        %v2518 = vshll.u32 %v2329, 16
        %v2520 = vrot.slane %v2518, 5
        %v2521 = vsel %vm1143, %v2516, %v2520
        %v2522 = vshrl.u32 %v2329, 16
        %v2524 = vrot.slane %v2522, 4
        %v2525 = vor.u32 %v2524, %v2520
        %v2526 = vrot.slane %v2525, 4
        %v2528 = vshll.u32 %v2354, 16
        %v2530 = vrot.slane %v2528, 5
        %v2531 = vsel %vm1143, %v2526, %v2530
        %v2533 = vshrl.u32 %v2330, 16
        %v2535 = vrot.slane %v2533, 4
        %v2536 = vshll.u32 %v2330, 16
        %v2538 = vrot.slane %v2536, 5
        %v2539 = vor.u32 %v2535, %v2538
        %v2540 = vrot.slane %v2539, 4
        %v2542 = vshll.u32 %v2331, 16
        %v2544 = vrot.slane %v2542, 5
        %v2545 = vsel %vm1143, %v2540, %v2544
        %v2546 = vshrl.u32 %v2331, 16
        %v2548 = vrot.slane %v2546, 4
        %v2549 = vor.u32 %v2548, %v2544
        %v2550 = vrot.slane %v2549, 4
        %v2552 = vshll.u32 %v2355, 16
        %v2554 = vrot.slane %v2552, 5
        %v2555 = vsel %vm1143, %v2550, %v2554
        %v2557 = vshrl.u32 %v2332, 16
        %v2559 = vrot.slane %v2557, 4
        %v2560 = vshll.u32 %v2332, 16
        %v2562 = vrot.slane %v2560, 5
        %v2563 = vor.u32 %v2559, %v2562
        %v2564 = vrot.slane %v2563, 4
        %v2566 = vshll.u32 %v2333, 16
        %v2568 = vrot.slane %v2566, 5
        %v2569 = vsel %vm1143, %v2564, %v2568
        %v2570 = vshrl.u32 %v2333, 16
        %v2572 = vrot.slane %v2570, 4
        %v2573 = vor.u32 %v2572, %v2568
        %v2574 = vrot.slane %v2573, 4
        %v2576 = vshll.u32 %v2356, 16
        %v2578 = vrot.slane %v2576, 5
        %v2579 = vsel %vm1143, %v2574, %v2578
        %v2581 = vshrl.u32 %v2334, 16
        %v2583 = vrot.slane %v2581, 4
        %v2584 = vshll.u32 %v2334, 16
        %v2586 = vrot.slane %v2584, 5
        %v2587 = vor.u32 %v2583, %v2586
        %v2588 = vrot.slane %v2587, 4
        %v2590 = vshll.u32 %v2335, 16
        %v2592 = vrot.slane %v2590, 5
        %v2593 = vsel %vm1143, %v2588, %v2592
        %v2594 = vshrl.u32 %v2335, 16
        %v2596 = vrot.slane %v2594, 4
        %v2597 = vor.u32 %v2596, %v2592
        %v2598 = vrot.slane %v2597, 4
        %v2600 = vshll.u32 %v2357, 16
        %v2602 = vrot.slane %v2600, 5
        %v2603 = vsel %vm1143, %v2598, %v2602
        %v2605 = vshrl.u32 %v2336, 16
        %v2607 = vrot.slane %v2605, 4
        %v2608 = vshll.u32 %v2336, 16
        %v2610 = vrot.slane %v2608, 5
        %v2611 = vor.u32 %v2607, %v2610
        %v2612 = vrot.slane %v2611, 4
        %v2614 = vshll.u32 %v2337, 16
        %v2616 = vrot.slane %v2614, 5
        %v2617 = vsel %vm1143, %v2612, %v2616
        %v2618 = vshrl.u32 %v2337, 16
        %v2620 = vrot.slane %v2618, 4
        %v2621 = vor.u32 %v2620, %v2616
        %v2622 = vrot.slane %v2621, 4
        %v2624 = vshll.u32 %v2358, 16
        %v2626 = vrot.slane %v2624, 5
        %v2627 = vsel %vm1143, %v2622, %v2626
        %v2629 = vshrl.u32 %v2338, 16
        %v2631 = vrot.slane %v2629, 4
        %v2632 = vshll.u32 %v2338, 16
        %v2634 = vrot.slane %v2632, 5
        %v2635 = vor.u32 %v2631, %v2634
        %v2636 = vrot.slane %v2635, 4
        %v2638 = vshll.u32 %v2339, 16
        %v2640 = vrot.slane %v2638, 5
        %v2641 = vsel %vm1143, %v2636, %v2640
        %v2642 = vshrl.u32 %v2339, 16
        %v2644 = vrot.slane %v2642, 4
        %v2645 = vor.u32 %v2644, %v2640
        %v2646 = vrot.slane %v2645, 4
        %v2648 = vshll.u32 %v2359, 16
        %v2650 = vrot.slane %v2648, 5
        %v2651 = vsel %vm1143, %v2646, %v2650
        %v2653 = vshrl.u32 %v2340, 16
        %v2655 = vrot.slane %v2653, 4
        %v2656 = vshll.u32 %v2340, 16
        %v2658 = vrot.slane %v2656, 5
        %v2659 = vor.u32 %v2655, %v2658
        %v2660 = vrot.slane %v2659, 4
        %v2662 = vshll.u32 %v2341, 16
        %v2664 = vrot.slane %v2662, 5
        %v2665 = vsel %vm1143, %v2660, %v2664
        %v2666 = vshrl.u32 %v2341, 16
        %v2668 = vrot.slane %v2666, 4
        %v2669 = vor.u32 %v2668, %v2664
        %v2670 = vrot.slane %v2669, 4
        %v2672 = vshll.u32 %v2360, 16
        %v2674 = vrot.slane %v2672, 5
        %v2675 = vsel %vm1143, %v2670, %v2674
        %v2677 = vshrl.u32 %v2342, 16
        %v2679 = vrot.slane %v2677, 4
        %v2680 = vshll.u32 %v2342, 16
        %v2682 = vrot.slane %v2680, 5
        %v2683 = vor.u32 %v2679, %v2682
        %v2684 = vrot.slane %v2683, 4
        %v2686 = vshll.u32 %v2343, 16
        %v2688 = vrot.slane %v2686, 5
        %v2689 = vsel %vm1143, %v2684, %v2688
        %v2690 = vshrl.u32 %v2343, 16
        %v2692 = vrot.slane %v2690, 4
        %v2693 = vor.u32 %v2692, %v2688
        %v2694 = vrot.slane %v2693, 4
        %v2696 = vshll.u32 %v2361, 16
        %v2698 = vrot.slane %v2696, 5
        %v2699 = vsel %vm1143, %v2694, %v2698
        %v2701 = vshrl.u32 %v2344, 16
        %v2703 = vrot.slane %v2701, 4
        %v2704 = vshll.u32 %v2344, 16
        %v2706 = vrot.slane %v2704, 5
        %v2707 = vor.u32 %v2703, %v2706
        %v2708 = vrot.slane %v2707, 4
        %v2710 = vshll.u32 %v2345, 16
        %v2712 = vrot.slane %v2710, 5
        %v2713 = vsel %vm1143, %v2708, %v2712
        %v2714 = vshrl.u32 %v2345, 16
        %v2716 = vrot.slane %v2714, 4
        %v2717 = vor.u32 %v2716, %v2712
        %v2718 = vrot.slane %v2717, 4
        %v2720 = vshll.u32 %v2362, 16
        %v2722 = vrot.slane %v2720, 5
        %v2723 = vsel %vm1143, %v2718, %v2722
        %v2725 = vshrl.u32 %v2346, 16
        %v2727 = vrot.slane %v2725, 4
        %v2728 = vshll.u32 %v2346, 16
        %v2730 = vrot.slane %v2728, 5
        %v2731 = vor.u32 %v2727, %v2730
        %v2732 = vrot.slane %v2731, 4
        %v2734 = vshll.u32 %v2347, 16
        %v2736 = vrot.slane %v2734, 5
        %v2737 = vsel %vm1143, %v2732, %v2736
        %v2738 = vshrl.u32 %v2347, 16
        %v2740 = vrot.slane %v2738, 4
        %v2741 = vor.u32 %v2740, %v2736
        %v2742 = vrot.slane %v2741, 4
        %v2744 = vshll.u32 %v2363, 16
        %v2746 = vrot.slane %v2744, 5
        %v2747 = vsel %vm1143, %v2742, %v2746
        %v2748 = vld [vmem:[%s2315] sm:$0xe]
        %v2749 = vld [vmem:[%s2315 + $0xc] sm:$0xe]
        %v2750 = vld [vmem:[%s2315 + $0x18] sm:$0xe]
        %v2751 = vld [vmem:[%s2315 + $0x24] sm:$0xe]
        %v2752 = vld [vmem:[%s2315 + $0x30] sm:$0xe]
        %v2753 = vld [vmem:[%s2315 + $0x3c] sm:$0xe]
        %v2754 = vld [vmem:[%s2315 + $0x48] sm:$0xe]
        %v2755 = vld [vmem:[%s2315 + $0x54] sm:$0xe]
        %v2756 = vld [vmem:[%s2315 + $0x60] sm:$0xe]
        %v2757 = vld [vmem:[%s2315 + $0x6c] sm:$0xe]
        %v2758 = vld [vmem:[%s2315 + $0x78] sm:$0xe]
        %v2759 = vld [vmem:[%s2315 + $0x84] sm:$0xe]
        %v2760 = vld [vmem:[%s2315 + $0x90] sm:$0xe]
        %v2761 = vld [vmem:[%s2315 + $0x9c] sm:$0xe]
        %v2762 = vld [vmem:[%s2315 + $0xa8] sm:$0xe]
        %v2763 = vld [vmem:[%s2315 + $0xb4] sm:$0xe]
        %v2812 = vrot.slane %v2748, 5
        %v2813 = vrot.slane %v2812, 4
        %v2814 = vrot.slane %v2317, 5
        %v2815 = vsel %vm1594, %v2813, %v2814
        %v2816 = vrot.slane %v2814, 4
        %v2817 = vrot.slane %v2348, 5
        %v2818 = vsel %vm1594, %v2816, %v2817
        %v2819 = vrot.slane %v2749, 5
        %v2820 = vrot.slane %v2819, 4
        %v2821 = vrot.slane %v2319, 5
        %v2822 = vsel %vm1594, %v2820, %v2821
        %v2823 = vrot.slane %v2821, 4
        %v2824 = vrot.slane %v2349, 5
        %v2825 = vsel %vm1594, %v2823, %v2824
        %v2826 = vrot.slane %v2750, 5
        %v2827 = vrot.slane %v2826, 4
        %v2828 = vrot.slane %v2321, 5
        %v2829 = vsel %vm1594, %v2827, %v2828
        %v2830 = vrot.slane %v2828, 4
        %v2831 = vrot.slane %v2350, 5
        %v2832 = vsel %vm1594, %v2830, %v2831
        %v2833 = vrot.slane %v2751, 5
        %v2834 = vrot.slane %v2833, 4
        %v2835 = vrot.slane %v2323, 5
        %v2836 = vsel %vm1594, %v2834, %v2835
        %v2837 = vrot.slane %v2835, 4
        %v2838 = vrot.slane %v2351, 5
        %v2839 = vsel %vm1594, %v2837, %v2838
        %v2840 = vrot.slane %v2752, 5
        %v2841 = vrot.slane %v2840, 4
        %v2842 = vrot.slane %v2325, 5
        %v2843 = vsel %vm1594, %v2841, %v2842
        %v2844 = vrot.slane %v2842, 4
        %v2845 = vrot.slane %v2352, 5
        %v2846 = vsel %vm1594, %v2844, %v2845
        %v2847 = vrot.slane %v2753, 5
        %v2848 = vrot.slane %v2847, 4
        %v2849 = vrot.slane %v2327, 5
        %v2850 = vsel %vm1594, %v2848, %v2849
        %v2851 = vrot.slane %v2849, 4
        %v2852 = vrot.slane %v2353, 5
        %v2853 = vsel %vm1594, %v2851, %v2852
        %v2854 = vrot.slane %v2754, 5
        %v2855 = vrot.slane %v2854, 4
        %v2856 = vrot.slane %v2329, 5
        %v2857 = vsel %vm1594, %v2855, %v2856
        %v2858 = vrot.slane %v2856, 4
        %v2859 = vrot.slane %v2354, 5
        %v2860 = vsel %vm1594, %v2858, %v2859
        %v2861 = vrot.slane %v2755, 5
        %v2862 = vrot.slane %v2861, 4
        %v2863 = vrot.slane %v2331, 5
        %v2864 = vsel %vm1594, %v2862, %v2863
        %v2865 = vrot.slane %v2863, 4
        %v2866 = vrot.slane %v2355, 5
        %v2867 = vsel %vm1594, %v2865, %v2866
        %v2868 = vrot.slane %v2756, 5
        %v2869 = vrot.slane %v2868, 4
        %v2870 = vrot.slane %v2333, 5
        %v2871 = vsel %vm1594, %v2869, %v2870
        %v2872 = vrot.slane %v2870, 4
        %v2873 = vrot.slane %v2356, 5
        %v2874 = vsel %vm1594, %v2872, %v2873
        %v2875 = vrot.slane %v2757, 5
        %v2876 = vrot.slane %v2875, 4
        %v2877 = vrot.slane %v2335, 5
        %v2878 = vsel %vm1594, %v2876, %v2877
        %v2879 = vrot.slane %v2877, 4
        %v2880 = vrot.slane %v2357, 5
        %v2881 = vsel %vm1594, %v2879, %v2880
        %v2882 = vrot.slane %v2758, 5
        %v2883 = vrot.slane %v2882, 4
        %v2884 = vrot.slane %v2337, 5
        %v2885 = vsel %vm1594, %v2883, %v2884
        %v2886 = vrot.slane %v2884, 4
        %v2887 = vrot.slane %v2358, 5
        %v2888 = vsel %vm1594, %v2886, %v2887
        %v2889 = vrot.slane %v2759, 5
        %v2890 = vrot.slane %v2889, 4
        %v2891 = vrot.slane %v2339, 5
        %v2892 = vsel %vm1594, %v2890, %v2891
        %v2893 = vrot.slane %v2891, 4
        %v2894 = vrot.slane %v2359, 5
        %v2895 = vsel %vm1594, %v2893, %v2894
        %v2896 = vrot.slane %v2760, 5
        %v2897 = vrot.slane %v2896, 4
        %v2898 = vrot.slane %v2341, 5
        %v2899 = vsel %vm1594, %v2897, %v2898
        %v2900 = vrot.slane %v2898, 4
        %v2901 = vrot.slane %v2360, 5
        %v2902 = vsel %vm1594, %v2900, %v2901
        %v2903 = vrot.slane %v2761, 5
        %v2904 = vrot.slane %v2903, 4
        %v2905 = vrot.slane %v2343, 5
        %v2906 = vsel %vm1594, %v2904, %v2905
        %v2907 = vrot.slane %v2905, 4
        %v2908 = vrot.slane %v2361, 5
        %v2909 = vsel %vm1594, %v2907, %v2908
        %v2910 = vrot.slane %v2762, 5
        %v2911 = vrot.slane %v2910, 4
        %v2912 = vrot.slane %v2345, 5
        %v2913 = vsel %vm1594, %v2911, %v2912
        %v2914 = vrot.slane %v2912, 4
        %v2915 = vrot.slane %v2362, 5
        %v2916 = vsel %vm1594, %v2914, %v2915
        %v2917 = vrot.slane %v2763, 5
        %v2918 = vrot.slane %v2917, 4
        %v2919 = vrot.slane %v2347, 5
        %v2920 = vsel %vm1594, %v2918, %v2919
        %v2921 = vrot.slane %v2919, 4
        %v2922 = vrot.slane %v2363, 5
        %v2923 = vsel %vm1594, %v2921, %v2922
        %v2940 = vunpack.c.l.b16 %v1093
        %v2941 = vunpack.c.l.b16 %v1094
        %v2942 = vunpack.c.l.b16 %v1095
        %v2943 = vunpack.c.l.b16 %v1096
        %v2944 = vunpack.c.l.b16 %v1097
        %v2945 = vunpack.c.l.b16 %v1098
        %v2946 = vunpack.c.l.b16 %v1099
        %v2947 = vunpack.c.l.b16 %v1100
        %v2948 = vunpack.c.l.b16 %v1101
        %v2949 = vunpack.c.l.b16 %v1102
        %v2950 = vunpack.c.l.b16 %v1103
        %v2951 = vunpack.c.l.b16 %v1104
        %v2952 = vunpack.c.l.b16 %v1105
        %v2953 = vunpack.c.l.b16 %v1106
        %v2954 = vunpack.c.l.b16 %v1107
        %v2955 = vunpack.c.l.b16 %v1108
        %v2956 = vunpack.c.l.b16 %v1109
        %v2957 = vunpack.c.l.b16 %v1110
        %v2958 = vunpack.c.l.b16 %v1111
        %v2959 = vunpack.c.l.b16 %v1112
        %v2960 = vunpack.c.l.b16 %v1113
        %v2961 = vunpack.c.l.b16 %v1114
        %v2962 = vunpack.c.l.b16 %v1115
        %v2963 = vunpack.c.l.b16 %v1116
        %v2964 = vunpack.c.l.b16 %v1117
        %v2965 = vunpack.c.l.b16 %v1118
        %v2966 = vunpack.c.l.b16 %v1119
        %v2967 = vunpack.c.l.b16 %v1120
        %v2968 = vunpack.c.l.b16 %v1121
        %v2969 = vunpack.c.l.b16 %v1122
        %v2970 = vunpack.c.l.b16 %v1123
        %v2971 = vunpack.c.l.b16 %v1124
        %v2972 = vpack.c.b16 %v2941, %v2940
        %v2973 = vpack.c.b16 %v2943, %v2942
        %v2974 = vpack.c.b16 %v2945, %v2944
        %v2975 = vpack.c.b16 %v2947, %v2946
        %v2976 = vpack.c.b16 %v2949, %v2948
        %v2977 = vpack.c.b16 %v2951, %v2950
        %v2978 = vpack.c.b16 %v2953, %v2952
        %v2979 = vpack.c.b16 %v2955, %v2954
        %v2980 = vpack.c.b16 %v2957, %v2956
        %v2981 = vpack.c.b16 %v2959, %v2958
        %v2982 = vpack.c.b16 %v2961, %v2960
        %v2983 = vpack.c.b16 %v2963, %v2962
        %v2984 = vpack.c.b16 %v2965, %v2964
        %v2985 = vpack.c.b16 %v2967, %v2966
        %v2986 = vpack.c.b16 %v2969, %v2968
        %v2987 = vpack.c.b16 %v2971, %v2970
        %v2988 = vunpack.c.l.b16 %v1157
        %v2989 = vunpack.c.l.b16 %v1167
        %v2990 = vunpack.c.l.b16 %v1181
        %v2991 = vunpack.c.l.b16 %v1191
        %v2992 = vunpack.c.l.b16 %v1205
        %v2993 = vunpack.c.l.b16 %v1215
        %v2994 = vunpack.c.l.b16 %v1229
        %v2995 = vunpack.c.l.b16 %v1239
        %v2996 = vunpack.c.l.b16 %v1253
        %v2997 = vunpack.c.l.b16 %v1263
        %v2998 = vunpack.c.l.b16 %v1277
        %v2999 = vunpack.c.l.b16 %v1287
        %v3000 = vunpack.c.l.b16 %v1301
        %v3001 = vunpack.c.l.b16 %v1311
        %v3002 = vunpack.c.l.b16 %v1325
        %v3003 = vunpack.c.l.b16 %v1335
        %v3004 = vunpack.c.l.b16 %v1349
        %v3005 = vunpack.c.l.b16 %v1359
        %v3006 = vunpack.c.l.b16 %v1373
        %v3007 = vunpack.c.l.b16 %v1383
        %v3008 = vunpack.c.l.b16 %v1397
        %v3009 = vunpack.c.l.b16 %v1407
        %v3010 = vunpack.c.l.b16 %v1421
        %v3011 = vunpack.c.l.b16 %v1431
        %v3012 = vunpack.c.l.b16 %v1445
        %v3013 = vunpack.c.l.b16 %v1455
        %v3014 = vunpack.c.l.b16 %v1469
        %v3015 = vunpack.c.l.b16 %v1479
        %v3016 = vunpack.c.l.b16 %v1493
        %v3017 = vunpack.c.l.b16 %v1503
        %v3018 = vunpack.c.l.b16 %v1517
        %v3019 = vunpack.c.l.b16 %v1527
        %v3020 = vpack.c.b16 %v2989, %v2988
        %v3021 = vpack.c.b16 %v2991, %v2990
        %v3022 = vpack.c.b16 %v2993, %v2992
        %v3023 = vpack.c.b16 %v2995, %v2994
        %v3024 = vpack.c.b16 %v2997, %v2996
        %v3025 = vpack.c.b16 %v2999, %v2998
        %v3026 = vpack.c.b16 %v3001, %v3000
        %v3027 = vpack.c.b16 %v3003, %v3002
        %v3028 = vpack.c.b16 %v3005, %v3004
        %v3029 = vpack.c.b16 %v3007, %v3006
        %v3030 = vpack.c.b16 %v3009, %v3008
        %v3031 = vpack.c.b16 %v3011, %v3010
        %v3032 = vpack.c.b16 %v3013, %v3012
        %v3033 = vpack.c.b16 %v3015, %v3014
        %v3034 = vpack.c.b16 %v3017, %v3016
        %v3035 = vpack.c.b16 %v3019, %v3018
        %3036 = vrot.lane.b32.xlu0 %v3020, 32
        %v3037 = vpop.permute.xlu0 %3036
        %3038 = vrot.lane.b32.xlu0 %v3021, 32
        %v3039 = vpop.permute.xlu0 %3038
        %3040 = vrot.lane.b32.xlu0 %v3022, 32
        %v3041 = vpop.permute.xlu0 %3040
        %3042 = vrot.lane.b32.xlu0 %v3023, 32
        %v3043 = vpop.permute.xlu0 %3042
        %3044 = vrot.lane.b32.xlu0 %v3024, 32
        %v3045 = vpop.permute.xlu0 %3044
        %3046 = vrot.lane.b32.xlu0 %v3025, 32
        %v3047 = vpop.permute.xlu0 %3046
        %3048 = vrot.lane.b32.xlu0 %v3026, 32
        %v3049 = vpop.permute.xlu0 %3048
        %3050 = vrot.lane.b32.xlu0 %v3027, 32
        %v3051 = vpop.permute.xlu0 %3050
        %3052 = vrot.lane.b32.xlu0 %v3028, 32
        %v3053 = vpop.permute.xlu0 %3052
        %3054 = vrot.lane.b32.xlu0 %v3029, 32
        %v3055 = vpop.permute.xlu0 %3054
        %3056 = vrot.lane.b32.xlu0 %v3030, 32
        %v3057 = vpop.permute.xlu0 %3056
        %3058 = vrot.lane.b32.xlu0 %v3031, 32
        %v3059 = vpop.permute.xlu0 %3058
        %3060 = vrot.lane.b32.xlu0 %v3032, 32
        %v3061 = vpop.permute.xlu0 %3060
        %3062 = vrot.lane.b32.xlu0 %v3033, 32
        %v3063 = vpop.permute.xlu0 %3062
        %3064 = vrot.lane.b32.xlu0 %v3034, 32
        %v3065 = vpop.permute.xlu0 %3064
        %3066 = vrot.lane.b32.xlu0 %v3035, 32
        %v3067 = vpop.permute.xlu0 %3066
        %v3068 = vunpack.c.l.b16 %v1598
        %v3069 = vunpack.c.l.b16 %v1601
        %v3070 = vunpack.c.l.b16 %v1605
        %v3071 = vunpack.c.l.b16 %v1608
        %v3072 = vunpack.c.l.b16 %v1612
        %v3073 = vunpack.c.l.b16 %v1615
        %v3074 = vunpack.c.l.b16 %v1619
        %v3075 = vunpack.c.l.b16 %v1622
        %v3076 = vunpack.c.l.b16 %v1626
        %v3077 = vunpack.c.l.b16 %v1629
        %v3078 = vunpack.c.l.b16 %v1633
        %v3079 = vunpack.c.l.b16 %v1636
        %v3080 = vunpack.c.l.b16 %v1640
        %v3081 = vunpack.c.l.b16 %v1643
        %v3082 = vunpack.c.l.b16 %v1647
        %v3083 = vunpack.c.l.b16 %v1650
        %v3084 = vunpack.c.l.b16 %v1654
        %v3085 = vunpack.c.l.b16 %v1657
        %v3086 = vunpack.c.l.b16 %v1661
        %v3087 = vunpack.c.l.b16 %v1664
        %v3088 = vunpack.c.l.b16 %v1668
        %v3089 = vunpack.c.l.b16 %v1671
        %v3090 = vunpack.c.l.b16 %v1675
        %v3091 = vunpack.c.l.b16 %v1678
        %v3092 = vunpack.c.l.b16 %v1682
        %v3093 = vunpack.c.l.b16 %v1685
        %v3094 = vunpack.c.l.b16 %v1689
        %v3095 = vunpack.c.l.b16 %v1692
        %v3096 = vunpack.c.l.b16 %v1696
        %v3097 = vunpack.c.l.b16 %v1699
        %v3098 = vunpack.c.l.b16 %v1703
        %v3099 = vunpack.c.l.b16 %v1706
        %v3100 = vpack.c.b16 %v3069, %v3068
        %v3101 = vpack.c.b16 %v3071, %v3070
        %v3102 = vpack.c.b16 %v3073, %v3072
        %v3103 = vpack.c.b16 %v3075, %v3074
        %v3104 = vpack.c.b16 %v3077, %v3076
        %v3105 = vpack.c.b16 %v3079, %v3078
        %v3106 = vpack.c.b16 %v3081, %v3080
        %v3107 = vpack.c.b16 %v3083, %v3082
        %v3108 = vpack.c.b16 %v3085, %v3084
        %v3109 = vpack.c.b16 %v3087, %v3086
        %v3110 = vpack.c.b16 %v3089, %v3088
        %v3111 = vpack.c.b16 %v3091, %v3090
        %v3112 = vpack.c.b16 %v3093, %v3092
        %v3113 = vpack.c.b16 %v3095, %v3094
        %v3114 = vpack.c.b16 %v3097, %v3096
        %v3115 = vpack.c.b16 %v3099, %v3098
        %3116 = vrot.lane.b32.xlu0 %v3100, 64
        %v3117 = vpop.permute.xlu0 %3116
        %3118 = vrot.lane.b32.xlu0 %v3101, 64
        %v3119 = vpop.permute.xlu0 %3118
        %3120 = vrot.lane.b32.xlu0 %v3102, 64
        %v3121 = vpop.permute.xlu0 %3120
        %3122 = vrot.lane.b32.xlu0 %v3103, 64
        %v3123 = vpop.permute.xlu0 %3122
        %3124 = vrot.lane.b32.xlu0 %v3104, 64
        %v3125 = vpop.permute.xlu0 %3124
        %3126 = vrot.lane.b32.xlu0 %v3105, 64
        %v3127 = vpop.permute.xlu0 %3126
        %3128 = vrot.lane.b32.xlu0 %v3106, 64
        %v3129 = vpop.permute.xlu0 %3128
        %3130 = vrot.lane.b32.xlu0 %v3107, 64
        %v3131 = vpop.permute.xlu0 %3130
        %3132 = vrot.lane.b32.xlu0 %v3108, 64
        %v3133 = vpop.permute.xlu0 %3132
        %3134 = vrot.lane.b32.xlu0 %v3109, 64
        %v3135 = vpop.permute.xlu0 %3134
        %3136 = vrot.lane.b32.xlu0 %v3110, 64
        %v3137 = vpop.permute.xlu0 %3136
        %3138 = vrot.lane.b32.xlu0 %v3111, 64
        %v3139 = vpop.permute.xlu0 %3138
        %3140 = vrot.lane.b32.xlu0 %v3112, 64
        %v3141 = vpop.permute.xlu0 %3140
        %3142 = vrot.lane.b32.xlu0 %v3113, 64
        %v3143 = vpop.permute.xlu0 %3142
        %3144 = vrot.lane.b32.xlu0 %v3114, 64
        %v3145 = vpop.permute.xlu0 %3144
        %3146 = vrot.lane.b32.xlu0 %v3115, 64
        %v3147 = vpop.permute.xlu0 %3146
        %v3164 = vunpack.c.l.b16 %v1707
        %v3165 = vunpack.c.l.b16 %v1708
        %v3166 = vunpack.c.l.b16 %v1709
        %v3167 = vunpack.c.l.b16 %v1710
        %v3168 = vunpack.c.l.b16 %v1711
        %v3169 = vunpack.c.l.b16 %v1712
        %v3170 = vunpack.c.l.b16 %v1713
        %v3171 = vunpack.c.l.b16 %v1714
        %v3172 = vunpack.c.l.b16 %v1715
        %v3173 = vunpack.c.l.b16 %v1716
        %v3174 = vunpack.c.l.b16 %v1717
        %v3175 = vunpack.c.l.b16 %v1718
        %v3176 = vunpack.c.l.b16 %v1719
        %v3177 = vunpack.c.l.b16 %v1720
        %v3178 = vunpack.c.l.b16 %v1721
        %v3179 = vunpack.c.l.b16 %v1722
        %v3180 = vunpack.c.l.b16 %v1723
        %v3181 = vunpack.c.l.b16 %v1724
        %v3182 = vunpack.c.l.b16 %v1725
        %v3183 = vunpack.c.l.b16 %v1726
        %v3184 = vunpack.c.l.b16 %v1727
        %v3185 = vunpack.c.l.b16 %v1728
        %v3186 = vunpack.c.l.b16 %v1729
        %v3187 = vunpack.c.l.b16 %v1730
        %v3188 = vunpack.c.l.b16 %v1731
        %v3189 = vunpack.c.l.b16 %v1732
        %v3190 = vunpack.c.l.b16 %v1733
        %v3191 = vunpack.c.l.b16 %v1734
        %v3192 = vunpack.c.l.b16 %v1735
        %v3193 = vunpack.c.l.b16 %v1736
        %v3194 = vunpack.c.l.b16 %v1737
        %v3195 = vunpack.c.l.b16 %v1738
        %v3196 = vpack.c.b16 %v3165, %v3164
        %v3197 = vpack.c.b16 %v3167, %v3166
        %v3198 = vpack.c.b16 %v3169, %v3168
        %v3199 = vpack.c.b16 %v3171, %v3170
        %v3200 = vpack.c.b16 %v3173, %v3172
        %v3201 = vpack.c.b16 %v3175, %v3174
        %v3202 = vpack.c.b16 %v3177, %v3176
        %v3203 = vpack.c.b16 %v3179, %v3178
        %v3204 = vpack.c.b16 %v3181, %v3180
        %v3205 = vpack.c.b16 %v3183, %v3182
        %v3206 = vpack.c.b16 %v3185, %v3184
        %v3207 = vpack.c.b16 %v3187, %v3186
        %v3208 = vpack.c.b16 %v3189, %v3188
        %v3209 = vpack.c.b16 %v3191, %v3190
        %v3210 = vpack.c.b16 %v3193, %v3192
        %v3211 = vpack.c.b16 %v3195, %v3194
        %3212 = vrot.lane.b32.xlu0 %v3196, 96
        %v3213 = vpop.permute.xlu0 %3212
        %3214 = vrot.lane.b32.xlu0 %v3197, 96
        %v3215 = vpop.permute.xlu0 %3214
        %3216 = vrot.lane.b32.xlu0 %v3198, 96
        %v3217 = vpop.permute.xlu0 %3216
        %3218 = vrot.lane.b32.xlu0 %v3199, 96
        %v3219 = vpop.permute.xlu0 %3218
        %3220 = vrot.lane.b32.xlu0 %v3200, 96
        %v3221 = vpop.permute.xlu0 %3220
        %3222 = vrot.lane.b32.xlu0 %v3201, 96
        %v3223 = vpop.permute.xlu0 %3222
        %3224 = vrot.lane.b32.xlu0 %v3202, 96
        %v3225 = vpop.permute.xlu0 %3224
        %3226 = vrot.lane.b32.xlu0 %v3203, 96
        %v3227 = vpop.permute.xlu0 %3226
        %3228 = vrot.lane.b32.xlu0 %v3204, 96
        %v3229 = vpop.permute.xlu0 %3228
        %3230 = vrot.lane.b32.xlu0 %v3205, 96
        %v3231 = vpop.permute.xlu0 %3230
        %3232 = vrot.lane.b32.xlu0 %v3206, 96
        %v3233 = vpop.permute.xlu0 %3232
        %3234 = vrot.lane.b32.xlu0 %v3207, 96
        %v3235 = vpop.permute.xlu0 %3234
        %3236 = vrot.lane.b32.xlu0 %v3208, 96
        %v3237 = vpop.permute.xlu0 %3236
        %3238 = vrot.lane.b32.xlu0 %v3209, 96
        %v3239 = vpop.permute.xlu0 %3238
        %3240 = vrot.lane.b32.xlu0 %v3210, 96
        %v3241 = vpop.permute.xlu0 %3240
        %3242 = vrot.lane.b32.xlu0 %v3211, 96
        %v3243 = vpop.permute.xlu0 %3242
        %v3244 = vunpack.c.l.b16 %v1768
        %v3245 = vunpack.c.l.b16 %v1778
        %v3246 = vunpack.c.l.b16 %v1792
        %v3247 = vunpack.c.l.b16 %v1802
        %v3248 = vunpack.c.l.b16 %v1816
        %v3249 = vunpack.c.l.b16 %v1826
        %v3250 = vunpack.c.l.b16 %v1840
        %v3251 = vunpack.c.l.b16 %v1850
        %v3252 = vunpack.c.l.b16 %v1864
        %v3253 = vunpack.c.l.b16 %v1874
        %v3254 = vunpack.c.l.b16 %v1888
        %v3255 = vunpack.c.l.b16 %v1898
        %v3256 = vunpack.c.l.b16 %v1912
        %v3257 = vunpack.c.l.b16 %v1922
        %v3258 = vunpack.c.l.b16 %v1936
        %v3259 = vunpack.c.l.b16 %v1946
        %v3260 = vunpack.c.l.b16 %v1960
        %v3261 = vunpack.c.l.b16 %v1970
        %v3262 = vunpack.c.l.b16 %v1984
        %v3263 = vunpack.c.l.b16 %v1994
        %v3264 = vunpack.c.l.b16 %v2008
        %v3265 = vunpack.c.l.b16 %v2018
        %v3266 = vunpack.c.l.b16 %v2032
        %v3267 = vunpack.c.l.b16 %v2042
        %v3268 = vunpack.c.l.b16 %v2056
        %v3269 = vunpack.c.l.b16 %v2066
        %v3270 = vunpack.c.l.b16 %v2080
        %v3271 = vunpack.c.l.b16 %v2090
        %v3272 = vunpack.c.l.b16 %v2104
        %v3273 = vunpack.c.l.b16 %v2114
        %v3274 = vunpack.c.l.b16 %v2128
        %v3275 = vunpack.c.l.b16 %v2138
        %v3276 = vpack.c.b16 %v3245, %v3244
        %v3277 = vpack.c.b16 %v3247, %v3246
        %v3278 = vpack.c.b16 %v3249, %v3248
        %v3279 = vpack.c.b16 %v3251, %v3250
        %v3280 = vpack.c.b16 %v3253, %v3252
        %v3281 = vpack.c.b16 %v3255, %v3254
        %v3282 = vpack.c.b16 %v3257, %v3256
        %v3283 = vpack.c.b16 %v3259, %v3258
        %v3284 = vpack.c.b16 %v3261, %v3260
        %v3285 = vpack.c.b16 %v3263, %v3262
        %v3286 = vpack.c.b16 %v3265, %v3264
        %v3287 = vpack.c.b16 %v3267, %v3266
        %v3288 = vpack.c.b16 %v3269, %v3268
        %v3289 = vpack.c.b16 %v3271, %v3270
        %v3290 = vpack.c.b16 %v3273, %v3272
        %v3291 = vpack.c.b16 %v3275, %v3274
        %v3292 = vunpack.c.l.b16 %v2206
        %v3293 = vunpack.c.l.b16 %v2209
        %v3294 = vunpack.c.l.b16 %v2213
        %v3295 = vunpack.c.l.b16 %v2216
        %v3296 = vunpack.c.l.b16 %v2220
        %v3297 = vunpack.c.l.b16 %v2223
        %v3298 = vunpack.c.l.b16 %v2227
        %v3299 = vunpack.c.l.b16 %v2230
        %v3300 = vunpack.c.l.b16 %v2234
        %v3301 = vunpack.c.l.b16 %v2237
        %v3302 = vunpack.c.l.b16 %v2241
        %v3303 = vunpack.c.l.b16 %v2244
        %v3304 = vunpack.c.l.b16 %v2248
        %v3305 = vunpack.c.l.b16 %v2251
        %v3306 = vunpack.c.l.b16 %v2255
        %v3307 = vunpack.c.l.b16 %v2258
        %v3308 = vunpack.c.l.b16 %v2262
        %v3309 = vunpack.c.l.b16 %v2265
        %v3310 = vunpack.c.l.b16 %v2269
        %v3311 = vunpack.c.l.b16 %v2272
        %v3312 = vunpack.c.l.b16 %v2276
        %v3313 = vunpack.c.l.b16 %v2279
        %v3314 = vunpack.c.l.b16 %v2283
        %v3315 = vunpack.c.l.b16 %v2286
        %v3316 = vunpack.c.l.b16 %v2290
        %v3317 = vunpack.c.l.b16 %v2293
        %v3318 = vunpack.c.l.b16 %v2297
        %v3319 = vunpack.c.l.b16 %v2300
        %v3320 = vunpack.c.l.b16 %v2304
        %v3321 = vunpack.c.l.b16 %v2307
        %v3322 = vunpack.c.l.b16 %v2311
        %v3323 = vunpack.c.l.b16 %v2314
        %v3324 = vpack.c.b16 %v3293, %v3292
        %v3325 = vpack.c.b16 %v3295, %v3294
        %v3326 = vpack.c.b16 %v3297, %v3296
        %v3327 = vpack.c.b16 %v3299, %v3298
        %v3328 = vpack.c.b16 %v3301, %v3300
        %v3329 = vpack.c.b16 %v3303, %v3302
        %v3330 = vpack.c.b16 %v3305, %v3304
        %v3331 = vpack.c.b16 %v3307, %v3306
        %v3332 = vpack.c.b16 %v3309, %v3308
        %v3333 = vpack.c.b16 %v3311, %v3310
        %v3334 = vpack.c.b16 %v3313, %v3312
        %v3335 = vpack.c.b16 %v3315, %v3314
        %v3336 = vpack.c.b16 %v3317, %v3316
        %v3337 = vpack.c.b16 %v3319, %v3318
        %v3338 = vpack.c.b16 %v3321, %v3320
        %v3339 = vpack.c.b16 %v3323, %v3322
        %3340 = vrot.lane.b32.xlu0 %v3324, 32
        %v3341 = vpop.permute.xlu0 %3340
        %3342 = vrot.lane.b32.xlu0 %v3325, 32
        %v3343 = vpop.permute.xlu0 %3342
        %3344 = vrot.lane.b32.xlu0 %v3326, 32
        %v3345 = vpop.permute.xlu0 %3344
        %3346 = vrot.lane.b32.xlu0 %v3327, 32
        %v3347 = vpop.permute.xlu0 %3346
        %3348 = vrot.lane.b32.xlu0 %v3328, 32
        %v3349 = vpop.permute.xlu0 %3348
        %3350 = vrot.lane.b32.xlu0 %v3329, 32
        %v3351 = vpop.permute.xlu0 %3350
        %3352 = vrot.lane.b32.xlu0 %v3330, 32
        %v3353 = vpop.permute.xlu0 %3352
        %3354 = vrot.lane.b32.xlu0 %v3331, 32
        %v3355 = vpop.permute.xlu0 %3354
        %3356 = vrot.lane.b32.xlu0 %v3332, 32
        %v3357 = vpop.permute.xlu0 %3356
        %3358 = vrot.lane.b32.xlu0 %v3333, 32
        %v3359 = vpop.permute.xlu0 %3358
        %3360 = vrot.lane.b32.xlu0 %v3334, 32
        %v3361 = vpop.permute.xlu0 %3360
        %3362 = vrot.lane.b32.xlu0 %v3335, 32
        %v3363 = vpop.permute.xlu0 %3362
        %3364 = vrot.lane.b32.xlu0 %v3336, 32
        %v3365 = vpop.permute.xlu0 %3364
        %3366 = vrot.lane.b32.xlu0 %v3337, 32
        %v3367 = vpop.permute.xlu0 %3366
        %3368 = vrot.lane.b32.xlu0 %v3338, 32
        %v3369 = vpop.permute.xlu0 %3368
        %3370 = vrot.lane.b32.xlu0 %v3339, 32
        %v3371 = vpop.permute.xlu0 %3370
        %v3388 = vunpack.c.l.b16 %v2316
        %v3389 = vunpack.c.l.b16 %v2317
        %v3390 = vunpack.c.l.b16 %v2318
        %v3391 = vunpack.c.l.b16 %v2319
        %v3392 = vunpack.c.l.b16 %v2320
        %v3393 = vunpack.c.l.b16 %v2321
        %v3394 = vunpack.c.l.b16 %v2322
        %v3395 = vunpack.c.l.b16 %v2323
        %v3396 = vunpack.c.l.b16 %v2324
        %v3397 = vunpack.c.l.b16 %v2325
        %v3398 = vunpack.c.l.b16 %v2326
        %v3399 = vunpack.c.l.b16 %v2327
        %v3400 = vunpack.c.l.b16 %v2328
        %v3401 = vunpack.c.l.b16 %v2329
        %v3402 = vunpack.c.l.b16 %v2330
        %v3403 = vunpack.c.l.b16 %v2331
        %v3404 = vunpack.c.l.b16 %v2332
        %v3405 = vunpack.c.l.b16 %v2333
        %v3406 = vunpack.c.l.b16 %v2334
        %v3407 = vunpack.c.l.b16 %v2335
        %v3408 = vunpack.c.l.b16 %v2336
        %v3409 = vunpack.c.l.b16 %v2337
        %v3410 = vunpack.c.l.b16 %v2338
        %v3411 = vunpack.c.l.b16 %v2339
        %v3412 = vunpack.c.l.b16 %v2340
        %v3413 = vunpack.c.l.b16 %v2341
        %v3414 = vunpack.c.l.b16 %v2342
        %v3415 = vunpack.c.l.b16 %v2343
        %v3416 = vunpack.c.l.b16 %v2344
        %v3417 = vunpack.c.l.b16 %v2345
        %v3418 = vunpack.c.l.b16 %v2346
        %v3419 = vunpack.c.l.b16 %v2347
        %v3420 = vpack.c.b16 %v3389, %v3388
        %v3421 = vpack.c.b16 %v3391, %v3390
        %v3422 = vpack.c.b16 %v3393, %v3392
        %v3423 = vpack.c.b16 %v3395, %v3394
        %v3424 = vpack.c.b16 %v3397, %v3396
        %v3425 = vpack.c.b16 %v3399, %v3398
        %v3426 = vpack.c.b16 %v3401, %v3400
        %v3427 = vpack.c.b16 %v3403, %v3402
        %v3428 = vpack.c.b16 %v3405, %v3404
        %v3429 = vpack.c.b16 %v3407, %v3406
        %v3430 = vpack.c.b16 %v3409, %v3408
        %v3431 = vpack.c.b16 %v3411, %v3410
        %v3432 = vpack.c.b16 %v3413, %v3412
        %v3433 = vpack.c.b16 %v3415, %v3414
        %v3434 = vpack.c.b16 %v3417, %v3416
        %v3435 = vpack.c.b16 %v3419, %v3418
        %3436 = vrot.lane.b32.xlu0 %v3420, 64
        %v3437 = vpop.permute.xlu0 %3436
        %3438 = vrot.lane.b32.xlu0 %v3421, 64
        %v3439 = vpop.permute.xlu0 %3438
        %3440 = vrot.lane.b32.xlu0 %v3422, 64
        %v3441 = vpop.permute.xlu0 %3440
        %3442 = vrot.lane.b32.xlu0 %v3423, 64
        %v3443 = vpop.permute.xlu0 %3442
        %3444 = vrot.lane.b32.xlu0 %v3424, 64
        %v3445 = vpop.permute.xlu0 %3444
        %3446 = vrot.lane.b32.xlu0 %v3425, 64
        %v3447 = vpop.permute.xlu0 %3446
        %3448 = vrot.lane.b32.xlu0 %v3426, 64
        %v3449 = vpop.permute.xlu0 %3448
        %3450 = vrot.lane.b32.xlu0 %v3427, 64
        %v3451 = vpop.permute.xlu0 %3450
        %3452 = vrot.lane.b32.xlu0 %v3428, 64
        %v3453 = vpop.permute.xlu0 %3452
        %3454 = vrot.lane.b32.xlu0 %v3429, 64
        %v3455 = vpop.permute.xlu0 %3454
        %3456 = vrot.lane.b32.xlu0 %v3430, 64
        %v3457 = vpop.permute.xlu0 %3456
        %3458 = vrot.lane.b32.xlu0 %v3431, 64
        %v3459 = vpop.permute.xlu0 %3458
        %3460 = vrot.lane.b32.xlu0 %v3432, 64
        %v3461 = vpop.permute.xlu0 %3460
        %3462 = vrot.lane.b32.xlu0 %v3433, 64
        %v3463 = vpop.permute.xlu0 %3462
        %3464 = vrot.lane.b32.xlu0 %v3434, 64
        %v3465 = vpop.permute.xlu0 %3464
        %3466 = vrot.lane.b32.xlu0 %v3435, 64
        %v3467 = vpop.permute.xlu0 %3466
        %v3468 = vunpack.c.l.b16 %v2377
        %v3469 = vunpack.c.l.b16 %v2387
        %v3470 = vunpack.c.l.b16 %v2401
        %v3471 = vunpack.c.l.b16 %v2411
        %v3472 = vunpack.c.l.b16 %v2425
        %v3473 = vunpack.c.l.b16 %v2435
        %v3474 = vunpack.c.l.b16 %v2449
        %v3475 = vunpack.c.l.b16 %v2459
        %v3476 = vunpack.c.l.b16 %v2473
        %v3477 = vunpack.c.l.b16 %v2483
        %v3478 = vunpack.c.l.b16 %v2497
        %v3479 = vunpack.c.l.b16 %v2507
        %v3480 = vunpack.c.l.b16 %v2521
        %v3481 = vunpack.c.l.b16 %v2531
        %v3482 = vunpack.c.l.b16 %v2545
        %v3483 = vunpack.c.l.b16 %v2555
        %v3484 = vunpack.c.l.b16 %v2569
        %v3485 = vunpack.c.l.b16 %v2579
        %v3486 = vunpack.c.l.b16 %v2593
        %v3487 = vunpack.c.l.b16 %v2603
        %v3488 = vunpack.c.l.b16 %v2617
        %v3489 = vunpack.c.l.b16 %v2627
        %v3490 = vunpack.c.l.b16 %v2641
        %v3491 = vunpack.c.l.b16 %v2651
        %v3492 = vunpack.c.l.b16 %v2665
        %v3493 = vunpack.c.l.b16 %v2675
        %v3494 = vunpack.c.l.b16 %v2689
        %v3495 = vunpack.c.l.b16 %v2699
        %v3496 = vunpack.c.l.b16 %v2713
        %v3497 = vunpack.c.l.b16 %v2723
        %v3498 = vunpack.c.l.b16 %v2737
        %v3499 = vunpack.c.l.b16 %v2747
        %v3500 = vpack.c.b16 %v3469, %v3468
        %v3501 = vpack.c.b16 %v3471, %v3470
        %v3502 = vpack.c.b16 %v3473, %v3472
        %v3503 = vpack.c.b16 %v3475, %v3474
        %v3504 = vpack.c.b16 %v3477, %v3476
        %v3505 = vpack.c.b16 %v3479, %v3478
        %v3506 = vpack.c.b16 %v3481, %v3480
        %v3507 = vpack.c.b16 %v3483, %v3482
        %v3508 = vpack.c.b16 %v3485, %v3484
        %v3509 = vpack.c.b16 %v3487, %v3486
        %v3510 = vpack.c.b16 %v3489, %v3488
        %v3511 = vpack.c.b16 %v3491, %v3490
        %v3512 = vpack.c.b16 %v3493, %v3492
        %v3513 = vpack.c.b16 %v3495, %v3494
        %v3514 = vpack.c.b16 %v3497, %v3496
        %v3515 = vpack.c.b16 %v3499, %v3498
        %3516 = vrot.lane.b32.xlu0 %v3500, 96
        %v3517 = vpop.permute.xlu0 %3516
        %3518 = vrot.lane.b32.xlu0 %v3501, 96
        %v3519 = vpop.permute.xlu0 %3518
        %3520 = vrot.lane.b32.xlu0 %v3502, 96
        %v3521 = vpop.permute.xlu0 %3520
        %3522 = vrot.lane.b32.xlu0 %v3503, 96
        %v3523 = vpop.permute.xlu0 %3522
        %3524 = vrot.lane.b32.xlu0 %v3504, 96
        %v3525 = vpop.permute.xlu0 %3524
        %3526 = vrot.lane.b32.xlu0 %v3505, 96
        %v3527 = vpop.permute.xlu0 %3526
        %3528 = vrot.lane.b32.xlu0 %v3506, 96
        %v3529 = vpop.permute.xlu0 %3528
        %3530 = vrot.lane.b32.xlu0 %v3507, 96
        %v3531 = vpop.permute.xlu0 %3530
        %3532 = vrot.lane.b32.xlu0 %v3508, 96
        %v3533 = vpop.permute.xlu0 %3532
        %3534 = vrot.lane.b32.xlu0 %v3509, 96
        %v3535 = vpop.permute.xlu0 %3534
        %3536 = vrot.lane.b32.xlu0 %v3510, 96
        %v3537 = vpop.permute.xlu0 %3536
        %3538 = vrot.lane.b32.xlu0 %v3511, 96
        %v3539 = vpop.permute.xlu0 %3538
        %3540 = vrot.lane.b32.xlu0 %v3512, 96
        %v3541 = vpop.permute.xlu0 %3540
        %3542 = vrot.lane.b32.xlu0 %v3513, 96
        %v3543 = vpop.permute.xlu0 %3542
        %3544 = vrot.lane.b32.xlu0 %v3514, 96
        %v3545 = vpop.permute.xlu0 %3544
        %3546 = vrot.lane.b32.xlu0 %v3515, 96
        %v3547 = vpop.permute.xlu0 %3546
        %v3548 = vunpack.c.l.b16 %v2815
        %v3549 = vunpack.c.l.b16 %v2818
        %v3550 = vunpack.c.l.b16 %v2822
        %v3551 = vunpack.c.l.b16 %v2825
        %v3552 = vunpack.c.l.b16 %v2829
        %v3553 = vunpack.c.l.b16 %v2832
        %v3554 = vunpack.c.l.b16 %v2836
        %v3555 = vunpack.c.l.b16 %v2839
        %v3556 = vunpack.c.l.b16 %v2843
        %v3557 = vunpack.c.l.b16 %v2846
        %v3558 = vunpack.c.l.b16 %v2850
        %v3559 = vunpack.c.l.b16 %v2853
        %v3560 = vunpack.c.l.b16 %v2857
        %v3561 = vunpack.c.l.b16 %v2860
        %v3562 = vunpack.c.l.b16 %v2864
        %v3563 = vunpack.c.l.b16 %v2867
        %v3564 = vunpack.c.l.b16 %v2871
        %v3565 = vunpack.c.l.b16 %v2874
        %v3566 = vunpack.c.l.b16 %v2878
        %v3567 = vunpack.c.l.b16 %v2881
        %v3568 = vunpack.c.l.b16 %v2885
        %v3569 = vunpack.c.l.b16 %v2888
        %v3570 = vunpack.c.l.b16 %v2892
        %v3571 = vunpack.c.l.b16 %v2895
        %v3572 = vunpack.c.l.b16 %v2899
        %v3573 = vunpack.c.l.b16 %v2902
        %v3574 = vunpack.c.l.b16 %v2906
        %v3575 = vunpack.c.l.b16 %v2909
        %v3576 = vunpack.c.l.b16 %v2913
        %v3577 = vunpack.c.l.b16 %v2916
        %v3578 = vunpack.c.l.b16 %v2920
        %v3579 = vunpack.c.l.b16 %v2923
        %v3580 = vpack.c.b16 %v3549, %v3548
        %v3581 = vpack.c.b16 %v3551, %v3550
        %v3582 = vpack.c.b16 %v3553, %v3552
        %v3583 = vpack.c.b16 %v3555, %v3554
        %v3584 = vpack.c.b16 %v3557, %v3556
        %v3585 = vpack.c.b16 %v3559, %v3558
        %v3586 = vpack.c.b16 %v3561, %v3560
        %v3587 = vpack.c.b16 %v3563, %v3562
        %v3588 = vpack.c.b16 %v3565, %v3564
        %v3589 = vpack.c.b16 %v3567, %v3566
        %v3590 = vpack.c.b16 %v3569, %v3568
        %v3591 = vpack.c.b16 %v3571, %v3570
        %v3592 = vpack.c.b16 %v3573, %v3572
        %v3593 = vpack.c.b16 %v3575, %v3574
        %v3594 = vpack.c.b16 %v3577, %v3576
        %v3595 = vpack.c.b16 %v3579, %v3578
        %vm3596 = vcmask 261120
        %v3599 = vsel %vm3596, %v2972, %v3037
        %v3602 = vsel %vm3596, %v2973, %v3039
        %v3605 = vsel %vm3596, %v2974, %v3041
        %v3608 = vsel %vm3596, %v2975, %v3043
        %v3611 = vsel %vm3596, %v2976, %v3045
        %v3614 = vsel %vm3596, %v2977, %v3047
        %v3617 = vsel %vm3596, %v2978, %v3049
        %v3620 = vsel %vm3596, %v2979, %v3051
        %v3623 = vsel %vm3596, %v2980, %v3053
        %v3626 = vsel %vm3596, %v2981, %v3055
        %v3629 = vsel %vm3596, %v2982, %v3057
        %v3632 = vsel %vm3596, %v2983, %v3059
        %v3635 = vsel %vm3596, %v2984, %v3061
        %v3638 = vsel %vm3596, %v2985, %v3063
        %v3641 = vsel %vm3596, %v2986, %v3065
        %v3644 = vsel %vm3596, %v2987, %v3067
        %vm3645 = vcmask 523264
        %v3647 = vsel %vm3645, %v3599, %v3117
        %v3649 = vsel %vm3645, %v3602, %v3119
        %v3651 = vsel %vm3645, %v3605, %v3121
        %v3653 = vsel %vm3645, %v3608, %v3123
        %v3655 = vsel %vm3645, %v3611, %v3125
        %v3657 = vsel %vm3645, %v3614, %v3127
        %v3659 = vsel %vm3645, %v3617, %v3129
        %v3661 = vsel %vm3645, %v3620, %v3131
        %v3663 = vsel %vm3645, %v3623, %v3133
        %v3665 = vsel %vm3645, %v3626, %v3135
        %v3667 = vsel %vm3645, %v3629, %v3137
        %v3669 = vsel %vm3645, %v3632, %v3139
        %v3671 = vsel %vm3645, %v3635, %v3141
        %v3673 = vsel %vm3645, %v3638, %v3143
        %v3675 = vsel %vm3645, %v3641, %v3145
        %v3677 = vsel %vm3645, %v3644, %v3147
        %vm3678 = vcmask 785408
        %v3680 = vsel %vm3678, %v3647, %v3213
        %v3683 = vsel %vm3678, %v3649, %v3215
        %v3686 = vsel %vm3678, %v3651, %v3217
        %v3689 = vsel %vm3678, %v3653, %v3219
        %v3692 = vsel %vm3678, %v3655, %v3221
        %v3695 = vsel %vm3678, %v3657, %v3223
        %v3698 = vsel %vm3678, %v3659, %v3225
        %v3701 = vsel %vm3678, %v3661, %v3227
        %v3704 = vsel %vm3678, %v3663, %v3229
        %v3707 = vsel %vm3678, %v3665, %v3231
        %v3710 = vsel %vm3678, %v3667, %v3233
        %v3713 = vsel %vm3678, %v3669, %v3235
        %v3716 = vsel %vm3678, %v3671, %v3237
        %v3719 = vsel %vm3678, %v3673, %v3239
        %v3722 = vsel %vm3678, %v3675, %v3241
        %v3725 = vsel %vm3678, %v3677, %v3243
        %v3729 = vsel %vm3596, %v3276, %v3341
        %v3732 = vsel %vm3596, %v3277, %v3343
        %v3735 = vsel %vm3596, %v3278, %v3345
        %v3738 = vsel %vm3596, %v3279, %v3347
        %v3741 = vsel %vm3596, %v3280, %v3349
        %v3744 = vsel %vm3596, %v3281, %v3351
        %v3747 = vsel %vm3596, %v3282, %v3353
        %v3750 = vsel %vm3596, %v3283, %v3355
        %v3753 = vsel %vm3596, %v3284, %v3357
        %v3756 = vsel %vm3596, %v3285, %v3359
        %v3759 = vsel %vm3596, %v3286, %v3361
        %v3762 = vsel %vm3596, %v3287, %v3363
        %v3765 = vsel %vm3596, %v3288, %v3365
        %v3768 = vsel %vm3596, %v3289, %v3367
        %v3771 = vsel %vm3596, %v3290, %v3369
        %v3774 = vsel %vm3596, %v3291, %v3371
        %v3776 = vsel %vm3645, %v3729, %v3437
        %v3778 = vsel %vm3645, %v3732, %v3439
        %v3780 = vsel %vm3645, %v3735, %v3441
        %v3782 = vsel %vm3645, %v3738, %v3443
        %v3784 = vsel %vm3645, %v3741, %v3445
        %v3786 = vsel %vm3645, %v3744, %v3447
        %v3788 = vsel %vm3645, %v3747, %v3449
        %v3790 = vsel %vm3645, %v3750, %v3451
        %v3792 = vsel %vm3645, %v3753, %v3453
        %v3794 = vsel %vm3645, %v3756, %v3455
        %v3796 = vsel %vm3645, %v3759, %v3457
        %v3798 = vsel %vm3645, %v3762, %v3459
        %v3800 = vsel %vm3645, %v3765, %v3461
        %v3802 = vsel %vm3645, %v3768, %v3463
        %v3804 = vsel %vm3645, %v3771, %v3465
        %v3806 = vsel %vm3645, %v3774, %v3467
        %v3808 = vsel %vm3678, %v3776, %v3517
        %v3811 = vsel %vm3678, %v3778, %v3519
        %v3814 = vsel %vm3678, %v3780, %v3521
        %v3817 = vsel %vm3678, %v3782, %v3523
        %v3820 = vsel %vm3678, %v3784, %v3525
        %v3823 = vsel %vm3678, %v3786, %v3527
        %v3826 = vsel %vm3678, %v3788, %v3529
        %v3829 = vsel %vm3678, %v3790, %v3531
        %v3832 = vsel %vm3678, %v3792, %v3533
        %v3835 = vsel %vm3678, %v3794, %v3535
        %v3838 = vsel %vm3678, %v3796, %v3537
        %v3841 = vsel %vm3678, %v3798, %v3539
        %v3844 = vsel %vm3678, %v3800, %v3541
        %v3847 = vsel %vm3678, %v3802, %v3543
        %v3850 = vsel %vm3678, %v3804, %v3545
        %v3853 = vsel %vm3678, %v3806, %v3547
        %v3855 = vld [vmem:[%s1] sm:$0xf]
        %v3856 = vld [vmem:[%s1 + $0x4] sm:$0xf]
        %v3857 = vld [vmem:[%s1 + $0x8] sm:$0xf]
        %v3858 = vld [vmem:[%s1 + $0xc] sm:$0xf]
        %v3859 = vld [vmem:[%s1 + $0x10] sm:$0xf]
        %v3860 = vld [vmem:[%s1 + $0x14] sm:$0xf]
        %v3861 = vld [vmem:[%s1 + $0x18] sm:$0xf]
        %v3862 = vld [vmem:[%s1 + $0x1c] sm:$0xf]
        %v3863 = vld [vmem:[%s1 + $0x20] sm:$0xf]
        %v3864 = vld [vmem:[%s1 + $0x24] sm:$0xf]
        %v3865 = vld [vmem:[%s1 + $0x28] sm:$0xf]
        %v3866 = vld [vmem:[%s1 + $0x2c] sm:$0xf]
        %v3867 = vld [vmem:[%s1 + $0x30] sm:$0xf]
        %v3868 = vld [vmem:[%s1 + $0x34] sm:$0xf]
        %v3869 = vld [vmem:[%s1 + $0x38] sm:$0xf]
        %v3870 = vld [vmem:[%s1 + $0x3c] sm:$0xf]
        %v3871 = vld [vmem:[%s1 + $0x40] sm:$0xf]
        %v3872 = vld [vmem:[%s1 + $0x44] sm:$0xf]
        %v3873 = vld [vmem:[%s1 + $0x48] sm:$0xf]
        %v3874 = vld [vmem:[%s1 + $0x4c] sm:$0xf]
        %v3875 = vld [vmem:[%s1 + $0x50] sm:$0xf]
        %v3876 = vld [vmem:[%s1 + $0x54] sm:$0xf]
        %v3877 = vld [vmem:[%s1 + $0x58] sm:$0xf]
        %v3878 = vld [vmem:[%s1 + $0x5c] sm:$0xf]
        %v3879 = vld [vmem:[%s1 + $0x60] sm:$0xf]
        %v3880 = vld [vmem:[%s1 + $0x64] sm:$0xf]
        %v3881 = vld [vmem:[%s1 + $0x68] sm:$0xf]
        %v3882 = vld [vmem:[%s1 + $0x6c] sm:$0xf]
        %v3883 = vld [vmem:[%s1 + $0x70] sm:$0xf]
        %v3884 = vld [vmem:[%s1 + $0x74] sm:$0xf]
        %v3885 = vld [vmem:[%s1 + $0x78] sm:$0xf]
        %v3886 = vld [vmem:[%s1 + $0x7c] sm:$0xf]
        %v3887 = vld [vmem:[%s1 + $0x80] sm:$0xf]
        %v3888 = vld [vmem:[%s1 + $0x84] sm:$0xf]
        %v3889 = vld [vmem:[%s1 + $0x88] sm:$0xf]
        %v3890 = vld [vmem:[%s1 + $0x8c] sm:$0xf]
        %v3927 = vunpack.c.l.b16 %v3855
        %v3928 = vunpack.c.l.b16 %v3856
        %v3929 = vunpack.c.l.b16 %v3857
        %v3930 = vunpack.c.l.b16 %v3858
        %v3931 = vunpack.c.l.b16 %v3859
        %v3932 = vunpack.c.l.b16 %v3860
        %v3933 = vunpack.c.l.b16 %v3861
        %v3934 = vunpack.c.l.b16 %v3862
        %v3935 = vunpack.c.l.b16 %v3863
        %v3936 = vunpack.c.l.b16 %v3864
        %v3937 = vunpack.c.l.b16 %v3865
        %v3938 = vunpack.c.l.b16 %v3866
        %v3939 = vunpack.c.l.b16 %v3867
        %v3940 = vunpack.c.l.b16 %v3868
        %v3941 = vunpack.c.l.b16 %v3869
        %v3942 = vunpack.c.l.b16 %v3870
        %v3943 = vunpack.c.l.b16 %v3871
        %v3944 = vunpack.c.l.b16 %v3872
        %v3945 = vunpack.c.l.b16 %v3873
        %v3946 = vunpack.c.l.b16 %v3874
        %v3947 = vunpack.c.l.b16 %v3875
        %v3948 = vunpack.c.l.b16 %v3876
        %v3949 = vunpack.c.l.b16 %v3877
        %v3950 = vunpack.c.l.b16 %v3878
        %v3951 = vunpack.c.l.b16 %v3879
        %v3952 = vunpack.c.l.b16 %v3880
        %v3953 = vunpack.c.l.b16 %v3881
        %v3954 = vunpack.c.l.b16 %v3882
        %v3955 = vunpack.c.l.b16 %v3883
        %v3956 = vunpack.c.l.b16 %v3884
        %v3957 = vunpack.c.l.b16 %v3885
        %v3958 = vunpack.c.l.b16 %v3886
        %v3959 = vunpack.c.l.b16 %v3887
        %v3960 = vunpack.c.l.b16 %v3888
        %v3961 = vunpack.c.l.b16 %v3889
        %v3962 = vunpack.c.l.b16 %v3890
        %v3963 = vpack.c.b16 %v3928, %v3927
        %v3964 = vpack.c.b16 %v3930, %v3929
        %v3965 = vpack.c.b16 %v3932, %v3931
        %v3966 = vpack.c.b16 %v3934, %v3933
        %v3967 = vpack.c.b16 %v3936, %v3935
        %v3968 = vpack.c.b16 %v3938, %v3937
        %v3969 = vpack.c.b16 %v3940, %v3939
        %v3970 = vpack.c.b16 %v3942, %v3941
        %v3971 = vpack.c.b16 %v3944, %v3943
        %v3972 = vpack.c.b16 %v3946, %v3945
        %v3973 = vpack.c.b16 %v3948, %v3947
        %v3974 = vpack.c.b16 %v3950, %v3949
        %v3975 = vpack.c.b16 %v3952, %v3951
        %v3976 = vpack.c.b16 %v3954, %v3953
        %v3977 = vpack.c.b16 %v3956, %v3955
        %v3978 = vpack.c.b16 %v3958, %v3957
        %v3979 = vpack.c.b16 %v3960, %v3959
        %v3980 = vpack.c.b16 %v3962, %v3961
        %v4000 = vsel %vm3596, %v3580, 0
        %v4003 = vsel %vm3596, %v3581, 0
        %v4006 = vsel %vm3596, %v3582, 0
        %v4009 = vsel %vm3596, %v3583, 0
        %v4012 = vsel %vm3596, %v3584, 0
        %v4015 = vsel %vm3596, %v3585, 0
        %v4018 = vsel %vm3596, %v3586, 0
        %v4021 = vsel %vm3596, %v3587, 0
        %v4024 = vsel %vm3596, %v3588, 0
        %v4027 = vsel %vm3596, %v3589, 0
        %v4030 = vsel %vm3596, %v3590, 0
        %v4033 = vsel %vm3596, %v3591, 0
        %v4036 = vsel %vm3596, %v3592, 0
        %v4039 = vsel %vm3596, %v3593, 0
        %v4042 = vsel %vm3596, %v3594, 0
        %v4045 = vsel %vm3596, %v3595, 0
        %4047 = vmatprep.subr.bf16.mxu0 0
        %4048 = vmatpush1.bf16.msra.mxu0 %v3970
        %4049 = vmatprep.subr.bf16.mxu0 0
        %4050 = vmatpush1.bf16.msra.mxu0 %v3969
        %4051 = vmatprep.subr.bf16.mxu0 0
        %4052 = vmatpush1.bf16.msra.mxu0 %v3968
        %4053 = vmatprep.subr.bf16.mxu0 0
        %4054 = vmatpush1.bf16.msra.mxu0 %v3967
        %4055 = vmatprep.subr.bf16.mxu0 0
        %4056 = vmatpush1.bf16.msra.mxu0 %v3966
        %4057 = vmatprep.subr.bf16.mxu0 0
        %4058 = vmatpush1.bf16.msra.mxu0 %v3965
        %4059 = vmatprep.subr.bf16.mxu0 0
        %4060 = vmatpush1.bf16.msra.mxu0 %v3964
        %4061 = vmatprep.subr.bf16.mxu0 0
        %4062 = vmatpush1.bf16.msra.mxu0 %v3963
        %4063 = vmatprep.subr.bf16.mxu0 0
        %4064 = vmatpush2.bf16.msra.mxu0 %v3978
        %4065 = vmatprep.subr.bf16.mxu0 0
        %4066 = vmatpush2.bf16.msra.mxu0 %v3977
        %4067 = vmatprep.subr.bf16.mxu0 0
        %4068 = vmatpush2.bf16.msra.mxu0 %v3976
        %4069 = vmatprep.subr.bf16.mxu0 0
        %4070 = vmatpush2.bf16.msra.mxu0 %v3975
        %4071 = vmatprep.subr.bf16.mxu0 0
        %4072 = vmatpush2.bf16.msra.mxu0 %v3974
        %4073 = vmatprep.subr.bf16.mxu0 0
        %4074 = vmatpush2.bf16.msra.mxu0 %v3973
        %4075 = vmatprep.subr.bf16.mxu0 0
        %4076 = vmatpush2.bf16.msra.mxu0 %v3972
        %4077 = vmatprep.subr.bf16.mxu0 0
        %4078 = vmatpush2.bf16.msra.mxu0 %v3971
        %4079 = vmatprep.mubr.bf16.mxu0 %v3808
        %4080 = vmatmul.mubr.bf16.gmra.mxu0 %v3680
        %v4081 = vpop.f32.mrf.mxu0
        %v4082 = vadd.f32 0.0, %v4081
        %v4083 = vpop.f32.mrf.mxu0
        %v4084 = vpop.f32.mrf.mxu0
        %v4085 = vadd.f32 0.0, %v4084
        %v4086 = vpop.f32.mrf.mxu0
        %4087 = vmatprep.mubr.bf16.mxu0 %v3811
        %4088 = vmatmul.mubr.bf16.gmra.mxu0 %v3683
        %v4089 = vpop.f32.mrf.mxu0
        %v4090 = vadd.f32 0.0, %v4089
        %v4091 = vpop.f32.mrf.mxu0
        %v4092 = vpop.f32.mrf.mxu0
        %v4093 = vadd.f32 0.0, %v4092
        %v4094 = vpop.f32.mrf.mxu0
        %4095 = vmatprep.mubr.bf16.mxu0 %v3814
        %4096 = vmatmul.mubr.bf16.gmra.mxu0 %v3686
        %v4097 = vpop.f32.mrf.mxu0
        %v4098 = vadd.f32 0.0, %v4097
        %v4099 = vpop.f32.mrf.mxu0
        %v4100 = vpop.f32.mrf.mxu0
        %v4101 = vadd.f32 0.0, %v4100
        %v4102 = vpop.f32.mrf.mxu0
        %4103 = vmatprep.mubr.bf16.mxu0 %v3817
        %4104 = vmatmul.mubr.bf16.gmra.mxu0 %v3689
        %v4105 = vpop.f32.mrf.mxu0
        %v4106 = vadd.f32 0.0, %v4105
        %v4107 = vpop.f32.mrf.mxu0
        %v4108 = vpop.f32.mrf.mxu0
        %v4109 = vadd.f32 0.0, %v4108
        %v4110 = vpop.f32.mrf.mxu0
        %4111 = vmatprep.mubr.bf16.mxu0 %v3820
        %4112 = vmatmul.mubr.bf16.gmra.mxu0 %v3692
        %v4113 = vpop.f32.mrf.mxu0
        %v4114 = vadd.f32 0.0, %v4113
        %v4115 = vpop.f32.mrf.mxu0
        %v4116 = vpop.f32.mrf.mxu0
        %v4117 = vadd.f32 0.0, %v4116
        %v4118 = vpop.f32.mrf.mxu0
        %4119 = vmatprep.mubr.bf16.mxu0 %v3823
        %4120 = vmatmul.mubr.bf16.gmra.mxu0 %v3695
        %v4121 = vpop.f32.mrf.mxu0
        %v4122 = vadd.f32 0.0, %v4121
        %v4123 = vpop.f32.mrf.mxu0
        %v4124 = vpop.f32.mrf.mxu0
        %v4125 = vadd.f32 0.0, %v4124
        %v4126 = vpop.f32.mrf.mxu0
        %4127 = vmatprep.mubr.bf16.mxu0 %v3826
        %4128 = vmatmul.mubr.bf16.gmra.mxu0 %v3698
        %v4129 = vpop.f32.mrf.mxu0
        %v4130 = vadd.f32 0.0, %v4129
        %v4131 = vpop.f32.mrf.mxu0
        %v4132 = vpop.f32.mrf.mxu0
        %v4133 = vadd.f32 0.0, %v4132
        %v4134 = vpop.f32.mrf.mxu0
        %4135 = vmatprep.mubr.bf16.mxu0 %v3829
        %4136 = vmatmul.mubr.bf16.gmra.mxu0 %v3701
        %v4137 = vpop.f32.mrf.mxu0
        %v4138 = vadd.f32 0.0, %v4137
        %v4139 = vpop.f32.mrf.mxu0
        %v4140 = vpop.f32.mrf.mxu0
        %v4141 = vadd.f32 0.0, %v4140
        %v4142 = vpop.f32.mrf.mxu0
        %4143 = vmatprep.mubr.bf16.mxu0 %v3832
        %4144 = vmatmul.mubr.bf16.gmra.mxu0 %v3704
        %v4145 = vpop.f32.mrf.mxu0
        %v4146 = vadd.f32 0.0, %v4145
        %v4147 = vpop.f32.mrf.mxu0
        %v4148 = vpop.f32.mrf.mxu0
        %v4149 = vadd.f32 0.0, %v4148
        %v4150 = vpop.f32.mrf.mxu0
        %4151 = vmatprep.mubr.bf16.mxu0 %v3835
        %4152 = vmatmul.mubr.bf16.gmra.mxu0 %v3707
        %v4153 = vpop.f32.mrf.mxu0
        %v4154 = vadd.f32 0.0, %v4153
        %v4155 = vpop.f32.mrf.mxu0
        %v4156 = vpop.f32.mrf.mxu0
        %v4157 = vadd.f32 0.0, %v4156
        %v4158 = vpop.f32.mrf.mxu0
        %4159 = vmatprep.mubr.bf16.mxu0 %v3838
        %4160 = vmatmul.mubr.bf16.gmra.mxu0 %v3710
        %v4161 = vpop.f32.mrf.mxu0
        %v4162 = vadd.f32 0.0, %v4161
        %v4163 = vpop.f32.mrf.mxu0
        %v4164 = vpop.f32.mrf.mxu0
        %v4165 = vadd.f32 0.0, %v4164
        %v4166 = vpop.f32.mrf.mxu0
        %4167 = vmatprep.mubr.bf16.mxu0 %v3841
        %4168 = vmatmul.mubr.bf16.gmra.mxu0 %v3713
        %v4169 = vpop.f32.mrf.mxu0
        %v4170 = vadd.f32 0.0, %v4169
        %v4171 = vpop.f32.mrf.mxu0
        %v4172 = vpop.f32.mrf.mxu0
        %v4173 = vadd.f32 0.0, %v4172
        %v4174 = vpop.f32.mrf.mxu0
        %4175 = vmatprep.mubr.bf16.mxu0 %v3844
        %4176 = vmatmul.mubr.bf16.gmra.mxu0 %v3716
        %v4177 = vpop.f32.mrf.mxu0
        %v4178 = vadd.f32 0.0, %v4177
        %v4179 = vpop.f32.mrf.mxu0
        %v4180 = vpop.f32.mrf.mxu0
        %v4181 = vadd.f32 0.0, %v4180
        %v4182 = vpop.f32.mrf.mxu0
        %4183 = vmatprep.mubr.bf16.mxu0 %v3847
        %4184 = vmatmul.mubr.bf16.gmra.mxu0 %v3719
        %v4185 = vpop.f32.mrf.mxu0
        %v4186 = vadd.f32 0.0, %v4185
        %v4187 = vpop.f32.mrf.mxu0
        %v4188 = vpop.f32.mrf.mxu0
        %v4189 = vadd.f32 0.0, %v4188
        %v4190 = vpop.f32.mrf.mxu0
        %4191 = vmatprep.mubr.bf16.mxu0 %v3850
        %4192 = vmatmul.mubr.bf16.gmra.mxu0 %v3722
        %v4193 = vpop.f32.mrf.mxu0
        %v4194 = vadd.f32 0.0, %v4193
        %v4195 = vpop.f32.mrf.mxu0
        %v4196 = vpop.f32.mrf.mxu0
        %v4197 = vadd.f32 0.0, %v4196
        %v4198 = vpop.f32.mrf.mxu0
        %4199 = vmatprep.mubr.bf16.mxu0 %v3853
        %4200 = vmatmul.mubr.bf16.gmra.mxu0 %v3725
        %v4201 = vpop.f32.mrf.mxu0
        %v4202 = vadd.f32 0.0, %v4201
        %v4203 = vpop.f32.mrf.mxu0
        %v4204 = vpop.f32.mrf.mxu0
        %v4205 = vadd.f32 0.0, %v4204
        %v4206 = vpop.f32.mrf.mxu0
        %4207 = vdwg.mxu0
        %4208 = vmatprep.subr.bf16.mxu0 0
        %4209 = vmatpush1.bf16.msra.mxu0 0
        %4210 = vmatprep.subr.bf16.mxu0 0
        %4211 = vmatpush1.bf16.msra.mxu0 0
        %4212 = vmatprep.subr.bf16.mxu0 0
        %4213 = vmatpush1.bf16.msra.mxu0 0
        %4214 = vmatprep.subr.bf16.mxu0 0
        %4215 = vmatpush1.bf16.msra.mxu0 0
        %4216 = vmatprep.subr.bf16.mxu0 0
        %4217 = vmatpush1.bf16.msra.mxu0 0
        %4218 = vmatprep.subr.bf16.mxu0 0
        %4219 = vmatpush1.bf16.msra.mxu0 0
        %4220 = vmatprep.subr.bf16.mxu0 0
        %4221 = vmatpush1.bf16.msra.mxu0 %v3980
        %4222 = vmatprep.subr.bf16.mxu0 0
        %4223 = vmatpush1.bf16.msra.mxu0 %v3979
        %4224 = vmatprep.subr.bf16.mxu0 0
        %4225 = vmatpush2.bf16.msra.mxu0 0
        %4226 = vmatprep.subr.bf16.mxu0 0
        %4227 = vmatpush2.bf16.msra.mxu0 0
        %4228 = vmatprep.subr.bf16.mxu0 0
        %4229 = vmatpush2.bf16.msra.mxu0 0
        %4230 = vmatprep.subr.bf16.mxu0 0
        %4231 = vmatpush2.bf16.msra.mxu0 0
        %4232 = vmatprep.subr.bf16.mxu0 0
        %4233 = vmatpush2.bf16.msra.mxu0 0
        %4234 = vmatprep.subr.bf16.mxu0 0
        %4235 = vmatpush2.bf16.msra.mxu0 0
        %4236 = vmatprep.subr.bf16.mxu0 0
        %4237 = vmatpush2.bf16.msra.mxu0 0
        %4238 = vmatprep.subr.bf16.mxu0 0
        %4239 = vmatpush2.bf16.msra.mxu0 0
        %4240 = vmatprep.mubr.bf16.mxu0 0
        %4241 = vmatmul.mubr.bf16.gmra.mxu0 %v4000
        %v4242 = vpop.f32.mrf.mxu0
        %v4243 = vadd.f32 %v4082, %v4242
        %v4244 = vpop.f32.mrf.mxu0
        %v4245 = vpop.f32.mrf.mxu0
        %v4246 = vadd.f32 %v4085, %v4245
        %v4247 = vpop.f32.mrf.mxu0
        %4248 = vmatprep.mubr.bf16.mxu0 0
        %4249 = vmatmul.mubr.bf16.gmra.mxu0 %v4003
        %v4250 = vpop.f32.mrf.mxu0
        %v4251 = vadd.f32 %v4090, %v4250
        %v4252 = vpop.f32.mrf.mxu0
        %v4253 = vpop.f32.mrf.mxu0
        %v4254 = vadd.f32 %v4093, %v4253
        %v4255 = vpop.f32.mrf.mxu0
        %4256 = vmatprep.mubr.bf16.mxu0 0
        %4257 = vmatmul.mubr.bf16.gmra.mxu0 %v4006
        %v4258 = vpop.f32.mrf.mxu0
        %v4259 = vadd.f32 %v4098, %v4258
        %v4260 = vpop.f32.mrf.mxu0
        %v4261 = vpop.f32.mrf.mxu0
        %v4262 = vadd.f32 %v4101, %v4261
        %v4263 = vpop.f32.mrf.mxu0
        %4264 = vmatprep.mubr.bf16.mxu0 0
        %4265 = vmatmul.mubr.bf16.gmra.mxu0 %v4009
        %v4266 = vpop.f32.mrf.mxu0
        %v4267 = vadd.f32 %v4106, %v4266
        %v4268 = vpop.f32.mrf.mxu0
        %v4269 = vpop.f32.mrf.mxu0
        %v4270 = vadd.f32 %v4109, %v4269
        %v4271 = vpop.f32.mrf.mxu0
        %4272 = vmatprep.mubr.bf16.mxu0 0
        %4273 = vmatmul.mubr.bf16.gmra.mxu0 %v4012
        %v4274 = vpop.f32.mrf.mxu0
        %v4275 = vadd.f32 %v4114, %v4274
        %v4276 = vpop.f32.mrf.mxu0
        %v4277 = vpop.f32.mrf.mxu0
        %v4278 = vadd.f32 %v4117, %v4277
        %v4279 = vpop.f32.mrf.mxu0
        %4280 = vmatprep.mubr.bf16.mxu0 0
        %4281 = vmatmul.mubr.bf16.gmra.mxu0 %v4015
        %v4282 = vpop.f32.mrf.mxu0
        %v4283 = vadd.f32 %v4122, %v4282
        %v4284 = vpop.f32.mrf.mxu0
        %v4285 = vpop.f32.mrf.mxu0
        %v4286 = vadd.f32 %v4125, %v4285
        %v4287 = vpop.f32.mrf.mxu0
        %4288 = vmatprep.mubr.bf16.mxu0 0
        %4289 = vmatmul.mubr.bf16.gmra.mxu0 %v4018
        %v4290 = vpop.f32.mrf.mxu0
        %v4291 = vadd.f32 %v4130, %v4290
        %v4292 = vpop.f32.mrf.mxu0
        %v4293 = vpop.f32.mrf.mxu0
        %v4294 = vadd.f32 %v4133, %v4293
        %v4295 = vpop.f32.mrf.mxu0
        %4296 = vmatprep.mubr.bf16.mxu0 0
        %4297 = vmatmul.mubr.bf16.gmra.mxu0 %v4021
        %v4298 = vpop.f32.mrf.mxu0
        %v4299 = vadd.f32 %v4138, %v4298
        %v4300 = vpop.f32.mrf.mxu0
        %v4301 = vpop.f32.mrf.mxu0
        %v4302 = vadd.f32 %v4141, %v4301
        %v4303 = vpop.f32.mrf.mxu0
        %4304 = vmatprep.mubr.bf16.mxu0 0
        %4305 = vmatmul.mubr.bf16.gmra.mxu0 %v4024
        %v4306 = vpop.f32.mrf.mxu0
        %v4307 = vadd.f32 %v4146, %v4306
        %v4308 = vpop.f32.mrf.mxu0
        %v4309 = vpop.f32.mrf.mxu0
        %v4310 = vadd.f32 %v4149, %v4309
        %v4311 = vpop.f32.mrf.mxu0
        %4312 = vmatprep.mubr.bf16.mxu0 0
        %4313 = vmatmul.mubr.bf16.gmra.mxu0 %v4027
        %v4314 = vpop.f32.mrf.mxu0
        %v4315 = vadd.f32 %v4154, %v4314
        %v4316 = vpop.f32.mrf.mxu0
        %v4317 = vpop.f32.mrf.mxu0
        %v4318 = vadd.f32 %v4157, %v4317
        %v4319 = vpop.f32.mrf.mxu0
        %4320 = vmatprep.mubr.bf16.mxu0 0
        %4321 = vmatmul.mubr.bf16.gmra.mxu0 %v4030
        %v4322 = vpop.f32.mrf.mxu0
        %v4323 = vadd.f32 %v4162, %v4322
        %v4324 = vpop.f32.mrf.mxu0
        %v4325 = vpop.f32.mrf.mxu0
        %v4326 = vadd.f32 %v4165, %v4325
        %v4327 = vpop.f32.mrf.mxu0
        %4328 = vmatprep.mubr.bf16.mxu0 0
        %4329 = vmatmul.mubr.bf16.gmra.mxu0 %v4033
        %v4330 = vpop.f32.mrf.mxu0
        %v4331 = vadd.f32 %v4170, %v4330
        %v4332 = vpop.f32.mrf.mxu0
        %v4333 = vpop.f32.mrf.mxu0
        %v4334 = vadd.f32 %v4173, %v4333
        %v4335 = vpop.f32.mrf.mxu0
        %4336 = vmatprep.mubr.bf16.mxu0 0
        %4337 = vmatmul.mubr.bf16.gmra.mxu0 %v4036
        %v4338 = vpop.f32.mrf.mxu0
        %v4339 = vadd.f32 %v4178, %v4338
        %v4340 = vpop.f32.mrf.mxu0
        %v4341 = vpop.f32.mrf.mxu0
        %v4342 = vadd.f32 %v4181, %v4341
        %v4343 = vpop.f32.mrf.mxu0
        %4344 = vmatprep.mubr.bf16.mxu0 0
        %4345 = vmatmul.mubr.bf16.gmra.mxu0 %v4039
        %v4346 = vpop.f32.mrf.mxu0
        %v4347 = vadd.f32 %v4186, %v4346
        %v4348 = vpop.f32.mrf.mxu0
        %v4349 = vpop.f32.mrf.mxu0
        %v4350 = vadd.f32 %v4189, %v4349
        %v4351 = vpop.f32.mrf.mxu0
        %4352 = vmatprep.mubr.bf16.mxu0 0
        %4353 = vmatmul.mubr.bf16.gmra.mxu0 %v4042
        %v4354 = vpop.f32.mrf.mxu0
        %v4355 = vadd.f32 %v4194, %v4354
        %v4356 = vpop.f32.mrf.mxu0
        %v4357 = vpop.f32.mrf.mxu0
        %v4358 = vadd.f32 %v4197, %v4357
        %v4359 = vpop.f32.mrf.mxu0
        %4360 = vmatprep.mubr.bf16.mxu0 0
        %4361 = vmatmul.mubr.bf16.gmra.mxu0 %v4045
        %v4362 = vpop.f32.mrf.mxu0
        %v4363 = vadd.f32 %v4202, %v4362
        %v4364 = vpop.f32.mrf.mxu0
        %v4365 = vpop.f32.mrf.mxu0
        %v4366 = vadd.f32 %v4205, %v4365
        %v4367 = vpop.f32.mrf.mxu0
        %4368 = vdwg.mxu0
        %v4369 = vld [vmem:[%s2] sm:$0x1]
        %v4371 = vlaneseq
        %v4372 = vshrl.u32 %v4371, 7
        %v4373 = vsub.s32 0, %v4372
        %v4374 = vrot.slane %v4369, %v4373
        %v4376 = vadd.f32 %v4243, %v4374
        %v4377 = vadd.f32 %v4246, %v4374
        %v4378 = vadd.f32 %v4251, %v4374
        %v4379 = vadd.f32 %v4254, %v4374
        %v4380 = vadd.f32 %v4259, %v4374
        %v4381 = vadd.f32 %v4262, %v4374
        %v4382 = vadd.f32 %v4267, %v4374
        %v4383 = vadd.f32 %v4270, %v4374
        %v4384 = vadd.f32 %v4275, %v4374
        %v4385 = vadd.f32 %v4278, %v4374
        %v4386 = vadd.f32 %v4283, %v4374
        %v4387 = vadd.f32 %v4286, %v4374
        %v4388 = vadd.f32 %v4291, %v4374
        %v4389 = vadd.f32 %v4294, %v4374
        %v4390 = vadd.f32 %v4299, %v4374
        %v4391 = vadd.f32 %v4302, %v4374
        %v4392 = vadd.f32 %v4307, %v4374
        %v4393 = vadd.f32 %v4310, %v4374
        %v4394 = vadd.f32 %v4315, %v4374
        %v4395 = vadd.f32 %v4318, %v4374
        %v4396 = vadd.f32 %v4323, %v4374
        %v4397 = vadd.f32 %v4326, %v4374
        %v4398 = vadd.f32 %v4331, %v4374
        %v4399 = vadd.f32 %v4334, %v4374
        %v4400 = vadd.f32 %v4339, %v4374
        %v4401 = vadd.f32 %v4342, %v4374
        %v4402 = vadd.f32 %v4347, %v4374
        %v4403 = vadd.f32 %v4350, %v4374
        %v4404 = vadd.f32 %v4355, %v4374
        %v4405 = vadd.f32 %v4358, %v4374
        %v4406 = vadd.f32 %v4363, %v4374
        %v4407 = vadd.f32 %v4366, %v4374
        %v4408 = vmax.f32 %v4376, 0.0
        %v4409 = vmax.f32 %v4377, 0.0
        %v4410 = vmax.f32 %v4378, 0.0
        %v4411 = vmax.f32 %v4379, 0.0
        %v4412 = vmax.f32 %v4380, 0.0
        %v4413 = vmax.f32 %v4381, 0.0
        %v4414 = vmax.f32 %v4382, 0.0
        %v4415 = vmax.f32 %v4383, 0.0
        %v4416 = vmax.f32 %v4384, 0.0
        %v4417 = vmax.f32 %v4385, 0.0
        %v4418 = vmax.f32 %v4386, 0.0
        %v4419 = vmax.f32 %v4387, 0.0
        %v4420 = vmax.f32 %v4388, 0.0
        %v4421 = vmax.f32 %v4389, 0.0
        %v4422 = vmax.f32 %v4390, 0.0
        %v4423 = vmax.f32 %v4391, 0.0
        %v4424 = vmax.f32 %v4392, 0.0
        %v4425 = vmax.f32 %v4393, 0.0
        %v4426 = vmax.f32 %v4394, 0.0
        %v4427 = vmax.f32 %v4395, 0.0
        %v4428 = vmax.f32 %v4396, 0.0
        %v4429 = vmax.f32 %v4397, 0.0
        %v4430 = vmax.f32 %v4398, 0.0
        %v4431 = vmax.f32 %v4399, 0.0
        %v4432 = vmax.f32 %v4400, 0.0
        %v4433 = vmax.f32 %v4401, 0.0
        %v4434 = vmax.f32 %v4402, 0.0
        %v4435 = vmax.f32 %v4403, 0.0
        %v4436 = vmax.f32 %v4404, 0.0
        %v4437 = vmax.f32 %v4405, 0.0
        %v4438 = vmax.f32 %v4406, 0.0
        %v4439 = vmax.f32 %v4407, 0.0
        %vm4440 = vcmask 125952
        %4441 = vst.msk [vmem:[#allocation3] sm:$0xf] %vm4440, 0
        %4442 = vst.msk [vmem:[#allocation3 + $0x4] sm:$0xf] %vm4440, 0
        %vm4443 = vcmask 122880
        %4444 = vst.msk [vmem:[#allocation3 + $0x8] sm:$0x1] %vm4443, 0
        %s4445 = scalar_lea.vmem [#allocation3], 204
        %4446 = vst.msk [vmem:[%s4445] sm:$0xf] %vm4440, 0
        %4447 = vst.msk [vmem:[%s4445 + $0x4] sm:$0xf] %vm4440, 0
        %4448 = vst.msk [vmem:[%s4445 + $0x8] sm:$0x1] %vm4443, 0
        %vm4449 = vcmask 122880
        %vm4450 = vmand %vm4449, %vm416
        %v4451 = vld [vmem:[#allocation3] sm:$0x1]
        %v4452 = vsel %vm4450, 0, %v4451
        %4453 = vst [vmem:[#allocation3] sm:$0x1] %v4452
        %v4454 = vld [vmem:[#allocation3 + $0xc] sm:$0x1]
        %v4455 = vsel %vm4450, 0, %v4454
        %4456 = vst [vmem:[#allocation3 + $0xc] sm:$0x1] %v4455
        %v4457 = vld [vmem:[#allocation3 + $0x18] sm:$0x1]
        %v4458 = vsel %vm4450, 0, %v4457
        %4459 = vst [vmem:[#allocation3 + $0x18] sm:$0x1] %v4458
        %v4460 = vld [vmem:[#allocation3 + $0x24] sm:$0x1]
        %v4461 = vsel %vm4450, 0, %v4460
        %4462 = vst [vmem:[#allocation3 + $0x24] sm:$0x1] %v4461
        %v4463 = vld [vmem:[#allocation3 + $0x30] sm:$0x1]
        %v4464 = vsel %vm4450, 0, %v4463
        %4465 = vst [vmem:[#allocation3 + $0x30] sm:$0x1] %v4464
        %v4466 = vld [vmem:[#allocation3 + $0x3c] sm:$0x1]
        %v4467 = vsel %vm4450, 0, %v4466
        %4468 = vst [vmem:[#allocation3 + $0x3c] sm:$0x1] %v4467
        %v4469 = vld [vmem:[#allocation3 + $0x48] sm:$0x1]
        %v4470 = vsel %vm4450, 0, %v4469
        %4471 = vst [vmem:[#allocation3 + $0x48] sm:$0x1] %v4470
        %v4472 = vld [vmem:[#allocation3 + $0x54] sm:$0x1]
        %v4473 = vsel %vm4450, 0, %v4472
        %4474 = vst [vmem:[#allocation3 + $0x54] sm:$0x1] %v4473
        %v4475 = vld [vmem:[#allocation3 + $0x60] sm:$0x1]
        %v4476 = vsel %vm4450, 0, %v4475
        %4477 = vst [vmem:[#allocation3 + $0x60] sm:$0x1] %v4476
        %v4478 = vld [vmem:[#allocation3 + $0x6c] sm:$0x1]
        %v4479 = vsel %vm4450, 0, %v4478
        %4480 = vst [vmem:[#allocation3 + $0x6c] sm:$0x1] %v4479
        %v4481 = vld [vmem:[#allocation3 + $0x78] sm:$0x1]
        %v4482 = vsel %vm4450, 0, %v4481
        %4483 = vst [vmem:[#allocation3 + $0x78] sm:$0x1] %v4482
        %v4484 = vld [vmem:[#allocation3 + $0x84] sm:$0x1]
        %v4485 = vsel %vm4450, 0, %v4484
        %4486 = vst [vmem:[#allocation3 + $0x84] sm:$0x1] %v4485
        %v4487 = vld [vmem:[#allocation3 + $0x90] sm:$0x1]
        %v4488 = vsel %vm4450, 0, %v4487
        %4489 = vst [vmem:[#allocation3 + $0x90] sm:$0x1] %v4488
        %v4490 = vld [vmem:[#allocation3 + $0x9c] sm:$0x1]
        %v4491 = vsel %vm4450, 0, %v4490
        %4492 = vst [vmem:[#allocation3 + $0x9c] sm:$0x1] %v4491
        %v4493 = vld [vmem:[#allocation3 + $0xa8] sm:$0x1]
        %v4494 = vsel %vm4450, 0, %v4493
        %4495 = vst [vmem:[#allocation3 + $0xa8] sm:$0x1] %v4494
        %v4496 = vld [vmem:[#allocation3 + $0xb4] sm:$0x1]
        %v4497 = vsel %vm4450, 0, %v4496
        %4498 = vst [vmem:[#allocation3 + $0xb4] sm:$0x1] %v4497
        %v4499 = vld [vmem:[#allocation3 + $0xc0] sm:$0x1]
        %v4500 = vsel %vm4450, 0, %v4499
        %4501 = vst [vmem:[#allocation3 + $0xc0] sm:$0x1] %v4500
        %v4502 = vld [vmem:[#allocation3 + $0xcc] sm:$0x1]
        %v4503 = vsel %vm4450, 0, %v4502
        %4504 = vst [vmem:[#allocation3 + $0xcc] sm:$0x1] %v4503
        %vm4505 = vmand %vm4449, %vm472
        %v4506 = vld [vmem:[#allocation3 + $0x8] sm:$0x1]
        %v4507 = vsel %vm4505, 0, %v4506
        %4508 = vst [vmem:[#allocation3 + $0x8] sm:$0x1] %v4507
        %v4509 = vld [vmem:[#allocation3 + $0x14] sm:$0x1]
        %v4510 = vsel %vm4505, 0, %v4509
        %4511 = vst [vmem:[#allocation3 + $0x14] sm:$0x1] %v4510
        %v4512 = vld [vmem:[#allocation3 + $0x20] sm:$0x1]
        %v4513 = vsel %vm4505, 0, %v4512
        %4514 = vst [vmem:[#allocation3 + $0x20] sm:$0x1] %v4513
        %v4515 = vld [vmem:[#allocation3 + $0x2c] sm:$0x1]
        %v4516 = vsel %vm4505, 0, %v4515
        %4517 = vst [vmem:[#allocation3 + $0x2c] sm:$0x1] %v4516
        %v4518 = vld [vmem:[#allocation3 + $0x38] sm:$0x1]
        %v4519 = vsel %vm4505, 0, %v4518
        %4520 = vst [vmem:[#allocation3 + $0x38] sm:$0x1] %v4519
        %v4521 = vld [vmem:[#allocation3 + $0x44] sm:$0x1]
        %v4522 = vsel %vm4505, 0, %v4521
        %4523 = vst [vmem:[#allocation3 + $0x44] sm:$0x1] %v4522
        %v4524 = vld [vmem:[#allocation3 + $0x50] sm:$0x1]
        %v4525 = vsel %vm4505, 0, %v4524
        %4526 = vst [vmem:[#allocation3 + $0x50] sm:$0x1] %v4525
        %v4527 = vld [vmem:[#allocation3 + $0x5c] sm:$0x1]
        %v4528 = vsel %vm4505, 0, %v4527
        %4529 = vst [vmem:[#allocation3 + $0x5c] sm:$0x1] %v4528
        %v4530 = vld [vmem:[#allocation3 + $0x68] sm:$0x1]
        %v4531 = vsel %vm4505, 0, %v4530
        %4532 = vst [vmem:[#allocation3 + $0x68] sm:$0x1] %v4531
        %v4533 = vld [vmem:[#allocation3 + $0x74] sm:$0x1]
        %v4534 = vsel %vm4505, 0, %v4533
        %4535 = vst [vmem:[#allocation3 + $0x74] sm:$0x1] %v4534
        %v4536 = vld [vmem:[#allocation3 + $0x80] sm:$0x1]
        %v4537 = vsel %vm4505, 0, %v4536
        %4538 = vst [vmem:[#allocation3 + $0x80] sm:$0x1] %v4537
        %v4539 = vld [vmem:[#allocation3 + $0x8c] sm:$0x1]
        %v4540 = vsel %vm4505, 0, %v4539
        %4541 = vst [vmem:[#allocation3 + $0x8c] sm:$0x1] %v4540
        %v4542 = vld [vmem:[#allocation3 + $0x98] sm:$0x1]
        %v4543 = vsel %vm4505, 0, %v4542
        %4544 = vst [vmem:[#allocation3 + $0x98] sm:$0x1] %v4543
        %v4545 = vld [vmem:[#allocation3 + $0xa4] sm:$0x1]
        %v4546 = vsel %vm4505, 0, %v4545
        %4547 = vst [vmem:[#allocation3 + $0xa4] sm:$0x1] %v4546
        %v4548 = vld [vmem:[#allocation3 + $0xb0] sm:$0x1]
        %v4549 = vsel %vm4505, 0, %v4548
        %4550 = vst [vmem:[#allocation3 + $0xb0] sm:$0x1] %v4549
        %v4551 = vld [vmem:[#allocation3 + $0xbc] sm:$0x1]
        %v4552 = vsel %vm4505, 0, %v4551
        %4553 = vst [vmem:[#allocation3 + $0xbc] sm:$0x1] %v4552
        %v4554 = vld [vmem:[#allocation3 + $0xc8] sm:$0x1]
        %v4555 = vsel %vm4505, 0, %v4554
        %4556 = vst [vmem:[#allocation3 + $0xc8] sm:$0x1] %v4555
        %v4557 = vld [vmem:[#allocation3 + $0xd4] sm:$0x1]
        %v4558 = vsel %vm4505, 0, %v4557
        %4559 = vst [vmem:[#allocation3 + $0xd4] sm:$0x1] %v4558
        %v4560 = vpack.c.bf16 %v4409, %v4408
        %v4561 = vpack.c.bf16 %v4411, %v4410
        %v4562 = vpack.c.bf16 %v4413, %v4412
        %v4563 = vpack.c.bf16 %v4415, %v4414
        %v4564 = vpack.c.bf16 %v4417, %v4416
        %v4565 = vpack.c.bf16 %v4419, %v4418
        %v4566 = vpack.c.bf16 %v4421, %v4420
        %v4567 = vpack.c.bf16 %v4423, %v4422
        %v4568 = vpack.c.bf16 %v4425, %v4424
        %v4569 = vpack.c.bf16 %v4427, %v4426
        %v4570 = vpack.c.bf16 %v4429, %v4428
        %v4571 = vpack.c.bf16 %v4431, %v4430
        %v4572 = vpack.c.bf16 %v4433, %v4432
        %v4573 = vpack.c.bf16 %v4435, %v4434
        %v4574 = vpack.c.bf16 %v4437, %v4436
        %v4575 = vpack.c.bf16 %v4439, %v4438
        %v4592 = vunpack.c.l.b16 %v4560
        %v4593 = vunpack.c.h.b16 %v4560
        %v4594 = vunpack.c.l.b16 %v4561
        %v4595 = vunpack.c.h.b16 %v4561
        %v4596 = vunpack.c.l.b16 %v4562
        %v4597 = vunpack.c.h.b16 %v4562
        %v4598 = vunpack.c.l.b16 %v4563
        %v4599 = vunpack.c.h.b16 %v4563
        %v4600 = vunpack.c.l.b16 %v4564
        %v4601 = vunpack.c.h.b16 %v4564
        %v4602 = vunpack.c.l.b16 %v4565
        %v4603 = vunpack.c.h.b16 %v4565
        %v4604 = vunpack.c.l.b16 %v4566
        %v4605 = vunpack.c.h.b16 %v4566
        %v4606 = vunpack.c.l.b16 %v4567
        %v4607 = vunpack.c.h.b16 %v4567
        %v4608 = vunpack.c.l.b16 %v4568
        %v4609 = vunpack.c.h.b16 %v4568
        %v4610 = vunpack.c.l.b16 %v4569
        %v4611 = vunpack.c.h.b16 %v4569
        %v4612 = vunpack.c.l.b16 %v4570
        %v4613 = vunpack.c.h.b16 %v4570
        %v4614 = vunpack.c.l.b16 %v4571
        %v4615 = vunpack.c.h.b16 %v4571
        %v4616 = vunpack.c.l.b16 %v4572
        %v4617 = vunpack.c.h.b16 %v4572
        %v4618 = vunpack.c.l.b16 %v4573
        %v4619 = vunpack.c.h.b16 %v4573
        %v4620 = vunpack.c.l.b16 %v4574
        %v4621 = vunpack.c.h.b16 %v4574
        %v4622 = vunpack.c.l.b16 %v4575
        %v4623 = vunpack.c.h.b16 %v4575
        %v4624 = vpack.c.b16 %v4592, %v4592
        %v4625 = vpack.c.b16 %v4593, %v4593
        %v4626 = vpack.c.b16 %v4594, %v4594
        %v4627 = vpack.c.b16 %v4595, %v4595
        %v4628 = vpack.c.b16 %v4596, %v4596
        %v4629 = vpack.c.b16 %v4597, %v4597
        %v4630 = vpack.c.b16 %v4598, %v4598
        %v4631 = vpack.c.b16 %v4599, %v4599
        %v4632 = vpack.c.b16 %v4600, %v4600
        %v4633 = vpack.c.b16 %v4601, %v4601
        %v4634 = vpack.c.b16 %v4602, %v4602
        %v4635 = vpack.c.b16 %v4603, %v4603
        %v4636 = vpack.c.b16 %v4604, %v4604
        %v4637 = vpack.c.b16 %v4605, %v4605
        %v4638 = vpack.c.b16 %v4606, %v4606
        %v4639 = vpack.c.b16 %v4607, %v4607
        %v4640 = vpack.c.b16 %v4608, %v4608
        %v4641 = vpack.c.b16 %v4609, %v4609
        %v4642 = vpack.c.b16 %v4610, %v4610
        %v4643 = vpack.c.b16 %v4611, %v4611
        %v4644 = vpack.c.b16 %v4612, %v4612
        %v4645 = vpack.c.b16 %v4613, %v4613
        %v4646 = vpack.c.b16 %v4614, %v4614
        %v4647 = vpack.c.b16 %v4615, %v4615
        %v4648 = vpack.c.b16 %v4616, %v4616
        %v4649 = vpack.c.b16 %v4617, %v4617
        %v4650 = vpack.c.b16 %v4618, %v4618
        %v4651 = vpack.c.b16 %v4619, %v4619
        %v4652 = vpack.c.b16 %v4620, %v4620
        %v4653 = vpack.c.b16 %v4621, %v4621
        %v4654 = vpack.c.b16 %v4622, %v4622
        %v4655 = vpack.c.b16 %v4623, %v4623
        %v4657 = vshrl.u32 %v4624, 16
        %v4659 = vrot.slane %v4657, 7
        %v4660 = vshll.u32 %v4624, 16
        %v4662 = vor.u32 %v4659, %v4660
        %v4663 = vrot.slane %v4659, 4
        %v4665 = vshrl.u32 %v4625, 16
        %v4667 = vrot.slane %v4665, 7
        %v4668 = vshll.u32 %v4625, 16
        %v4670 = vor.u32 %v4667, %v4668
        %v4671 = vsel %vm657, %v4663, %v4670
        %v4672 = vrot.slane %v4667, 4
        %v4674 = vshrl.u32 %v4626, 16
        %v4676 = vrot.slane %v4674, 7
        %v4677 = vshll.u32 %v4626, 16
        %v4679 = vor.u32 %v4676, %v4677
        %v4680 = vrot.slane %v4676, 4
        %v4682 = vshrl.u32 %v4627, 16
        %v4684 = vrot.slane %v4682, 7
        %v4685 = vshll.u32 %v4627, 16
        %v4687 = vor.u32 %v4684, %v4685
        %v4688 = vsel %vm657, %v4680, %v4687
        %v4689 = vrot.slane %v4684, 4
        %v4691 = vshrl.u32 %v4628, 16
        %v4693 = vrot.slane %v4691, 7
        %v4694 = vshll.u32 %v4628, 16
        %v4696 = vor.u32 %v4693, %v4694
        %v4697 = vrot.slane %v4693, 4
        %v4699 = vshrl.u32 %v4629, 16
        %v4701 = vrot.slane %v4699, 7
        %v4702 = vshll.u32 %v4629, 16
        %v4704 = vor.u32 %v4701, %v4702
        %v4705 = vsel %vm657, %v4697, %v4704
        %v4706 = vrot.slane %v4701, 4
        %v4708 = vshrl.u32 %v4630, 16
        %v4710 = vrot.slane %v4708, 7
        %v4711 = vshll.u32 %v4630, 16
        %v4713 = vor.u32 %v4710, %v4711
        %v4714 = vrot.slane %v4710, 4
        %v4716 = vshrl.u32 %v4631, 16
        %v4718 = vrot.slane %v4716, 7
        %v4719 = vshll.u32 %v4631, 16
        %v4721 = vor.u32 %v4718, %v4719
        %v4722 = vsel %vm657, %v4714, %v4721
        %v4723 = vrot.slane %v4718, 4
        %v4725 = vshrl.u32 %v4632, 16
        %v4727 = vrot.slane %v4725, 7
        %v4728 = vshll.u32 %v4632, 16
        %v4730 = vor.u32 %v4727, %v4728
        %v4731 = vrot.slane %v4727, 4
        %v4733 = vshrl.u32 %v4633, 16
        %v4735 = vrot.slane %v4733, 7
        %v4736 = vshll.u32 %v4633, 16
        %v4738 = vor.u32 %v4735, %v4736
        %v4739 = vsel %vm657, %v4731, %v4738
        %v4740 = vrot.slane %v4735, 4
        %v4742 = vshrl.u32 %v4634, 16
        %v4744 = vrot.slane %v4742, 7
        %v4745 = vshll.u32 %v4634, 16
        %v4747 = vor.u32 %v4744, %v4745
        %v4748 = vrot.slane %v4744, 4
        %v4750 = vshrl.u32 %v4635, 16
        %v4752 = vrot.slane %v4750, 7
        %v4753 = vshll.u32 %v4635, 16
        %v4755 = vor.u32 %v4752, %v4753
        %v4756 = vsel %vm657, %v4748, %v4755
        %v4757 = vrot.slane %v4752, 4
        %v4759 = vshrl.u32 %v4636, 16
        %v4761 = vrot.slane %v4759, 7
        %v4762 = vshll.u32 %v4636, 16
        %v4764 = vor.u32 %v4761, %v4762
        %v4765 = vrot.slane %v4761, 4
        %v4767 = vshrl.u32 %v4637, 16
        %v4769 = vrot.slane %v4767, 7
        %v4770 = vshll.u32 %v4637, 16
        %v4772 = vor.u32 %v4769, %v4770
        %v4773 = vsel %vm657, %v4765, %v4772
        %v4774 = vrot.slane %v4769, 4
        %v4776 = vshrl.u32 %v4638, 16
        %v4778 = vrot.slane %v4776, 7
        %v4779 = vshll.u32 %v4638, 16
        %v4781 = vor.u32 %v4778, %v4779
        %v4782 = vrot.slane %v4778, 4
        %v4784 = vshrl.u32 %v4639, 16
        %v4786 = vrot.slane %v4784, 7
        %v4787 = vshll.u32 %v4639, 16
        %v4789 = vor.u32 %v4786, %v4787
        %v4790 = vsel %vm657, %v4782, %v4789
        %v4791 = vrot.slane %v4786, 4
        %v4793 = vshrl.u32 %v4640, 16
        %v4795 = vrot.slane %v4793, 7
        %v4796 = vshll.u32 %v4640, 16
        %v4798 = vor.u32 %v4795, %v4796
        %v4799 = vrot.slane %v4795, 4
        %v4801 = vshrl.u32 %v4641, 16
        %v4803 = vrot.slane %v4801, 7
        %v4804 = vshll.u32 %v4641, 16
        %v4806 = vor.u32 %v4803, %v4804
        %v4807 = vsel %vm657, %v4799, %v4806
        %v4808 = vrot.slane %v4803, 4
        %v4810 = vshrl.u32 %v4642, 16
        %v4812 = vrot.slane %v4810, 7
        %v4813 = vshll.u32 %v4642, 16
        %v4815 = vor.u32 %v4812, %v4813
        %v4816 = vrot.slane %v4812, 4
        %v4818 = vshrl.u32 %v4643, 16
        %v4820 = vrot.slane %v4818, 7
        %v4821 = vshll.u32 %v4643, 16
        %v4823 = vor.u32 %v4820, %v4821
        %v4824 = vsel %vm657, %v4816, %v4823
        %v4825 = vrot.slane %v4820, 4
        %v4827 = vshrl.u32 %v4644, 16
        %v4829 = vrot.slane %v4827, 7
        %v4830 = vshll.u32 %v4644, 16
        %v4832 = vor.u32 %v4829, %v4830
        %v4833 = vrot.slane %v4829, 4
        %v4835 = vshrl.u32 %v4645, 16
        %v4837 = vrot.slane %v4835, 7
        %v4838 = vshll.u32 %v4645, 16
        %v4840 = vor.u32 %v4837, %v4838
        %v4841 = vsel %vm657, %v4833, %v4840
        %v4842 = vrot.slane %v4837, 4
        %v4844 = vshrl.u32 %v4646, 16
        %v4846 = vrot.slane %v4844, 7
        %v4847 = vshll.u32 %v4646, 16
        %v4849 = vor.u32 %v4846, %v4847
        %v4850 = vrot.slane %v4846, 4
        %v4852 = vshrl.u32 %v4647, 16
        %v4854 = vrot.slane %v4852, 7
        %v4855 = vshll.u32 %v4647, 16
        %v4857 = vor.u32 %v4854, %v4855
        %v4858 = vsel %vm657, %v4850, %v4857
        %v4859 = vrot.slane %v4854, 4
        %v4861 = vshrl.u32 %v4648, 16
        %v4863 = vrot.slane %v4861, 7
        %v4864 = vshll.u32 %v4648, 16
        %v4866 = vor.u32 %v4863, %v4864
        %v4867 = vrot.slane %v4863, 4
        %v4869 = vshrl.u32 %v4649, 16
        %v4871 = vrot.slane %v4869, 7
        %v4872 = vshll.u32 %v4649, 16
        %v4874 = vor.u32 %v4871, %v4872
        %v4875 = vsel %vm657, %v4867, %v4874
        %v4876 = vrot.slane %v4871, 4
        %v4878 = vshrl.u32 %v4650, 16
        %v4880 = vrot.slane %v4878, 7
        %v4881 = vshll.u32 %v4650, 16
        %v4883 = vor.u32 %v4880, %v4881
        %v4884 = vrot.slane %v4880, 4
        %v4886 = vshrl.u32 %v4651, 16
        %v4888 = vrot.slane %v4886, 7
        %v4889 = vshll.u32 %v4651, 16
        %v4891 = vor.u32 %v4888, %v4889
        %v4892 = vsel %vm657, %v4884, %v4891
        %v4893 = vrot.slane %v4888, 4
        %v4895 = vshrl.u32 %v4652, 16
        %v4897 = vrot.slane %v4895, 7
        %v4898 = vshll.u32 %v4652, 16
        %v4900 = vor.u32 %v4897, %v4898
        %v4901 = vrot.slane %v4897, 4
        %v4903 = vshrl.u32 %v4653, 16
        %v4905 = vrot.slane %v4903, 7
        %v4906 = vshll.u32 %v4653, 16
        %v4908 = vor.u32 %v4905, %v4906
        %v4909 = vsel %vm657, %v4901, %v4908
        %v4910 = vrot.slane %v4905, 4
        %v4912 = vshrl.u32 %v4654, 16
        %v4914 = vrot.slane %v4912, 7
        %v4915 = vshll.u32 %v4654, 16
        %v4917 = vor.u32 %v4914, %v4915
        %v4918 = vrot.slane %v4914, 4
        %v4920 = vshrl.u32 %v4655, 16
        %v4922 = vrot.slane %v4920, 7
        %v4923 = vshll.u32 %v4655, 16
        %v4925 = vor.u32 %v4922, %v4923
        %v4926 = vsel %vm657, %v4918, %v4925
        %v4927 = vrot.slane %v4922, 4
        %s4976 = scalar_lea.vmem [#allocation3], 12
        %vm4977 = vcmask 125952
        %vm4978 = vmand %vm4977, %vm472
        %v4979 = vld [vmem:[%s4976] sm:$0xf]
        %v4980 = vsel %vm4978, %v4662, %v4979
        %4981 = vst [vmem:[%s4976] sm:$0xf] %v4980
        %4982 = vst.msk [vmem:[%s4976 + $0x4] sm:$0xf] %vm4440, %v4671
        %v4983 = vld [vmem:[%s4976 + $0x8] sm:$0x1]
        %v4984 = vsel %vm4450, %v4672, %v4983
        %4985 = vst [vmem:[%s4976 + $0x8] sm:$0x1] %v4984
        %v4986 = vld [vmem:[%s4976 + $0xc] sm:$0xf]
        %v4987 = vsel %vm4978, %v4679, %v4986
        %4988 = vst [vmem:[%s4976 + $0xc] sm:$0xf] %v4987
        %4989 = vst.msk [vmem:[%s4976 + $0x10] sm:$0xf] %vm4440, %v4688
        %v4990 = vld [vmem:[%s4976 + $0x14] sm:$0x1]
        %v4991 = vsel %vm4450, %v4689, %v4990
        %4992 = vst [vmem:[%s4976 + $0x14] sm:$0x1] %v4991
        %v4993 = vld [vmem:[%s4976 + $0x18] sm:$0xf]
        %v4994 = vsel %vm4978, %v4696, %v4993
        %4995 = vst [vmem:[%s4976 + $0x18] sm:$0xf] %v4994
        %4996 = vst.msk [vmem:[%s4976 + $0x1c] sm:$0xf] %vm4440, %v4705
        %v4997 = vld [vmem:[%s4976 + $0x20] sm:$0x1]
        %v4998 = vsel %vm4450, %v4706, %v4997
        %4999 = vst [vmem:[%s4976 + $0x20] sm:$0x1] %v4998
        %v5000 = vld [vmem:[%s4976 + $0x24] sm:$0xf]
        %v5001 = vsel %vm4978, %v4713, %v5000
        %5002 = vst [vmem:[%s4976 + $0x24] sm:$0xf] %v5001
        %5003 = vst.msk [vmem:[%s4976 + $0x28] sm:$0xf] %vm4440, %v4722
        %v5004 = vld [vmem:[%s4976 + $0x2c] sm:$0x1]
        %v5005 = vsel %vm4450, %v4723, %v5004
        %5006 = vst [vmem:[%s4976 + $0x2c] sm:$0x1] %v5005
        %v5007 = vld [vmem:[%s4976 + $0x30] sm:$0xf]
        %v5008 = vsel %vm4978, %v4730, %v5007
        %5009 = vst [vmem:[%s4976 + $0x30] sm:$0xf] %v5008
        %5010 = vst.msk [vmem:[%s4976 + $0x34] sm:$0xf] %vm4440, %v4739
        %v5011 = vld [vmem:[%s4976 + $0x38] sm:$0x1]
        %v5012 = vsel %vm4450, %v4740, %v5011
        %5013 = vst [vmem:[%s4976 + $0x38] sm:$0x1] %v5012
        %v5014 = vld [vmem:[%s4976 + $0x3c] sm:$0xf]
        %v5015 = vsel %vm4978, %v4747, %v5014
        %5016 = vst [vmem:[%s4976 + $0x3c] sm:$0xf] %v5015
        %5017 = vst.msk [vmem:[%s4976 + $0x40] sm:$0xf] %vm4440, %v4756
        %v5018 = vld [vmem:[%s4976 + $0x44] sm:$0x1]
        %v5019 = vsel %vm4450, %v4757, %v5018
        %5020 = vst [vmem:[%s4976 + $0x44] sm:$0x1] %v5019
        %v5021 = vld [vmem:[%s4976 + $0x48] sm:$0xf]
        %v5022 = vsel %vm4978, %v4764, %v5021
        %5023 = vst [vmem:[%s4976 + $0x48] sm:$0xf] %v5022
        %5024 = vst.msk [vmem:[%s4976 + $0x4c] sm:$0xf] %vm4440, %v4773
        %v5025 = vld [vmem:[%s4976 + $0x50] sm:$0x1]
        %v5026 = vsel %vm4450, %v4774, %v5025
        %5027 = vst [vmem:[%s4976 + $0x50] sm:$0x1] %v5026
        %v5028 = vld [vmem:[%s4976 + $0x54] sm:$0xf]
        %v5029 = vsel %vm4978, %v4781, %v5028
        %5030 = vst [vmem:[%s4976 + $0x54] sm:$0xf] %v5029
        %5031 = vst.msk [vmem:[%s4976 + $0x58] sm:$0xf] %vm4440, %v4790
        %v5032 = vld [vmem:[%s4976 + $0x5c] sm:$0x1]
        %v5033 = vsel %vm4450, %v4791, %v5032
        %5034 = vst [vmem:[%s4976 + $0x5c] sm:$0x1] %v5033
        %v5035 = vld [vmem:[%s4976 + $0x60] sm:$0xf]
        %v5036 = vsel %vm4978, %v4798, %v5035
        %5037 = vst [vmem:[%s4976 + $0x60] sm:$0xf] %v5036
        %5038 = vst.msk [vmem:[%s4976 + $0x64] sm:$0xf] %vm4440, %v4807
        %v5039 = vld [vmem:[%s4976 + $0x68] sm:$0x1]
        %v5040 = vsel %vm4450, %v4808, %v5039
        %5041 = vst [vmem:[%s4976 + $0x68] sm:$0x1] %v5040
        %v5042 = vld [vmem:[%s4976 + $0x6c] sm:$0xf]
        %v5043 = vsel %vm4978, %v4815, %v5042
        %5044 = vst [vmem:[%s4976 + $0x6c] sm:$0xf] %v5043
        %5045 = vst.msk [vmem:[%s4976 + $0x70] sm:$0xf] %vm4440, %v4824
        %v5046 = vld [vmem:[%s4976 + $0x74] sm:$0x1]
        %v5047 = vsel %vm4450, %v4825, %v5046
        %5048 = vst [vmem:[%s4976 + $0x74] sm:$0x1] %v5047
        %v5049 = vld [vmem:[%s4976 + $0x78] sm:$0xf]
        %v5050 = vsel %vm4978, %v4832, %v5049
        %5051 = vst [vmem:[%s4976 + $0x78] sm:$0xf] %v5050
        %5052 = vst.msk [vmem:[%s4976 + $0x7c] sm:$0xf] %vm4440, %v4841
        %v5053 = vld [vmem:[%s4976 + $0x80] sm:$0x1]
        %v5054 = vsel %vm4450, %v4842, %v5053
        %5055 = vst [vmem:[%s4976 + $0x80] sm:$0x1] %v5054
        %v5056 = vld [vmem:[%s4976 + $0x84] sm:$0xf]
        %v5057 = vsel %vm4978, %v4849, %v5056
        %5058 = vst [vmem:[%s4976 + $0x84] sm:$0xf] %v5057
        %5059 = vst.msk [vmem:[%s4976 + $0x88] sm:$0xf] %vm4440, %v4858
        %v5060 = vld [vmem:[%s4976 + $0x8c] sm:$0x1]
        %v5061 = vsel %vm4450, %v4859, %v5060
        %5062 = vst [vmem:[%s4976 + $0x8c] sm:$0x1] %v5061
        %v5063 = vld [vmem:[%s4976 + $0x90] sm:$0xf]
        %v5064 = vsel %vm4978, %v4866, %v5063
        %5065 = vst [vmem:[%s4976 + $0x90] sm:$0xf] %v5064
        %5066 = vst.msk [vmem:[%s4976 + $0x94] sm:$0xf] %vm4440, %v4875
        %v5067 = vld [vmem:[%s4976 + $0x98] sm:$0x1]
        %v5068 = vsel %vm4450, %v4876, %v5067
        %5069 = vst [vmem:[%s4976 + $0x98] sm:$0x1] %v5068
        %v5070 = vld [vmem:[%s4976 + $0x9c] sm:$0xf]
        %v5071 = vsel %vm4978, %v4883, %v5070
        %5072 = vst [vmem:[%s4976 + $0x9c] sm:$0xf] %v5071
        %5073 = vst.msk [vmem:[%s4976 + $0xa0] sm:$0xf] %vm4440, %v4892
        %v5074 = vld [vmem:[%s4976 + $0xa4] sm:$0x1]
        %v5075 = vsel %vm4450, %v4893, %v5074
        %5076 = vst [vmem:[%s4976 + $0xa4] sm:$0x1] %v5075
        %v5077 = vld [vmem:[%s4976 + $0xa8] sm:$0xf]
        %v5078 = vsel %vm4978, %v4900, %v5077
        %5079 = vst [vmem:[%s4976 + $0xa8] sm:$0xf] %v5078
        %5080 = vst.msk [vmem:[%s4976 + $0xac] sm:$0xf] %vm4440, %v4909
        %v5081 = vld [vmem:[%s4976 + $0xb0] sm:$0x1]
        %v5082 = vsel %vm4450, %v4910, %v5081
        %5083 = vst [vmem:[%s4976 + $0xb0] sm:$0x1] %v5082
        %v5084 = vld [vmem:[%s4976 + $0xb4] sm:$0xf]
        %v5085 = vsel %vm4978, %v4917, %v5084
        %5086 = vst [vmem:[%s4976 + $0xb4] sm:$0xf] %v5085
        %5087 = vst.msk [vmem:[%s4976 + $0xb8] sm:$0xf] %vm4440, %v4926
        %v5088 = vld [vmem:[%s4976 + $0xbc] sm:$0x1]
        %v5089 = vsel %vm4450, %v4927, %v5088
        %5090 = vst [vmem:[%s4976 + $0xbc] sm:$0x1] %v5089
        %v5091 = vld [vmem:[#allocation3] sm:$0xf]
        %v5092 = vld [vmem:[#allocation3 + $0x4] sm:$0xf]
        %v5093 = vld [vmem:[#allocation3 + $0xc] sm:$0xf]
        %v5094 = vld [vmem:[#allocation3 + $0x10] sm:$0xf]
        %v5095 = vld [vmem:[#allocation3 + $0x18] sm:$0xf]
        %v5096 = vld [vmem:[#allocation3 + $0x1c] sm:$0xf]
        %v5097 = vld [vmem:[#allocation3 + $0x24] sm:$0xf]
        %v5098 = vld [vmem:[#allocation3 + $0x28] sm:$0xf]
        %v5099 = vld [vmem:[#allocation3 + $0x30] sm:$0xf]
        %v5100 = vld [vmem:[#allocation3 + $0x34] sm:$0xf]
        %v5101 = vld [vmem:[#allocation3 + $0x3c] sm:$0xf]
        %v5102 = vld [vmem:[#allocation3 + $0x40] sm:$0xf]
        %v5103 = vld [vmem:[#allocation3 + $0x48] sm:$0xf]
        %v5104 = vld [vmem:[#allocation3 + $0x4c] sm:$0xf]
        %v5105 = vld [vmem:[#allocation3 + $0x54] sm:$0xf]
        %v5106 = vld [vmem:[#allocation3 + $0x58] sm:$0xf]
        %v5107 = vld [vmem:[#allocation3 + $0x60] sm:$0xf]
        %v5108 = vld [vmem:[#allocation3 + $0x64] sm:$0xf]
        %v5109 = vld [vmem:[#allocation3 + $0x6c] sm:$0xf]
        %v5110 = vld [vmem:[#allocation3 + $0x70] sm:$0xf]
        %v5111 = vld [vmem:[#allocation3 + $0x78] sm:$0xf]
        %v5112 = vld [vmem:[#allocation3 + $0x7c] sm:$0xf]
        %v5113 = vld [vmem:[#allocation3 + $0x84] sm:$0xf]
        %v5114 = vld [vmem:[#allocation3 + $0x88] sm:$0xf]
        %v5115 = vld [vmem:[#allocation3 + $0x90] sm:$0xf]
        %v5116 = vld [vmem:[#allocation3 + $0x94] sm:$0xf]
        %v5117 = vld [vmem:[#allocation3 + $0x9c] sm:$0xf]
        %v5118 = vld [vmem:[#allocation3 + $0xa0] sm:$0xf]
        %v5119 = vld [vmem:[#allocation3 + $0xa8] sm:$0xf]
        %v5120 = vld [vmem:[#allocation3 + $0xac] sm:$0xf]
        %v5121 = vld [vmem:[#allocation3 + $0xb4] sm:$0xf]
        %v5122 = vld [vmem:[#allocation3 + $0xb8] sm:$0xf]
        %v5123 = vld [vmem:[#allocation3 + $0x8] sm:$0x1]
        %v5124 = vld [vmem:[#allocation3 + $0x14] sm:$0x1]
        %v5125 = vld [vmem:[#allocation3 + $0x20] sm:$0x1]
        %v5126 = vld [vmem:[#allocation3 + $0x2c] sm:$0x1]
        %v5127 = vld [vmem:[#allocation3 + $0x38] sm:$0x1]
        %v5128 = vld [vmem:[#allocation3 + $0x44] sm:$0x1]
        %v5129 = vld [vmem:[#allocation3 + $0x50] sm:$0x1]
        %v5130 = vld [vmem:[#allocation3 + $0x5c] sm:$0x1]
        %v5131 = vld [vmem:[#allocation3 + $0x68] sm:$0x1]
        %v5132 = vld [vmem:[#allocation3 + $0x74] sm:$0x1]
        %v5133 = vld [vmem:[#allocation3 + $0x80] sm:$0x1]
        %v5134 = vld [vmem:[#allocation3 + $0x8c] sm:$0x1]
        %v5135 = vld [vmem:[#allocation3 + $0x98] sm:$0x1]
        %v5136 = vld [vmem:[#allocation3 + $0xa4] sm:$0x1]
        %v5137 = vld [vmem:[#allocation3 + $0xb0] sm:$0x1]
        %v5138 = vld [vmem:[#allocation3 + $0xbc] sm:$0x1]
        %v5140 = vshrl.u32 %v5091, 16
        %v5142 = vrot.slane %v5140, 4
        %v5143 = vshll.u32 %v5091, 16
        %v5145 = vrot.slane %v5143, 5
        %v5146 = vor.u32 %v5142, %v5145
        %v5147 = vrot.slane %v5146, 4
        %v5149 = vshll.u32 %v5092, 16
        %v5151 = vrot.slane %v5149, 5
        %v5152 = vsel %vm1143, %v5147, %v5151
        %v5153 = vshrl.u32 %v5092, 16
        %v5155 = vrot.slane %v5153, 4
        %v5156 = vor.u32 %v5155, %v5151
        %v5157 = vrot.slane %v5156, 4
        %v5159 = vshll.u32 %v5123, 16
        %v5161 = vrot.slane %v5159, 5
        %v5162 = vsel %vm1143, %v5157, %v5161
        %v5164 = vshrl.u32 %v5093, 16
        %v5166 = vrot.slane %v5164, 4
        %v5167 = vshll.u32 %v5093, 16
        %v5169 = vrot.slane %v5167, 5
        %v5170 = vor.u32 %v5166, %v5169
        %v5171 = vrot.slane %v5170, 4
        %v5173 = vshll.u32 %v5094, 16
        %v5175 = vrot.slane %v5173, 5
        %v5176 = vsel %vm1143, %v5171, %v5175
        %v5177 = vshrl.u32 %v5094, 16
        %v5179 = vrot.slane %v5177, 4
        %v5180 = vor.u32 %v5179, %v5175
        %v5181 = vrot.slane %v5180, 4
        %v5183 = vshll.u32 %v5124, 16
        %v5185 = vrot.slane %v5183, 5
        %v5186 = vsel %vm1143, %v5181, %v5185
        %v5188 = vshrl.u32 %v5095, 16
        %v5190 = vrot.slane %v5188, 4
        %v5191 = vshll.u32 %v5095, 16
        %v5193 = vrot.slane %v5191, 5
        %v5194 = vor.u32 %v5190, %v5193
        %v5195 = vrot.slane %v5194, 4
        %v5197 = vshll.u32 %v5096, 16
        %v5199 = vrot.slane %v5197, 5
        %v5200 = vsel %vm1143, %v5195, %v5199
        %v5201 = vshrl.u32 %v5096, 16
        %v5203 = vrot.slane %v5201, 4
        %v5204 = vor.u32 %v5203, %v5199
        %v5205 = vrot.slane %v5204, 4
        %v5207 = vshll.u32 %v5125, 16
        %v5209 = vrot.slane %v5207, 5
        %v5210 = vsel %vm1143, %v5205, %v5209
        %v5212 = vshrl.u32 %v5097, 16
        %v5214 = vrot.slane %v5212, 4
        %v5215 = vshll.u32 %v5097, 16
        %v5217 = vrot.slane %v5215, 5
        %v5218 = vor.u32 %v5214, %v5217
        %v5219 = vrot.slane %v5218, 4
        %v5221 = vshll.u32 %v5098, 16
        %v5223 = vrot.slane %v5221, 5
        %v5224 = vsel %vm1143, %v5219, %v5223
        %v5225 = vshrl.u32 %v5098, 16
        %v5227 = vrot.slane %v5225, 4
        %v5228 = vor.u32 %v5227, %v5223
        %v5229 = vrot.slane %v5228, 4
        %v5231 = vshll.u32 %v5126, 16
        %v5233 = vrot.slane %v5231, 5
        %v5234 = vsel %vm1143, %v5229, %v5233
        %v5236 = vshrl.u32 %v5099, 16
        %v5238 = vrot.slane %v5236, 4
        %v5239 = vshll.u32 %v5099, 16
        %v5241 = vrot.slane %v5239, 5
        %v5242 = vor.u32 %v5238, %v5241
        %v5243 = vrot.slane %v5242, 4
        %v5245 = vshll.u32 %v5100, 16
        %v5247 = vrot.slane %v5245, 5
        %v5248 = vsel %vm1143, %v5243, %v5247
        %v5249 = vshrl.u32 %v5100, 16
        %v5251 = vrot.slane %v5249, 4
        %v5252 = vor.u32 %v5251, %v5247
        %v5253 = vrot.slane %v5252, 4
        %v5255 = vshll.u32 %v5127, 16
        %v5257 = vrot.slane %v5255, 5
        %v5258 = vsel %vm1143, %v5253, %v5257
        %v5260 = vshrl.u32 %v5101, 16
        %v5262 = vrot.slane %v5260, 4
        %v5263 = vshll.u32 %v5101, 16
        %v5265 = vrot.slane %v5263, 5
        %v5266 = vor.u32 %v5262, %v5265
        %v5267 = vrot.slane %v5266, 4
        %v5269 = vshll.u32 %v5102, 16
        %v5271 = vrot.slane %v5269, 5
        %v5272 = vsel %vm1143, %v5267, %v5271
        %v5273 = vshrl.u32 %v5102, 16
        %v5275 = vrot.slane %v5273, 4
        %v5276 = vor.u32 %v5275, %v5271
        %v5277 = vrot.slane %v5276, 4
        %v5279 = vshll.u32 %v5128, 16
        %v5281 = vrot.slane %v5279, 5
        %v5282 = vsel %vm1143, %v5277, %v5281
        %v5284 = vshrl.u32 %v5103, 16
        %v5286 = vrot.slane %v5284, 4
        %v5287 = vshll.u32 %v5103, 16
        %v5289 = vrot.slane %v5287, 5
        %v5290 = vor.u32 %v5286, %v5289
        %v5291 = vrot.slane %v5290, 4
        %v5293 = vshll.u32 %v5104, 16
        %v5295 = vrot.slane %v5293, 5
        %v5296 = vsel %vm1143, %v5291, %v5295
        %v5297 = vshrl.u32 %v5104, 16
        %v5299 = vrot.slane %v5297, 4
        %v5300 = vor.u32 %v5299, %v5295
        %v5301 = vrot.slane %v5300, 4
        %v5303 = vshll.u32 %v5129, 16
        %v5305 = vrot.slane %v5303, 5
        %v5306 = vsel %vm1143, %v5301, %v5305
        %v5308 = vshrl.u32 %v5105, 16
        %v5310 = vrot.slane %v5308, 4
        %v5311 = vshll.u32 %v5105, 16
        %v5313 = vrot.slane %v5311, 5
        %v5314 = vor.u32 %v5310, %v5313
        %v5315 = vrot.slane %v5314, 4
        %v5317 = vshll.u32 %v5106, 16
        %v5319 = vrot.slane %v5317, 5
        %v5320 = vsel %vm1143, %v5315, %v5319
        %v5321 = vshrl.u32 %v5106, 16
        %v5323 = vrot.slane %v5321, 4
        %v5324 = vor.u32 %v5323, %v5319
        %v5325 = vrot.slane %v5324, 4
        %v5327 = vshll.u32 %v5130, 16
        %v5329 = vrot.slane %v5327, 5
        %v5330 = vsel %vm1143, %v5325, %v5329
        %v5332 = vshrl.u32 %v5107, 16
        %v5334 = vrot.slane %v5332, 4
        %v5335 = vshll.u32 %v5107, 16
        %v5337 = vrot.slane %v5335, 5
        %v5338 = vor.u32 %v5334, %v5337
        %v5339 = vrot.slane %v5338, 4
        %v5341 = vshll.u32 %v5108, 16
        %v5343 = vrot.slane %v5341, 5
        %v5344 = vsel %vm1143, %v5339, %v5343
        %v5345 = vshrl.u32 %v5108, 16
        %v5347 = vrot.slane %v5345, 4
        %v5348 = vor.u32 %v5347, %v5343
        %v5349 = vrot.slane %v5348, 4
        %v5351 = vshll.u32 %v5131, 16
        %v5353 = vrot.slane %v5351, 5
        %v5354 = vsel %vm1143, %v5349, %v5353
        %v5356 = vshrl.u32 %v5109, 16
        %v5358 = vrot.slane %v5356, 4
        %v5359 = vshll.u32 %v5109, 16
        %v5361 = vrot.slane %v5359, 5
        %v5362 = vor.u32 %v5358, %v5361
        %v5363 = vrot.slane %v5362, 4
        %v5365 = vshll.u32 %v5110, 16
        %v5367 = vrot.slane %v5365, 5
        %v5368 = vsel %vm1143, %v5363, %v5367
        %v5369 = vshrl.u32 %v5110, 16
        %v5371 = vrot.slane %v5369, 4
        %v5372 = vor.u32 %v5371, %v5367
        %v5373 = vrot.slane %v5372, 4
        %v5375 = vshll.u32 %v5132, 16
        %v5377 = vrot.slane %v5375, 5
        %v5378 = vsel %vm1143, %v5373, %v5377
        %v5380 = vshrl.u32 %v5111, 16
        %v5382 = vrot.slane %v5380, 4
        %v5383 = vshll.u32 %v5111, 16
        %v5385 = vrot.slane %v5383, 5
        %v5386 = vor.u32 %v5382, %v5385
        %v5387 = vrot.slane %v5386, 4
        %v5389 = vshll.u32 %v5112, 16
        %v5391 = vrot.slane %v5389, 5
        %v5392 = vsel %vm1143, %v5387, %v5391
        %v5393 = vshrl.u32 %v5112, 16
        %v5395 = vrot.slane %v5393, 4
        %v5396 = vor.u32 %v5395, %v5391
        %v5397 = vrot.slane %v5396, 4
        %v5399 = vshll.u32 %v5133, 16
        %v5401 = vrot.slane %v5399, 5
        %v5402 = vsel %vm1143, %v5397, %v5401
        %v5404 = vshrl.u32 %v5113, 16
        %v5406 = vrot.slane %v5404, 4
        %v5407 = vshll.u32 %v5113, 16
        %v5409 = vrot.slane %v5407, 5
        %v5410 = vor.u32 %v5406, %v5409
        %v5411 = vrot.slane %v5410, 4
        %v5413 = vshll.u32 %v5114, 16
        %v5415 = vrot.slane %v5413, 5
        %v5416 = vsel %vm1143, %v5411, %v5415
        %v5417 = vshrl.u32 %v5114, 16
        %v5419 = vrot.slane %v5417, 4
        %v5420 = vor.u32 %v5419, %v5415
        %v5421 = vrot.slane %v5420, 4
        %v5423 = vshll.u32 %v5134, 16
        %v5425 = vrot.slane %v5423, 5
        %v5426 = vsel %vm1143, %v5421, %v5425
        %v5428 = vshrl.u32 %v5115, 16
        %v5430 = vrot.slane %v5428, 4
        %v5431 = vshll.u32 %v5115, 16
        %v5433 = vrot.slane %v5431, 5
        %v5434 = vor.u32 %v5430, %v5433
        %v5435 = vrot.slane %v5434, 4
        %v5437 = vshll.u32 %v5116, 16
        %v5439 = vrot.slane %v5437, 5
        %v5440 = vsel %vm1143, %v5435, %v5439
        %v5441 = vshrl.u32 %v5116, 16
        %v5443 = vrot.slane %v5441, 4
        %v5444 = vor.u32 %v5443, %v5439
        %v5445 = vrot.slane %v5444, 4
        %v5447 = vshll.u32 %v5135, 16
        %v5449 = vrot.slane %v5447, 5
        %v5450 = vsel %vm1143, %v5445, %v5449
        %v5452 = vshrl.u32 %v5117, 16
        %v5454 = vrot.slane %v5452, 4
        %v5455 = vshll.u32 %v5117, 16
        %v5457 = vrot.slane %v5455, 5
        %v5458 = vor.u32 %v5454, %v5457
        %v5459 = vrot.slane %v5458, 4
        %v5461 = vshll.u32 %v5118, 16
        %v5463 = vrot.slane %v5461, 5
        %v5464 = vsel %vm1143, %v5459, %v5463
        %v5465 = vshrl.u32 %v5118, 16
        %v5467 = vrot.slane %v5465, 4
        %v5468 = vor.u32 %v5467, %v5463
        %v5469 = vrot.slane %v5468, 4
        %v5471 = vshll.u32 %v5136, 16
        %v5473 = vrot.slane %v5471, 5
        %v5474 = vsel %vm1143, %v5469, %v5473
        %v5476 = vshrl.u32 %v5119, 16
        %v5478 = vrot.slane %v5476, 4
        %v5479 = vshll.u32 %v5119, 16
        %v5481 = vrot.slane %v5479, 5
        %v5482 = vor.u32 %v5478, %v5481
        %v5483 = vrot.slane %v5482, 4
        %v5485 = vshll.u32 %v5120, 16
        %v5487 = vrot.slane %v5485, 5
        %v5488 = vsel %vm1143, %v5483, %v5487
        %v5489 = vshrl.u32 %v5120, 16
        %v5491 = vrot.slane %v5489, 4
        %v5492 = vor.u32 %v5491, %v5487
        %v5493 = vrot.slane %v5492, 4
        %v5495 = vshll.u32 %v5137, 16
        %v5497 = vrot.slane %v5495, 5
        %v5498 = vsel %vm1143, %v5493, %v5497
        %v5500 = vshrl.u32 %v5121, 16
        %v5502 = vrot.slane %v5500, 4
        %v5503 = vshll.u32 %v5121, 16
        %v5505 = vrot.slane %v5503, 5
        %v5506 = vor.u32 %v5502, %v5505
        %v5507 = vrot.slane %v5506, 4
        %v5509 = vshll.u32 %v5122, 16
        %v5511 = vrot.slane %v5509, 5
        %v5512 = vsel %vm1143, %v5507, %v5511
        %v5513 = vshrl.u32 %v5122, 16
        %v5515 = vrot.slane %v5513, 4
        %v5516 = vor.u32 %v5515, %v5511
        %v5517 = vrot.slane %v5516, 4
        %v5519 = vshll.u32 %v5138, 16
        %v5521 = vrot.slane %v5519, 5
        %v5522 = vsel %vm1143, %v5517, %v5521
        %v5523 = vld [vmem:[#allocation3] sm:$0xe]
        %v5524 = vld [vmem:[#allocation3 + $0xc] sm:$0xe]
        %v5525 = vld [vmem:[#allocation3 + $0x18] sm:$0xe]
        %v5526 = vld [vmem:[#allocation3 + $0x24] sm:$0xe]
        %v5527 = vld [vmem:[#allocation3 + $0x30] sm:$0xe]
        %v5528 = vld [vmem:[#allocation3 + $0x3c] sm:$0xe]
        %v5529 = vld [vmem:[#allocation3 + $0x48] sm:$0xe]
        %v5530 = vld [vmem:[#allocation3 + $0x54] sm:$0xe]
        %v5531 = vld [vmem:[#allocation3 + $0x60] sm:$0xe]
        %v5532 = vld [vmem:[#allocation3 + $0x6c] sm:$0xe]
        %v5533 = vld [vmem:[#allocation3 + $0x78] sm:$0xe]
        %v5534 = vld [vmem:[#allocation3 + $0x84] sm:$0xe]
        %v5535 = vld [vmem:[#allocation3 + $0x90] sm:$0xe]
        %v5536 = vld [vmem:[#allocation3 + $0x9c] sm:$0xe]
        %v5537 = vld [vmem:[#allocation3 + $0xa8] sm:$0xe]
        %v5538 = vld [vmem:[#allocation3 + $0xb4] sm:$0xe]
        %v5587 = vrot.slane %v5523, 5
        %v5588 = vrot.slane %v5587, 4
        %v5589 = vrot.slane %v5092, 5
        %v5590 = vsel %vm1594, %v5588, %v5589
        %v5591 = vrot.slane %v5589, 4
        %v5592 = vrot.slane %v5123, 5
        %v5593 = vsel %vm1594, %v5591, %v5592
        %v5594 = vrot.slane %v5524, 5
        %v5595 = vrot.slane %v5594, 4
        %v5596 = vrot.slane %v5094, 5
        %v5597 = vsel %vm1594, %v5595, %v5596
        %v5598 = vrot.slane %v5596, 4
        %v5599 = vrot.slane %v5124, 5
        %v5600 = vsel %vm1594, %v5598, %v5599
        %v5601 = vrot.slane %v5525, 5
        %v5602 = vrot.slane %v5601, 4
        %v5603 = vrot.slane %v5096, 5
        %v5604 = vsel %vm1594, %v5602, %v5603
        %v5605 = vrot.slane %v5603, 4
        %v5606 = vrot.slane %v5125, 5
        %v5607 = vsel %vm1594, %v5605, %v5606
        %v5608 = vrot.slane %v5526, 5
        %v5609 = vrot.slane %v5608, 4
        %v5610 = vrot.slane %v5098, 5
        %v5611 = vsel %vm1594, %v5609, %v5610
        %v5612 = vrot.slane %v5610, 4
        %v5613 = vrot.slane %v5126, 5
        %v5614 = vsel %vm1594, %v5612, %v5613
        %v5615 = vrot.slane %v5527, 5
        %v5616 = vrot.slane %v5615, 4
        %v5617 = vrot.slane %v5100, 5
        %v5618 = vsel %vm1594, %v5616, %v5617
        %v5619 = vrot.slane %v5617, 4
        %v5620 = vrot.slane %v5127, 5
        %v5621 = vsel %vm1594, %v5619, %v5620
        %v5622 = vrot.slane %v5528, 5
        %v5623 = vrot.slane %v5622, 4
        %v5624 = vrot.slane %v5102, 5
        %v5625 = vsel %vm1594, %v5623, %v5624
        %v5626 = vrot.slane %v5624, 4
        %v5627 = vrot.slane %v5128, 5
        %v5628 = vsel %vm1594, %v5626, %v5627
        %v5629 = vrot.slane %v5529, 5
        %v5630 = vrot.slane %v5629, 4
        %v5631 = vrot.slane %v5104, 5
        %v5632 = vsel %vm1594, %v5630, %v5631
        %v5633 = vrot.slane %v5631, 4
        %v5634 = vrot.slane %v5129, 5
        %v5635 = vsel %vm1594, %v5633, %v5634
        %v5636 = vrot.slane %v5530, 5
        %v5637 = vrot.slane %v5636, 4
        %v5638 = vrot.slane %v5106, 5
        %v5639 = vsel %vm1594, %v5637, %v5638
        %v5640 = vrot.slane %v5638, 4
        %v5641 = vrot.slane %v5130, 5
        %v5642 = vsel %vm1594, %v5640, %v5641
        %v5643 = vrot.slane %v5531, 5
        %v5644 = vrot.slane %v5643, 4
        %v5645 = vrot.slane %v5108, 5
        %v5646 = vsel %vm1594, %v5644, %v5645
        %v5647 = vrot.slane %v5645, 4
        %v5648 = vrot.slane %v5131, 5
        %v5649 = vsel %vm1594, %v5647, %v5648
        %v5650 = vrot.slane %v5532, 5
        %v5651 = vrot.slane %v5650, 4
        %v5652 = vrot.slane %v5110, 5
        %v5653 = vsel %vm1594, %v5651, %v5652
        %v5654 = vrot.slane %v5652, 4
        %v5655 = vrot.slane %v5132, 5
        %v5656 = vsel %vm1594, %v5654, %v5655
        %v5657 = vrot.slane %v5533, 5
        %v5658 = vrot.slane %v5657, 4
        %v5659 = vrot.slane %v5112, 5
        %v5660 = vsel %vm1594, %v5658, %v5659
        %v5661 = vrot.slane %v5659, 4
        %v5662 = vrot.slane %v5133, 5
        %v5663 = vsel %vm1594, %v5661, %v5662
        %v5664 = vrot.slane %v5534, 5
        %v5665 = vrot.slane %v5664, 4
        %v5666 = vrot.slane %v5114, 5
        %v5667 = vsel %vm1594, %v5665, %v5666
        %v5668 = vrot.slane %v5666, 4
        %v5669 = vrot.slane %v5134, 5
        %v5670 = vsel %vm1594, %v5668, %v5669
        %v5671 = vrot.slane %v5535, 5
        %v5672 = vrot.slane %v5671, 4
        %v5673 = vrot.slane %v5116, 5
        %v5674 = vsel %vm1594, %v5672, %v5673
        %v5675 = vrot.slane %v5673, 4
        %v5676 = vrot.slane %v5135, 5
        %v5677 = vsel %vm1594, %v5675, %v5676
        %v5678 = vrot.slane %v5536, 5
        %v5679 = vrot.slane %v5678, 4
        %v5680 = vrot.slane %v5118, 5
        %v5681 = vsel %vm1594, %v5679, %v5680
        %v5682 = vrot.slane %v5680, 4
        %v5683 = vrot.slane %v5136, 5
        %v5684 = vsel %vm1594, %v5682, %v5683
        %v5685 = vrot.slane %v5537, 5
        %v5686 = vrot.slane %v5685, 4
        %v5687 = vrot.slane %v5120, 5
        %v5688 = vsel %vm1594, %v5686, %v5687
        %v5689 = vrot.slane %v5687, 4
        %v5690 = vrot.slane %v5137, 5
        %v5691 = vsel %vm1594, %v5689, %v5690
        %v5692 = vrot.slane %v5538, 5
        %v5693 = vrot.slane %v5692, 4
        %v5694 = vrot.slane %v5122, 5
        %v5695 = vsel %vm1594, %v5693, %v5694
        %v5696 = vrot.slane %v5694, 4
        %v5697 = vrot.slane %v5138, 5
        %v5698 = vsel %vm1594, %v5696, %v5697
        %v5699 = vld [vmem:[%s4976] sm:$0xf]
        %v5700 = vld [vmem:[%s4976 + $0x4] sm:$0xf]
        %v5701 = vld [vmem:[%s4976 + $0xc] sm:$0xf]
        %v5702 = vld [vmem:[%s4976 + $0x10] sm:$0xf]
        %v5703 = vld [vmem:[%s4976 + $0x18] sm:$0xf]
        %v5704 = vld [vmem:[%s4976 + $0x1c] sm:$0xf]
        %v5705 = vld [vmem:[%s4976 + $0x24] sm:$0xf]
        %v5706 = vld [vmem:[%s4976 + $0x28] sm:$0xf]
        %v5707 = vld [vmem:[%s4976 + $0x30] sm:$0xf]
        %v5708 = vld [vmem:[%s4976 + $0x34] sm:$0xf]
        %v5709 = vld [vmem:[%s4976 + $0x3c] sm:$0xf]
        %v5710 = vld [vmem:[%s4976 + $0x40] sm:$0xf]
        %v5711 = vld [vmem:[%s4976 + $0x48] sm:$0xf]
        %v5712 = vld [vmem:[%s4976 + $0x4c] sm:$0xf]
        %v5713 = vld [vmem:[%s4976 + $0x54] sm:$0xf]
        %v5714 = vld [vmem:[%s4976 + $0x58] sm:$0xf]
        %v5715 = vld [vmem:[%s4976 + $0x60] sm:$0xf]
        %v5716 = vld [vmem:[%s4976 + $0x64] sm:$0xf]
        %v5717 = vld [vmem:[%s4976 + $0x6c] sm:$0xf]
        %v5718 = vld [vmem:[%s4976 + $0x70] sm:$0xf]
        %v5719 = vld [vmem:[%s4976 + $0x78] sm:$0xf]
        %v5720 = vld [vmem:[%s4976 + $0x7c] sm:$0xf]
        %v5721 = vld [vmem:[%s4976 + $0x84] sm:$0xf]
        %v5722 = vld [vmem:[%s4976 + $0x88] sm:$0xf]
        %v5723 = vld [vmem:[%s4976 + $0x90] sm:$0xf]
        %v5724 = vld [vmem:[%s4976 + $0x94] sm:$0xf]
        %v5725 = vld [vmem:[%s4976 + $0x9c] sm:$0xf]
        %v5726 = vld [vmem:[%s4976 + $0xa0] sm:$0xf]
        %v5727 = vld [vmem:[%s4976 + $0xa8] sm:$0xf]
        %v5728 = vld [vmem:[%s4976 + $0xac] sm:$0xf]
        %v5729 = vld [vmem:[%s4976 + $0xb4] sm:$0xf]
        %v5730 = vld [vmem:[%s4976 + $0xb8] sm:$0xf]
        %v5731 = vld [vmem:[%s4976 + $0x8] sm:$0x1]
        %v5732 = vld [vmem:[%s4976 + $0x14] sm:$0x1]
        %v5733 = vld [vmem:[%s4976 + $0x20] sm:$0x1]
        %v5734 = vld [vmem:[%s4976 + $0x2c] sm:$0x1]
        %v5735 = vld [vmem:[%s4976 + $0x38] sm:$0x1]
        %v5736 = vld [vmem:[%s4976 + $0x44] sm:$0x1]
        %v5737 = vld [vmem:[%s4976 + $0x50] sm:$0x1]
        %v5738 = vld [vmem:[%s4976 + $0x5c] sm:$0x1]
        %v5739 = vld [vmem:[%s4976 + $0x68] sm:$0x1]
        %v5740 = vld [vmem:[%s4976 + $0x74] sm:$0x1]
        %v5741 = vld [vmem:[%s4976 + $0x80] sm:$0x1]
        %v5742 = vld [vmem:[%s4976 + $0x8c] sm:$0x1]
        %v5743 = vld [vmem:[%s4976 + $0x98] sm:$0x1]
        %v5744 = vld [vmem:[%s4976 + $0xa4] sm:$0x1]
        %v5745 = vld [vmem:[%s4976 + $0xb0] sm:$0x1]
        %v5746 = vld [vmem:[%s4976 + $0xbc] sm:$0x1]
        %v5748 = vshrl.u32 %v5699, 16
        %v5750 = vrot.slane %v5748, 4
        %v5751 = vshll.u32 %v5699, 16
        %v5753 = vrot.slane %v5751, 5
        %v5754 = vor.u32 %v5750, %v5753
        %v5755 = vrot.slane %v5754, 4
        %v5757 = vshll.u32 %v5700, 16
        %v5759 = vrot.slane %v5757, 5
        %v5760 = vsel %vm1143, %v5755, %v5759
        %v5761 = vshrl.u32 %v5700, 16
        %v5763 = vrot.slane %v5761, 4
        %v5764 = vor.u32 %v5763, %v5759
        %v5765 = vrot.slane %v5764, 4
        %v5767 = vshll.u32 %v5731, 16
        %v5769 = vrot.slane %v5767, 5
        %v5770 = vsel %vm1143, %v5765, %v5769
        %v5772 = vshrl.u32 %v5701, 16
        %v5774 = vrot.slane %v5772, 4
        %v5775 = vshll.u32 %v5701, 16
        %v5777 = vrot.slane %v5775, 5
        %v5778 = vor.u32 %v5774, %v5777
        %v5779 = vrot.slane %v5778, 4
        %v5781 = vshll.u32 %v5702, 16
        %v5783 = vrot.slane %v5781, 5
        %v5784 = vsel %vm1143, %v5779, %v5783
        %v5785 = vshrl.u32 %v5702, 16
        %v5787 = vrot.slane %v5785, 4
        %v5788 = vor.u32 %v5787, %v5783
        %v5789 = vrot.slane %v5788, 4
        %v5791 = vshll.u32 %v5732, 16
        %v5793 = vrot.slane %v5791, 5
        %v5794 = vsel %vm1143, %v5789, %v5793
        %v5796 = vshrl.u32 %v5703, 16
        %v5798 = vrot.slane %v5796, 4
        %v5799 = vshll.u32 %v5703, 16
        %v5801 = vrot.slane %v5799, 5
        %v5802 = vor.u32 %v5798, %v5801
        %v5803 = vrot.slane %v5802, 4
        %v5805 = vshll.u32 %v5704, 16
        %v5807 = vrot.slane %v5805, 5
        %v5808 = vsel %vm1143, %v5803, %v5807
        %v5809 = vshrl.u32 %v5704, 16
        %v5811 = vrot.slane %v5809, 4
        %v5812 = vor.u32 %v5811, %v5807
        %v5813 = vrot.slane %v5812, 4
        %v5815 = vshll.u32 %v5733, 16
        %v5817 = vrot.slane %v5815, 5
        %v5818 = vsel %vm1143, %v5813, %v5817
        %v5820 = vshrl.u32 %v5705, 16
        %v5822 = vrot.slane %v5820, 4
        %v5823 = vshll.u32 %v5705, 16
        %v5825 = vrot.slane %v5823, 5
        %v5826 = vor.u32 %v5822, %v5825
        %v5827 = vrot.slane %v5826, 4
        %v5829 = vshll.u32 %v5706, 16
        %v5831 = vrot.slane %v5829, 5
        %v5832 = vsel %vm1143, %v5827, %v5831
        %v5833 = vshrl.u32 %v5706, 16
        %v5835 = vrot.slane %v5833, 4
        %v5836 = vor.u32 %v5835, %v5831
        %v5837 = vrot.slane %v5836, 4
        %v5839 = vshll.u32 %v5734, 16
        %v5841 = vrot.slane %v5839, 5
        %v5842 = vsel %vm1143, %v5837, %v5841
        %v5844 = vshrl.u32 %v5707, 16
        %v5846 = vrot.slane %v5844, 4
        %v5847 = vshll.u32 %v5707, 16
        %v5849 = vrot.slane %v5847, 5
        %v5850 = vor.u32 %v5846, %v5849
        %v5851 = vrot.slane %v5850, 4
        %v5853 = vshll.u32 %v5708, 16
        %v5855 = vrot.slane %v5853, 5
        %v5856 = vsel %vm1143, %v5851, %v5855
        %v5857 = vshrl.u32 %v5708, 16
        %v5859 = vrot.slane %v5857, 4
        %v5860 = vor.u32 %v5859, %v5855
        %v5861 = vrot.slane %v5860, 4
        %v5863 = vshll.u32 %v5735, 16
        %v5865 = vrot.slane %v5863, 5
        %v5866 = vsel %vm1143, %v5861, %v5865
        %v5868 = vshrl.u32 %v5709, 16
        %v5870 = vrot.slane %v5868, 4
        %v5871 = vshll.u32 %v5709, 16
        %v5873 = vrot.slane %v5871, 5
        %v5874 = vor.u32 %v5870, %v5873
        %v5875 = vrot.slane %v5874, 4
        %v5877 = vshll.u32 %v5710, 16
        %v5879 = vrot.slane %v5877, 5
        %v5880 = vsel %vm1143, %v5875, %v5879
        %v5881 = vshrl.u32 %v5710, 16
        %v5883 = vrot.slane %v5881, 4
        %v5884 = vor.u32 %v5883, %v5879
        %v5885 = vrot.slane %v5884, 4
        %v5887 = vshll.u32 %v5736, 16
        %v5889 = vrot.slane %v5887, 5
        %v5890 = vsel %vm1143, %v5885, %v5889
        %v5892 = vshrl.u32 %v5711, 16
        %v5894 = vrot.slane %v5892, 4
        %v5895 = vshll.u32 %v5711, 16
        %v5897 = vrot.slane %v5895, 5
        %v5898 = vor.u32 %v5894, %v5897
        %v5899 = vrot.slane %v5898, 4
        %v5901 = vshll.u32 %v5712, 16
        %v5903 = vrot.slane %v5901, 5
        %v5904 = vsel %vm1143, %v5899, %v5903
        %v5905 = vshrl.u32 %v5712, 16
        %v5907 = vrot.slane %v5905, 4
        %v5908 = vor.u32 %v5907, %v5903
        %v5909 = vrot.slane %v5908, 4
        %v5911 = vshll.u32 %v5737, 16
        %v5913 = vrot.slane %v5911, 5
        %v5914 = vsel %vm1143, %v5909, %v5913
        %v5916 = vshrl.u32 %v5713, 16
        %v5918 = vrot.slane %v5916, 4
        %v5919 = vshll.u32 %v5713, 16
        %v5921 = vrot.slane %v5919, 5
        %v5922 = vor.u32 %v5918, %v5921
        %v5923 = vrot.slane %v5922, 4
        %v5925 = vshll.u32 %v5714, 16
        %v5927 = vrot.slane %v5925, 5
        %v5928 = vsel %vm1143, %v5923, %v5927
        %v5929 = vshrl.u32 %v5714, 16
        %v5931 = vrot.slane %v5929, 4
        %v5932 = vor.u32 %v5931, %v5927
        %v5933 = vrot.slane %v5932, 4
        %v5935 = vshll.u32 %v5738, 16
        %v5937 = vrot.slane %v5935, 5
        %v5938 = vsel %vm1143, %v5933, %v5937
        %v5940 = vshrl.u32 %v5715, 16
        %v5942 = vrot.slane %v5940, 4
        %v5943 = vshll.u32 %v5715, 16
        %v5945 = vrot.slane %v5943, 5
        %v5946 = vor.u32 %v5942, %v5945
        %v5947 = vrot.slane %v5946, 4
        %v5949 = vshll.u32 %v5716, 16
        %v5951 = vrot.slane %v5949, 5
        %v5952 = vsel %vm1143, %v5947, %v5951
        %v5953 = vshrl.u32 %v5716, 16
        %v5955 = vrot.slane %v5953, 4
        %v5956 = vor.u32 %v5955, %v5951
        %v5957 = vrot.slane %v5956, 4
        %v5959 = vshll.u32 %v5739, 16
        %v5961 = vrot.slane %v5959, 5
        %v5962 = vsel %vm1143, %v5957, %v5961
        %v5964 = vshrl.u32 %v5717, 16
        %v5966 = vrot.slane %v5964, 4
        %v5967 = vshll.u32 %v5717, 16
        %v5969 = vrot.slane %v5967, 5
        %v5970 = vor.u32 %v5966, %v5969
        %v5971 = vrot.slane %v5970, 4
        %v5973 = vshll.u32 %v5718, 16
        %v5975 = vrot.slane %v5973, 5
        %v5976 = vsel %vm1143, %v5971, %v5975
        %v5977 = vshrl.u32 %v5718, 16
        %v5979 = vrot.slane %v5977, 4
        %v5980 = vor.u32 %v5979, %v5975
        %v5981 = vrot.slane %v5980, 4
        %v5983 = vshll.u32 %v5740, 16
        %v5985 = vrot.slane %v5983, 5
        %v5986 = vsel %vm1143, %v5981, %v5985
        %v5988 = vshrl.u32 %v5719, 16
        %v5990 = vrot.slane %v5988, 4
        %v5991 = vshll.u32 %v5719, 16
        %v5993 = vrot.slane %v5991, 5
        %v5994 = vor.u32 %v5990, %v5993
        %v5995 = vrot.slane %v5994, 4
        %v5997 = vshll.u32 %v5720, 16
        %v5999 = vrot.slane %v5997, 5
        %v6000 = vsel %vm1143, %v5995, %v5999
        %v6001 = vshrl.u32 %v5720, 16
        %v6003 = vrot.slane %v6001, 4
        %v6004 = vor.u32 %v6003, %v5999
        %v6005 = vrot.slane %v6004, 4
        %v6007 = vshll.u32 %v5741, 16
        %v6009 = vrot.slane %v6007, 5
        %v6010 = vsel %vm1143, %v6005, %v6009
        %v6012 = vshrl.u32 %v5721, 16
        %v6014 = vrot.slane %v6012, 4
        %v6015 = vshll.u32 %v5721, 16
        %v6017 = vrot.slane %v6015, 5
        %v6018 = vor.u32 %v6014, %v6017
        %v6019 = vrot.slane %v6018, 4
        %v6021 = vshll.u32 %v5722, 16
        %v6023 = vrot.slane %v6021, 5
        %v6024 = vsel %vm1143, %v6019, %v6023
        %v6025 = vshrl.u32 %v5722, 16
        %v6027 = vrot.slane %v6025, 4
        %v6028 = vor.u32 %v6027, %v6023
        %v6029 = vrot.slane %v6028, 4
        %v6031 = vshll.u32 %v5742, 16
        %v6033 = vrot.slane %v6031, 5
        %v6034 = vsel %vm1143, %v6029, %v6033
        %v6036 = vshrl.u32 %v5723, 16
        %v6038 = vrot.slane %v6036, 4
        %v6039 = vshll.u32 %v5723, 16
        %v6041 = vrot.slane %v6039, 5
        %v6042 = vor.u32 %v6038, %v6041
        %v6043 = vrot.slane %v6042, 4
        %v6045 = vshll.u32 %v5724, 16
        %v6047 = vrot.slane %v6045, 5
        %v6048 = vsel %vm1143, %v6043, %v6047
        %v6049 = vshrl.u32 %v5724, 16
        %v6051 = vrot.slane %v6049, 4
        %v6052 = vor.u32 %v6051, %v6047
        %v6053 = vrot.slane %v6052, 4
        %v6055 = vshll.u32 %v5743, 16
        %v6057 = vrot.slane %v6055, 5
        %v6058 = vsel %vm1143, %v6053, %v6057
        %v6060 = vshrl.u32 %v5725, 16
        %v6062 = vrot.slane %v6060, 4
        %v6063 = vshll.u32 %v5725, 16
        %v6065 = vrot.slane %v6063, 5
        %v6066 = vor.u32 %v6062, %v6065
        %v6067 = vrot.slane %v6066, 4
        %v6069 = vshll.u32 %v5726, 16
        %v6071 = vrot.slane %v6069, 5
        %v6072 = vsel %vm1143, %v6067, %v6071
        %v6073 = vshrl.u32 %v5726, 16
        %v6075 = vrot.slane %v6073, 4
        %v6076 = vor.u32 %v6075, %v6071
        %v6077 = vrot.slane %v6076, 4
        %v6079 = vshll.u32 %v5744, 16
        %v6081 = vrot.slane %v6079, 5
        %v6082 = vsel %vm1143, %v6077, %v6081
        %v6084 = vshrl.u32 %v5727, 16
        %v6086 = vrot.slane %v6084, 4
        %v6087 = vshll.u32 %v5727, 16
        %v6089 = vrot.slane %v6087, 5
        %v6090 = vor.u32 %v6086, %v6089
        %v6091 = vrot.slane %v6090, 4
        %v6093 = vshll.u32 %v5728, 16
        %v6095 = vrot.slane %v6093, 5
        %v6096 = vsel %vm1143, %v6091, %v6095
        %v6097 = vshrl.u32 %v5728, 16
        %v6099 = vrot.slane %v6097, 4
        %v6100 = vor.u32 %v6099, %v6095
        %v6101 = vrot.slane %v6100, 4
        %v6103 = vshll.u32 %v5745, 16
        %v6105 = vrot.slane %v6103, 5
        %v6106 = vsel %vm1143, %v6101, %v6105
        %v6108 = vshrl.u32 %v5729, 16
        %v6110 = vrot.slane %v6108, 4
        %v6111 = vshll.u32 %v5729, 16
        %v6113 = vrot.slane %v6111, 5
        %v6114 = vor.u32 %v6110, %v6113
        %v6115 = vrot.slane %v6114, 4
        %v6117 = vshll.u32 %v5730, 16
        %v6119 = vrot.slane %v6117, 5
        %v6120 = vsel %vm1143, %v6115, %v6119
        %v6121 = vshrl.u32 %v5730, 16
        %v6123 = vrot.slane %v6121, 4
        %v6124 = vor.u32 %v6123, %v6119
        %v6125 = vrot.slane %v6124, 4
        %v6127 = vshll.u32 %v5746, 16
        %v6129 = vrot.slane %v6127, 5
        %v6130 = vsel %vm1143, %v6125, %v6129
        %v6131 = vld [vmem:[%s4976] sm:$0xe]
        %v6132 = vld [vmem:[%s4976 + $0xc] sm:$0xe]
        %v6133 = vld [vmem:[%s4976 + $0x18] sm:$0xe]
        %v6134 = vld [vmem:[%s4976 + $0x24] sm:$0xe]
        %v6135 = vld [vmem:[%s4976 + $0x30] sm:$0xe]
        %v6136 = vld [vmem:[%s4976 + $0x3c] sm:$0xe]
        %v6137 = vld [vmem:[%s4976 + $0x48] sm:$0xe]
        %v6138 = vld [vmem:[%s4976 + $0x54] sm:$0xe]
        %v6139 = vld [vmem:[%s4976 + $0x60] sm:$0xe]
        %v6140 = vld [vmem:[%s4976 + $0x6c] sm:$0xe]
        %v6141 = vld [vmem:[%s4976 + $0x78] sm:$0xe]
        %v6142 = vld [vmem:[%s4976 + $0x84] sm:$0xe]
        %v6143 = vld [vmem:[%s4976 + $0x90] sm:$0xe]
        %v6144 = vld [vmem:[%s4976 + $0x9c] sm:$0xe]
        %v6145 = vld [vmem:[%s4976 + $0xa8] sm:$0xe]
        %v6146 = vld [vmem:[%s4976 + $0xb4] sm:$0xe]
        %v6195 = vrot.slane %v6131, 5
        %v6196 = vrot.slane %v6195, 4
        %v6197 = vrot.slane %v5700, 5
        %v6198 = vsel %vm1594, %v6196, %v6197
        %v6199 = vrot.slane %v6197, 4
        %v6200 = vrot.slane %v5731, 5
        %v6201 = vsel %vm1594, %v6199, %v6200
        %v6202 = vrot.slane %v6132, 5
        %v6203 = vrot.slane %v6202, 4
        %v6204 = vrot.slane %v5702, 5
        %v6205 = vsel %vm1594, %v6203, %v6204
        %v6206 = vrot.slane %v6204, 4
        %v6207 = vrot.slane %v5732, 5
        %v6208 = vsel %vm1594, %v6206, %v6207
        %v6209 = vrot.slane %v6133, 5
        %v6210 = vrot.slane %v6209, 4
        %v6211 = vrot.slane %v5704, 5
        %v6212 = vsel %vm1594, %v6210, %v6211
        %v6213 = vrot.slane %v6211, 4
        %v6214 = vrot.slane %v5733, 5
        %v6215 = vsel %vm1594, %v6213, %v6214
        %v6216 = vrot.slane %v6134, 5
        %v6217 = vrot.slane %v6216, 4
        %v6218 = vrot.slane %v5706, 5
        %v6219 = vsel %vm1594, %v6217, %v6218
        %v6220 = vrot.slane %v6218, 4
        %v6221 = vrot.slane %v5734, 5
        %v6222 = vsel %vm1594, %v6220, %v6221
        %v6223 = vrot.slane %v6135, 5
        %v6224 = vrot.slane %v6223, 4
        %v6225 = vrot.slane %v5708, 5
        %v6226 = vsel %vm1594, %v6224, %v6225
        %v6227 = vrot.slane %v6225, 4
        %v6228 = vrot.slane %v5735, 5
        %v6229 = vsel %vm1594, %v6227, %v6228
        %v6230 = vrot.slane %v6136, 5
        %v6231 = vrot.slane %v6230, 4
        %v6232 = vrot.slane %v5710, 5
        %v6233 = vsel %vm1594, %v6231, %v6232
        %v6234 = vrot.slane %v6232, 4
        %v6235 = vrot.slane %v5736, 5
        %v6236 = vsel %vm1594, %v6234, %v6235
        %v6237 = vrot.slane %v6137, 5
        %v6238 = vrot.slane %v6237, 4
        %v6239 = vrot.slane %v5712, 5
        %v6240 = vsel %vm1594, %v6238, %v6239
        %v6241 = vrot.slane %v6239, 4
        %v6242 = vrot.slane %v5737, 5
        %v6243 = vsel %vm1594, %v6241, %v6242
        %v6244 = vrot.slane %v6138, 5
        %v6245 = vrot.slane %v6244, 4
        %v6246 = vrot.slane %v5714, 5
        %v6247 = vsel %vm1594, %v6245, %v6246
        %v6248 = vrot.slane %v6246, 4
        %v6249 = vrot.slane %v5738, 5
        %v6250 = vsel %vm1594, %v6248, %v6249
        %v6251 = vrot.slane %v6139, 5
        %v6252 = vrot.slane %v6251, 4
        %v6253 = vrot.slane %v5716, 5
        %v6254 = vsel %vm1594, %v6252, %v6253
        %v6255 = vrot.slane %v6253, 4
        %v6256 = vrot.slane %v5739, 5
        %v6257 = vsel %vm1594, %v6255, %v6256
        %v6258 = vrot.slane %v6140, 5
        %v6259 = vrot.slane %v6258, 4
        %v6260 = vrot.slane %v5718, 5
        %v6261 = vsel %vm1594, %v6259, %v6260
        %v6262 = vrot.slane %v6260, 4
        %v6263 = vrot.slane %v5740, 5
        %v6264 = vsel %vm1594, %v6262, %v6263
        %v6265 = vrot.slane %v6141, 5
        %v6266 = vrot.slane %v6265, 4
        %v6267 = vrot.slane %v5720, 5
        %v6268 = vsel %vm1594, %v6266, %v6267
        %v6269 = vrot.slane %v6267, 4
        %v6270 = vrot.slane %v5741, 5
        %v6271 = vsel %vm1594, %v6269, %v6270
        %v6272 = vrot.slane %v6142, 5
        %v6273 = vrot.slane %v6272, 4
        %v6274 = vrot.slane %v5722, 5
        %v6275 = vsel %vm1594, %v6273, %v6274
        %v6276 = vrot.slane %v6274, 4
        %v6277 = vrot.slane %v5742, 5
        %v6278 = vsel %vm1594, %v6276, %v6277
        %v6279 = vrot.slane %v6143, 5
        %v6280 = vrot.slane %v6279, 4
        %v6281 = vrot.slane %v5724, 5
        %v6282 = vsel %vm1594, %v6280, %v6281
        %v6283 = vrot.slane %v6281, 4
        %v6284 = vrot.slane %v5743, 5
        %v6285 = vsel %vm1594, %v6283, %v6284
        %v6286 = vrot.slane %v6144, 5
        %v6287 = vrot.slane %v6286, 4
        %v6288 = vrot.slane %v5726, 5
        %v6289 = vsel %vm1594, %v6287, %v6288
        %v6290 = vrot.slane %v6288, 4
        %v6291 = vrot.slane %v5744, 5
        %v6292 = vsel %vm1594, %v6290, %v6291
        %v6293 = vrot.slane %v6145, 5
        %v6294 = vrot.slane %v6293, 4
        %v6295 = vrot.slane %v5728, 5
        %v6296 = vsel %vm1594, %v6294, %v6295
        %v6297 = vrot.slane %v6295, 4
        %v6298 = vrot.slane %v5745, 5
        %v6299 = vsel %vm1594, %v6297, %v6298
        %v6300 = vrot.slane %v6146, 5
        %v6301 = vrot.slane %v6300, 4
        %v6302 = vrot.slane %v5730, 5
        %v6303 = vsel %vm1594, %v6301, %v6302
        %v6304 = vrot.slane %v6302, 4
        %v6305 = vrot.slane %v5746, 5
        %v6306 = vsel %vm1594, %v6304, %v6305
        %s6307 = scalar_lea.vmem [#allocation3], 24
        %v6308 = vld [vmem:[%s6307] sm:$0xf]
        %v6309 = vld [vmem:[%s6307 + $0x4] sm:$0xf]
        %v6310 = vld [vmem:[%s6307 + $0xc] sm:$0xf]
        %v6311 = vld [vmem:[%s6307 + $0x10] sm:$0xf]
        %v6312 = vld [vmem:[%s6307 + $0x18] sm:$0xf]
        %v6313 = vld [vmem:[%s6307 + $0x1c] sm:$0xf]
        %v6314 = vld [vmem:[%s6307 + $0x24] sm:$0xf]
        %v6315 = vld [vmem:[%s6307 + $0x28] sm:$0xf]
        %v6316 = vld [vmem:[%s6307 + $0x30] sm:$0xf]
        %v6317 = vld [vmem:[%s6307 + $0x34] sm:$0xf]
        %v6318 = vld [vmem:[%s6307 + $0x3c] sm:$0xf]
        %v6319 = vld [vmem:[%s6307 + $0x40] sm:$0xf]
        %v6320 = vld [vmem:[%s6307 + $0x48] sm:$0xf]
        %v6321 = vld [vmem:[%s6307 + $0x4c] sm:$0xf]
        %v6322 = vld [vmem:[%s6307 + $0x54] sm:$0xf]
        %v6323 = vld [vmem:[%s6307 + $0x58] sm:$0xf]
        %v6324 = vld [vmem:[%s6307 + $0x60] sm:$0xf]
        %v6325 = vld [vmem:[%s6307 + $0x64] sm:$0xf]
        %v6326 = vld [vmem:[%s6307 + $0x6c] sm:$0xf]
        %v6327 = vld [vmem:[%s6307 + $0x70] sm:$0xf]
        %v6328 = vld [vmem:[%s6307 + $0x78] sm:$0xf]
        %v6329 = vld [vmem:[%s6307 + $0x7c] sm:$0xf]
        %v6330 = vld [vmem:[%s6307 + $0x84] sm:$0xf]
        %v6331 = vld [vmem:[%s6307 + $0x88] sm:$0xf]
        %v6332 = vld [vmem:[%s6307 + $0x90] sm:$0xf]
        %v6333 = vld [vmem:[%s6307 + $0x94] sm:$0xf]
        %v6334 = vld [vmem:[%s6307 + $0x9c] sm:$0xf]
        %v6335 = vld [vmem:[%s6307 + $0xa0] sm:$0xf]
        %v6336 = vld [vmem:[%s6307 + $0xa8] sm:$0xf]
        %v6337 = vld [vmem:[%s6307 + $0xac] sm:$0xf]
        %v6338 = vld [vmem:[%s6307 + $0xb4] sm:$0xf]
        %v6339 = vld [vmem:[%s6307 + $0xb8] sm:$0xf]
        %v6340 = vld [vmem:[%s6307 + $0x8] sm:$0x1]
        %v6341 = vld [vmem:[%s6307 + $0x14] sm:$0x1]
        %v6342 = vld [vmem:[%s6307 + $0x20] sm:$0x1]
        %v6343 = vld [vmem:[%s6307 + $0x2c] sm:$0x1]
        %v6344 = vld [vmem:[%s6307 + $0x38] sm:$0x1]
        %v6345 = vld [vmem:[%s6307 + $0x44] sm:$0x1]
        %v6346 = vld [vmem:[%s6307 + $0x50] sm:$0x1]
        %v6347 = vld [vmem:[%s6307 + $0x5c] sm:$0x1]
        %v6348 = vld [vmem:[%s6307 + $0x68] sm:$0x1]
        %v6349 = vld [vmem:[%s6307 + $0x74] sm:$0x1]
        %v6350 = vld [vmem:[%s6307 + $0x80] sm:$0x1]
        %v6351 = vld [vmem:[%s6307 + $0x8c] sm:$0x1]
        %v6352 = vld [vmem:[%s6307 + $0x98] sm:$0x1]
        %v6353 = vld [vmem:[%s6307 + $0xa4] sm:$0x1]
        %v6354 = vld [vmem:[%s6307 + $0xb0] sm:$0x1]
        %v6355 = vld [vmem:[%s6307 + $0xbc] sm:$0x1]
        %v6357 = vshrl.u32 %v6308, 16
        %v6359 = vrot.slane %v6357, 4
        %v6360 = vshll.u32 %v6308, 16
        %v6362 = vrot.slane %v6360, 5
        %v6363 = vor.u32 %v6359, %v6362
        %v6364 = vrot.slane %v6363, 4
        %v6366 = vshll.u32 %v6309, 16
        %v6368 = vrot.slane %v6366, 5
        %v6369 = vsel %vm1143, %v6364, %v6368
        %v6370 = vshrl.u32 %v6309, 16
        %v6372 = vrot.slane %v6370, 4
        %v6373 = vor.u32 %v6372, %v6368
        %v6374 = vrot.slane %v6373, 4
        %v6376 = vshll.u32 %v6340, 16
        %v6378 = vrot.slane %v6376, 5
        %v6379 = vsel %vm1143, %v6374, %v6378
        %v6381 = vshrl.u32 %v6310, 16
        %v6383 = vrot.slane %v6381, 4
        %v6384 = vshll.u32 %v6310, 16
        %v6386 = vrot.slane %v6384, 5
        %v6387 = vor.u32 %v6383, %v6386
        %v6388 = vrot.slane %v6387, 4
        %v6390 = vshll.u32 %v6311, 16
        %v6392 = vrot.slane %v6390, 5
        %v6393 = vsel %vm1143, %v6388, %v6392
        %v6394 = vshrl.u32 %v6311, 16
        %v6396 = vrot.slane %v6394, 4
        %v6397 = vor.u32 %v6396, %v6392
        %v6398 = vrot.slane %v6397, 4
        %v6400 = vshll.u32 %v6341, 16
        %v6402 = vrot.slane %v6400, 5
        %v6403 = vsel %vm1143, %v6398, %v6402
        %v6405 = vshrl.u32 %v6312, 16
        %v6407 = vrot.slane %v6405, 4
        %v6408 = vshll.u32 %v6312, 16
        %v6410 = vrot.slane %v6408, 5
        %v6411 = vor.u32 %v6407, %v6410
        %v6412 = vrot.slane %v6411, 4
        %v6414 = vshll.u32 %v6313, 16
        %v6416 = vrot.slane %v6414, 5
        %v6417 = vsel %vm1143, %v6412, %v6416
        %v6418 = vshrl.u32 %v6313, 16
        %v6420 = vrot.slane %v6418, 4
        %v6421 = vor.u32 %v6420, %v6416
        %v6422 = vrot.slane %v6421, 4
        %v6424 = vshll.u32 %v6342, 16
        %v6426 = vrot.slane %v6424, 5
        %v6427 = vsel %vm1143, %v6422, %v6426
        %v6429 = vshrl.u32 %v6314, 16
        %v6431 = vrot.slane %v6429, 4
        %v6432 = vshll.u32 %v6314, 16
        %v6434 = vrot.slane %v6432, 5
        %v6435 = vor.u32 %v6431, %v6434
        %v6436 = vrot.slane %v6435, 4
        %v6438 = vshll.u32 %v6315, 16
        %v6440 = vrot.slane %v6438, 5
        %v6441 = vsel %vm1143, %v6436, %v6440
        %v6442 = vshrl.u32 %v6315, 16
        %v6444 = vrot.slane %v6442, 4
        %v6445 = vor.u32 %v6444, %v6440
        %v6446 = vrot.slane %v6445, 4
        %v6448 = vshll.u32 %v6343, 16
        %v6450 = vrot.slane %v6448, 5
        %v6451 = vsel %vm1143, %v6446, %v6450
        %v6453 = vshrl.u32 %v6316, 16
        %v6455 = vrot.slane %v6453, 4
        %v6456 = vshll.u32 %v6316, 16
        %v6458 = vrot.slane %v6456, 5
        %v6459 = vor.u32 %v6455, %v6458
        %v6460 = vrot.slane %v6459, 4
        %v6462 = vshll.u32 %v6317, 16
        %v6464 = vrot.slane %v6462, 5
        %v6465 = vsel %vm1143, %v6460, %v6464
        %v6466 = vshrl.u32 %v6317, 16
        %v6468 = vrot.slane %v6466, 4
        %v6469 = vor.u32 %v6468, %v6464
        %v6470 = vrot.slane %v6469, 4
        %v6472 = vshll.u32 %v6344, 16
        %v6474 = vrot.slane %v6472, 5
        %v6475 = vsel %vm1143, %v6470, %v6474
        %v6477 = vshrl.u32 %v6318, 16
        %v6479 = vrot.slane %v6477, 4
        %v6480 = vshll.u32 %v6318, 16
        %v6482 = vrot.slane %v6480, 5
        %v6483 = vor.u32 %v6479, %v6482
        %v6484 = vrot.slane %v6483, 4
        %v6486 = vshll.u32 %v6319, 16
        %v6488 = vrot.slane %v6486, 5
        %v6489 = vsel %vm1143, %v6484, %v6488
        %v6490 = vshrl.u32 %v6319, 16
        %v6492 = vrot.slane %v6490, 4
        %v6493 = vor.u32 %v6492, %v6488
        %v6494 = vrot.slane %v6493, 4
        %v6496 = vshll.u32 %v6345, 16
        %v6498 = vrot.slane %v6496, 5
        %v6499 = vsel %vm1143, %v6494, %v6498
        %v6501 = vshrl.u32 %v6320, 16
        %v6503 = vrot.slane %v6501, 4
        %v6504 = vshll.u32 %v6320, 16
        %v6506 = vrot.slane %v6504, 5
        %v6507 = vor.u32 %v6503, %v6506
        %v6508 = vrot.slane %v6507, 4
        %v6510 = vshll.u32 %v6321, 16
        %v6512 = vrot.slane %v6510, 5
        %v6513 = vsel %vm1143, %v6508, %v6512
        %v6514 = vshrl.u32 %v6321, 16
        %v6516 = vrot.slane %v6514, 4
        %v6517 = vor.u32 %v6516, %v6512
        %v6518 = vrot.slane %v6517, 4
        %v6520 = vshll.u32 %v6346, 16
        %v6522 = vrot.slane %v6520, 5
        %v6523 = vsel %vm1143, %v6518, %v6522
        %v6525 = vshrl.u32 %v6322, 16
        %v6527 = vrot.slane %v6525, 4
        %v6528 = vshll.u32 %v6322, 16
        %v6530 = vrot.slane %v6528, 5
        %v6531 = vor.u32 %v6527, %v6530
        %v6532 = vrot.slane %v6531, 4
        %v6534 = vshll.u32 %v6323, 16
        %v6536 = vrot.slane %v6534, 5
        %v6537 = vsel %vm1143, %v6532, %v6536
        %v6538 = vshrl.u32 %v6323, 16
        %v6540 = vrot.slane %v6538, 4
        %v6541 = vor.u32 %v6540, %v6536
        %v6542 = vrot.slane %v6541, 4
        %v6544 = vshll.u32 %v6347, 16
        %v6546 = vrot.slane %v6544, 5
        %v6547 = vsel %vm1143, %v6542, %v6546
        %v6549 = vshrl.u32 %v6324, 16
        %v6551 = vrot.slane %v6549, 4
        %v6552 = vshll.u32 %v6324, 16
        %v6554 = vrot.slane %v6552, 5
        %v6555 = vor.u32 %v6551, %v6554
        %v6556 = vrot.slane %v6555, 4
        %v6558 = vshll.u32 %v6325, 16
        %v6560 = vrot.slane %v6558, 5
        %v6561 = vsel %vm1143, %v6556, %v6560
        %v6562 = vshrl.u32 %v6325, 16
        %v6564 = vrot.slane %v6562, 4
        %v6565 = vor.u32 %v6564, %v6560
        %v6566 = vrot.slane %v6565, 4
        %v6568 = vshll.u32 %v6348, 16
        %v6570 = vrot.slane %v6568, 5
        %v6571 = vsel %vm1143, %v6566, %v6570
        %v6573 = vshrl.u32 %v6326, 16
        %v6575 = vrot.slane %v6573, 4
        %v6576 = vshll.u32 %v6326, 16
        %v6578 = vrot.slane %v6576, 5
        %v6579 = vor.u32 %v6575, %v6578
        %v6580 = vrot.slane %v6579, 4
        %v6582 = vshll.u32 %v6327, 16
        %v6584 = vrot.slane %v6582, 5
        %v6585 = vsel %vm1143, %v6580, %v6584
        %v6586 = vshrl.u32 %v6327, 16
        %v6588 = vrot.slane %v6586, 4
        %v6589 = vor.u32 %v6588, %v6584
        %v6590 = vrot.slane %v6589, 4
        %v6592 = vshll.u32 %v6349, 16
        %v6594 = vrot.slane %v6592, 5
        %v6595 = vsel %vm1143, %v6590, %v6594
        %v6597 = vshrl.u32 %v6328, 16
        %v6599 = vrot.slane %v6597, 4
        %v6600 = vshll.u32 %v6328, 16
        %v6602 = vrot.slane %v6600, 5
        %v6603 = vor.u32 %v6599, %v6602
        %v6604 = vrot.slane %v6603, 4
        %v6606 = vshll.u32 %v6329, 16
        %v6608 = vrot.slane %v6606, 5
        %v6609 = vsel %vm1143, %v6604, %v6608
        %v6610 = vshrl.u32 %v6329, 16
        %v6612 = vrot.slane %v6610, 4
        %v6613 = vor.u32 %v6612, %v6608
        %v6614 = vrot.slane %v6613, 4
        %v6616 = vshll.u32 %v6350, 16
        %v6618 = vrot.slane %v6616, 5
        %v6619 = vsel %vm1143, %v6614, %v6618
        %v6621 = vshrl.u32 %v6330, 16
        %v6623 = vrot.slane %v6621, 4
        %v6624 = vshll.u32 %v6330, 16
        %v6626 = vrot.slane %v6624, 5
        %v6627 = vor.u32 %v6623, %v6626
        %v6628 = vrot.slane %v6627, 4
        %v6630 = vshll.u32 %v6331, 16
        %v6632 = vrot.slane %v6630, 5
        %v6633 = vsel %vm1143, %v6628, %v6632
        %v6634 = vshrl.u32 %v6331, 16
        %v6636 = vrot.slane %v6634, 4
        %v6637 = vor.u32 %v6636, %v6632
        %v6638 = vrot.slane %v6637, 4
        %v6640 = vshll.u32 %v6351, 16
        %v6642 = vrot.slane %v6640, 5
        %v6643 = vsel %vm1143, %v6638, %v6642
        %v6645 = vshrl.u32 %v6332, 16
        %v6647 = vrot.slane %v6645, 4
        %v6648 = vshll.u32 %v6332, 16
        %v6650 = vrot.slane %v6648, 5
        %v6651 = vor.u32 %v6647, %v6650
        %v6652 = vrot.slane %v6651, 4
        %v6654 = vshll.u32 %v6333, 16
        %v6656 = vrot.slane %v6654, 5
        %v6657 = vsel %vm1143, %v6652, %v6656
        %v6658 = vshrl.u32 %v6333, 16
        %v6660 = vrot.slane %v6658, 4
        %v6661 = vor.u32 %v6660, %v6656
        %v6662 = vrot.slane %v6661, 4
        %v6664 = vshll.u32 %v6352, 16
        %v6666 = vrot.slane %v6664, 5
        %v6667 = vsel %vm1143, %v6662, %v6666
        %v6669 = vshrl.u32 %v6334, 16
        %v6671 = vrot.slane %v6669, 4
        %v6672 = vshll.u32 %v6334, 16
        %v6674 = vrot.slane %v6672, 5
        %v6675 = vor.u32 %v6671, %v6674
        %v6676 = vrot.slane %v6675, 4
        %v6678 = vshll.u32 %v6335, 16
        %v6680 = vrot.slane %v6678, 5
        %v6681 = vsel %vm1143, %v6676, %v6680
        %v6682 = vshrl.u32 %v6335, 16
        %v6684 = vrot.slane %v6682, 4
        %v6685 = vor.u32 %v6684, %v6680
        %v6686 = vrot.slane %v6685, 4
        %v6688 = vshll.u32 %v6353, 16
        %v6690 = vrot.slane %v6688, 5
        %v6691 = vsel %vm1143, %v6686, %v6690
        %v6693 = vshrl.u32 %v6336, 16
        %v6695 = vrot.slane %v6693, 4
        %v6696 = vshll.u32 %v6336, 16
        %v6698 = vrot.slane %v6696, 5
        %v6699 = vor.u32 %v6695, %v6698
        %v6700 = vrot.slane %v6699, 4
        %v6702 = vshll.u32 %v6337, 16
        %v6704 = vrot.slane %v6702, 5
        %v6705 = vsel %vm1143, %v6700, %v6704
        %v6706 = vshrl.u32 %v6337, 16
        %v6708 = vrot.slane %v6706, 4
        %v6709 = vor.u32 %v6708, %v6704
        %v6710 = vrot.slane %v6709, 4
        %v6712 = vshll.u32 %v6354, 16
        %v6714 = vrot.slane %v6712, 5
        %v6715 = vsel %vm1143, %v6710, %v6714
        %v6717 = vshrl.u32 %v6338, 16
        %v6719 = vrot.slane %v6717, 4
        %v6720 = vshll.u32 %v6338, 16
        %v6722 = vrot.slane %v6720, 5
        %v6723 = vor.u32 %v6719, %v6722
        %v6724 = vrot.slane %v6723, 4
        %v6726 = vshll.u32 %v6339, 16
        %v6728 = vrot.slane %v6726, 5
        %v6729 = vsel %vm1143, %v6724, %v6728
        %v6730 = vshrl.u32 %v6339, 16
        %v6732 = vrot.slane %v6730, 4
        %v6733 = vor.u32 %v6732, %v6728
        %v6734 = vrot.slane %v6733, 4
        %v6736 = vshll.u32 %v6355, 16
        %v6738 = vrot.slane %v6736, 5
        %v6739 = vsel %vm1143, %v6734, %v6738
        %v6740 = vld [vmem:[%s6307] sm:$0xe]
        %v6741 = vld [vmem:[%s6307 + $0xc] sm:$0xe]
        %v6742 = vld [vmem:[%s6307 + $0x18] sm:$0xe]
        %v6743 = vld [vmem:[%s6307 + $0x24] sm:$0xe]
        %v6744 = vld [vmem:[%s6307 + $0x30] sm:$0xe]
        %v6745 = vld [vmem:[%s6307 + $0x3c] sm:$0xe]
        %v6746 = vld [vmem:[%s6307 + $0x48] sm:$0xe]
        %v6747 = vld [vmem:[%s6307 + $0x54] sm:$0xe]
        %v6748 = vld [vmem:[%s6307 + $0x60] sm:$0xe]
        %v6749 = vld [vmem:[%s6307 + $0x6c] sm:$0xe]
        %v6750 = vld [vmem:[%s6307 + $0x78] sm:$0xe]
        %v6751 = vld [vmem:[%s6307 + $0x84] sm:$0xe]
        %v6752 = vld [vmem:[%s6307 + $0x90] sm:$0xe]
        %v6753 = vld [vmem:[%s6307 + $0x9c] sm:$0xe]
        %v6754 = vld [vmem:[%s6307 + $0xa8] sm:$0xe]
        %v6755 = vld [vmem:[%s6307 + $0xb4] sm:$0xe]
        %v6804 = vrot.slane %v6740, 5
        %v6805 = vrot.slane %v6804, 4
        %v6806 = vrot.slane %v6309, 5
        %v6807 = vsel %vm1594, %v6805, %v6806
        %v6808 = vrot.slane %v6806, 4
        %v6809 = vrot.slane %v6340, 5
        %v6810 = vsel %vm1594, %v6808, %v6809
        %v6811 = vrot.slane %v6741, 5
        %v6812 = vrot.slane %v6811, 4
        %v6813 = vrot.slane %v6311, 5
        %v6814 = vsel %vm1594, %v6812, %v6813
        %v6815 = vrot.slane %v6813, 4
        %v6816 = vrot.slane %v6341, 5
        %v6817 = vsel %vm1594, %v6815, %v6816
        %v6818 = vrot.slane %v6742, 5
        %v6819 = vrot.slane %v6818, 4
        %v6820 = vrot.slane %v6313, 5
        %v6821 = vsel %vm1594, %v6819, %v6820
        %v6822 = vrot.slane %v6820, 4
        %v6823 = vrot.slane %v6342, 5
        %v6824 = vsel %vm1594, %v6822, %v6823
        %v6825 = vrot.slane %v6743, 5
        %v6826 = vrot.slane %v6825, 4
        %v6827 = vrot.slane %v6315, 5
        %v6828 = vsel %vm1594, %v6826, %v6827
        %v6829 = vrot.slane %v6827, 4
        %v6830 = vrot.slane %v6343, 5
        %v6831 = vsel %vm1594, %v6829, %v6830
        %v6832 = vrot.slane %v6744, 5
        %v6833 = vrot.slane %v6832, 4
        %v6834 = vrot.slane %v6317, 5
        %v6835 = vsel %vm1594, %v6833, %v6834
        %v6836 = vrot.slane %v6834, 4
        %v6837 = vrot.slane %v6344, 5
        %v6838 = vsel %vm1594, %v6836, %v6837
        %v6839 = vrot.slane %v6745, 5
        %v6840 = vrot.slane %v6839, 4
        %v6841 = vrot.slane %v6319, 5
        %v6842 = vsel %vm1594, %v6840, %v6841
        %v6843 = vrot.slane %v6841, 4
        %v6844 = vrot.slane %v6345, 5
        %v6845 = vsel %vm1594, %v6843, %v6844
        %v6846 = vrot.slane %v6746, 5
        %v6847 = vrot.slane %v6846, 4
        %v6848 = vrot.slane %v6321, 5
        %v6849 = vsel %vm1594, %v6847, %v6848
        %v6850 = vrot.slane %v6848, 4
        %v6851 = vrot.slane %v6346, 5
        %v6852 = vsel %vm1594, %v6850, %v6851
        %v6853 = vrot.slane %v6747, 5
        %v6854 = vrot.slane %v6853, 4
        %v6855 = vrot.slane %v6323, 5
        %v6856 = vsel %vm1594, %v6854, %v6855
        %v6857 = vrot.slane %v6855, 4
        %v6858 = vrot.slane %v6347, 5
        %v6859 = vsel %vm1594, %v6857, %v6858
        %v6860 = vrot.slane %v6748, 5
        %v6861 = vrot.slane %v6860, 4
        %v6862 = vrot.slane %v6325, 5
        %v6863 = vsel %vm1594, %v6861, %v6862
        %v6864 = vrot.slane %v6862, 4
        %v6865 = vrot.slane %v6348, 5
        %v6866 = vsel %vm1594, %v6864, %v6865
        %v6867 = vrot.slane %v6749, 5
        %v6868 = vrot.slane %v6867, 4
        %v6869 = vrot.slane %v6327, 5
        %v6870 = vsel %vm1594, %v6868, %v6869
        %v6871 = vrot.slane %v6869, 4
        %v6872 = vrot.slane %v6349, 5
        %v6873 = vsel %vm1594, %v6871, %v6872
        %v6874 = vrot.slane %v6750, 5
        %v6875 = vrot.slane %v6874, 4
        %v6876 = vrot.slane %v6329, 5
        %v6877 = vsel %vm1594, %v6875, %v6876
        %v6878 = vrot.slane %v6876, 4
        %v6879 = vrot.slane %v6350, 5
        %v6880 = vsel %vm1594, %v6878, %v6879
        %v6881 = vrot.slane %v6751, 5
        %v6882 = vrot.slane %v6881, 4
        %v6883 = vrot.slane %v6331, 5
        %v6884 = vsel %vm1594, %v6882, %v6883
        %v6885 = vrot.slane %v6883, 4
        %v6886 = vrot.slane %v6351, 5
        %v6887 = vsel %vm1594, %v6885, %v6886
        %v6888 = vrot.slane %v6752, 5
        %v6889 = vrot.slane %v6888, 4
        %v6890 = vrot.slane %v6333, 5
        %v6891 = vsel %vm1594, %v6889, %v6890
        %v6892 = vrot.slane %v6890, 4
        %v6893 = vrot.slane %v6352, 5
        %v6894 = vsel %vm1594, %v6892, %v6893
        %v6895 = vrot.slane %v6753, 5
        %v6896 = vrot.slane %v6895, 4
        %v6897 = vrot.slane %v6335, 5
        %v6898 = vsel %vm1594, %v6896, %v6897
        %v6899 = vrot.slane %v6897, 4
        %v6900 = vrot.slane %v6353, 5
        %v6901 = vsel %vm1594, %v6899, %v6900
        %v6902 = vrot.slane %v6754, 5
        %v6903 = vrot.slane %v6902, 4
        %v6904 = vrot.slane %v6337, 5
        %v6905 = vsel %vm1594, %v6903, %v6904
        %v6906 = vrot.slane %v6904, 4
        %v6907 = vrot.slane %v6354, 5
        %v6908 = vsel %vm1594, %v6906, %v6907
        %v6909 = vrot.slane %v6755, 5
        %v6910 = vrot.slane %v6909, 4
        %v6911 = vrot.slane %v6339, 5
        %v6912 = vsel %vm1594, %v6910, %v6911
        %v6913 = vrot.slane %v6911, 4
        %v6914 = vrot.slane %v6355, 5
        %v6915 = vsel %vm1594, %v6913, %v6914
        %v6932 = vunpack.c.l.b16 %v5091
        %v6933 = vunpack.c.l.b16 %v5092
        %v6934 = vunpack.c.l.b16 %v5093
        %v6935 = vunpack.c.l.b16 %v5094
        %v6936 = vunpack.c.l.b16 %v5095
        %v6937 = vunpack.c.l.b16 %v5096
        %v6938 = vunpack.c.l.b16 %v5097
        %v6939 = vunpack.c.l.b16 %v5098
        %v6940 = vunpack.c.l.b16 %v5099
        %v6941 = vunpack.c.l.b16 %v5100
        %v6942 = vunpack.c.l.b16 %v5101
        %v6943 = vunpack.c.l.b16 %v5102
        %v6944 = vunpack.c.l.b16 %v5103
        %v6945 = vunpack.c.l.b16 %v5104
        %v6946 = vunpack.c.l.b16 %v5105
        %v6947 = vunpack.c.l.b16 %v5106
        %v6948 = vunpack.c.l.b16 %v5107
        %v6949 = vunpack.c.l.b16 %v5108
        %v6950 = vunpack.c.l.b16 %v5109
        %v6951 = vunpack.c.l.b16 %v5110
        %v6952 = vunpack.c.l.b16 %v5111
        %v6953 = vunpack.c.l.b16 %v5112
        %v6954 = vunpack.c.l.b16 %v5113
        %v6955 = vunpack.c.l.b16 %v5114
        %v6956 = vunpack.c.l.b16 %v5115
        %v6957 = vunpack.c.l.b16 %v5116
        %v6958 = vunpack.c.l.b16 %v5117
        %v6959 = vunpack.c.l.b16 %v5118
        %v6960 = vunpack.c.l.b16 %v5119
        %v6961 = vunpack.c.l.b16 %v5120
        %v6962 = vunpack.c.l.b16 %v5121
        %v6963 = vunpack.c.l.b16 %v5122
        %v6964 = vpack.c.b16 %v6933, %v6932
        %v6965 = vpack.c.b16 %v6935, %v6934
        %v6966 = vpack.c.b16 %v6937, %v6936
        %v6967 = vpack.c.b16 %v6939, %v6938
        %v6968 = vpack.c.b16 %v6941, %v6940
        %v6969 = vpack.c.b16 %v6943, %v6942
        %v6970 = vpack.c.b16 %v6945, %v6944
        %v6971 = vpack.c.b16 %v6947, %v6946
        %v6972 = vpack.c.b16 %v6949, %v6948
        %v6973 = vpack.c.b16 %v6951, %v6950
        %v6974 = vpack.c.b16 %v6953, %v6952
        %v6975 = vpack.c.b16 %v6955, %v6954
        %v6976 = vpack.c.b16 %v6957, %v6956
        %v6977 = vpack.c.b16 %v6959, %v6958
        %v6978 = vpack.c.b16 %v6961, %v6960
        %v6979 = vpack.c.b16 %v6963, %v6962
        %v6980 = vunpack.c.l.b16 %v5152
        %v6981 = vunpack.c.l.b16 %v5162
        %v6982 = vunpack.c.l.b16 %v5176
        %v6983 = vunpack.c.l.b16 %v5186
        %v6984 = vunpack.c.l.b16 %v5200
        %v6985 = vunpack.c.l.b16 %v5210
        %v6986 = vunpack.c.l.b16 %v5224
        %v6987 = vunpack.c.l.b16 %v5234
        %v6988 = vunpack.c.l.b16 %v5248
        %v6989 = vunpack.c.l.b16 %v5258
        %v6990 = vunpack.c.l.b16 %v5272
        %v6991 = vunpack.c.l.b16 %v5282
        %v6992 = vunpack.c.l.b16 %v5296
        %v6993 = vunpack.c.l.b16 %v5306
        %v6994 = vunpack.c.l.b16 %v5320
        %v6995 = vunpack.c.l.b16 %v5330
        %v6996 = vunpack.c.l.b16 %v5344
        %v6997 = vunpack.c.l.b16 %v5354
        %v6998 = vunpack.c.l.b16 %v5368
        %v6999 = vunpack.c.l.b16 %v5378
        %v7000 = vunpack.c.l.b16 %v5392
        %v7001 = vunpack.c.l.b16 %v5402
        %v7002 = vunpack.c.l.b16 %v5416
        %v7003 = vunpack.c.l.b16 %v5426
        %v7004 = vunpack.c.l.b16 %v5440
        %v7005 = vunpack.c.l.b16 %v5450
        %v7006 = vunpack.c.l.b16 %v5464
        %v7007 = vunpack.c.l.b16 %v5474
        %v7008 = vunpack.c.l.b16 %v5488
        %v7009 = vunpack.c.l.b16 %v5498
        %v7010 = vunpack.c.l.b16 %v5512
        %v7011 = vunpack.c.l.b16 %v5522
        %v7012 = vpack.c.b16 %v6981, %v6980
        %v7013 = vpack.c.b16 %v6983, %v6982
        %v7014 = vpack.c.b16 %v6985, %v6984
        %v7015 = vpack.c.b16 %v6987, %v6986
        %v7016 = vpack.c.b16 %v6989, %v6988
        %v7017 = vpack.c.b16 %v6991, %v6990
        %v7018 = vpack.c.b16 %v6993, %v6992
        %v7019 = vpack.c.b16 %v6995, %v6994
        %v7020 = vpack.c.b16 %v6997, %v6996
        %v7021 = vpack.c.b16 %v6999, %v6998
        %v7022 = vpack.c.b16 %v7001, %v7000
        %v7023 = vpack.c.b16 %v7003, %v7002
        %v7024 = vpack.c.b16 %v7005, %v7004
        %v7025 = vpack.c.b16 %v7007, %v7006
        %v7026 = vpack.c.b16 %v7009, %v7008
        %v7027 = vpack.c.b16 %v7011, %v7010
        %7028 = vrot.lane.b32.xlu0 %v7012, 16
        %v7029 = vpop.permute.xlu0 %7028
        %7030 = vrot.lane.b32.xlu0 %v7013, 16
        %v7031 = vpop.permute.xlu0 %7030
        %7032 = vrot.lane.b32.xlu0 %v7014, 16
        %v7033 = vpop.permute.xlu0 %7032
        %7034 = vrot.lane.b32.xlu0 %v7015, 16
        %v7035 = vpop.permute.xlu0 %7034
        %7036 = vrot.lane.b32.xlu0 %v7016, 16
        %v7037 = vpop.permute.xlu0 %7036
        %7038 = vrot.lane.b32.xlu0 %v7017, 16
        %v7039 = vpop.permute.xlu0 %7038
        %7040 = vrot.lane.b32.xlu0 %v7018, 16
        %v7041 = vpop.permute.xlu0 %7040
        %7042 = vrot.lane.b32.xlu0 %v7019, 16
        %v7043 = vpop.permute.xlu0 %7042
        %7044 = vrot.lane.b32.xlu0 %v7020, 16
        %v7045 = vpop.permute.xlu0 %7044
        %7046 = vrot.lane.b32.xlu0 %v7021, 16
        %v7047 = vpop.permute.xlu0 %7046
        %7048 = vrot.lane.b32.xlu0 %v7022, 16
        %v7049 = vpop.permute.xlu0 %7048
        %7050 = vrot.lane.b32.xlu0 %v7023, 16
        %v7051 = vpop.permute.xlu0 %7050
        %7052 = vrot.lane.b32.xlu0 %v7024, 16
        %v7053 = vpop.permute.xlu0 %7052
        %7054 = vrot.lane.b32.xlu0 %v7025, 16
        %v7055 = vpop.permute.xlu0 %7054
        %7056 = vrot.lane.b32.xlu0 %v7026, 16
        %v7057 = vpop.permute.xlu0 %7056
        %7058 = vrot.lane.b32.xlu0 %v7027, 16
        %v7059 = vpop.permute.xlu0 %7058
        %v7060 = vunpack.c.l.b16 %v5590
        %v7061 = vunpack.c.l.b16 %v5593
        %v7062 = vunpack.c.l.b16 %v5597
        %v7063 = vunpack.c.l.b16 %v5600
        %v7064 = vunpack.c.l.b16 %v5604
        %v7065 = vunpack.c.l.b16 %v5607
        %v7066 = vunpack.c.l.b16 %v5611
        %v7067 = vunpack.c.l.b16 %v5614
        %v7068 = vunpack.c.l.b16 %v5618
        %v7069 = vunpack.c.l.b16 %v5621
        %v7070 = vunpack.c.l.b16 %v5625
        %v7071 = vunpack.c.l.b16 %v5628
        %v7072 = vunpack.c.l.b16 %v5632
        %v7073 = vunpack.c.l.b16 %v5635
        %v7074 = vunpack.c.l.b16 %v5639
        %v7075 = vunpack.c.l.b16 %v5642
        %v7076 = vunpack.c.l.b16 %v5646
        %v7077 = vunpack.c.l.b16 %v5649
        %v7078 = vunpack.c.l.b16 %v5653
        %v7079 = vunpack.c.l.b16 %v5656
        %v7080 = vunpack.c.l.b16 %v5660
        %v7081 = vunpack.c.l.b16 %v5663
        %v7082 = vunpack.c.l.b16 %v5667
        %v7083 = vunpack.c.l.b16 %v5670
        %v7084 = vunpack.c.l.b16 %v5674
        %v7085 = vunpack.c.l.b16 %v5677
        %v7086 = vunpack.c.l.b16 %v5681
        %v7087 = vunpack.c.l.b16 %v5684
        %v7088 = vunpack.c.l.b16 %v5688
        %v7089 = vunpack.c.l.b16 %v5691
        %v7090 = vunpack.c.l.b16 %v5695
        %v7091 = vunpack.c.l.b16 %v5698
        %v7092 = vpack.c.b16 %v7061, %v7060
        %v7093 = vpack.c.b16 %v7063, %v7062
        %v7094 = vpack.c.b16 %v7065, %v7064
        %v7095 = vpack.c.b16 %v7067, %v7066
        %v7096 = vpack.c.b16 %v7069, %v7068
        %v7097 = vpack.c.b16 %v7071, %v7070
        %v7098 = vpack.c.b16 %v7073, %v7072
        %v7099 = vpack.c.b16 %v7075, %v7074
        %v7100 = vpack.c.b16 %v7077, %v7076
        %v7101 = vpack.c.b16 %v7079, %v7078
        %v7102 = vpack.c.b16 %v7081, %v7080
        %v7103 = vpack.c.b16 %v7083, %v7082
        %v7104 = vpack.c.b16 %v7085, %v7084
        %v7105 = vpack.c.b16 %v7087, %v7086
        %v7106 = vpack.c.b16 %v7089, %v7088
        %v7107 = vpack.c.b16 %v7091, %v7090
        %7108 = vrot.lane.b32.xlu0 %v7092, 32
        %v7109 = vpop.permute.xlu0 %7108
        %7110 = vrot.lane.b32.xlu0 %v7093, 32
        %v7111 = vpop.permute.xlu0 %7110
        %7112 = vrot.lane.b32.xlu0 %v7094, 32
        %v7113 = vpop.permute.xlu0 %7112
        %7114 = vrot.lane.b32.xlu0 %v7095, 32
        %v7115 = vpop.permute.xlu0 %7114
        %7116 = vrot.lane.b32.xlu0 %v7096, 32
        %v7117 = vpop.permute.xlu0 %7116
        %7118 = vrot.lane.b32.xlu0 %v7097, 32
        %v7119 = vpop.permute.xlu0 %7118
        %7120 = vrot.lane.b32.xlu0 %v7098, 32
        %v7121 = vpop.permute.xlu0 %7120
        %7122 = vrot.lane.b32.xlu0 %v7099, 32
        %v7123 = vpop.permute.xlu0 %7122
        %7124 = vrot.lane.b32.xlu0 %v7100, 32
        %v7125 = vpop.permute.xlu0 %7124
        %7126 = vrot.lane.b32.xlu0 %v7101, 32
        %v7127 = vpop.permute.xlu0 %7126
        %7128 = vrot.lane.b32.xlu0 %v7102, 32
        %v7129 = vpop.permute.xlu0 %7128
        %7130 = vrot.lane.b32.xlu0 %v7103, 32
        %v7131 = vpop.permute.xlu0 %7130
        %7132 = vrot.lane.b32.xlu0 %v7104, 32
        %v7133 = vpop.permute.xlu0 %7132
        %7134 = vrot.lane.b32.xlu0 %v7105, 32
        %v7135 = vpop.permute.xlu0 %7134
        %7136 = vrot.lane.b32.xlu0 %v7106, 32
        %v7137 = vpop.permute.xlu0 %7136
        %7138 = vrot.lane.b32.xlu0 %v7107, 32
        %v7139 = vpop.permute.xlu0 %7138
        %v7156 = vunpack.c.l.b16 %v5699
        %v7157 = vunpack.c.l.b16 %v5700
        %v7158 = vunpack.c.l.b16 %v5701
        %v7159 = vunpack.c.l.b16 %v5702
        %v7160 = vunpack.c.l.b16 %v5703
        %v7161 = vunpack.c.l.b16 %v5704
        %v7162 = vunpack.c.l.b16 %v5705
        %v7163 = vunpack.c.l.b16 %v5706
        %v7164 = vunpack.c.l.b16 %v5707
        %v7165 = vunpack.c.l.b16 %v5708
        %v7166 = vunpack.c.l.b16 %v5709
        %v7167 = vunpack.c.l.b16 %v5710
        %v7168 = vunpack.c.l.b16 %v5711
        %v7169 = vunpack.c.l.b16 %v5712
        %v7170 = vunpack.c.l.b16 %v5713
        %v7171 = vunpack.c.l.b16 %v5714
        %v7172 = vunpack.c.l.b16 %v5715
        %v7173 = vunpack.c.l.b16 %v5716
        %v7174 = vunpack.c.l.b16 %v5717
        %v7175 = vunpack.c.l.b16 %v5718
        %v7176 = vunpack.c.l.b16 %v5719
        %v7177 = vunpack.c.l.b16 %v5720
        %v7178 = vunpack.c.l.b16 %v5721
        %v7179 = vunpack.c.l.b16 %v5722
        %v7180 = vunpack.c.l.b16 %v5723
        %v7181 = vunpack.c.l.b16 %v5724
        %v7182 = vunpack.c.l.b16 %v5725
        %v7183 = vunpack.c.l.b16 %v5726
        %v7184 = vunpack.c.l.b16 %v5727
        %v7185 = vunpack.c.l.b16 %v5728
        %v7186 = vunpack.c.l.b16 %v5729
        %v7187 = vunpack.c.l.b16 %v5730
        %v7188 = vpack.c.b16 %v7157, %v7156
        %v7189 = vpack.c.b16 %v7159, %v7158
        %v7190 = vpack.c.b16 %v7161, %v7160
        %v7191 = vpack.c.b16 %v7163, %v7162
        %v7192 = vpack.c.b16 %v7165, %v7164
        %v7193 = vpack.c.b16 %v7167, %v7166
        %v7194 = vpack.c.b16 %v7169, %v7168
        %v7195 = vpack.c.b16 %v7171, %v7170
        %v7196 = vpack.c.b16 %v7173, %v7172
        %v7197 = vpack.c.b16 %v7175, %v7174
        %v7198 = vpack.c.b16 %v7177, %v7176
        %v7199 = vpack.c.b16 %v7179, %v7178
        %v7200 = vpack.c.b16 %v7181, %v7180
        %v7201 = vpack.c.b16 %v7183, %v7182
        %v7202 = vpack.c.b16 %v7185, %v7184
        %v7203 = vpack.c.b16 %v7187, %v7186
        %7204 = vrot.lane.b32.xlu0 %v7188, 48
        %v7205 = vpop.permute.xlu0 %7204
        %7206 = vrot.lane.b32.xlu0 %v7189, 48
        %v7207 = vpop.permute.xlu0 %7206
        %7208 = vrot.lane.b32.xlu0 %v7190, 48
        %v7209 = vpop.permute.xlu0 %7208
        %7210 = vrot.lane.b32.xlu0 %v7191, 48
        %v7211 = vpop.permute.xlu0 %7210
        %7212 = vrot.lane.b32.xlu0 %v7192, 48
        %v7213 = vpop.permute.xlu0 %7212
        %7214 = vrot.lane.b32.xlu0 %v7193, 48
        %v7215 = vpop.permute.xlu0 %7214
        %7216 = vrot.lane.b32.xlu0 %v7194, 48
        %v7217 = vpop.permute.xlu0 %7216
        %7218 = vrot.lane.b32.xlu0 %v7195, 48
        %v7219 = vpop.permute.xlu0 %7218
        %7220 = vrot.lane.b32.xlu0 %v7196, 48
        %v7221 = vpop.permute.xlu0 %7220
        %7222 = vrot.lane.b32.xlu0 %v7197, 48
        %v7223 = vpop.permute.xlu0 %7222
        %7224 = vrot.lane.b32.xlu0 %v7198, 48
        %v7225 = vpop.permute.xlu0 %7224
        %7226 = vrot.lane.b32.xlu0 %v7199, 48
        %v7227 = vpop.permute.xlu0 %7226
        %7228 = vrot.lane.b32.xlu0 %v7200, 48
        %v7229 = vpop.permute.xlu0 %7228
        %7230 = vrot.lane.b32.xlu0 %v7201, 48
        %v7231 = vpop.permute.xlu0 %7230
        %7232 = vrot.lane.b32.xlu0 %v7202, 48
        %v7233 = vpop.permute.xlu0 %7232
        %7234 = vrot.lane.b32.xlu0 %v7203, 48
        %v7235 = vpop.permute.xlu0 %7234
        %v7236 = vunpack.c.l.b16 %v5760
        %v7237 = vunpack.c.l.b16 %v5770
        %v7238 = vunpack.c.l.b16 %v5784
        %v7239 = vunpack.c.l.b16 %v5794
        %v7240 = vunpack.c.l.b16 %v5808
        %v7241 = vunpack.c.l.b16 %v5818
        %v7242 = vunpack.c.l.b16 %v5832
        %v7243 = vunpack.c.l.b16 %v5842
        %v7244 = vunpack.c.l.b16 %v5856
        %v7245 = vunpack.c.l.b16 %v5866
        %v7246 = vunpack.c.l.b16 %v5880
        %v7247 = vunpack.c.l.b16 %v5890
        %v7248 = vunpack.c.l.b16 %v5904
        %v7249 = vunpack.c.l.b16 %v5914
        %v7250 = vunpack.c.l.b16 %v5928
        %v7251 = vunpack.c.l.b16 %v5938
        %v7252 = vunpack.c.l.b16 %v5952
        %v7253 = vunpack.c.l.b16 %v5962
        %v7254 = vunpack.c.l.b16 %v5976
        %v7255 = vunpack.c.l.b16 %v5986
        %v7256 = vunpack.c.l.b16 %v6000
        %v7257 = vunpack.c.l.b16 %v6010
        %v7258 = vunpack.c.l.b16 %v6024
        %v7259 = vunpack.c.l.b16 %v6034
        %v7260 = vunpack.c.l.b16 %v6048
        %v7261 = vunpack.c.l.b16 %v6058
        %v7262 = vunpack.c.l.b16 %v6072
        %v7263 = vunpack.c.l.b16 %v6082
        %v7264 = vunpack.c.l.b16 %v6096
        %v7265 = vunpack.c.l.b16 %v6106
        %v7266 = vunpack.c.l.b16 %v6120
        %v7267 = vunpack.c.l.b16 %v6130
        %v7268 = vpack.c.b16 %v7237, %v7236
        %v7269 = vpack.c.b16 %v7239, %v7238
        %v7270 = vpack.c.b16 %v7241, %v7240
        %v7271 = vpack.c.b16 %v7243, %v7242
        %v7272 = vpack.c.b16 %v7245, %v7244
        %v7273 = vpack.c.b16 %v7247, %v7246
        %v7274 = vpack.c.b16 %v7249, %v7248
        %v7275 = vpack.c.b16 %v7251, %v7250
        %v7276 = vpack.c.b16 %v7253, %v7252
        %v7277 = vpack.c.b16 %v7255, %v7254
        %v7278 = vpack.c.b16 %v7257, %v7256
        %v7279 = vpack.c.b16 %v7259, %v7258
        %v7280 = vpack.c.b16 %v7261, %v7260
        %v7281 = vpack.c.b16 %v7263, %v7262
        %v7282 = vpack.c.b16 %v7265, %v7264
        %v7283 = vpack.c.b16 %v7267, %v7266
        %7284 = vrot.lane.b32.xlu0 %v7268, 64
        %v7285 = vpop.permute.xlu0 %7284
        %7286 = vrot.lane.b32.xlu0 %v7269, 64
        %v7287 = vpop.permute.xlu0 %7286
        %7288 = vrot.lane.b32.xlu0 %v7270, 64
        %v7289 = vpop.permute.xlu0 %7288
        %7290 = vrot.lane.b32.xlu0 %v7271, 64
        %v7291 = vpop.permute.xlu0 %7290
        %7292 = vrot.lane.b32.xlu0 %v7272, 64
        %v7293 = vpop.permute.xlu0 %7292
        %7294 = vrot.lane.b32.xlu0 %v7273, 64
        %v7295 = vpop.permute.xlu0 %7294
        %7296 = vrot.lane.b32.xlu0 %v7274, 64
        %v7297 = vpop.permute.xlu0 %7296
        %7298 = vrot.lane.b32.xlu0 %v7275, 64
        %v7299 = vpop.permute.xlu0 %7298
        %7300 = vrot.lane.b32.xlu0 %v7276, 64
        %v7301 = vpop.permute.xlu0 %7300
        %7302 = vrot.lane.b32.xlu0 %v7277, 64
        %v7303 = vpop.permute.xlu0 %7302
        %7304 = vrot.lane.b32.xlu0 %v7278, 64
        %v7305 = vpop.permute.xlu0 %7304
        %7306 = vrot.lane.b32.xlu0 %v7279, 64
        %v7307 = vpop.permute.xlu0 %7306
        %7308 = vrot.lane.b32.xlu0 %v7280, 64
        %v7309 = vpop.permute.xlu0 %7308
        %7310 = vrot.lane.b32.xlu0 %v7281, 64
        %v7311 = vpop.permute.xlu0 %7310
        %7312 = vrot.lane.b32.xlu0 %v7282, 64
        %v7313 = vpop.permute.xlu0 %7312
        %7314 = vrot.lane.b32.xlu0 %v7283, 64
        %v7315 = vpop.permute.xlu0 %7314
        %v7316 = vunpack.c.l.b16 %v6198
        %v7317 = vunpack.c.l.b16 %v6201
        %v7318 = vunpack.c.l.b16 %v6205
        %v7319 = vunpack.c.l.b16 %v6208
        %v7320 = vunpack.c.l.b16 %v6212
        %v7321 = vunpack.c.l.b16 %v6215
        %v7322 = vunpack.c.l.b16 %v6219
        %v7323 = vunpack.c.l.b16 %v6222
        %v7324 = vunpack.c.l.b16 %v6226
        %v7325 = vunpack.c.l.b16 %v6229
        %v7326 = vunpack.c.l.b16 %v6233
        %v7327 = vunpack.c.l.b16 %v6236
        %v7328 = vunpack.c.l.b16 %v6240
        %v7329 = vunpack.c.l.b16 %v6243
        %v7330 = vunpack.c.l.b16 %v6247
        %v7331 = vunpack.c.l.b16 %v6250
        %v7332 = vunpack.c.l.b16 %v6254
        %v7333 = vunpack.c.l.b16 %v6257
        %v7334 = vunpack.c.l.b16 %v6261
        %v7335 = vunpack.c.l.b16 %v6264
        %v7336 = vunpack.c.l.b16 %v6268
        %v7337 = vunpack.c.l.b16 %v6271
        %v7338 = vunpack.c.l.b16 %v6275
        %v7339 = vunpack.c.l.b16 %v6278
        %v7340 = vunpack.c.l.b16 %v6282
        %v7341 = vunpack.c.l.b16 %v6285
        %v7342 = vunpack.c.l.b16 %v6289
        %v7343 = vunpack.c.l.b16 %v6292
        %v7344 = vunpack.c.l.b16 %v6296
        %v7345 = vunpack.c.l.b16 %v6299
        %v7346 = vunpack.c.l.b16 %v6303
        %v7347 = vunpack.c.l.b16 %v6306
        %v7348 = vpack.c.b16 %v7317, %v7316
        %v7349 = vpack.c.b16 %v7319, %v7318
        %v7350 = vpack.c.b16 %v7321, %v7320
        %v7351 = vpack.c.b16 %v7323, %v7322
        %v7352 = vpack.c.b16 %v7325, %v7324
        %v7353 = vpack.c.b16 %v7327, %v7326
        %v7354 = vpack.c.b16 %v7329, %v7328
        %v7355 = vpack.c.b16 %v7331, %v7330
        %v7356 = vpack.c.b16 %v7333, %v7332
        %v7357 = vpack.c.b16 %v7335, %v7334
        %v7358 = vpack.c.b16 %v7337, %v7336
        %v7359 = vpack.c.b16 %v7339, %v7338
        %v7360 = vpack.c.b16 %v7341, %v7340
        %v7361 = vpack.c.b16 %v7343, %v7342
        %v7362 = vpack.c.b16 %v7345, %v7344
        %v7363 = vpack.c.b16 %v7347, %v7346
        %7364 = vrot.lane.b32.xlu0 %v7348, 80
        %v7365 = vpop.permute.xlu0 %7364
        %7366 = vrot.lane.b32.xlu0 %v7349, 80
        %v7367 = vpop.permute.xlu0 %7366
        %7368 = vrot.lane.b32.xlu0 %v7350, 80
        %v7369 = vpop.permute.xlu0 %7368
        %7370 = vrot.lane.b32.xlu0 %v7351, 80
        %v7371 = vpop.permute.xlu0 %7370
        %7372 = vrot.lane.b32.xlu0 %v7352, 80
        %v7373 = vpop.permute.xlu0 %7372
        %7374 = vrot.lane.b32.xlu0 %v7353, 80
        %v7375 = vpop.permute.xlu0 %7374
        %7376 = vrot.lane.b32.xlu0 %v7354, 80
        %v7377 = vpop.permute.xlu0 %7376
        %7378 = vrot.lane.b32.xlu0 %v7355, 80
        %v7379 = vpop.permute.xlu0 %7378
        %7380 = vrot.lane.b32.xlu0 %v7356, 80
        %v7381 = vpop.permute.xlu0 %7380
        %7382 = vrot.lane.b32.xlu0 %v7357, 80
        %v7383 = vpop.permute.xlu0 %7382
        %7384 = vrot.lane.b32.xlu0 %v7358, 80
        %v7385 = vpop.permute.xlu0 %7384
        %7386 = vrot.lane.b32.xlu0 %v7359, 80
        %v7387 = vpop.permute.xlu0 %7386
        %7388 = vrot.lane.b32.xlu0 %v7360, 80
        %v7389 = vpop.permute.xlu0 %7388
        %7390 = vrot.lane.b32.xlu0 %v7361, 80
        %v7391 = vpop.permute.xlu0 %7390
        %7392 = vrot.lane.b32.xlu0 %v7362, 80
        %v7393 = vpop.permute.xlu0 %7392
        %7394 = vrot.lane.b32.xlu0 %v7363, 80
        %v7395 = vpop.permute.xlu0 %7394
        %v7412 = vunpack.c.l.b16 %v6308
        %v7413 = vunpack.c.l.b16 %v6309
        %v7414 = vunpack.c.l.b16 %v6310
        %v7415 = vunpack.c.l.b16 %v6311
        %v7416 = vunpack.c.l.b16 %v6312
        %v7417 = vunpack.c.l.b16 %v6313
        %v7418 = vunpack.c.l.b16 %v6314
        %v7419 = vunpack.c.l.b16 %v6315
        %v7420 = vunpack.c.l.b16 %v6316
        %v7421 = vunpack.c.l.b16 %v6317
        %v7422 = vunpack.c.l.b16 %v6318
        %v7423 = vunpack.c.l.b16 %v6319
        %v7424 = vunpack.c.l.b16 %v6320
        %v7425 = vunpack.c.l.b16 %v6321
        %v7426 = vunpack.c.l.b16 %v6322
        %v7427 = vunpack.c.l.b16 %v6323
        %v7428 = vunpack.c.l.b16 %v6324
        %v7429 = vunpack.c.l.b16 %v6325
        %v7430 = vunpack.c.l.b16 %v6326
        %v7431 = vunpack.c.l.b16 %v6327
        %v7432 = vunpack.c.l.b16 %v6328
        %v7433 = vunpack.c.l.b16 %v6329
        %v7434 = vunpack.c.l.b16 %v6330
        %v7435 = vunpack.c.l.b16 %v6331
        %v7436 = vunpack.c.l.b16 %v6332
        %v7437 = vunpack.c.l.b16 %v6333
        %v7438 = vunpack.c.l.b16 %v6334
        %v7439 = vunpack.c.l.b16 %v6335
        %v7440 = vunpack.c.l.b16 %v6336
        %v7441 = vunpack.c.l.b16 %v6337
        %v7442 = vunpack.c.l.b16 %v6338
        %v7443 = vunpack.c.l.b16 %v6339
        %v7444 = vpack.c.b16 %v7413, %v7412
        %v7445 = vpack.c.b16 %v7415, %v7414
        %v7446 = vpack.c.b16 %v7417, %v7416
        %v7447 = vpack.c.b16 %v7419, %v7418
        %v7448 = vpack.c.b16 %v7421, %v7420
        %v7449 = vpack.c.b16 %v7423, %v7422
        %v7450 = vpack.c.b16 %v7425, %v7424
        %v7451 = vpack.c.b16 %v7427, %v7426
        %v7452 = vpack.c.b16 %v7429, %v7428
        %v7453 = vpack.c.b16 %v7431, %v7430
        %v7454 = vpack.c.b16 %v7433, %v7432
        %v7455 = vpack.c.b16 %v7435, %v7434
        %v7456 = vpack.c.b16 %v7437, %v7436
        %v7457 = vpack.c.b16 %v7439, %v7438
        %v7458 = vpack.c.b16 %v7441, %v7440
        %v7459 = vpack.c.b16 %v7443, %v7442
        %7460 = vrot.lane.b32.xlu0 %v7444, 96
        %v7461 = vpop.permute.xlu0 %7460
        %7462 = vrot.lane.b32.xlu0 %v7445, 96
        %v7463 = vpop.permute.xlu0 %7462
        %7464 = vrot.lane.b32.xlu0 %v7446, 96
        %v7465 = vpop.permute.xlu0 %7464
        %7466 = vrot.lane.b32.xlu0 %v7447, 96
        %v7467 = vpop.permute.xlu0 %7466
        %7468 = vrot.lane.b32.xlu0 %v7448, 96
        %v7469 = vpop.permute.xlu0 %7468
        %7470 = vrot.lane.b32.xlu0 %v7449, 96
        %v7471 = vpop.permute.xlu0 %7470
        %7472 = vrot.lane.b32.xlu0 %v7450, 96
        %v7473 = vpop.permute.xlu0 %7472
        %7474 = vrot.lane.b32.xlu0 %v7451, 96
        %v7475 = vpop.permute.xlu0 %7474
        %7476 = vrot.lane.b32.xlu0 %v7452, 96
        %v7477 = vpop.permute.xlu0 %7476
        %7478 = vrot.lane.b32.xlu0 %v7453, 96
        %v7479 = vpop.permute.xlu0 %7478
        %7480 = vrot.lane.b32.xlu0 %v7454, 96
        %v7481 = vpop.permute.xlu0 %7480
        %7482 = vrot.lane.b32.xlu0 %v7455, 96
        %v7483 = vpop.permute.xlu0 %7482
        %7484 = vrot.lane.b32.xlu0 %v7456, 96
        %v7485 = vpop.permute.xlu0 %7484
        %7486 = vrot.lane.b32.xlu0 %v7457, 96
        %v7487 = vpop.permute.xlu0 %7486
        %7488 = vrot.lane.b32.xlu0 %v7458, 96
        %v7489 = vpop.permute.xlu0 %7488
        %7490 = vrot.lane.b32.xlu0 %v7459, 96
        %v7491 = vpop.permute.xlu0 %7490
        %v7492 = vunpack.c.l.b16 %v6369
        %v7493 = vunpack.c.l.b16 %v6379
        %v7494 = vunpack.c.l.b16 %v6393
        %v7495 = vunpack.c.l.b16 %v6403
        %v7496 = vunpack.c.l.b16 %v6417
        %v7497 = vunpack.c.l.b16 %v6427
        %v7498 = vunpack.c.l.b16 %v6441
        %v7499 = vunpack.c.l.b16 %v6451
        %v7500 = vunpack.c.l.b16 %v6465
        %v7501 = vunpack.c.l.b16 %v6475
        %v7502 = vunpack.c.l.b16 %v6489
        %v7503 = vunpack.c.l.b16 %v6499
        %v7504 = vunpack.c.l.b16 %v6513
        %v7505 = vunpack.c.l.b16 %v6523
        %v7506 = vunpack.c.l.b16 %v6537
        %v7507 = vunpack.c.l.b16 %v6547
        %v7508 = vunpack.c.l.b16 %v6561
        %v7509 = vunpack.c.l.b16 %v6571
        %v7510 = vunpack.c.l.b16 %v6585
        %v7511 = vunpack.c.l.b16 %v6595
        %v7512 = vunpack.c.l.b16 %v6609
        %v7513 = vunpack.c.l.b16 %v6619
        %v7514 = vunpack.c.l.b16 %v6633
        %v7515 = vunpack.c.l.b16 %v6643
        %v7516 = vunpack.c.l.b16 %v6657
        %v7517 = vunpack.c.l.b16 %v6667
        %v7518 = vunpack.c.l.b16 %v6681
        %v7519 = vunpack.c.l.b16 %v6691
        %v7520 = vunpack.c.l.b16 %v6705
        %v7521 = vunpack.c.l.b16 %v6715
        %v7522 = vunpack.c.l.b16 %v6729
        %v7523 = vunpack.c.l.b16 %v6739
        %v7524 = vpack.c.b16 %v7493, %v7492
        %v7525 = vpack.c.b16 %v7495, %v7494
        %v7526 = vpack.c.b16 %v7497, %v7496
        %v7527 = vpack.c.b16 %v7499, %v7498
        %v7528 = vpack.c.b16 %v7501, %v7500
        %v7529 = vpack.c.b16 %v7503, %v7502
        %v7530 = vpack.c.b16 %v7505, %v7504
        %v7531 = vpack.c.b16 %v7507, %v7506
        %v7532 = vpack.c.b16 %v7509, %v7508
        %v7533 = vpack.c.b16 %v7511, %v7510
        %v7534 = vpack.c.b16 %v7513, %v7512
        %v7535 = vpack.c.b16 %v7515, %v7514
        %v7536 = vpack.c.b16 %v7517, %v7516
        %v7537 = vpack.c.b16 %v7519, %v7518
        %v7538 = vpack.c.b16 %v7521, %v7520
        %v7539 = vpack.c.b16 %v7523, %v7522
        %7540 = vrot.lane.b32.xlu0 %v7524, 112
        %v7541 = vpop.permute.xlu0 %7540
        %7542 = vrot.lane.b32.xlu0 %v7525, 112
        %v7543 = vpop.permute.xlu0 %7542
        %7544 = vrot.lane.b32.xlu0 %v7526, 112
        %v7545 = vpop.permute.xlu0 %7544
        %7546 = vrot.lane.b32.xlu0 %v7527, 112
        %v7547 = vpop.permute.xlu0 %7546
        %7548 = vrot.lane.b32.xlu0 %v7528, 112
        %v7549 = vpop.permute.xlu0 %7548
        %7550 = vrot.lane.b32.xlu0 %v7529, 112
        %v7551 = vpop.permute.xlu0 %7550
        %7552 = vrot.lane.b32.xlu0 %v7530, 112
        %v7553 = vpop.permute.xlu0 %7552
        %7554 = vrot.lane.b32.xlu0 %v7531, 112
        %v7555 = vpop.permute.xlu0 %7554
        %7556 = vrot.lane.b32.xlu0 %v7532, 112
        %v7557 = vpop.permute.xlu0 %7556
        %7558 = vrot.lane.b32.xlu0 %v7533, 112
        %v7559 = vpop.permute.xlu0 %7558
        %7560 = vrot.lane.b32.xlu0 %v7534, 112
        %v7561 = vpop.permute.xlu0 %7560
        %7562 = vrot.lane.b32.xlu0 %v7535, 112
        %v7563 = vpop.permute.xlu0 %7562
        %7564 = vrot.lane.b32.xlu0 %v7536, 112
        %v7565 = vpop.permute.xlu0 %7564
        %7566 = vrot.lane.b32.xlu0 %v7537, 112
        %v7567 = vpop.permute.xlu0 %7566
        %7568 = vrot.lane.b32.xlu0 %v7538, 112
        %v7569 = vpop.permute.xlu0 %7568
        %7570 = vrot.lane.b32.xlu0 %v7539, 112
        %v7571 = vpop.permute.xlu0 %7570
        %v7572 = vunpack.c.l.b16 %v6807
        %v7573 = vunpack.c.l.b16 %v6810
        %v7574 = vunpack.c.l.b16 %v6814
        %v7575 = vunpack.c.l.b16 %v6817
        %v7576 = vunpack.c.l.b16 %v6821
        %v7577 = vunpack.c.l.b16 %v6824
        %v7578 = vunpack.c.l.b16 %v6828
        %v7579 = vunpack.c.l.b16 %v6831
        %v7580 = vunpack.c.l.b16 %v6835
        %v7581 = vunpack.c.l.b16 %v6838
        %v7582 = vunpack.c.l.b16 %v6842
        %v7583 = vunpack.c.l.b16 %v6845
        %v7584 = vunpack.c.l.b16 %v6849
        %v7585 = vunpack.c.l.b16 %v6852
        %v7586 = vunpack.c.l.b16 %v6856
        %v7587 = vunpack.c.l.b16 %v6859
        %v7588 = vunpack.c.l.b16 %v6863
        %v7589 = vunpack.c.l.b16 %v6866
        %v7590 = vunpack.c.l.b16 %v6870
        %v7591 = vunpack.c.l.b16 %v6873
        %v7592 = vunpack.c.l.b16 %v6877
        %v7593 = vunpack.c.l.b16 %v6880
        %v7594 = vunpack.c.l.b16 %v6884
        %v7595 = vunpack.c.l.b16 %v6887
        %v7596 = vunpack.c.l.b16 %v6891
        %v7597 = vunpack.c.l.b16 %v6894
        %v7598 = vunpack.c.l.b16 %v6898
        %v7599 = vunpack.c.l.b16 %v6901
        %v7600 = vunpack.c.l.b16 %v6905
        %v7601 = vunpack.c.l.b16 %v6908
        %v7602 = vunpack.c.l.b16 %v6912
        %v7603 = vunpack.c.l.b16 %v6915
        %v7604 = vpack.c.b16 %v7573, %v7572
        %v7605 = vpack.c.b16 %v7575, %v7574
        %v7606 = vpack.c.b16 %v7577, %v7576
        %v7607 = vpack.c.b16 %v7579, %v7578
        %v7608 = vpack.c.b16 %v7581, %v7580
        %v7609 = vpack.c.b16 %v7583, %v7582
        %v7610 = vpack.c.b16 %v7585, %v7584
        %v7611 = vpack.c.b16 %v7587, %v7586
        %v7612 = vpack.c.b16 %v7589, %v7588
        %v7613 = vpack.c.b16 %v7591, %v7590
        %v7614 = vpack.c.b16 %v7593, %v7592
        %v7615 = vpack.c.b16 %v7595, %v7594
        %v7616 = vpack.c.b16 %v7597, %v7596
        %v7617 = vpack.c.b16 %v7599, %v7598
        %v7618 = vpack.c.b16 %v7601, %v7600
        %v7619 = vpack.c.b16 %v7603, %v7602
        %vm7620 = vcmask 130048
        %v7623 = vsel %vm7620, %v6964, %v7029
        %v7626 = vsel %vm7620, %v6965, %v7031
        %v7629 = vsel %vm7620, %v6966, %v7033
        %v7632 = vsel %vm7620, %v6967, %v7035
        %v7635 = vsel %vm7620, %v6968, %v7037
        %v7638 = vsel %vm7620, %v6969, %v7039
        %v7641 = vsel %vm7620, %v6970, %v7041
        %v7644 = vsel %vm7620, %v6971, %v7043
        %v7647 = vsel %vm7620, %v6972, %v7045
        %v7650 = vsel %vm7620, %v6973, %v7047
        %v7653 = vsel %vm7620, %v6974, %v7049
        %v7656 = vsel %vm7620, %v6975, %v7051
        %v7659 = vsel %vm7620, %v6976, %v7053
        %v7662 = vsel %vm7620, %v6977, %v7055
        %v7665 = vsel %vm7620, %v6978, %v7057
        %v7668 = vsel %vm7620, %v6979, %v7059
        %v7670 = vsel %vm3596, %v7623, %v7109
        %v7672 = vsel %vm3596, %v7626, %v7111
        %v7674 = vsel %vm3596, %v7629, %v7113
        %v7676 = vsel %vm3596, %v7632, %v7115
        %v7678 = vsel %vm3596, %v7635, %v7117
        %v7680 = vsel %vm3596, %v7638, %v7119
        %v7682 = vsel %vm3596, %v7641, %v7121
        %v7684 = vsel %vm3596, %v7644, %v7123
        %v7686 = vsel %vm3596, %v7647, %v7125
        %v7688 = vsel %vm3596, %v7650, %v7127
        %v7690 = vsel %vm3596, %v7653, %v7129
        %v7692 = vsel %vm3596, %v7656, %v7131
        %v7694 = vsel %vm3596, %v7659, %v7133
        %v7696 = vsel %vm3596, %v7662, %v7135
        %v7698 = vsel %vm3596, %v7665, %v7137
        %v7700 = vsel %vm3596, %v7668, %v7139
        %vm7701 = vcmask 392192
        %v7703 = vsel %vm7701, %v7670, %v7205
        %v7705 = vsel %vm7701, %v7672, %v7207
        %v7707 = vsel %vm7701, %v7674, %v7209
        %v7709 = vsel %vm7701, %v7676, %v7211
        %v7711 = vsel %vm7701, %v7678, %v7213
        %v7713 = vsel %vm7701, %v7680, %v7215
        %v7715 = vsel %vm7701, %v7682, %v7217
        %v7717 = vsel %vm7701, %v7684, %v7219
        %v7719 = vsel %vm7701, %v7686, %v7221
        %v7721 = vsel %vm7701, %v7688, %v7223
        %v7723 = vsel %vm7701, %v7690, %v7225
        %v7725 = vsel %vm7701, %v7692, %v7227
        %v7727 = vsel %vm7701, %v7694, %v7229
        %v7729 = vsel %vm7701, %v7696, %v7231
        %v7731 = vsel %vm7701, %v7698, %v7233
        %v7733 = vsel %vm7701, %v7700, %v7235
        %v7735 = vsel %vm3645, %v7703, %v7285
        %v7737 = vsel %vm3645, %v7705, %v7287
        %v7739 = vsel %vm3645, %v7707, %v7289
        %v7741 = vsel %vm3645, %v7709, %v7291
        %v7743 = vsel %vm3645, %v7711, %v7293
        %v7745 = vsel %vm3645, %v7713, %v7295
        %v7747 = vsel %vm3645, %v7715, %v7297
        %v7749 = vsel %vm3645, %v7717, %v7299
        %v7751 = vsel %vm3645, %v7719, %v7301
        %v7753 = vsel %vm3645, %v7721, %v7303
        %v7755 = vsel %vm3645, %v7723, %v7305
        %v7757 = vsel %vm3645, %v7725, %v7307
        %v7759 = vsel %vm3645, %v7727, %v7309
        %v7761 = vsel %vm3645, %v7729, %v7311
        %v7763 = vsel %vm3645, %v7731, %v7313
        %v7765 = vsel %vm3645, %v7733, %v7315
        %vm7766 = vcmask 654336
        %v7768 = vsel %vm7766, %v7735, %v7365
        %v7770 = vsel %vm7766, %v7737, %v7367
        %v7772 = vsel %vm7766, %v7739, %v7369
        %v7774 = vsel %vm7766, %v7741, %v7371
        %v7776 = vsel %vm7766, %v7743, %v7373
        %v7778 = vsel %vm7766, %v7745, %v7375
        %v7780 = vsel %vm7766, %v7747, %v7377
        %v7782 = vsel %vm7766, %v7749, %v7379
        %v7784 = vsel %vm7766, %v7751, %v7381
        %v7786 = vsel %vm7766, %v7753, %v7383
        %v7788 = vsel %vm7766, %v7755, %v7385
        %v7790 = vsel %vm7766, %v7757, %v7387
        %v7792 = vsel %vm7766, %v7759, %v7389
        %v7794 = vsel %vm7766, %v7761, %v7391
        %v7796 = vsel %vm7766, %v7763, %v7393
        %v7798 = vsel %vm7766, %v7765, %v7395
        %v7800 = vsel %vm3678, %v7768, %v7461
        %v7802 = vsel %vm3678, %v7770, %v7463
        %v7804 = vsel %vm3678, %v7772, %v7465
        %v7806 = vsel %vm3678, %v7774, %v7467
        %v7808 = vsel %vm3678, %v7776, %v7469
        %v7810 = vsel %vm3678, %v7778, %v7471
        %v7812 = vsel %vm3678, %v7780, %v7473
        %v7814 = vsel %vm3678, %v7782, %v7475
        %v7816 = vsel %vm3678, %v7784, %v7477
        %v7818 = vsel %vm3678, %v7786, %v7479
        %v7820 = vsel %vm3678, %v7788, %v7481
        %v7822 = vsel %vm3678, %v7790, %v7483
        %v7824 = vsel %vm3678, %v7792, %v7485
        %v7826 = vsel %vm3678, %v7794, %v7487
        %v7828 = vsel %vm3678, %v7796, %v7489
        %v7830 = vsel %vm3678, %v7798, %v7491
        %vm7831 = vcmask 916480
        %v7833 = vsel %vm7831, %v7800, %v7541
        %v7836 = vsel %vm7831, %v7802, %v7543
        %v7839 = vsel %vm7831, %v7804, %v7545
        %v7842 = vsel %vm7831, %v7806, %v7547
        %v7845 = vsel %vm7831, %v7808, %v7549
        %v7848 = vsel %vm7831, %v7810, %v7551
        %v7851 = vsel %vm7831, %v7812, %v7553
        %v7854 = vsel %vm7831, %v7814, %v7555
        %v7857 = vsel %vm7831, %v7816, %v7557
        %v7860 = vsel %vm7831, %v7818, %v7559
        %v7863 = vsel %vm7831, %v7820, %v7561
        %v7866 = vsel %vm7831, %v7822, %v7563
        %v7869 = vsel %vm7831, %v7824, %v7565
        %v7872 = vsel %vm7831, %v7826, %v7567
        %v7875 = vsel %vm7831, %v7828, %v7569
        %v7878 = vsel %vm7831, %v7830, %v7571
        %v7880 = vld [vmem:[%s3] sm:$0xf]
        %v7881 = vld [vmem:[%s3 + $0x4] sm:$0xf]
        %v7882 = vld [vmem:[%s3 + $0x8] sm:$0xf]
        %v7883 = vld [vmem:[%s3 + $0xc] sm:$0xf]
        %v7884 = vld [vmem:[%s3 + $0x10] sm:$0xf]
        %v7885 = vld [vmem:[%s3 + $0x14] sm:$0xf]
        %v7886 = vld [vmem:[%s3 + $0x18] sm:$0xf]
        %v7887 = vld [vmem:[%s3 + $0x1c] sm:$0xf]
        %v7888 = vld [vmem:[%s3 + $0x20] sm:$0xf]
        %v7889 = vld [vmem:[%s3 + $0x24] sm:$0xf]
        %v7890 = vld [vmem:[%s3 + $0x28] sm:$0xf]
        %v7891 = vld [vmem:[%s3 + $0x2c] sm:$0xf]
        %v7892 = vld [vmem:[%s3 + $0x30] sm:$0xf]
        %v7893 = vld [vmem:[%s3 + $0x34] sm:$0xf]
        %v7894 = vld [vmem:[%s3 + $0x38] sm:$0xf]
        %v7895 = vld [vmem:[%s3 + $0x3c] sm:$0xf]
        %v7896 = vld [vmem:[%s3 + $0x40] sm:$0xf]
        %v7897 = vld [vmem:[%s3 + $0x44] sm:$0xf]
        %v7916 = vunpack.c.l.b16 %v7880
        %v7917 = vunpack.c.l.b16 %v7881
        %v7918 = vunpack.c.l.b16 %v7882
        %v7919 = vunpack.c.l.b16 %v7883
        %v7920 = vunpack.c.l.b16 %v7884
        %v7921 = vunpack.c.l.b16 %v7885
        %v7922 = vunpack.c.l.b16 %v7886
        %v7923 = vunpack.c.l.b16 %v7887
        %v7924 = vunpack.c.l.b16 %v7888
        %v7925 = vunpack.c.l.b16 %v7889
        %v7926 = vunpack.c.l.b16 %v7890
        %v7927 = vunpack.c.l.b16 %v7891
        %v7928 = vunpack.c.l.b16 %v7892
        %v7929 = vunpack.c.l.b16 %v7893
        %v7930 = vunpack.c.l.b16 %v7894
        %v7931 = vunpack.c.l.b16 %v7895
        %v7932 = vunpack.c.l.b16 %v7896
        %v7933 = vunpack.c.l.b16 %v7897
        %v7934 = vpack.c.b16 %v7917, %v7916
        %v7935 = vpack.c.b16 %v7919, %v7918
        %v7936 = vpack.c.b16 %v7921, %v7920
        %v7937 = vpack.c.b16 %v7923, %v7922
        %v7938 = vpack.c.b16 %v7925, %v7924
        %v7939 = vpack.c.b16 %v7927, %v7926
        %v7940 = vpack.c.b16 %v7929, %v7928
        %v7941 = vpack.c.b16 %v7931, %v7930
        %v7942 = vpack.c.b16 %v7933, %v7932
        %v7953 = vsel %vm7620, %v7604, 0
        %v7956 = vsel %vm7620, %v7605, 0
        %v7959 = vsel %vm7620, %v7606, 0
        %v7962 = vsel %vm7620, %v7607, 0
        %v7965 = vsel %vm7620, %v7608, 0
        %v7968 = vsel %vm7620, %v7609, 0
        %v7971 = vsel %vm7620, %v7610, 0
        %v7974 = vsel %vm7620, %v7611, 0
        %v7977 = vsel %vm7620, %v7612, 0
        %v7980 = vsel %vm7620, %v7613, 0
        %v7983 = vsel %vm7620, %v7614, 0
        %v7986 = vsel %vm7620, %v7615, 0
        %v7989 = vsel %vm7620, %v7616, 0
        %v7992 = vsel %vm7620, %v7617, 0
        %v7995 = vsel %vm7620, %v7618, 0
        %v7998 = vsel %vm7620, %v7619, 0
        %8000 = vmatprep.subr.bf16.mxu0 0
        %8001 = vmatpush1.bf16.msra.mxu0 %v7941
        %8002 = vmatprep.subr.bf16.mxu0 0
        %8003 = vmatpush1.bf16.msra.mxu0 %v7940
        %8004 = vmatprep.subr.bf16.mxu0 0
        %8005 = vmatpush1.bf16.msra.mxu0 %v7939
        %8006 = vmatprep.subr.bf16.mxu0 0
        %8007 = vmatpush1.bf16.msra.mxu0 %v7938
        %8008 = vmatprep.subr.bf16.mxu0 0
        %8009 = vmatpush1.bf16.msra.mxu0 %v7937
        %8010 = vmatprep.subr.bf16.mxu0 0
        %8011 = vmatpush1.bf16.msra.mxu0 %v7936
        %8012 = vmatprep.subr.bf16.mxu0 0
        %8013 = vmatpush1.bf16.msra.mxu0 %v7935
        %8014 = vmatprep.subr.bf16.mxu0 0
        %8015 = vmatpush1.bf16.msra.mxu0 %v7934
        %8016 = vmatprep.subr.bf16.mxu0 0
        %8017 = vmatpush2.bf16.msra.mxu0 0
        %8018 = vmatprep.subr.bf16.mxu0 0
        %8019 = vmatpush2.bf16.msra.mxu0 0
        %8020 = vmatprep.subr.bf16.mxu0 0
        %8021 = vmatpush2.bf16.msra.mxu0 0
        %8022 = vmatprep.subr.bf16.mxu0 0
        %8023 = vmatpush2.bf16.msra.mxu0 0
        %8024 = vmatprep.subr.bf16.mxu0 0
        %8025 = vmatpush2.bf16.msra.mxu0 0
        %8026 = vmatprep.subr.bf16.mxu0 0
        %8027 = vmatpush2.bf16.msra.mxu0 0
        %8028 = vmatprep.subr.bf16.mxu0 0
        %8029 = vmatpush2.bf16.msra.mxu0 0
        %8030 = vmatprep.subr.bf16.mxu0 0
        %8031 = vmatpush2.bf16.msra.mxu0 %v7942
        %8032 = vmatprep.mubr.bf16.mxu0 %v7953
        %8033 = vmatmul.mubr.bf16.gmra.mxu0 %v7833
        %v8034 = vpop.f32.mrf.mxu0
        %v8035 = vadd.f32 0.0, %v8034
        %v8036 = vpop.f32.mrf.mxu0
        %v8037 = vpop.f32.mrf.mxu0
        %v8038 = vadd.f32 0.0, %v8037
        %v8039 = vpop.f32.mrf.mxu0
        %8040 = vmatprep.mubr.bf16.mxu0 %v7956
        %8041 = vmatmul.mubr.bf16.gmra.mxu0 %v7836
        %v8042 = vpop.f32.mrf.mxu0
        %v8043 = vadd.f32 0.0, %v8042
        %v8044 = vpop.f32.mrf.mxu0
        %v8045 = vpop.f32.mrf.mxu0
        %v8046 = vadd.f32 0.0, %v8045
        %v8047 = vpop.f32.mrf.mxu0
        %8048 = vmatprep.mubr.bf16.mxu0 %v7959
        %8049 = vmatmul.mubr.bf16.gmra.mxu0 %v7839
        %v8050 = vpop.f32.mrf.mxu0
        %v8051 = vadd.f32 0.0, %v8050
        %v8052 = vpop.f32.mrf.mxu0
        %v8053 = vpop.f32.mrf.mxu0
        %v8054 = vadd.f32 0.0, %v8053
        %v8055 = vpop.f32.mrf.mxu0
        %8056 = vmatprep.mubr.bf16.mxu0 %v7962
        %8057 = vmatmul.mubr.bf16.gmra.mxu0 %v7842
        %v8058 = vpop.f32.mrf.mxu0
        %v8059 = vadd.f32 0.0, %v8058
        %v8060 = vpop.f32.mrf.mxu0
        %v8061 = vpop.f32.mrf.mxu0
        %v8062 = vadd.f32 0.0, %v8061
        %v8063 = vpop.f32.mrf.mxu0
        %8064 = vmatprep.mubr.bf16.mxu0 %v7965
        %8065 = vmatmul.mubr.bf16.gmra.mxu0 %v7845
        %v8066 = vpop.f32.mrf.mxu0
        %v8067 = vadd.f32 0.0, %v8066
        %v8068 = vpop.f32.mrf.mxu0
        %v8069 = vpop.f32.mrf.mxu0
        %v8070 = vadd.f32 0.0, %v8069
        %v8071 = vpop.f32.mrf.mxu0
        %8072 = vmatprep.mubr.bf16.mxu0 %v7968
        %8073 = vmatmul.mubr.bf16.gmra.mxu0 %v7848
        %v8074 = vpop.f32.mrf.mxu0
        %v8075 = vadd.f32 0.0, %v8074
        %v8076 = vpop.f32.mrf.mxu0
        %v8077 = vpop.f32.mrf.mxu0
        %v8078 = vadd.f32 0.0, %v8077
        %v8079 = vpop.f32.mrf.mxu0
        %8080 = vmatprep.mubr.bf16.mxu0 %v7971
        %8081 = vmatmul.mubr.bf16.gmra.mxu0 %v7851
        %v8082 = vpop.f32.mrf.mxu0
        %v8083 = vadd.f32 0.0, %v8082
        %v8084 = vpop.f32.mrf.mxu0
        %v8085 = vpop.f32.mrf.mxu0
        %v8086 = vadd.f32 0.0, %v8085
        %v8087 = vpop.f32.mrf.mxu0
        %8088 = vmatprep.mubr.bf16.mxu0 %v7974
        %8089 = vmatmul.mubr.bf16.gmra.mxu0 %v7854
        %v8090 = vpop.f32.mrf.mxu0
        %v8091 = vadd.f32 0.0, %v8090
        %v8092 = vpop.f32.mrf.mxu0
        %v8093 = vpop.f32.mrf.mxu0
        %v8094 = vadd.f32 0.0, %v8093
        %v8095 = vpop.f32.mrf.mxu0
        %8096 = vmatprep.mubr.bf16.mxu0 %v7977
        %8097 = vmatmul.mubr.bf16.gmra.mxu0 %v7857
        %v8098 = vpop.f32.mrf.mxu0
        %v8099 = vadd.f32 0.0, %v8098
        %v8100 = vpop.f32.mrf.mxu0
        %v8101 = vpop.f32.mrf.mxu0
        %v8102 = vadd.f32 0.0, %v8101
        %v8103 = vpop.f32.mrf.mxu0
        %8104 = vmatprep.mubr.bf16.mxu0 %v7980
        %8105 = vmatmul.mubr.bf16.gmra.mxu0 %v7860
        %v8106 = vpop.f32.mrf.mxu0
        %v8107 = vadd.f32 0.0, %v8106
        %v8108 = vpop.f32.mrf.mxu0
        %v8109 = vpop.f32.mrf.mxu0
        %v8110 = vadd.f32 0.0, %v8109
        %v8111 = vpop.f32.mrf.mxu0
        %8112 = vmatprep.mubr.bf16.mxu0 %v7983
        %8113 = vmatmul.mubr.bf16.gmra.mxu0 %v7863
        %v8114 = vpop.f32.mrf.mxu0
        %v8115 = vadd.f32 0.0, %v8114
        %v8116 = vpop.f32.mrf.mxu0
        %v8117 = vpop.f32.mrf.mxu0
        %v8118 = vadd.f32 0.0, %v8117
        %v8119 = vpop.f32.mrf.mxu0
        %8120 = vmatprep.mubr.bf16.mxu0 %v7986
        %8121 = vmatmul.mubr.bf16.gmra.mxu0 %v7866
        %v8122 = vpop.f32.mrf.mxu0
        %v8123 = vadd.f32 0.0, %v8122
        %v8124 = vpop.f32.mrf.mxu0
        %v8125 = vpop.f32.mrf.mxu0
        %v8126 = vadd.f32 0.0, %v8125
        %v8127 = vpop.f32.mrf.mxu0
        %8128 = vmatprep.mubr.bf16.mxu0 %v7989
        %8129 = vmatmul.mubr.bf16.gmra.mxu0 %v7869
        %v8130 = vpop.f32.mrf.mxu0
        %v8131 = vadd.f32 0.0, %v8130
        %v8132 = vpop.f32.mrf.mxu0
        %v8133 = vpop.f32.mrf.mxu0
        %v8134 = vadd.f32 0.0, %v8133
        %v8135 = vpop.f32.mrf.mxu0
        %8136 = vmatprep.mubr.bf16.mxu0 %v7992
        %8137 = vmatmul.mubr.bf16.gmra.mxu0 %v7872
        %v8138 = vpop.f32.mrf.mxu0
        %v8139 = vadd.f32 0.0, %v8138
        %v8140 = vpop.f32.mrf.mxu0
        %v8141 = vpop.f32.mrf.mxu0
        %v8142 = vadd.f32 0.0, %v8141
        %v8143 = vpop.f32.mrf.mxu0
        %8144 = vmatprep.mubr.bf16.mxu0 %v7995
        %8145 = vmatmul.mubr.bf16.gmra.mxu0 %v7875
        %v8146 = vpop.f32.mrf.mxu0
        %v8147 = vadd.f32 0.0, %v8146
        %v8148 = vpop.f32.mrf.mxu0
        %v8149 = vpop.f32.mrf.mxu0
        %v8150 = vadd.f32 0.0, %v8149
        %v8151 = vpop.f32.mrf.mxu0
        %8152 = vmatprep.mubr.bf16.mxu0 %v7998
        %8153 = vmatmul.mubr.bf16.gmra.mxu0 %v7878
        %v8154 = vpop.f32.mrf.mxu0
        %v8155 = vadd.f32 0.0, %v8154
        %v8156 = vpop.f32.mrf.mxu0
        %v8157 = vpop.f32.mrf.mxu0
        %v8158 = vadd.f32 0.0, %v8157
        %v8159 = vpop.f32.mrf.mxu0
        %8160 = vdwg.mxu0
        %8193 = vrot.lane.b32.xlu0 %v8035, 16
        %v8194 = vpop.permute.xlu0 %8193
        %8195 = vrot.lane.b32.xlu0 %v8038, 16
        %v8196 = vpop.permute.xlu0 %8195
        %8197 = vrot.lane.b32.xlu0 %v8043, 16
        %v8198 = vpop.permute.xlu0 %8197
        %8199 = vrot.lane.b32.xlu0 %v8046, 16
        %v8200 = vpop.permute.xlu0 %8199
        %8201 = vrot.lane.b32.xlu0 %v8051, 16
        %v8202 = vpop.permute.xlu0 %8201
        %8203 = vrot.lane.b32.xlu0 %v8054, 16
        %v8204 = vpop.permute.xlu0 %8203
        %8205 = vrot.lane.b32.xlu0 %v8059, 16
        %v8206 = vpop.permute.xlu0 %8205
        %8207 = vrot.lane.b32.xlu0 %v8062, 16
        %v8208 = vpop.permute.xlu0 %8207
        %8209 = vrot.lane.b32.xlu0 %v8067, 16
        %v8210 = vpop.permute.xlu0 %8209
        %8211 = vrot.lane.b32.xlu0 %v8070, 16
        %v8212 = vpop.permute.xlu0 %8211
        %8213 = vrot.lane.b32.xlu0 %v8075, 16
        %v8214 = vpop.permute.xlu0 %8213
        %8215 = vrot.lane.b32.xlu0 %v8078, 16
        %v8216 = vpop.permute.xlu0 %8215
        %8217 = vrot.lane.b32.xlu0 %v8083, 16
        %v8218 = vpop.permute.xlu0 %8217
        %8219 = vrot.lane.b32.xlu0 %v8086, 16
        %v8220 = vpop.permute.xlu0 %8219
        %8221 = vrot.lane.b32.xlu0 %v8091, 16
        %v8222 = vpop.permute.xlu0 %8221
        %8223 = vrot.lane.b32.xlu0 %v8094, 16
        %v8224 = vpop.permute.xlu0 %8223
        %8225 = vrot.lane.b32.xlu0 %v8099, 16
        %v8226 = vpop.permute.xlu0 %8225
        %8227 = vrot.lane.b32.xlu0 %v8102, 16
        %v8228 = vpop.permute.xlu0 %8227
        %8229 = vrot.lane.b32.xlu0 %v8107, 16
        %v8230 = vpop.permute.xlu0 %8229
        %8231 = vrot.lane.b32.xlu0 %v8110, 16
        %v8232 = vpop.permute.xlu0 %8231
        %8233 = vrot.lane.b32.xlu0 %v8115, 16
        %v8234 = vpop.permute.xlu0 %8233
        %8235 = vrot.lane.b32.xlu0 %v8118, 16
        %v8236 = vpop.permute.xlu0 %8235
        %8237 = vrot.lane.b32.xlu0 %v8123, 16
        %v8238 = vpop.permute.xlu0 %8237
        %8239 = vrot.lane.b32.xlu0 %v8126, 16
        %v8240 = vpop.permute.xlu0 %8239
        %8241 = vrot.lane.b32.xlu0 %v8131, 16
        %v8242 = vpop.permute.xlu0 %8241
        %8243 = vrot.lane.b32.xlu0 %v8134, 16
        %v8244 = vpop.permute.xlu0 %8243
        %8245 = vrot.lane.b32.xlu0 %v8139, 16
        %v8246 = vpop.permute.xlu0 %8245
        %8247 = vrot.lane.b32.xlu0 %v8142, 16
        %v8248 = vpop.permute.xlu0 %8247
        %8249 = vrot.lane.b32.xlu0 %v8147, 16
        %v8250 = vpop.permute.xlu0 %8249
        %8251 = vrot.lane.b32.xlu0 %v8150, 16
        %v8252 = vpop.permute.xlu0 %8251
        %8253 = vrot.lane.b32.xlu0 %v8155, 16
        %v8254 = vpop.permute.xlu0 %8253
        %8255 = vrot.lane.b32.xlu0 %v8158, 16
        %v8256 = vpop.permute.xlu0 %8255
        %v8289 = vadd.f32 %v4243, %v8194
        %v8290 = vadd.f32 %v4246, %v8196
        %v8291 = vadd.f32 %v4251, %v8198
        %v8292 = vadd.f32 %v4254, %v8200
        %v8293 = vadd.f32 %v4259, %v8202
        %v8294 = vadd.f32 %v4262, %v8204
        %v8295 = vadd.f32 %v4267, %v8206
        %v8296 = vadd.f32 %v4270, %v8208
        %v8297 = vadd.f32 %v4275, %v8210
        %v8298 = vadd.f32 %v4278, %v8212
        %v8299 = vadd.f32 %v4283, %v8214
        %v8300 = vadd.f32 %v4286, %v8216
        %v8301 = vadd.f32 %v4291, %v8218
        %v8302 = vadd.f32 %v4294, %v8220
        %v8303 = vadd.f32 %v4299, %v8222
        %v8304 = vadd.f32 %v4302, %v8224
        %v8305 = vadd.f32 %v4307, %v8226
        %v8306 = vadd.f32 %v4310, %v8228
        %v8307 = vadd.f32 %v4315, %v8230
        %v8308 = vadd.f32 %v4318, %v8232
        %v8309 = vadd.f32 %v4323, %v8234
        %v8310 = vadd.f32 %v4326, %v8236
        %v8311 = vadd.f32 %v4331, %v8238
        %v8312 = vadd.f32 %v4334, %v8240
        %v8313 = vadd.f32 %v4339, %v8242
        %v8314 = vadd.f32 %v4342, %v8244
        %v8315 = vadd.f32 %v4347, %v8246
        %v8316 = vadd.f32 %v4350, %v8248
        %v8317 = vadd.f32 %v4355, %v8250
        %v8318 = vadd.f32 %v4358, %v8252
        %v8319 = vadd.f32 %v4363, %v8254
        %v8320 = vadd.f32 %v4366, %v8256
        %v8321 = vld [vmem:[%s4] sm:$0x1]
        %v8323 = vlaneseq
        %v8324 = vshrl.u32 %v8323, 7
        %v8325 = vsub.s32 0, %v8324
        %v8326 = vrot.slane %v8321, %v8325
        %8327 = vrot.lane.b32.xlu0 %v8326, 16
        %v8328 = vpop.permute.xlu0 %8327
        %v8330 = vadd.f32 %v8289, %v8328
        %v8331 = vadd.f32 %v8290, %v8328
        %v8332 = vadd.f32 %v8291, %v8328
        %v8333 = vadd.f32 %v8292, %v8328
        %v8334 = vadd.f32 %v8293, %v8328
        %v8335 = vadd.f32 %v8294, %v8328
        %v8336 = vadd.f32 %v8295, %v8328
        %v8337 = vadd.f32 %v8296, %v8328
        %v8338 = vadd.f32 %v8297, %v8328
        %v8339 = vadd.f32 %v8298, %v8328
        %v8340 = vadd.f32 %v8299, %v8328
        %v8341 = vadd.f32 %v8300, %v8328
        %v8342 = vadd.f32 %v8301, %v8328
        %v8343 = vadd.f32 %v8302, %v8328
        %v8344 = vadd.f32 %v8303, %v8328
        %v8345 = vadd.f32 %v8304, %v8328
        %v8346 = vadd.f32 %v8305, %v8328
        %v8347 = vadd.f32 %v8306, %v8328
        %v8348 = vadd.f32 %v8307, %v8328
        %v8349 = vadd.f32 %v8308, %v8328
        %v8350 = vadd.f32 %v8309, %v8328
        %v8351 = vadd.f32 %v8310, %v8328
        %v8352 = vadd.f32 %v8311, %v8328
        %v8353 = vadd.f32 %v8312, %v8328
        %v8354 = vadd.f32 %v8313, %v8328
        %v8355 = vadd.f32 %v8314, %v8328
        %v8356 = vadd.f32 %v8315, %v8328
        %v8357 = vadd.f32 %v8316, %v8328
        %v8358 = vadd.f32 %v8317, %v8328
        %v8359 = vadd.f32 %v8318, %v8328
        %v8360 = vadd.f32 %v8319, %v8328
        %v8361 = vadd.f32 %v8320, %v8328
        %v8362 = vmax.f32 %v8330, 0.0
        %v8363 = vmax.f32 %v8331, 0.0
        %v8364 = vmax.f32 %v8332, 0.0
        %v8365 = vmax.f32 %v8333, 0.0
        %v8366 = vmax.f32 %v8334, 0.0
        %v8367 = vmax.f32 %v8335, 0.0
        %v8368 = vmax.f32 %v8336, 0.0
        %v8369 = vmax.f32 %v8337, 0.0
        %v8370 = vmax.f32 %v8338, 0.0
        %v8371 = vmax.f32 %v8339, 0.0
        %v8372 = vmax.f32 %v8340, 0.0
        %v8373 = vmax.f32 %v8341, 0.0
        %v8374 = vmax.f32 %v8342, 0.0
        %v8375 = vmax.f32 %v8343, 0.0
        %v8376 = vmax.f32 %v8344, 0.0
        %v8377 = vmax.f32 %v8345, 0.0
        %v8378 = vmax.f32 %v8346, 0.0
        %v8379 = vmax.f32 %v8347, 0.0
        %v8380 = vmax.f32 %v8348, 0.0
        %v8381 = vmax.f32 %v8349, 0.0
        %v8382 = vmax.f32 %v8350, 0.0
        %v8383 = vmax.f32 %v8351, 0.0
        %v8384 = vmax.f32 %v8352, 0.0
        %v8385 = vmax.f32 %v8353, 0.0
        %v8386 = vmax.f32 %v8354, 0.0
        %v8387 = vmax.f32 %v8355, 0.0
        %v8388 = vmax.f32 %v8356, 0.0
        %v8389 = vmax.f32 %v8357, 0.0
        %v8390 = vmax.f32 %v8358, 0.0
        %v8391 = vmax.f32 %v8359, 0.0
        %v8392 = vmax.f32 %v8360, 0.0
        %v8393 = vmax.f32 %v8361, 0.0
        %v8394 = vpack.c.bf16 %v8363, %v8362
        %v8395 = vpack.c.bf16 %v8365, %v8364
        %v8396 = vpack.c.bf16 %v8367, %v8366
        %v8397 = vpack.c.bf16 %v8369, %v8368
        %v8398 = vpack.c.bf16 %v8371, %v8370
        %v8399 = vpack.c.bf16 %v8373, %v8372
        %v8400 = vpack.c.bf16 %v8375, %v8374
        %v8401 = vpack.c.bf16 %v8377, %v8376
        %v8402 = vpack.c.bf16 %v8379, %v8378
        %v8403 = vpack.c.bf16 %v8381, %v8380
        %v8404 = vpack.c.bf16 %v8383, %v8382
        %v8405 = vpack.c.bf16 %v8385, %v8384
        %v8406 = vpack.c.bf16 %v8387, %v8386
        %v8407 = vpack.c.bf16 %v8389, %v8388
        %v8408 = vpack.c.bf16 %v8391, %v8390
        %v8409 = vpack.c.bf16 %v8393, %v8392
        %8410 = vrot.lane.b32.xlu0 %v4560, 32
        %v8411 = vpop.permute.xlu0 %8410
        %8412 = vrot.lane.b32.xlu0 %v4561, 32
        %v8413 = vpop.permute.xlu0 %8412
        %8414 = vrot.lane.b32.xlu0 %v4562, 32
        %v8415 = vpop.permute.xlu0 %8414
        %8416 = vrot.lane.b32.xlu0 %v4563, 32
        %v8417 = vpop.permute.xlu0 %8416
        %8418 = vrot.lane.b32.xlu0 %v4564, 32
        %v8419 = vpop.permute.xlu0 %8418
        %8420 = vrot.lane.b32.xlu0 %v4565, 32
        %v8421 = vpop.permute.xlu0 %8420
        %8422 = vrot.lane.b32.xlu0 %v4566, 32
        %v8423 = vpop.permute.xlu0 %8422
        %8424 = vrot.lane.b32.xlu0 %v4567, 32
        %v8425 = vpop.permute.xlu0 %8424
        %8426 = vrot.lane.b32.xlu0 %v4568, 32
        %v8427 = vpop.permute.xlu0 %8426
        %8428 = vrot.lane.b32.xlu0 %v4569, 32
        %v8429 = vpop.permute.xlu0 %8428
        %8430 = vrot.lane.b32.xlu0 %v4570, 32
        %v8431 = vpop.permute.xlu0 %8430
        %8432 = vrot.lane.b32.xlu0 %v4571, 32
        %v8433 = vpop.permute.xlu0 %8432
        %8434 = vrot.lane.b32.xlu0 %v4572, 32
        %v8435 = vpop.permute.xlu0 %8434
        %8436 = vrot.lane.b32.xlu0 %v4573, 32
        %v8437 = vpop.permute.xlu0 %8436
        %8438 = vrot.lane.b32.xlu0 %v4574, 32
        %v8439 = vpop.permute.xlu0 %8438
        %8440 = vrot.lane.b32.xlu0 %v4575, 32
        %v8441 = vpop.permute.xlu0 %8440
        %8458 = vrot.lane.b32.xlu0 %v8394, 32
        %v8459 = vpop.permute.xlu0 %8458
        %8460 = vrot.lane.b32.xlu0 %v8395, 32
        %v8461 = vpop.permute.xlu0 %8460
        %8462 = vrot.lane.b32.xlu0 %v8396, 32
        %v8463 = vpop.permute.xlu0 %8462
        %8464 = vrot.lane.b32.xlu0 %v8397, 32
        %v8465 = vpop.permute.xlu0 %8464
        %8466 = vrot.lane.b32.xlu0 %v8398, 32
        %v8467 = vpop.permute.xlu0 %8466
        %8468 = vrot.lane.b32.xlu0 %v8399, 32
        %v8469 = vpop.permute.xlu0 %8468
        %8470 = vrot.lane.b32.xlu0 %v8400, 32
        %v8471 = vpop.permute.xlu0 %8470
        %8472 = vrot.lane.b32.xlu0 %v8401, 32
        %v8473 = vpop.permute.xlu0 %8472
        %8474 = vrot.lane.b32.xlu0 %v8402, 32
        %v8475 = vpop.permute.xlu0 %8474
        %8476 = vrot.lane.b32.xlu0 %v8403, 32
        %v8477 = vpop.permute.xlu0 %8476
        %8478 = vrot.lane.b32.xlu0 %v8404, 32
        %v8479 = vpop.permute.xlu0 %8478
        %8480 = vrot.lane.b32.xlu0 %v8405, 32
        %v8481 = vpop.permute.xlu0 %8480
        %8482 = vrot.lane.b32.xlu0 %v8406, 32
        %v8483 = vpop.permute.xlu0 %8482
        %8484 = vrot.lane.b32.xlu0 %v8407, 32
        %v8485 = vpop.permute.xlu0 %8484
        %8486 = vrot.lane.b32.xlu0 %v8408, 32
        %v8487 = vpop.permute.xlu0 %8486
        %8488 = vrot.lane.b32.xlu0 %v8409, 32
        %v8489 = vpop.permute.xlu0 %8488
        %v8491 = vsel %vm3596, %v3276, %v8411
        %v8493 = vsel %vm3596, %v3277, %v8413
        %v8495 = vsel %vm3596, %v3278, %v8415
        %v8497 = vsel %vm3596, %v3279, %v8417
        %v8499 = vsel %vm3596, %v3280, %v8419
        %v8501 = vsel %vm3596, %v3281, %v8421
        %v8503 = vsel %vm3596, %v3282, %v8423
        %v8505 = vsel %vm3596, %v3283, %v8425
        %v8507 = vsel %vm3596, %v3284, %v8427
        %v8509 = vsel %vm3596, %v3285, %v8429
        %v8511 = vsel %vm3596, %v3286, %v8431
        %v8513 = vsel %vm3596, %v3287, %v8433
        %v8515 = vsel %vm3596, %v3288, %v8435
        %v8517 = vsel %vm3596, %v3289, %v8437
        %v8519 = vsel %vm3596, %v3290, %v8439
        %v8521 = vsel %vm3596, %v3291, %v8441
        %v8523 = vsel %vm7701, %v8491, %v8459
        %v8525 = vsel %vm7701, %v8493, %v8461
        %v8527 = vsel %vm7701, %v8495, %v8463
        %v8529 = vsel %vm7701, %v8497, %v8465
        %v8531 = vsel %vm7701, %v8499, %v8467
        %v8533 = vsel %vm7701, %v8501, %v8469
        %v8535 = vsel %vm7701, %v8503, %v8471
        %v8537 = vsel %vm7701, %v8505, %v8473
        %v8539 = vsel %vm7701, %v8507, %v8475
        %v8541 = vsel %vm7701, %v8509, %v8477
        %v8543 = vsel %vm7701, %v8511, %v8479
        %v8545 = vsel %vm7701, %v8513, %v8481
        %v8547 = vsel %vm7701, %v8515, %v8483
        %v8549 = vsel %vm7701, %v8517, %v8485
        %v8551 = vsel %vm7701, %v8519, %v8487
        %v8553 = vsel %vm7701, %v8521, %v8489
        %v8554 = vld [vmem:[%s5] sm:$0xf]
        %v8555 = vld [vmem:[%s5 + $0x4] sm:$0xf]
        %v8556 = vld [vmem:[%s5 + $0x8] sm:$0xf]
        %v8557 = vld [vmem:[%s5 + $0xc] sm:$0xf]
        %v8558 = vld [vmem:[%s5 + $0x10] sm:$0xf]
        %v8559 = vld [vmem:[%s5 + $0x14] sm:$0xf]
        %v8560 = vld [vmem:[%s5 + $0x18] sm:$0xf]
        %v8561 = vld [vmem:[%s5 + $0x1c] sm:$0xf]
        %v8562 = vld [vmem:[%s6] sm:$0x1]
        %v8564 = vlaneseq
        %v8565 = vshrl.u32 %v8564, 7
        %v8566 = vsub.s32 0, %v8565
        %v8567 = vrot.slane %v8562, %v8566
        %v8577 = vunpack.c.l.b16 %v8554
        %v8578 = vunpack.c.l.b16 %v8555
        %v8579 = vunpack.c.l.b16 %v8556
        %v8580 = vunpack.c.l.b16 %v8557
        %v8581 = vunpack.c.l.b16 %v8558
        %v8582 = vunpack.c.l.b16 %v8559
        %v8583 = vunpack.c.l.b16 %v8560
        %v8584 = vunpack.c.l.b16 %v8561
        %v8585 = vpack.c.b16 %v8578, %v8577
        %v8586 = vpack.c.b16 %v8580, %v8579
        %v8587 = vpack.c.b16 %v8582, %v8581
        %v8588 = vpack.c.b16 %v8584, %v8583
        %v8593 = vsel %vm3645, %v8523, 0
        %v8595 = vsel %vm3645, %v8525, 0
        %v8597 = vsel %vm3645, %v8527, 0
        %v8599 = vsel %vm3645, %v8529, 0
        %v8601 = vsel %vm3645, %v8531, 0
        %v8603 = vsel %vm3645, %v8533, 0
        %v8605 = vsel %vm3645, %v8535, 0
        %v8607 = vsel %vm3645, %v8537, 0
        %v8609 = vsel %vm3645, %v8539, 0
        %v8611 = vsel %vm3645, %v8541, 0
        %v8613 = vsel %vm3645, %v8543, 0
        %v8615 = vsel %vm3645, %v8545, 0
        %v8617 = vsel %vm3645, %v8547, 0
        %v8619 = vsel %vm3645, %v8549, 0
        %v8621 = vsel %vm3645, %v8551, 0
        %v8623 = vsel %vm3645, %v8553, 0
        %8625 = vmatprep.subr.bf16.mxu0 0
        %8626 = vmatpush1.bf16.msra.mxu0 0
        %8627 = vmatprep.subr.bf16.mxu0 0
        %8628 = vmatpush1.bf16.msra.mxu0 0
        %8629 = vmatprep.subr.bf16.mxu0 0
        %8630 = vmatpush1.bf16.msra.mxu0 0
        %8631 = vmatprep.subr.bf16.mxu0 0
        %8632 = vmatpush1.bf16.msra.mxu0 0
        %8633 = vmatprep.subr.bf16.mxu0 0
        %8634 = vmatpush1.bf16.msra.mxu0 %v8588
        %8635 = vmatprep.subr.bf16.mxu0 0
        %8636 = vmatpush1.bf16.msra.mxu0 %v8587
        %8637 = vmatprep.subr.bf16.mxu0 0
        %8638 = vmatpush1.bf16.msra.mxu0 %v8586
        %8639 = vmatprep.subr.bf16.mxu0 0
        %8640 = vmatpush1.bf16.msra.mxu0 %v8585
        %8641 = vmatprep.subr.bf16.mxu0 0
        %8642 = vmatpush2.bf16.msra.mxu0 0
        %8643 = vmatprep.subr.bf16.mxu0 0
        %8644 = vmatpush2.bf16.msra.mxu0 0
        %8645 = vmatprep.subr.bf16.mxu0 0
        %8646 = vmatpush2.bf16.msra.mxu0 0
        %8647 = vmatprep.subr.bf16.mxu0 0
        %8648 = vmatpush2.bf16.msra.mxu0 0
        %8649 = vmatprep.subr.bf16.mxu0 0
        %8650 = vmatpush2.bf16.msra.mxu0 0
        %8651 = vmatprep.subr.bf16.mxu0 0
        %8652 = vmatpush2.bf16.msra.mxu0 0
        %8653 = vmatprep.subr.bf16.mxu0 0
        %8654 = vmatpush2.bf16.msra.mxu0 0
        %8655 = vmatprep.subr.bf16.mxu0 0
        %8656 = vmatpush2.bf16.msra.mxu0 0
        %8657 = vmatprep.mubr.bf16.mxu0 0
        %8658 = vmatmul.mubr.bf16.gmra.mxu0 %v8593
        %v8659 = vpop.f32.mrf.mxu0
        %v8660 = vadd.f32 %v8567, %v8659
        %v8661 = vpop.f32.mrf.mxu0
        %v8662 = vpop.f32.mrf.mxu0
        %v8663 = vadd.f32 %v8567, %v8662
        %v8664 = vpop.f32.mrf.mxu0
        %8665 = vmatprep.mubr.bf16.mxu0 0
        %8666 = vmatmul.mubr.bf16.gmra.mxu0 %v8595
        %v8667 = vpop.f32.mrf.mxu0
        %v8668 = vadd.f32 %v8567, %v8667
        %v8669 = vpop.f32.mrf.mxu0
        %v8670 = vpop.f32.mrf.mxu0
        %v8671 = vadd.f32 %v8567, %v8670
        %v8672 = vpop.f32.mrf.mxu0
        %8673 = vmatprep.mubr.bf16.mxu0 0
        %8674 = vmatmul.mubr.bf16.gmra.mxu0 %v8597
        %v8675 = vpop.f32.mrf.mxu0
        %v8676 = vadd.f32 %v8567, %v8675
        %v8677 = vpop.f32.mrf.mxu0
        %v8678 = vpop.f32.mrf.mxu0
        %v8679 = vadd.f32 %v8567, %v8678
        %v8680 = vpop.f32.mrf.mxu0
        %8681 = vmatprep.mubr.bf16.mxu0 0
        %8682 = vmatmul.mubr.bf16.gmra.mxu0 %v8599
        %v8683 = vpop.f32.mrf.mxu0
        %v8684 = vadd.f32 %v8567, %v8683
        %v8685 = vpop.f32.mrf.mxu0
        %v8686 = vpop.f32.mrf.mxu0
        %v8687 = vadd.f32 %v8567, %v8686
        %v8688 = vpop.f32.mrf.mxu0
        %8689 = vmatprep.mubr.bf16.mxu0 0
        %8690 = vmatmul.mubr.bf16.gmra.mxu0 %v8601
        %v8691 = vpop.f32.mrf.mxu0
        %v8692 = vadd.f32 %v8567, %v8691
        %v8693 = vpop.f32.mrf.mxu0
        %v8694 = vpop.f32.mrf.mxu0
        %v8695 = vadd.f32 %v8567, %v8694
        %v8696 = vpop.f32.mrf.mxu0
        %8697 = vmatprep.mubr.bf16.mxu0 0
        %8698 = vmatmul.mubr.bf16.gmra.mxu0 %v8603
        %v8699 = vpop.f32.mrf.mxu0
        %v8700 = vadd.f32 %v8567, %v8699
        %v8701 = vpop.f32.mrf.mxu0
        %v8702 = vpop.f32.mrf.mxu0
        %v8703 = vadd.f32 %v8567, %v8702
        %v8704 = vpop.f32.mrf.mxu0
        %8705 = vmatprep.mubr.bf16.mxu0 0
        %8706 = vmatmul.mubr.bf16.gmra.mxu0 %v8605
        %v8707 = vpop.f32.mrf.mxu0
        %v8708 = vadd.f32 %v8567, %v8707
        %v8709 = vpop.f32.mrf.mxu0
        %v8710 = vpop.f32.mrf.mxu0
        %v8711 = vadd.f32 %v8567, %v8710
        %v8712 = vpop.f32.mrf.mxu0
        %8713 = vmatprep.mubr.bf16.mxu0 0
        %8714 = vmatmul.mubr.bf16.gmra.mxu0 %v8607
        %v8715 = vpop.f32.mrf.mxu0
        %v8716 = vadd.f32 %v8567, %v8715
        %v8717 = vpop.f32.mrf.mxu0
        %v8718 = vpop.f32.mrf.mxu0
        %v8719 = vadd.f32 %v8567, %v8718
        %v8720 = vpop.f32.mrf.mxu0
        %8721 = vmatprep.mubr.bf16.mxu0 0
        %8722 = vmatmul.mubr.bf16.gmra.mxu0 %v8609
        %v8723 = vpop.f32.mrf.mxu0
        %v8724 = vadd.f32 %v8567, %v8723
        %v8725 = vpop.f32.mrf.mxu0
        %v8726 = vpop.f32.mrf.mxu0
        %v8727 = vadd.f32 %v8567, %v8726
        %v8728 = vpop.f32.mrf.mxu0
        %8729 = vmatprep.mubr.bf16.mxu0 0
        %8730 = vmatmul.mubr.bf16.gmra.mxu0 %v8611
        %v8731 = vpop.f32.mrf.mxu0
        %v8732 = vadd.f32 %v8567, %v8731
        %v8733 = vpop.f32.mrf.mxu0
        %v8734 = vpop.f32.mrf.mxu0
        %v8735 = vadd.f32 %v8567, %v8734
        %v8736 = vpop.f32.mrf.mxu0
        %8737 = vmatprep.mubr.bf16.mxu0 0
        %8738 = vmatmul.mubr.bf16.gmra.mxu0 %v8613
        %v8739 = vpop.f32.mrf.mxu0
        %v8740 = vadd.f32 %v8567, %v8739
        %v8741 = vpop.f32.mrf.mxu0
        %v8742 = vpop.f32.mrf.mxu0
        %v8743 = vadd.f32 %v8567, %v8742
        %v8744 = vpop.f32.mrf.mxu0
        %8745 = vmatprep.mubr.bf16.mxu0 0
        %8746 = vmatmul.mubr.bf16.gmra.mxu0 %v8615
        %v8747 = vpop.f32.mrf.mxu0
        %v8748 = vadd.f32 %v8567, %v8747
        %v8749 = vpop.f32.mrf.mxu0
        %v8750 = vpop.f32.mrf.mxu0
        %v8751 = vadd.f32 %v8567, %v8750
        %v8752 = vpop.f32.mrf.mxu0
        %8753 = vmatprep.mubr.bf16.mxu0 0
        %8754 = vmatmul.mubr.bf16.gmra.mxu0 %v8617
        %v8755 = vpop.f32.mrf.mxu0
        %v8756 = vadd.f32 %v8567, %v8755
        %v8757 = vpop.f32.mrf.mxu0
        %v8758 = vpop.f32.mrf.mxu0
        %v8759 = vadd.f32 %v8567, %v8758
        %v8760 = vpop.f32.mrf.mxu0
        %8761 = vmatprep.mubr.bf16.mxu0 0
        %8762 = vmatmul.mubr.bf16.gmra.mxu0 %v8619
        %v8763 = vpop.f32.mrf.mxu0
        %v8764 = vadd.f32 %v8567, %v8763
        %v8765 = vpop.f32.mrf.mxu0
        %v8766 = vpop.f32.mrf.mxu0
        %v8767 = vadd.f32 %v8567, %v8766
        %v8768 = vpop.f32.mrf.mxu0
        %8769 = vmatprep.mubr.bf16.mxu0 0
        %8770 = vmatmul.mubr.bf16.gmra.mxu0 %v8621
        %v8771 = vpop.f32.mrf.mxu0
        %v8772 = vadd.f32 %v8567, %v8771
        %v8773 = vpop.f32.mrf.mxu0
        %v8774 = vpop.f32.mrf.mxu0
        %v8775 = vadd.f32 %v8567, %v8774
        %v8776 = vpop.f32.mrf.mxu0
        %8777 = vmatprep.mubr.bf16.mxu0 0
        %8778 = vmatmul.mubr.bf16.gmra.mxu0 %v8623
        %v8779 = vpop.f32.mrf.mxu0
        %v8780 = vadd.f32 %v8567, %v8779
        %v8781 = vpop.f32.mrf.mxu0
        %v8782 = vpop.f32.mrf.mxu0
        %v8783 = vadd.f32 %v8567, %v8782
        %v8784 = vpop.f32.mrf.mxu0
        %8785 = vdwg.mxu0
        %v8786 = vsel %vm3596, %v8660, 0.0
        %v8787 = vsel %vm3596, %v8663, 0.0
        %v8788 = vadd.f32 %v8786, %v8787
        %v8789 = vsel %vm3596, %v8668, 0.0
        %v8790 = vadd.f32 %v8788, %v8789
        %v8791 = vsel %vm3596, %v8671, 0.0
        %v8792 = vadd.f32 %v8790, %v8791
        %v8793 = vsel %vm3596, %v8676, 0.0
        %v8794 = vadd.f32 %v8792, %v8793
        %v8795 = vsel %vm3596, %v8679, 0.0
        %v8796 = vadd.f32 %v8794, %v8795
        %v8797 = vsel %vm3596, %v8684, 0.0
        %v8798 = vadd.f32 %v8796, %v8797
        %v8799 = vsel %vm3596, %v8687, 0.0
        %v8800 = vadd.f32 %v8798, %v8799
        %v8801 = vsel %vm3596, %v8692, 0.0
        %v8802 = vadd.f32 %v8800, %v8801
        %v8803 = vsel %vm3596, %v8695, 0.0
        %v8804 = vadd.f32 %v8802, %v8803
        %v8805 = vsel %vm3596, %v8700, 0.0
        %v8806 = vadd.f32 %v8804, %v8805
        %v8807 = vsel %vm3596, %v8703, 0.0
        %v8808 = vadd.f32 %v8806, %v8807
        %v8809 = vsel %vm3596, %v8708, 0.0
        %v8810 = vadd.f32 %v8808, %v8809
        %v8811 = vsel %vm3596, %v8711, 0.0
        %v8812 = vadd.f32 %v8810, %v8811
        %v8813 = vsel %vm3596, %v8716, 0.0
        %v8814 = vadd.f32 %v8812, %v8813
        %v8815 = vsel %vm3596, %v8719, 0.0
        %v8816 = vadd.f32 %v8814, %v8815
        %v8817 = vsel %vm3596, %v8724, 0.0
        %v8818 = vadd.f32 %v8816, %v8817
        %v8819 = vsel %vm3596, %v8727, 0.0
        %v8820 = vadd.f32 %v8818, %v8819
        %v8821 = vsel %vm3596, %v8732, 0.0
        %v8822 = vadd.f32 %v8820, %v8821
        %v8823 = vsel %vm3596, %v8735, 0.0
        %v8824 = vadd.f32 %v8822, %v8823
        %v8825 = vsel %vm3596, %v8740, 0.0
        %v8826 = vadd.f32 %v8824, %v8825
        %v8827 = vsel %vm3596, %v8743, 0.0
        %v8828 = vadd.f32 %v8826, %v8827
        %v8829 = vsel %vm3596, %v8748, 0.0
        %v8830 = vadd.f32 %v8828, %v8829
        %v8831 = vsel %vm3596, %v8751, 0.0
        %v8832 = vadd.f32 %v8830, %v8831
        %v8833 = vsel %vm3596, %v8756, 0.0
        %v8834 = vadd.f32 %v8832, %v8833
        %v8835 = vsel %vm3596, %v8759, 0.0
        %v8836 = vadd.f32 %v8834, %v8835
        %v8837 = vsel %vm3596, %v8764, 0.0
        %v8838 = vadd.f32 %v8836, %v8837
        %v8839 = vsel %vm3596, %v8767, 0.0
        %v8840 = vadd.f32 %v8838, %v8839
        %v8841 = vsel %vm3596, %v8772, 0.0
        %v8842 = vadd.f32 %v8840, %v8841
        %v8843 = vsel %vm3596, %v8775, 0.0
        %v8844 = vadd.f32 %v8842, %v8843
        %v8845 = vsel %vm3596, %v8780, 0.0
        %v8846 = vadd.f32 %v8844, %v8845
        %v8847 = vsel %vm3596, %v8783, 0.0
        %v8848 = vadd.f32 %v8846, %v8847
        %v8849 = vrot.slane %v8848, 4
        %v8850 = vadd.f32 %v8848, %v8849
        %v8851 = vrot.slane %v8850, 2
        %v8852 = vadd.f32 %v8850, %v8851
        %v8853 = vrot.slane %v8852, 1
        %v8854 = vadd.f32 %v8852, %v8853
        %v8855 = vrcp.pop 256.0
        %v8856 = vmul.f32 %v8854, %v8855
        %v8857 = vld [vmem:[%s7] sm:$0x3]
        %v8858 = vmul.f32 %v8856, %v8857
        %vm8859 = vcmask 254976
        %v8860 = vsel %vm8859, %v8858, 0.0
        %8861 = vadd.xlane.f32.xlu0 %v8860
        %v8862 = vpop.xlane.xlu0 %8861
        %v8863 = vld [vmem:[%s8] sm:$0x1]
        %v8865 = vlaneseq
        %v8866 = vshrl.u32 %v8865, 7
        %v8867 = vsub.s32 0, %v8866
        %v8868 = vrot.slane %v8863, %v8867
        %8870 = vbcast.lane.b32.xlu0 %v8868, 256
        %v8871 = vpop.permute.xlu0 %8870
        %v8873 = vadd.f32 %v8862, %v8871
        %v8874 = vmax.f32 %v8873, 0.0
        %v8875 = vld [vmem:[%s9] sm:$0x3]
        %8877 = vset.pattern.permute.xlu0 0
        %8878 = vperm.xlu0 %8877, %v8874
        %v8879 = vpop.permute.xlu0 %8878
        %v8881 = vmul.f32 %v8879, %v8875
        %v8882 = vsel %vm8859, %v8881, 0.0
        %v8883 = vrot.slane %v8882, 4
        %v8884 = vadd.f32 %v8882, %v8883
        %v8885 = vrot.slane %v8884, 2
        %v8886 = vadd.f32 %v8884, %v8885
        %v8887 = vrot.slane %v8886, 1
        %v8888 = vadd.f32 %v8886, %v8887
        %v8889 = vld [vmem:[%s10] sm:$0x1]
        %v8890 = vadd.f32 %v8888, %v8889
        %v8891 = vxor.u32 %v8890, 2147483648
        %v8892 = vmul.f32 %v8891, 1.442695
        %v8893 = vpow.pop %v8892
        %v8894 = vadd.f32 %v8893, 1.0
        %v8895 = vrcp.pop %v8894
        %v8896 = vmul.f32 1.0, %v8895
        %v8897 = vlaneseq
        %v8898 = vshrl.u32 %v8897, 7
        %v8899 = vsub.s32 0, %v8898
        %v8900 = vrot.slane %v8896, %v8899
        %v8901 = vmul.f32 %v8660, %v8900
        %v8902 = vmul.f32 %v8663, %v8900
        %v8903 = vmul.f32 %v8668, %v8900
        %v8904 = vmul.f32 %v8671, %v8900
        %v8905 = vmul.f32 %v8676, %v8900
        %v8906 = vmul.f32 %v8679, %v8900
        %v8907 = vmul.f32 %v8684, %v8900
        %v8908 = vmul.f32 %v8687, %v8900
        %v8909 = vmul.f32 %v8692, %v8900
        %v8910 = vmul.f32 %v8695, %v8900
        %v8911 = vmul.f32 %v8700, %v8900
        %v8912 = vmul.f32 %v8703, %v8900
        %v8913 = vmul.f32 %v8708, %v8900
        %v8914 = vmul.f32 %v8711, %v8900
        %v8915 = vmul.f32 %v8716, %v8900
        %v8916 = vmul.f32 %v8719, %v8900
        %v8917 = vmul.f32 %v8724, %v8900
        %v8918 = vmul.f32 %v8727, %v8900
        %v8919 = vmul.f32 %v8732, %v8900
        %v8920 = vmul.f32 %v8735, %v8900
        %v8921 = vmul.f32 %v8740, %v8900
        %v8922 = vmul.f32 %v8743, %v8900
        %v8923 = vmul.f32 %v8748, %v8900
        %v8924 = vmul.f32 %v8751, %v8900
        %v8925 = vmul.f32 %v8756, %v8900
        %v8926 = vmul.f32 %v8759, %v8900
        %v8927 = vmul.f32 %v8764, %v8900
        %v8928 = vmul.f32 %v8767, %v8900
        %v8929 = vmul.f32 %v8772, %v8900
        %v8930 = vmul.f32 %v8775, %v8900
        %v8931 = vmul.f32 %v8780, %v8900
        %v8932 = vmul.f32 %v8783, %v8900
        %v8933 = vadd.f32 %v528, %v8901
        %v8934 = vadd.f32 %v529, %v8902
        %v8935 = vadd.f32 %v530, %v8903
        %v8936 = vadd.f32 %v531, %v8904
        %v8937 = vadd.f32 %v532, %v8905
        %v8938 = vadd.f32 %v533, %v8906
        %v8939 = vadd.f32 %v534, %v8907
        %v8940 = vadd.f32 %v535, %v8908
        %v8941 = vadd.f32 %v536, %v8909
        %v8942 = vadd.f32 %v537, %v8910
        %v8943 = vadd.f32 %v538, %v8911
        %v8944 = vadd.f32 %v539, %v8912
        %v8945 = vadd.f32 %v540, %v8913
        %v8946 = vadd.f32 %v541, %v8914
        %v8947 = vadd.f32 %v542, %v8915
        %v8948 = vadd.f32 %v543, %v8916
        %v8949 = vadd.f32 %v544, %v8917
        %v8950 = vadd.f32 %v545, %v8918
        %v8951 = vadd.f32 %v546, %v8919
        %v8952 = vadd.f32 %v547, %v8920
        %v8953 = vadd.f32 %v548, %v8921
        %v8954 = vadd.f32 %v549, %v8922
        %v8955 = vadd.f32 %v550, %v8923
        %v8956 = vadd.f32 %v551, %v8924
        %v8957 = vadd.f32 %v552, %v8925
        %v8958 = vadd.f32 %v553, %v8926
        %v8959 = vadd.f32 %v554, %v8927
        %v8960 = vadd.f32 %v555, %v8928
        %v8961 = vadd.f32 %v556, %v8929
        %v8962 = vadd.f32 %v557, %v8930
        %v8963 = vadd.f32 %v558, %v8931
        %v8964 = vadd.f32 %v559, %v8932
        %8965 = vxpose.xlu0.b32.start [1/16] %v8933, 128
        %8966 = vxpose.xlu0.b32.cont [2/16] %v8934, 128
        %8967 = vxpose.xlu0.b32.cont [3/16] %v8935, 128
        %8968 = vxpose.xlu0.b32.cont [4/16] %v8936, 128
        %8969 = vxpose.xlu0.b32.cont [5/16] %v8937, 128
        %8970 = vxpose.xlu0.b32.cont [6/16] %v8938, 128
        %8971 = vxpose.xlu0.b32.cont [7/16] %v8939, 128
        %8972 = vxpose.xlu0.b32.cont [8/16] %v8940, 128
        %8973 = vxpose.xlu0.b32.cont [9/16] %v8941, 128
        %8974 = vxpose.xlu0.b32.cont [10/16] %v8942, 128
        %8975 = vxpose.xlu0.b32.cont [11/16] %v8943, 128
        %8976 = vxpose.xlu0.b32.cont [12/16] %v8944, 128
        %8977 = vxpose.xlu0.b32.cont [13/16] %v8945, 128
        %8978 = vxpose.xlu0.b32.cont [14/16] %v8946, 128
        %8979 = vxpose.xlu0.b32.cont [15/16] %v8947, 128
        %8980 = vxpose.xlu0.b32.end [16/16] %v8948, 128
        %v8981 = vpop.trf.xlu0
        %v8982 = vpop.trf.xlu0
        %v8983 = vpop.trf.xlu0
        %v8984 = vpop.trf.xlu0
        %v8985 = vpop.trf.xlu0
        %v8986 = vpop.trf.xlu0
        %v8987 = vpop.trf.xlu0
        %v8988 = vpop.trf.xlu0
        %v8989 = vpop.trf.xlu0
        %v8990 = vpop.trf.xlu0
        %v8991 = vpop.trf.xlu0
        %v8992 = vpop.trf.xlu0
        %v8993 = vpop.trf.xlu0
        %v8994 = vpop.trf.xlu0
        %v8995 = vpop.trf.xlu0
        %v8996 = vpop.trf.xlu0
        %8997 = vxpose.xlu0.b32.start [1/16] %v8949, 128
        %8998 = vxpose.xlu0.b32.cont [2/16] %v8950, 128
        %8999 = vxpose.xlu0.b32.cont [3/16] %v8951, 128
        %9000 = vxpose.xlu0.b32.cont [4/16] %v8952, 128
        %9001 = vxpose.xlu0.b32.cont [5/16] %v8953, 128
        %9002 = vxpose.xlu0.b32.cont [6/16] %v8954, 128
        %9003 = vxpose.xlu0.b32.cont [7/16] %v8955, 128
        %9004 = vxpose.xlu0.b32.cont [8/16] %v8956, 128
        %9005 = vxpose.xlu0.b32.cont [9/16] %v8957, 128
        %9006 = vxpose.xlu0.b32.cont [10/16] %v8958, 128
        %9007 = vxpose.xlu0.b32.cont [11/16] %v8959, 128
        %9008 = vxpose.xlu0.b32.cont [12/16] %v8960, 128
        %9009 = vxpose.xlu0.b32.cont [13/16] %v8961, 128
        %9010 = vxpose.xlu0.b32.cont [14/16] %v8962, 128
        %9011 = vxpose.xlu0.b32.cont [15/16] %v8963, 128
        %9012 = vxpose.xlu0.b32.end [16/16] %v8964, 128
        %v9013 = vpop.trf.xlu0
        %v9014 = vpop.trf.xlu0
        %v9015 = vpop.trf.xlu0
        %v9016 = vpop.trf.xlu0
        %v9017 = vpop.trf.xlu0
        %v9018 = vpop.trf.xlu0
        %v9019 = vpop.trf.xlu0
        %v9020 = vpop.trf.xlu0
        %v9021 = vpop.trf.xlu0
        %v9022 = vpop.trf.xlu0
        %v9023 = vpop.trf.xlu0
        %v9024 = vpop.trf.xlu0
        %v9025 = vpop.trf.xlu0
        %v9026 = vpop.trf.xlu0
        %v9027 = vpop.trf.xlu0
        %v9028 = vpop.trf.xlu0
        %9029 = vst [vmem:[%s404] sm:$0xff] %v8981
        %9030 = vst [vmem:[%s404 + $0x8] sm:$0xff] %v9013
        %9031 = vst [vmem:[%s404 + $0x10] sm:$0xff] %v8982
        %9032 = vst [vmem:[%s404 + $0x18] sm:$0xff] %v9014
        %9033 = vst [vmem:[%s404 + $0x20] sm:$0xff] %v8983
        %9034 = vst [vmem:[%s404 + $0x28] sm:$0xff] %v9015
        %9035 = vst [vmem:[%s404 + $0x30] sm:$0xff] %v8984
        %9036 = vst [vmem:[%s404 + $0x38] sm:$0xff] %v9016
        %s9037 = sand.u32 %s272, 1
        %s9038 = scalar_lea.sflag [#allocation6], %s9037
        %s9039 = sand.u32 %s272, 1
        %s9040 = smul.addr %s9039, 64
        %s9041 = scalar_lea.vmem [#allocation7], %s9040
        // Predicated region
        $region69: #{tpu_custom_call.1} parent=63 // pred_check
          %p9042 = pneg %p282
        $region70: #{tpu_custom_call.1} parent=63 // pred_check_branch
          %9044 = sbr.rel (%p9042) target = $region72
        $region71: #{tpu_custom_call.1} parent=63 // pred_region
          %s9046 = ssub.s32 1024, 1024
          %9047 = vsyncadd %s9038, %s9046
          %s9048 = smul.addr %s28, 8
          %s9049 = smul.addr %s9048, 128
          %s9050 = scalar_lea.hbm %s11, %s9049
          %s9051 = sshll.u32 %s9041, 4
          %s9052 = int_to_ptr.vmem [resolvable:$true] %s9051
          %9057 = dma.vmem_to_hbm [thread:$0]  %s9052, 1024, %s9050, %s9038, 256, 256, 16
        $region72: #{tpu_custom_call.1} parent=63 // pred_fallthru
          _
      $region64: #{tpu_custom_call.1} parent=5 // pred_fallthru
        _
      %p9058 = scmp.le.s32.totalorder 2, %s23
      // Predicated region
      $region73: #{tpu_custom_call.1} parent=5 // pred_check
        %p9059 = pneg %p9058
      $region74: #{tpu_custom_call.1} parent=5 // pred_check_branch
        %9061 = sbr.rel (%p9059) target = $region76
      $region75: #{tpu_custom_call.1} parent=5 // pred_region
        %s9062 = ssub.s32 %s23, 2
        // Predicated region
        $region77: #{tpu_custom_call.1} parent=75 // pred_check
          %p9063 = pneg %p288
        $region78: #{tpu_custom_call.1} parent=75 // pred_check_branch
          %9065 = sbr.rel (%p9063) target = $region80
        $region79: #{tpu_custom_call.1} parent=75 // pred_region
          %s9066 = sand.u32 %s273, 1
          %s9067 = scalar_lea.sflag [#allocation6], %s9066
          %s9068 = sand.u32 %s273, 1
          %s9069 = smul.addr %s9068, 64
          %s9070 = scalar_lea.vmem [#allocation7], %s9069
          %9071 = dma.done %s9067, 1024
        $region80: #{tpu_custom_call.1} parent=75 // pred_fallthru
          _
      $region76: #{tpu_custom_call.1} parent=5 // pred_fallthru
        _
    $region6: #{tpu_custom_call.1} parent=1 // loop_footer
      %s27 = sadd.s32 1, %s23
    $region7: #{tpu_custom_call.1} parent=1 // loop_footer_branch
      %22 = sbr.rel target = $region3
    $region8: #{tpu_custom_call.1} parent=1 // loop_exit
      _
    %9072 = vsyncpa [#allocation5], 1
    %s9073 = scalar_lea.sflag [#allocation5], 1
    %9074 = vsyncpa %s9073, 1
    %9075 = vsyncpa [#allocation6], 1
    %s9076 = scalar_lea.sflag [#allocation6], 1
    %9077 = vsyncpa %s9076, 1

</llo_original>
